<compile_context>
chip_gen: v6e
topology: v6e:2x2x1
jax: 0.10.0
libtpu: 0.0.40
codegen_flags: <defaults>
</compile_context>

<pallas_src>
import functools

import jax
import jax.numpy as jnp
import numpy as np
from jax.experimental import pallas as pl
from jax.experimental.pallas import tpu as pltpu


# ----------------------------- Pallas kernel ------------------------------ #

def _conv3x3_kernel(xlo_ref, xhi_ref, w_ref, b_ref, o_ref, *, pool):
    """Fused 3x3 conv + bias + ReLU (+ optional 2x2 max-pool) on one row tile.

    xlo_ref: (1, TH, W+2, Cin)   padded-input rows [h*TH, h*TH+TH)
    xhi_ref: (1, 2,  W+2, Cin)   the 2-row halo just below the tile
    w_ref:   (3, 3*Cin, Cout)    bf16 weights, laid out (ky, kx*Cin, Cout)
    b_ref:   (1, Cout)           f32 bias
    o_ref:   (1, TH', W', Cout)  TH' = TH//2, W' = W//2 when pooling, else TH, W
    """
    _, TH, Wp, Cin = xlo_ref.shape
    W = Wp - 2
    Cout = o_ref.shape[-1]

    xlo = xlo_ref[0]                      # (TH,  W+2, Cin) bf16
    xhi = xhi_ref[0]                      # (2,   W+2, Cin) bf16

    acc = jnp.zeros((TH * W, Cout), jnp.float32)
    for ky in range(3):
        if ky == 0:
            rows = xlo                                            # (TH, W+2, Cin)
        else:
            rows = jnp.concatenate([xlo[ky:], xhi[:ky]], axis=0)  # (TH, W+2, Cin)
        # im2col over the three kx taps -> one MXU dot with K = 3*Cin.
        patch = jnp.concatenate(
            [rows[:, 0:W, :], rows[:, 1:W + 1, :], rows[:, 2:W + 2, :]], axis=-1)
        patch = patch.reshape(TH * W, 3 * Cin)
        acc = acc + jnp.dot(patch, w_ref[ky], preferred_element_type=jnp.float32)

    acc = jnp.maximum(acc + b_ref[...], 0.0)          # fused bias + ReLU (f32)
    y = acc.reshape(TH, W, Cout)
    if pool:                                          # fused 2x2 max-pool
        y = y.reshape(TH // 2, 2, W, Cout).max(axis=1)
        y = y.reshape(TH // 2, W // 2, 2, Cout).max(axis=2)
    o_ref[0] = y.astype(o_ref.dtype)


# ------------------------------ layer wrapper ------------------------------ #

def _pick_row_tile(H, target=16):
    """Largest even divisor of H that is <= target (H assumed even)."""
    th = min(H, target)
    if th % 2:
        th -= 1
    while th > 2 and H % th:
        th -= 2
    return th


def conv3x3_layer(x, w_hwio, b, *, pool):
    """x: (N, H, W, Cin) bf16 (un-padded). Returns bf16 NHWC output."""
    N, H, W, Cin = x.shape
    Cout = w_hwio.shape[-1]
    assert H % 2 == 0 and W % 2 == 0
    TH = _pick_row_tile(H)
    Hc = H // TH
    TH_out, W_out = (TH // 2, W // 2) if pool else (TH, W)
    Wp = W + 2

    # TODO(synk): fold the zero padding / halo gather into the kernel (manual
    # DMA from the un-padded activation) to remove this extra HBM copy, and
    # fuse the same-resolution conv pairs (conv1+conv2, conv3+conv4).
    x_pad = jnp.pad(x, ((0, 0), (1, 1), (1, 1), (0, 0)))

    w3 = w_hwio.reshape(3, 3 * Cin, Cout)             # (ky, kx*Cin, Cout) bf16

    return pl.pallas_call(
        functools.partial(_conv3x3_kernel, pool=pool),
        out_shape=jax.ShapeDtypeStruct((N, Hc * TH_out, W_out, Cout), jnp.bfloat16),
        grid=(N, Hc),
        in_specs=[
            # main row tile (TH rows of the padded input)
            pl.BlockSpec((1, TH, Wp, Cin), lambda n, h: (n, h, 0, 0)),
            # 2-row halo below the tile (block granularity 2 along H)
            pl.BlockSpec((1, 2, Wp, Cin),
                         lambda n, h: (n, (h + 1) * (TH // 2), 0, 0)),
            # weights / bias: constant index_map -> stay VMEM-resident
            pl.BlockSpec((3, 3 * Cin, Cout), lambda n, h: (0, 0, 0)),
            pl.BlockSpec((1, Cout), lambda n, h: (0, 0)),
        ],
        out_specs=pl.BlockSpec((1, TH_out, W_out, Cout), lambda n, h: (n, h, 0, 0)),
        compiler_params=pltpu.CompilerParams(
            dimension_semantics=("parallel", "parallel"),
            vmem_limit_bytes=48 * 1024 * 1024,
        ),
    )(x_pad, x_pad, w3, b)


# ------------------------------- parameters -------------------------------- #

def init_params(key, in_features):
    """Synthetic params mirroring the PyTorch module's shapes/default init.

    Weights stored HWIO bf16 (3, 3, Cin, Cout); biases (1, Cout) f32.
    """
    shapes = [
        ("conv1", in_features, 64),
        ("conv2", 64, 64),
        ("conv3", 64, 128),
        ("conv4", 128, 128),
        ("conv5", 128, 256),
    ]
    params = {}
    keys = jax.random.split(key, 2 * len(shapes))
    for i, (name, cin, cout) in enumerate(shapes):
        bound = 1.0 / np.sqrt(cin * 9)
        w = jax.random.uniform(keys[2 * i], (cout, cin, 3, 3), jnp.float32, -bound, bound)
        bb = jax.random.uniform(keys[2 * i + 1], (cout,), jnp.float32, -bound, bound)
        params[name + "_w"] = jnp.transpose(w, (2, 3, 1, 0)).astype(jnp.bfloat16)
        params[name + "_b"] = bb.reshape(1, cout)
    return params


# -------------------------------- forward ---------------------------------- #

@jax.jit
def encoder_forward(x_nchw, params):
    x = jnp.transpose(x_nchw, (0, 2, 3, 1)).astype(jnp.bfloat16)            # NCHW -> NHWC
    x = conv3x3_layer(x, params["conv1_w"], params["conv1_b"], pool=False)  # relu(conv1)
    x = conv3x3_layer(x, params["conv2_w"], params["conv2_b"], pool=True)   # pool(relu(conv2))
    x = conv3x3_layer(x, params["conv3_w"], params["conv3_b"], pool=False)  # relu(conv3)
    x = conv3x3_layer(x, params["conv4_w"], params["conv4_b"], pool=True)   # pool(relu(conv4))
    x = conv3x3_layer(x, params["conv5_w"], params["conv5_b"], pool=False)  # relu(conv5)
    return jnp.transpose(x, (0, 3, 1, 2)).astype(jnp.float32)               # NHWC -> NCHW


# --------------------------- pure-JAX reference ----------------------------- #

def _ref_layer(x, w_hwio, b, pool):
    y = jax.lax.conv_general_dilated(
        x, w_hwio, window_strides=(1, 1), padding="SAME",
        dimension_numbers=("NHWC", "HWIO", "NHWC"),
        preferred_element_type=jnp.float32)
    y = jnp.maximum(y + b.reshape(1, 1, 1, -1), 0.0)
    if pool:
        N, H, W, C = y.shape
        y = y.reshape(N, H // 2, 2, W // 2, 2, C).max(axis=(2, 4))
    return y.astype(jnp.bfloat16)


@jax.jit
def _ref_forward(x_nchw, params):
    x = jnp.transpose(x_nchw, (0, 2, 3, 1)).astype(jnp.bfloat16)
    x = _ref_layer(x, params["conv1_w"], params["conv1_b"], False)
    x = _ref_layer(x, params["conv2_w"], params["conv2_b"], True)
    x = _ref_layer(x, params["conv3_w"], params["conv3_b"], False)
    x = _ref_layer(x, params["conv4_w"], params["conv4_b"], True)
    x = _ref_layer(x, params["conv5_w"], params["conv5_b"], False)
    return jnp.transpose(x, (0, 3, 1, 2)).astype(jnp.float32)


# ----------------------------------- main ----------------------------------- #

if __name__ == "__main__":
    key = jax.random.PRNGKey(0)
    k_x, k_p = jax.random.split(key)

    batch, in_features, spatial = 2, 4, 16
    x = jax.random.normal(k_x, (batch, in_features, spatial, spatial), jnp.float32)
    params = init_params(k_p, in_features)

    out = jax.block_until_ready(encoder_forward(x, params))
    assert out.shape == (batch, 256, spatial // 4, spatial // 4), out.shape

    ref = jax.block_until_ready(_ref_forward(x, params))
    np.testing.assert_allclose(np.asarray(out), np.asarray(ref), rtol=3e-2, atol=3e-2)

    print("KERNEL_OK")
</pallas_src>

<mosaic_0001>
module attributes {stable_mosaic.version = 11 : i64} {
  func.func @_conv3x3_kernel(%arg0: i32, %arg1: i32, %arg2: memref<1x16x18x64xbf16, #tpu.memory_space<vmem>>, %arg3: memref<1x2x18x64xbf16, #tpu.memory_space<vmem>>, %arg4: memref<3x192x64xbf16, #tpu.memory_space<vmem>>, %arg5: memref<1x64xf32, #tpu.memory_space<vmem>>, %arg6: memref<1x8x8x64xbf16, #tpu.memory_space<vmem>>) attributes {dimension_semantics = [#tpu.dimension_semantics<parallel>, #tpu.dimension_semantics<parallel>], iteration_bounds = array<i64: 2, 1>, scalar_prefetch = 0 : i64, scratch_operands = 0 : i64, tpu.core_type = #tpu.core_type<tc>, window_params = [{transform_indices = @transform_0, window_bounds = array<i64: 1, 16, 18, 64>}, {transform_indices = @transform_1, window_bounds = array<i64: 1, 2, 18, 64>}, {pipeline_mode = #tpu.pipeline_mode<synchronous>, transform_indices = @transform_2, window_bounds = array<i64: 3, 192, 64>}, {pipeline_mode = #tpu.pipeline_mode<synchronous>, transform_indices = @transform_3, window_bounds = array<i64: 1, 64>}, {transform_indices = @transform_4, window_bounds = array<i64: 1, 8, 8, 64>}]} {
    %c0 = arith.constant 0 : index
    %c0_0 = arith.constant 0 : index
    %c0_1 = arith.constant 0 : index
    %c0_2 = arith.constant 0 : index
    %0 = vector.load %arg2[%c0, %c0_0, %c0_1, %c0_2] : memref<1x16x18x64xbf16, #tpu.memory_space<vmem>>, vector<1x16x18x64xbf16>
    %1 = vector.shape_cast %0 : vector<1x16x18x64xbf16> to vector<16x18x64xbf16>
    %c0_3 = arith.constant 0 : index
    %c0_4 = arith.constant 0 : index
    %c0_5 = arith.constant 0 : index
    %c0_6 = arith.constant 0 : index
    %2 = vector.load %arg3[%c0_3, %c0_4, %c0_5, %c0_6] : memref<1x2x18x64xbf16, #tpu.memory_space<vmem>>, vector<1x2x18x64xbf16>
    %3 = vector.shape_cast %2 : vector<1x2x18x64xbf16> to vector<2x18x64xbf16>
    %cst = arith.constant 0.000000e+00 : f32
    %4 = vector.broadcast %cst : f32 to vector<256x64xf32>
    %5 = vector.extract_strided_slice %1 {offsets = [0, 0, 0], sizes = [16, 16, 64], strides = [1, 1, 1]} : vector<16x18x64xbf16> to vector<16x16x64xbf16>
    %6 = vector.extract_strided_slice %1 {offsets = [0, 1, 0], sizes = [16, 16, 64], strides = [1, 1, 1]} : vector<16x18x64xbf16> to vector<16x16x64xbf16>
    %7 = vector.extract_strided_slice %1 {offsets = [0, 2, 0], sizes = [16, 16, 64], strides = [1, 1, 1]} : vector<16x18x64xbf16> to vector<16x16x64xbf16>
    %8 = tpu.concatenate %5, %6, %7 in 2 : vector<16x16x64xbf16>, vector<16x16x64xbf16>, vector<16x16x64xbf16> -> vector<16x16x192xbf16>
    %9 = vector.shape_cast %8 : vector<16x16x192xbf16> to vector<256x192xbf16>
    %c0_7 = arith.constant 0 : index
    %c0_8 = arith.constant 0 : index
    %c0_9 = arith.constant 0 : index
    %10 = vector.load %arg4[%c0_7, %c0_8, %c0_9] : memref<3x192x64xbf16, #tpu.memory_space<vmem>>, vector<1x192x64xbf16>
    %11 = vector.shape_cast %10 : vector<1x192x64xbf16> to vector<192x64xbf16>
    %cst_10 = arith.constant dense<0.000000e+00> : vector<256x64xf32>
    %12 = tpu.matmul %9, %11, %cst_10 {dimension_numbers = #tpu.dot_dimension_numbers<[1], [0], [0], [1], [0, 0, 1, 1], [], []>} : vector<256x192xbf16>, vector<192x64xbf16>, vector<256x64xf32> -> vector<256x64xf32>
    %13 = arith.addf %4, %12 : vector<256x64xf32>
    %14 = vector.extract_strided_slice %1 {offsets = [1, 0, 0], sizes = [15, 18, 64], strides = [1, 1, 1]} : vector<16x18x64xbf16> to vector<15x18x64xbf16>
    %15 = vector.extract_strided_slice %3 {offsets = [0, 0, 0], sizes = [1, 18, 64], strides = [1, 1, 1]} : vector<2x18x64xbf16> to vector<1x18x64xbf16>
    %16 = tpu.concatenate %14, %15 in 0 : vector<15x18x64xbf16>, vector<1x18x64xbf16> -> vector<16x18x64xbf16>
    %17 = vector.extract_strided_slice %16 {offsets = [0, 0, 0], sizes = [16, 16, 64], strides = [1, 1, 1]} : vector<16x18x64xbf16> to vector<16x16x64xbf16>
    %18 = vector.extract_strided_slice %16 {offsets = [0, 1, 0], sizes = [16, 16, 64], strides = [1, 1, 1]} : vector<16x18x64xbf16> to vector<16x16x64xbf16>
    %19 = vector.extract_strided_slice %16 {offsets = [0, 2, 0], sizes = [16, 16, 64], strides = [1, 1, 1]} : vector<16x18x64xbf16> to vector<16x16x64xbf16>
    %20 = tpu.concatenate %17, %18, %19 in 2 : vector<16x16x64xbf16>, vector<16x16x64xbf16>, vector<16x16x64xbf16> -> vector<16x16x192xbf16>
    %21 = vector.shape_cast %20 : vector<16x16x192xbf16> to vector<256x192xbf16>
    %c1 = arith.constant 1 : index
    %c0_11 = arith.constant 0 : index
    %c0_12 = arith.constant 0 : index
    %22 = vector.load %arg4[%c1, %c0_11, %c0_12] : memref<3x192x64xbf16, #tpu.memory_space<vmem>>, vector<1x192x64xbf16>
    %23 = vector.shape_cast %22 : vector<1x192x64xbf16> to vector<192x64xbf16>
    %cst_13 = arith.constant dense<0.000000e+00> : vector<256x64xf32>
    %24 = tpu.matmul %21, %23, %cst_13 {dimension_numbers = #tpu.dot_dimension_numbers<[1], [0], [0], [1], [0, 0, 1, 1], [], []>} : vector<256x192xbf16>, vector<192x64xbf16>, vector<256x64xf32> -> vector<256x64xf32>
    %25 = arith.addf %13, %24 : vector<256x64xf32>
    %26 = vector.extract_strided_slice %1 {offsets = [2, 0, 0], sizes = [14, 18, 64], strides = [1, 1, 1]} : vector<16x18x64xbf16> to vector<14x18x64xbf16>
    %27 = tpu.concatenate %26, %3 in 0 : vector<14x18x64xbf16>, vector<2x18x64xbf16> -> vector<16x18x64xbf16>
    %28 = vector.extract_strided_slice %27 {offsets = [0, 0, 0], sizes = [16, 16, 64], strides = [1, 1, 1]} : vector<16x18x64xbf16> to vector<16x16x64xbf16>
    %29 = vector.extract_strided_slice %27 {offsets = [0, 1, 0], sizes = [16, 16, 64], strides = [1, 1, 1]} : vector<16x18x64xbf16> to vector<16x16x64xbf16>
    %30 = vector.extract_strided_slice %27 {offsets = [0, 2, 0], sizes = [16, 16, 64], strides = [1, 1, 1]} : vector<16x18x64xbf16> to vector<16x16x64xbf16>
    %31 = tpu.concatenate %28, %29, %30 in 2 : vector<16x16x64xbf16>, vector<16x16x64xbf16>, vector<16x16x64xbf16> -> vector<16x16x192xbf16>
    %32 = vector.shape_cast %31 : vector<16x16x192xbf16> to vector<256x192xbf16>
    %c2 = arith.constant 2 : index
    %c0_14 = arith.constant 0 : index
    %c0_15 = arith.constant 0 : index
    %33 = vector.load %arg4[%c2, %c0_14, %c0_15] : memref<3x192x64xbf16, #tpu.memory_space<vmem>>, vector<1x192x64xbf16>
    %34 = vector.shape_cast %33 : vector<1x192x64xbf16> to vector<192x64xbf16>
    %cst_16 = arith.constant dense<0.000000e+00> : vector<256x64xf32>
    %35 = tpu.matmul %32, %34, %cst_16 {dimension_numbers = #tpu.dot_dimension_numbers<[1], [0], [0], [1], [0, 0, 1, 1], [], []>} : vector<256x192xbf16>, vector<192x64xbf16>, vector<256x64xf32> -> vector<256x64xf32>
    %36 = arith.addf %25, %35 : vector<256x64xf32>
    %c0_17 = arith.constant 0 : index
    %c0_18 = arith.constant 0 : index
    %37 = vector.load %arg5[%c0_17, %c0_18] : memref<1x64xf32, #tpu.memory_space<vmem>>, vector<1x64xf32>
    %38 = vector.broadcast %37 : vector<1x64xf32> to vector<256x64xf32>
    %39 = arith.addf %36, %38 : vector<256x64xf32>
    %cst_19 = arith.constant 0.000000e+00 : f32
    %40 = vector.broadcast %cst_19 : f32 to vector<256x64xf32>
    %41 = arith.maximumf %39, %40 : vector<256x64xf32>
    %42 = vector.shape_cast %41 : vector<256x64xf32> to vector<16x16x64xf32>
    %43 = vector.shape_cast %42 : vector<16x16x64xf32> to vector<8x2x16x64xf32>
    %cst_20 = arith.constant dense<0xFF800000> : vector<8x16x64xf32>
    %44 = vector.multi_reduction <maximumf>, %43, %cst_20 [1] : vector<8x2x16x64xf32> to vector<8x16x64xf32>
    %45 = vector.shape_cast %44 : vector<8x16x64xf32> to vector<8x8x2x64xf32>
    %cst_21 = arith.constant dense<0xFF800000> : vector<8x8x64xf32>
    %46 = vector.multi_reduction <maximumf>, %45, %cst_21 [2] : vector<8x8x2x64xf32> to vector<8x8x64xf32>
    %47 = arith.truncf %46 : vector<8x8x64xf32> to vector<8x8x64xbf16>
    %c0_22 = arith.constant 0 : index
    %c0_23 = arith.constant 0 : index
    %c0_24 = arith.constant 0 : index
    %c0_25 = arith.constant 0 : index
    %48 = vector.load %arg6[%c0_22, %c0_23, %c0_24, %c0_25] : memref<1x8x8x64xbf16, #tpu.memory_space<vmem>>, vector<1x8x8x64xbf16>
    %49 = vector.shape_cast %48 : vector<1x8x8x64xbf16> to vector<8x8x64xbf16>
    %50 = vector.shape_cast %47 : vector<8x8x64xbf16> to vector<1x8x8x64xbf16>
    tpu.vector_store %arg6[%c0_22, %c0_23, %c0_24, %c0_25], %50 {strides = array<i32>} : memref<1x8x8x64xbf16, #tpu.memory_space<vmem>>, vector<1x8x8x64xbf16>,
    return
  }
  func.func @transform_0(%arg0: i32, %arg1: i32) -> (i32, i32, i32, i32) {
    %c0_i32 = arith.constant 0 : i32
    %c0_i32_0 = arith.constant 0 : i32
    %c0_i32_1 = arith.constant 0 : i32
    return %arg0, %arg1, %c0_i32, %c0_i32_0 : i32, i32, i32, i32
  }
  func.func @transform_1(%arg0: i32, %arg1: i32) -> (i32, i32, i32, i32) {
    %c1_i32 = arith.constant 1 : i32
    %0 = arith.addi %arg1, %c1_i32 : i32
    %c8_i32 = arith.constant 8 : i32
    %1 = arith.muli %0, %c8_i32 : i32
    %c0_i32 = arith.constant 0 : i32
    %c0_i32_0 = arith.constant 0 : i32
    %c0_i32_1 = arith.constant 0 : i32
    return %arg0, %1, %c0_i32, %c0_i32_0 : i32, i32, i32, i32
  }
  func.func @transform_2(%arg0: i32, %arg1: i32) -> (i32, i32, i32) {
    %c0_i32 = arith.constant 0 : i32
    %c0_i32_0 = arith.constant 0 : i32
    %c0_i32_1 = arith.constant 0 : i32
    %c0_i32_2 = arith.constant 0 : i32
    return %c0_i32, %c0_i32_0, %c0_i32_1 : i32, i32, i32
  }
  func.func @transform_3(%arg0: i32, %arg1: i32) -> (i32, i32) {
    %c0_i32 = arith.constant 0 : i32
    %c0_i32_0 = arith.constant 0 : i32
    %c0_i32_1 = arith.constant 0 : i32
    return %c0_i32, %c0_i32_0 : i32, i32
  }
  func.func @transform_4(%arg0: i32, %arg1: i32) -> (i32, i32, i32, i32) {
    %c0_i32 = arith.constant 0 : i32
    %c0_i32_0 = arith.constant 0 : i32
    %c0_i32_1 = arith.constant 0 : i32
    return %arg0, %arg1, %c0_i32, %c0_i32_0 : i32, i32, i32, i32
  }
}

module attributes {stable_mosaic.version = 11 : i64} {
  func.func @_conv3x3_kernel(%arg0: i32, %arg1: i32, %arg2: memref<1x16x18x4xbf16, #tpu.memory_space<vmem>>, %arg3: memref<1x2x18x4xbf16, #tpu.memory_space<vmem>>, %arg4: memref<3x12x64xbf16, #tpu.memory_space<vmem>>, %arg5: memref<1x64xf32, #tpu.memory_space<vmem>>, %arg6: memref<1x16x16x64xbf16, #tpu.memory_space<vmem>>) attributes {dimension_semantics = [#tpu.dimension_semantics<parallel>, #tpu.dimension_semantics<parallel>], iteration_bounds = array<i64: 2, 1>, scalar_prefetch = 0 : i64, scratch_operands = 0 : i64, tpu.core_type = #tpu.core_type<tc>, window_params = [{transform_indices = @transform_0, window_bounds = array<i64: 1, 16, 18, 4>}, {transform_indices = @transform_1, window_bounds = array<i64: 1, 2, 18, 4>}, {pipeline_mode = #tpu.pipeline_mode<synchronous>, transform_indices = @transform_2, window_bounds = array<i64: 3, 12, 64>}, {pipeline_mode = #tpu.pipeline_mode<synchronous>, transform_indices = @transform_3, window_bounds = array<i64: 1, 64>}, {transform_indices = @transform_4, window_bounds = array<i64: 1, 16, 16, 64>}]} {
    %c0 = arith.constant 0 : index
    %c0_0 = arith.constant 0 : index
    %c0_1 = arith.constant 0 : index
    %c0_2 = arith.constant 0 : index
    %0 = vector.load %arg2[%c0, %c0_0, %c0_1, %c0_2] : memref<1x16x18x4xbf16, #tpu.memory_space<vmem>>, vector<1x16x18x4xbf16>
    %1 = vector.shape_cast %0 : vector<1x16x18x4xbf16> to vector<16x18x4xbf16>
    %c0_3 = arith.constant 0 : index
    %c0_4 = arith.constant 0 : index
    %c0_5 = arith.constant 0 : index
    %c0_6 = arith.constant 0 : index
    %2 = vector.load %arg3[%c0_3, %c0_4, %c0_5, %c0_6] : memref<1x2x18x4xbf16, #tpu.memory_space<vmem>>, vector<1x2x18x4xbf16>
    %3 = vector.shape_cast %2 : vector<1x2x18x4xbf16> to vector<2x18x4xbf16>
    %cst = arith.constant 0.000000e+00 : f32
    %4 = vector.broadcast %cst : f32 to vector<256x64xf32>
    %5 = vector.extract_strided_slice %1 {offsets = [0, 0, 0], sizes = [16, 16, 4], strides = [1, 1, 1]} : vector<16x18x4xbf16> to vector<16x16x4xbf16>
    %6 = vector.extract_strided_slice %1 {offsets = [0, 1, 0], sizes = [16, 16, 4], strides = [1, 1, 1]} : vector<16x18x4xbf16> to vector<16x16x4xbf16>
    %7 = vector.extract_strided_slice %1 {offsets = [0, 2, 0], sizes = [16, 16, 4], strides = [1, 1, 1]} : vector<16x18x4xbf16> to vector<16x16x4xbf16>
    %8 = tpu.concatenate %5, %6, %7 in 2 : vector<16x16x4xbf16>, vector<16x16x4xbf16>, vector<16x16x4xbf16> -> vector<16x16x12xbf16>
    %9 = vector.shape_cast %8 : vector<16x16x12xbf16> to vector<256x12xbf16>
    %c0_7 = arith.constant 0 : index
    %c0_8 = arith.constant 0 : index
    %c0_9 = arith.constant 0 : index
    %10 = vector.load %arg4[%c0_7, %c0_8, %c0_9] : memref<3x12x64xbf16, #tpu.memory_space<vmem>>, vector<1x12x64xbf16>
    %11 = vector.shape_cast %10 : vector<1x12x64xbf16> to vector<12x64xbf16>
    %cst_10 = arith.constant dense<0.000000e+00> : vector<256x64xf32>
    %12 = tpu.matmul %9, %11, %cst_10 {dimension_numbers = #tpu.dot_dimension_numbers<[1], [0], [0], [1], [0, 0, 1, 1], [], []>} : vector<256x12xbf16>, vector<12x64xbf16>, vector<256x64xf32> -> vector<256x64xf32>
    %13 = arith.addf %4, %12 : vector<256x64xf32>
    %14 = vector.extract_strided_slice %1 {offsets = [1, 0, 0], sizes = [15, 18, 4], strides = [1, 1, 1]} : vector<16x18x4xbf16> to vector<15x18x4xbf16>
    %15 = vector.extract_strided_slice %3 {offsets = [0, 0, 0], sizes = [1, 18, 4], strides = [1, 1, 1]} : vector<2x18x4xbf16> to vector<1x18x4xbf16>
    %16 = tpu.concatenate %14, %15 in 0 : vector<15x18x4xbf16>, vector<1x18x4xbf16> -> vector<16x18x4xbf16>
    %17 = vector.extract_strided_slice %16 {offsets = [0, 0, 0], sizes = [16, 16, 4], strides = [1, 1, 1]} : vector<16x18x4xbf16> to vector<16x16x4xbf16>
    %18 = vector.extract_strided_slice %16 {offsets = [0, 1, 0], sizes = [16, 16, 4], strides = [1, 1, 1]} : vector<16x18x4xbf16> to vector<16x16x4xbf16>
    %19 = vector.extract_strided_slice %16 {offsets = [0, 2, 0], sizes = [16, 16, 4], strides = [1, 1, 1]} : vector<16x18x4xbf16> to vector<16x16x4xbf16>
    %20 = tpu.concatenate %17, %18, %19 in 2 : vector<16x16x4xbf16>, vector<16x16x4xbf16>, vector<16x16x4xbf16> -> vector<16x16x12xbf16>
    %21 = vector.shape_cast %20 : vector<16x16x12xbf16> to vector<256x12xbf16>
    %c1 = arith.constant 1 : index
    %c0_11 = arith.constant 0 : index
    %c0_12 = arith.constant 0 : index
    %22 = vector.load %arg4[%c1, %c0_11, %c0_12] : memref<3x12x64xbf16, #tpu.memory_space<vmem>>, vector<1x12x64xbf16>
    %23 = vector.shape_cast %22 : vector<1x12x64xbf16> to vector<12x64xbf16>
    %cst_13 = arith.constant dense<0.000000e+00> : vector<256x64xf32>
    %24 = tpu.matmul %21, %23, %cst_13 {dimension_numbers = #tpu.dot_dimension_numbers<[1], [0], [0], [1], [0, 0, 1, 1], [], []>} : vector<256x12xbf16>, vector<12x64xbf16>, vector<256x64xf32> -> vector<256x64xf32>
    %25 = arith.addf %13, %24 : vector<256x64xf32>
    %26 = vector.extract_strided_slice %1 {offsets = [2, 0, 0], sizes = [14, 18, 4], strides = [1, 1, 1]} : vector<16x18x4xbf16> to vector<14x18x4xbf16>
    %27 = tpu.concatenate %26, %3 in 0 : vector<14x18x4xbf16>, vector<2x18x4xbf16> -> vector<16x18x4xbf16>
    %28 = vector.extract_strided_slice %27 {offsets = [0, 0, 0], sizes = [16, 16, 4], strides = [1, 1, 1]} : vector<16x18x4xbf16> to vector<16x16x4xbf16>
    %29 = vector.extract_strided_slice %27 {offsets = [0, 1, 0], sizes = [16, 16, 4], strides = [1, 1, 1]} : vector<16x18x4xbf16> to vector<16x16x4xbf16>
    %30 = vector.extract_strided_slice %27 {offsets = [0, 2, 0], sizes = [16, 16, 4], strides = [1, 1, 1]} : vector<16x18x4xbf16> to vector<16x16x4xbf16>
    %31 = tpu.concatenate %28, %29, %30 in 2 : vector<16x16x4xbf16>, vector<16x16x4xbf16>, vector<16x16x4xbf16> -> vector<16x16x12xbf16>
    %32 = vector.shape_cast %31 : vector<16x16x12xbf16> to vector<256x12xbf16>
    %c2 = arith.constant 2 : index
    %c0_14 = arith.constant 0 : index
    %c0_15 = arith.constant 0 : index
    %33 = vector.load %arg4[%c2, %c0_14, %c0_15] : memref<3x12x64xbf16, #tpu.memory_space<vmem>>, vector<1x12x64xbf16>
    %34 = vector.shape_cast %33 : vector<1x12x64xbf16> to vector<12x64xbf16>
    %cst_16 = arith.constant dense<0.000000e+00> : vector<256x64xf32>
    %35 = tpu.matmul %32, %34, %cst_16 {dimension_numbers = #tpu.dot_dimension_numbers<[1], [0], [0], [1], [0, 0, 1, 1], [], []>} : vector<256x12xbf16>, vector<12x64xbf16>, vector<256x64xf32> -> vector<256x64xf32>
    %36 = arith.addf %25, %35 : vector<256x64xf32>
    %c0_17 = arith.constant 0 : index
    %c0_18 = arith.constant 0 : index
    %37 = vector.load %arg5[%c0_17, %c0_18] : memref<1x64xf32, #tpu.memory_space<vmem>>, vector<1x64xf32>
    %38 = vector.broadcast %37 : vector<1x64xf32> to vector<256x64xf32>
    %39 = arith.addf %36, %38 : vector<256x64xf32>
    %cst_19 = arith.constant 0.000000e+00 : f32
    %40 = vector.broadcast %cst_19 : f32 to vector<256x64xf32>
    %41 = arith.maximumf %39, %40 : vector<256x64xf32>
    %42 = vector.shape_cast %41 : vector<256x64xf32> to vector<16x16x64xf32>
    %43 = arith.truncf %42 : vector<16x16x64xf32> to vector<16x16x64xbf16>
    %c0_20 = arith.constant 0 : index
    %c0_21 = arith.constant 0 : index
    %c0_22 = arith.constant 0 : index
    %c0_23 = arith.constant 0 : index
    %44 = vector.load %arg6[%c0_20, %c0_21, %c0_22, %c0_23] : memref<1x16x16x64xbf16, #tpu.memory_space<vmem>>, vector<1x16x16x64xbf16>
    %45 = vector.shape_cast %44 : vector<1x16x16x64xbf16> to vector<16x16x64xbf16>
    %46 = vector.shape_cast %43 : vector<16x16x64xbf16> to vector<1x16x16x64xbf16>
    tpu.vector_store %arg6[%c0_20, %c0_21, %c0_22, %c0_23], %46 {strides = array<i32>} : memref<1x16x16x64xbf16, #tpu.memory_space<vmem>>, vector<1x16x16x64xbf16>,
    return
  }
  func.func @transform_0(%arg0: i32, %arg1: i32) -> (i32, i32, i32, i32) {
    %c0_i32 = arith.constant 0 : i32
    %c0_i32_0 = arith.constant 0 : i32
    %c0_i32_1 = arith.constant 0 : i32
    return %arg0, %arg1, %c0_i32, %c0_i32_0 : i32, i32, i32, i32
  }
  func.func @transform_1(%arg0: i32, %arg1: i32) -> (i32, i32, i32, i32) {
    %c1_i32 = arith.constant 1 : i32
    %0 = arith.addi %arg1, %c1_i32 : i32
    %c8_i32 = arith.constant 8 : i32
    %1 = arith.muli %0, %c8_i32 : i32
    %c0_i32 = arith.constant 0 : i32
    %c0_i32_0 = arith.constant 0 : i32
    %c0_i32_1 = arith.constant 0 : i32
    return %arg0, %1, %c0_i32, %c0_i32_0 : i32, i32, i32, i32
  }
  func.func @transform_2(%arg0: i32, %arg1: i32) -> (i32, i32, i32) {
    %c0_i32 = arith.constant 0 : i32
    %c0_i32_0 = arith.constant 0 : i32
    %c0_i32_1 = arith.constant 0 : i32
    %c0_i32_2 = arith.constant 0 : i32
    return %c0_i32, %c0_i32_0, %c0_i32_1 : i32, i32, i32
  }
  func.func @transform_3(%arg0: i32, %arg1: i32) -> (i32, i32) {
    %c0_i32 = arith.constant 0 : i32
    %c0_i32_0 = arith.constant 0 : i32
    %c0_i32_1 = arith.constant 0 : i32
    return %c0_i32, %c0_i32_0 : i32, i32
  }
  func.func @transform_4(%arg0: i32, %arg1: i32) -> (i32, i32, i32, i32) {
    %c0_i32 = arith.constant 0 : i32
    %c0_i32_0 = arith.constant 0 : i32
    %c0_i32_1 = arith.constant 0 : i32
    return %arg0, %arg1, %c0_i32, %c0_i32_0 : i32, i32, i32, i32
  }
}

module attributes {stable_mosaic.version = 11 : i64} {
  func.func @_conv3x3_kernel(%arg0: i32, %arg1: i32, %arg2: memref<1x8x10x64xbf16, #tpu.memory_space<vmem>>, %arg3: memref<1x2x10x64xbf16, #tpu.memory_space<vmem>>, %arg4: memref<3x192x128xbf16, #tpu.memory_space<vmem>>, %arg5: memref<1x128xf32, #tpu.memory_space<vmem>>, %arg6: memref<1x8x8x128xbf16, #tpu.memory_space<vmem>>) attributes {dimension_semantics = [#tpu.dimension_semantics<parallel>, #tpu.dimension_semantics<parallel>], iteration_bounds = array<i64: 2, 1>, scalar_prefetch = 0 : i64, scratch_operands = 0 : i64, tpu.core_type = #tpu.core_type<tc>, window_params = [{transform_indices = @transform_0, window_bounds = array<i64: 1, 8, 10, 64>}, {transform_indices = @transform_1, window_bounds = array<i64: 1, 2, 10, 64>}, {pipeline_mode = #tpu.pipeline_mode<synchronous>, transform_indices = @transform_2, window_bounds = array<i64: 3, 192, 128>}, {pipeline_mode = #tpu.pipeline_mode<synchronous>, transform_indices = @transform_3, window_bounds = array<i64: 1, 128>}, {transform_indices = @transform_4, window_bounds = array<i64: 1, 8, 8, 128>}]} {
    %c0 = arith.constant 0 : index
    %c0_0 = arith.constant 0 : index
    %c0_1 = arith.constant 0 : index
    %c0_2 = arith.constant 0 : index
    %0 = vector.load %arg2[%c0, %c0_0, %c0_1, %c0_2] : memref<1x8x10x64xbf16, #tpu.memory_space<vmem>>, vector<1x8x10x64xbf16>
    %1 = vector.shape_cast %0 : vector<1x8x10x64xbf16> to vector<8x10x64xbf16>
    %c0_3 = arith.constant 0 : index
    %c0_4 = arith.constant 0 : index
    %c0_5 = arith.constant 0 : index
    %c0_6 = arith.constant 0 : index
    %2 = vector.load %arg3[%c0_3, %c0_4, %c0_5, %c0_6] : memref<1x2x10x64xbf16, #tpu.memory_space<vmem>>, vector<1x2x10x64xbf16>
    %3 = vector.shape_cast %2 : vector<1x2x10x64xbf16> to vector<2x10x64xbf16>
    %cst = arith.constant 0.000000e+00 : f32
    %4 = vector.broadcast %cst : f32 to vector<64x128xf32>
    %5 = vector.extract_strided_slice %1 {offsets = [0, 0, 0], sizes = [8, 8, 64], strides = [1, 1, 1]} : vector<8x10x64xbf16> to vector<8x8x64xbf16>
    %6 = vector.extract_strided_slice %1 {offsets = [0, 1, 0], sizes = [8, 8, 64], strides = [1, 1, 1]} : vector<8x10x64xbf16> to vector<8x8x64xbf16>
    %7 = vector.extract_strided_slice %1 {offsets = [0, 2, 0], sizes = [8, 8, 64], strides = [1, 1, 1]} : vector<8x10x64xbf16> to vector<8x8x64xbf16>
    %8 = tpu.concatenate %5, %6, %7 in 2 : vector<8x8x64xbf16>, vector<8x8x64xbf16>, vector<8x8x64xbf16> -> vector<8x8x192xbf16>
    %9 = vector.shape_cast %8 : vector<8x8x192xbf16> to vector<64x192xbf16>
    %c0_7 = arith.constant 0 : index
    %c0_8 = arith.constant 0 : index
    %c0_9 = arith.constant 0 : index
    %10 = vector.load %arg4[%c0_7, %c0_8, %c0_9] : memref<3x192x128xbf16, #tpu.memory_space<vmem>>, vector<1x192x128xbf16>
    %11 = vector.shape_cast %10 : vector<1x192x128xbf16> to vector<192x128xbf16>
    %cst_10 = arith.constant dense<0.000000e+00> : vector<64x128xf32>
    %12 = tpu.matmul %9, %11, %cst_10 {dimension_numbers = #tpu.dot_dimension_numbers<[1], [0], [0], [1], [0, 0, 1, 1], [], []>} : vector<64x192xbf16>, vector<192x128xbf16>, vector<64x128xf32> -> vector<64x128xf32>
    %13 = arith.addf %4, %12 : vector<64x128xf32>
    %14 = vector.extract_strided_slice %1 {offsets = [1, 0, 0], sizes = [7, 10, 64], strides = [1, 1, 1]} : vector<8x10x64xbf16> to vector<7x10x64xbf16>
    %15 = vector.extract_strided_slice %3 {offsets = [0, 0, 0], sizes = [1, 10, 64], strides = [1, 1, 1]} : vector<2x10x64xbf16> to vector<1x10x64xbf16>
    %16 = tpu.concatenate %14, %15 in 0 : vector<7x10x64xbf16>, vector<1x10x64xbf16> -> vector<8x10x64xbf16>
    %17 = vector.extract_strided_slice %16 {offsets = [0, 0, 0], sizes = [8, 8, 64], strides = [1, 1, 1]} : vector<8x10x64xbf16> to vector<8x8x64xbf16>
    %18 = vector.extract_strided_slice %16 {offsets = [0, 1, 0], sizes = [8, 8, 64], strides = [1, 1, 1]} : vector<8x10x64xbf16> to vector<8x8x64xbf16>
    %19 = vector.extract_strided_slice %16 {offsets = [0, 2, 0], sizes = [8, 8, 64], strides = [1, 1, 1]} : vector<8x10x64xbf16> to vector<8x8x64xbf16>
    %20 = tpu.concatenate %17, %18, %19 in 2 : vector<8x8x64xbf16>, vector<8x8x64xbf16>, vector<8x8x64xbf16> -> vector<8x8x192xbf16>
    %21 = vector.shape_cast %20 : vector<8x8x192xbf16> to vector<64x192xbf16>
    %c1 = arith.constant 1 : index
    %c0_11 = arith.constant 0 : index
    %c0_12 = arith.constant 0 : index
    %22 = vector.load %arg4[%c1, %c0_11, %c0_12] : memref<3x192x128xbf16, #tpu.memory_space<vmem>>, vector<1x192x128xbf16>
    %23 = vector.shape_cast %22 : vector<1x192x128xbf16> to vector<192x128xbf16>
    %cst_13 = arith.constant dense<0.000000e+00> : vector<64x128xf32>
    %24 = tpu.matmul %21, %23, %cst_13 {dimension_numbers = #tpu.dot_dimension_numbers<[1], [0], [0], [1], [0, 0, 1, 1], [], []>} : vector<64x192xbf16>, vector<192x128xbf16>, vector<64x128xf32> -> vector<64x128xf32>
    %25 = arith.addf %13, %24 : vector<64x128xf32>
    %26 = vector.extract_strided_slice %1 {offsets = [2, 0, 0], sizes = [6, 10, 64], strides = [1, 1, 1]} : vector<8x10x64xbf16> to vector<6x10x64xbf16>
    %27 = tpu.concatenate %26, %3 in 0 : vector<6x10x64xbf16>, vector<2x10x64xbf16> -> vector<8x10x64xbf16>
    %28 = vector.extract_strided_slice %27 {offsets = [0, 0, 0], sizes = [8, 8, 64], strides = [1, 1, 1]} : vector<8x10x64xbf16> to vector<8x8x64xbf16>
    %29 = vector.extract_strided_slice %27 {offsets = [0, 1, 0], sizes = [8, 8, 64], strides = [1, 1, 1]} : vector<8x10x64xbf16> to vector<8x8x64xbf16>
    %30 = vector.extract_strided_slice %27 {offsets = [0, 2, 0], sizes = [8, 8, 64], strides = [1, 1, 1]} : vector<8x10x64xbf16> to vector<8x8x64xbf16>
    %31 = tpu.concatenate %28, %29, %30 in 2 : vector<8x8x64xbf16>, vector<8x8x64xbf16>, vector<8x8x64xbf16> -> vector<8x8x192xbf16>
    %32 = vector.shape_cast %31 : vector<8x8x192xbf16> to vector<64x192xbf16>
    %c2 = arith.constant 2 : index
    %c0_14 = arith.constant 0 : index
    %c0_15 = arith.constant 0 : index
    %33 = vector.load %arg4[%c2, %c0_14, %c0_15] : memref<3x192x128xbf16, #tpu.memory_space<vmem>>, vector<1x192x128xbf16>
    %34 = vector.shape_cast %33 : vector<1x192x128xbf16> to vector<192x128xbf16>
    %cst_16 = arith.constant dense<0.000000e+00> : vector<64x128xf32>
    %35 = tpu.matmul %32, %34, %cst_16 {dimension_numbers = #tpu.dot_dimension_numbers<[1], [0], [0], [1], [0, 0, 1, 1], [], []>} : vector<64x192xbf16>, vector<192x128xbf16>, vector<64x128xf32> -> vector<64x128xf32>
    %36 = arith.addf %25, %35 : vector<64x128xf32>
    %c0_17 = arith.constant 0 : index
    %c0_18 = arith.constant 0 : index
    %37 = vector.load %arg5[%c0_17, %c0_18] : memref<1x128xf32, #tpu.memory_space<vmem>>, vector<1x128xf32>
    %38 = vector.broadcast %37 : vector<1x128xf32> to vector<64x128xf32>
    %39 = arith.addf %36, %38 : vector<64x128xf32>
    %cst_19 = arith.constant 0.000000e+00 : f32
    %40 = vector.broadcast %cst_19 : f32 to vector<64x128xf32>
    %41 = arith.maximumf %39, %40 : vector<64x128xf32>
    %42 = vector.shape_cast %41 : vector<64x128xf32> to vector<8x8x128xf32>
    %43 = arith.truncf %42 : vector<8x8x128xf32> to vector<8x8x128xbf16>
    %c0_20 = arith.constant 0 : index
    %c0_21 = arith.constant 0 : index
    %c0_22 = arith.constant 0 : index
    %c0_23 = arith.constant 0 : index
    %44 = vector.load %arg6[%c0_20, %c0_21, %c0_22, %c0_23] : memref<1x8x8x128xbf16, #tpu.memory_space<vmem>>, vector<1x8x8x128xbf16>
    %45 = vector.shape_cast %44 : vector<1x8x8x128xbf16> to vector<8x8x128xbf16>
    %46 = vector.shape_cast %43 : vector<8x8x128xbf16> to vector<1x8x8x128xbf16>
    tpu.vector_store %arg6[%c0_20, %c0_21, %c0_22, %c0_23], %46 {strides = array<i32>} : memref<1x8x8x128xbf16, #tpu.memory_space<vmem>>, vector<1x8x8x128xbf16>,
    return
  }
  func.func @transform_0(%arg0: i32, %arg1: i32) -> (i32, i32, i32, i32) {
    %c0_i32 = arith.constant 0 : i32
    %c0_i32_0 = arith.constant 0 : i32
    %c0_i32_1 = arith.constant 0 : i32
    return %arg0, %arg1, %c0_i32, %c0_i32_0 : i32, i32, i32, i32
  }
  func.func @transform_1(%arg0: i32, %arg1: i32) -> (i32, i32, i32, i32) {
    %c1_i32 = arith.constant 1 : i32
    %0 = arith.addi %arg1, %c1_i32 : i32
    %c4_i32 = arith.constant 4 : i32
    %1 = arith.muli %0, %c4_i32 : i32
    %c0_i32 = arith.constant 0 : i32
    %c0_i32_0 = arith.constant 0 : i32
    %c0_i32_1 = arith.constant 0 : i32
    return %arg0, %1, %c0_i32, %c0_i32_0 : i32, i32, i32, i32
  }
  func.func @transform_2(%arg0: i32, %arg1: i32) -> (i32, i32, i32) {
    %c0_i32 = arith.constant 0 : i32
    %c0_i32_0 = arith.constant 0 : i32
    %c0_i32_1 = arith.constant 0 : i32
    %c0_i32_2 = arith.constant 0 : i32
    return %c0_i32, %c0_i32_0, %c0_i32_1 : i32, i32, i32
  }
  func.func @transform_3(%arg0: i32, %arg1: i32) -> (i32, i32) {
    %c0_i32 = arith.constant 0 : i32
    %c0_i32_0 = arith.constant 0 : i32
    %c0_i32_1 = arith.constant 0 : i32
    return %c0_i32, %c0_i32_0 : i32, i32
  }
  func.func @transform_4(%arg0: i32, %arg1: i32) -> (i32, i32, i32, i32) {
    %c0_i32 = arith.constant 0 : i32
    %c0_i32_0 = arith.constant 0 : i32
    %c0_i32_1 = arith.constant 0 : i32
    return %arg0, %arg1, %c0_i32, %c0_i32_0 : i32, i32, i32, i32
  }
}

module attributes {stable_mosaic.version = 11 : i64} {
  func.func @_conv3x3_kernel(%arg0: i32, %arg1: i32, %arg2: memref<1x8x10x128xbf16, #tpu.memory_space<vmem>>, %arg3: memref<1x2x10x128xbf16, #tpu.memory_space<vmem>>, %arg4: memref<3x384x128xbf16, #tpu.memory_space<vmem>>, %arg5: memref<1x128xf32, #tpu.memory_space<vmem>>, %arg6: memref<1x4x4x128xbf16, #tpu.memory_space<vmem>>) attributes {dimension_semantics = [#tpu.dimension_semantics<parallel>, #tpu.dimension_semantics<parallel>], iteration_bounds = array<i64: 2, 1>, scalar_prefetch = 0 : i64, scratch_operands = 0 : i64, tpu.core_type = #tpu.core_type<tc>, window_params = [{transform_indices = @transform_0, window_bounds = array<i64: 1, 8, 10, 128>}, {transform_indices = @transform_1, window_bounds = array<i64: 1, 2, 10, 128>}, {pipeline_mode = #tpu.pipeline_mode<synchronous>, transform_indices = @transform_2, window_bounds = array<i64: 3, 384, 128>}, {pipeline_mode = #tpu.pipeline_mode<synchronous>, transform_indices = @transform_3, window_bounds = array<i64: 1, 128>}, {transform_indices = @transform_4, window_bounds = array<i64: 1, 4, 4, 128>}]} {
    %c0 = arith.constant 0 : index
    %c0_0 = arith.constant 0 : index
    %c0_1 = arith.constant 0 : index
    %c0_2 = arith.constant 0 : index
    %0 = vector.load %arg2[%c0, %c0_0, %c0_1, %c0_2] : memref<1x8x10x128xbf16, #tpu.memory_space<vmem>>, vector<1x8x10x128xbf16>
    %1 = vector.shape_cast %0 : vector<1x8x10x128xbf16> to vector<8x10x128xbf16>
    %c0_3 = arith.constant 0 : index
    %c0_4 = arith.constant 0 : index
    %c0_5 = arith.constant 0 : index
    %c0_6 = arith.constant 0 : index
    %2 = vector.load %arg3[%c0_3, %c0_4, %c0_5, %c0_6] : memref<1x2x10x128xbf16, #tpu.memory_space<vmem>>, vector<1x2x10x128xbf16>
    %3 = vector.shape_cast %2 : vector<1x2x10x128xbf16> to vector<2x10x128xbf16>
    %cst = arith.constant 0.000000e+00 : f32
    %4 = vector.broadcast %cst : f32 to vector<64x128xf32>
    %5 = vector.extract_strided_slice %1 {offsets = [0, 0, 0], sizes = [8, 8, 128], strides = [1, 1, 1]} : vector<8x10x128xbf16> to vector<8x8x128xbf16>
    %6 = vector.extract_strided_slice %1 {offsets = [0, 1, 0], sizes = [8, 8, 128], strides = [1, 1, 1]} : vector<8x10x128xbf16> to vector<8x8x128xbf16>
    %7 = vector.extract_strided_slice %1 {offsets = [0, 2, 0], sizes = [8, 8, 128], strides = [1, 1, 1]} : vector<8x10x128xbf16> to vector<8x8x128xbf16>
    %8 = tpu.concatenate %5, %6, %7 in 2 : vector<8x8x128xbf16>, vector<8x8x128xbf16>, vector<8x8x128xbf16> -> vector<8x8x384xbf16>
    %9 = vector.shape_cast %8 : vector<8x8x384xbf16> to vector<64x384xbf16>
    %c0_7 = arith.constant 0 : index
    %c0_8 = arith.constant 0 : index
    %c0_9 = arith.constant 0 : index
    %10 = vector.load %arg4[%c0_7, %c0_8, %c0_9] : memref<3x384x128xbf16, #tpu.memory_space<vmem>>, vector<1x384x128xbf16>
    %11 = vector.shape_cast %10 : vector<1x384x128xbf16> to vector<384x128xbf16>
    %cst_10 = arith.constant dense<0.000000e+00> : vector<64x128xf32>
    %12 = tpu.matmul %9, %11, %cst_10 {dimension_numbers = #tpu.dot_dimension_numbers<[1], [0], [0], [1], [0, 0, 1, 1], [], []>} : vector<64x384xbf16>, vector<384x128xbf16>, vector<64x128xf32> -> vector<64x128xf32>
    %13 = arith.addf %4, %12 : vector<64x128xf32>
    %14 = vector.extract_strided_slice %1 {offsets = [1, 0, 0], sizes = [7, 10, 128], strides = [1, 1, 1]} : vector<8x10x128xbf16> to vector<7x10x128xbf16>
    %15 = vector.extract_strided_slice %3 {offsets = [0, 0, 0], sizes = [1, 10, 128], strides = [1, 1, 1]} : vector<2x10x128xbf16> to vector<1x10x128xbf16>
    %16 = tpu.concatenate %14, %15 in 0 : vector<7x10x128xbf16>, vector<1x10x128xbf16> -> vector<8x10x128xbf16>
    %17 = vector.extract_strided_slice %16 {offsets = [0, 0, 0], sizes = [8, 8, 128], strides = [1, 1, 1]} : vector<8x10x128xbf16> to vector<8x8x128xbf16>
    %18 = vector.extract_strided_slice %16 {offsets = [0, 1, 0], sizes = [8, 8, 128], strides = [1, 1, 1]} : vector<8x10x128xbf16> to vector<8x8x128xbf16>
    %19 = vector.extract_strided_slice %16 {offsets = [0, 2, 0], sizes = [8, 8, 128], strides = [1, 1, 1]} : vector<8x10x128xbf16> to vector<8x8x128xbf16>
    %20 = tpu.concatenate %17, %18, %19 in 2 : vector<8x8x128xbf16>, vector<8x8x128xbf16>, vector<8x8x128xbf16> -> vector<8x8x384xbf16>
    %21 = vector.shape_cast %20 : vector<8x8x384xbf16> to vector<64x384xbf16>
    %c1 = arith.constant 1 : index
    %c0_11 = arith.constant 0 : index
    %c0_12 = arith.constant 0 : index
    %22 = vector.load %arg4[%c1, %c0_11, %c0_12] : memref<3x384x128xbf16, #tpu.memory_space<vmem>>, vector<1x384x128xbf16>
    %23 = vector.shape_cast %22 : vector<1x384x128xbf16> to vector<384x128xbf16>
    %cst_13 = arith.constant dense<0.000000e+00> : vector<64x128xf32>
    %24 = tpu.matmul %21, %23, %cst_13 {dimension_numbers = #tpu.dot_dimension_numbers<[1], [0], [0], [1], [0, 0, 1, 1], [], []>} : vector<64x384xbf16>, vector<384x128xbf16>, vector<64x128xf32> -> vector<64x128xf32>
    %25 = arith.addf %13, %24 : vector<64x128xf32>
    %26 = vector.extract_strided_slice %1 {offsets = [2, 0, 0], sizes = [6, 10, 128], strides = [1, 1, 1]} : vector<8x10x128xbf16> to vector<6x10x128xbf16>
    %27 = tpu.concatenate %26, %3 in 0 : vector<6x10x128xbf16>, vector<2x10x128xbf16> -> vector<8x10x128xbf16>
    %28 = vector.extract_strided_slice %27 {offsets = [0, 0, 0], sizes = [8, 8, 128], strides = [1, 1, 1]} : vector<8x10x128xbf16> to vector<8x8x128xbf16>
    %29 = vector.extract_strided_slice %27 {offsets = [0, 1, 0], sizes = [8, 8, 128], strides = [1, 1, 1]} : vector<8x10x128xbf16> to vector<8x8x128xbf16>
    %30 = vector.extract_strided_slice %27 {offsets = [0, 2, 0], sizes = [8, 8, 128], strides = [1, 1, 1]} : vector<8x10x128xbf16> to vector<8x8x128xbf16>
    %31 = tpu.concatenate %28, %29, %30 in 2 : vector<8x8x128xbf16>, vector<8x8x128xbf16>, vector<8x8x128xbf16> -> vector<8x8x384xbf16>
    %32 = vector.shape_cast %31 : vector<8x8x384xbf16> to vector<64x384xbf16>
    %c2 = arith.constant 2 : index
    %c0_14 = arith.constant 0 : index
    %c0_15 = arith.constant 0 : index
    %33 = vector.load %arg4[%c2, %c0_14, %c0_15] : memref<3x384x128xbf16, #tpu.memory_space<vmem>>, vector<1x384x128xbf16>
    %34 = vector.shape_cast %33 : vector<1x384x128xbf16> to vector<384x128xbf16>
    %cst_16 = arith.constant dense<0.000000e+00> : vector<64x128xf32>
    %35 = tpu.matmul %32, %34, %cst_16 {dimension_numbers = #tpu.dot_dimension_numbers<[1], [0], [0], [1], [0, 0, 1, 1], [], []>} : vector<64x384xbf16>, vector<384x128xbf16>, vector<64x128xf32> -> vector<64x128xf32>
    %36 = arith.addf %25, %35 : vector<64x128xf32>
    %c0_17 = arith.constant 0 : index
    %c0_18 = arith.constant 0 : index
    %37 = vector.load %arg5[%c0_17, %c0_18] : memref<1x128xf32, #tpu.memory_space<vmem>>, vector<1x128xf32>
    %38 = vector.broadcast %37 : vector<1x128xf32> to vector<64x128xf32>
    %39 = arith.addf %36, %38 : vector<64x128xf32>
    %cst_19 = arith.constant 0.000000e+00 : f32
    %40 = vector.broadcast %cst_19 : f32 to vector<64x128xf32>
    %41 = arith.maximumf %39, %40 : vector<64x128xf32>
    %42 = vector.shape_cast %41 : vector<64x128xf32> to vector<8x8x128xf32>
    %43 = vector.shape_cast %42 : vector<8x8x128xf32> to vector<4x2x8x128xf32>
    %cst_20 = arith.constant dense<0xFF800000> : vector<4x8x128xf32>
    %44 = vector.multi_reduction <maximumf>, %43, %cst_20 [1] : vector<4x2x8x128xf32> to vector<4x8x128xf32>
    %45 = vector.shape_cast %44 : vector<4x8x128xf32> to vector<4x4x2x128xf32>
    %cst_21 = arith.constant dense<0xFF800000> : vector<4x4x128xf32>
    %46 = vector.multi_reduction <maximumf>, %45, %cst_21 [2] : vector<4x4x2x128xf32> to vector<4x4x128xf32>
    %47 = arith.truncf %46 : vector<4x4x128xf32> to vector<4x4x128xbf16>
    %c0_22 = arith.constant 0 : index
    %c0_23 = arith.constant 0 : index
    %c0_24 = arith.constant 0 : index
    %c0_25 = arith.constant 0 : index
    %48 = vector.load %arg6[%c0_22, %c0_23, %c0_24, %c0_25] : memref<1x4x4x128xbf16, #tpu.memory_space<vmem>>, vector<1x4x4x128xbf16>
    %49 = vector.shape_cast %48 : vector<1x4x4x128xbf16> to vector<4x4x128xbf16>
    %50 = vector.shape_cast %47 : vector<4x4x128xbf16> to vector<1x4x4x128xbf16>
    tpu.vector_store %arg6[%c0_22, %c0_23, %c0_24, %c0_25], %50 {strides = array<i32>} : memref<1x4x4x128xbf16, #tpu.memory_space<vmem>>, vector<1x4x4x128xbf16>,
    return
  }
  func.func @transform_0(%arg0: i32, %arg1: i32) -> (i32, i32, i32, i32) {
    %c0_i32 = arith.constant 0 : i32
    %c0_i32_0 = arith.constant 0 : i32
    %c0_i32_1 = arith.constant 0 : i32
    return %arg0, %arg1, %c0_i32, %c0_i32_0 : i32, i32, i32, i32
  }
  func.func @transform_1(%arg0: i32, %arg1: i32) -> (i32, i32, i32, i32) {
    %c1_i32 = arith.constant 1 : i32
    %0 = arith.addi %arg1, %c1_i32 : i32
    %c4_i32 = arith.constant 4 : i32
    %1 = arith.muli %0, %c4_i32 : i32
    %c0_i32 = arith.constant 0 : i32
    %c0_i32_0 = arith.constant 0 : i32
    %c0_i32_1 = arith.constant 0 : i32
    return %arg0, %1, %c0_i32, %c0_i32_0 : i32, i32, i32, i32
  }
  func.func @transform_2(%arg0: i32, %arg1: i32) -> (i32, i32, i32) {
    %c0_i32 = arith.constant 0 : i32
    %c0_i32_0 = arith.constant 0 : i32
    %c0_i32_1 = arith.constant 0 : i32
    %c0_i32_2 = arith.constant 0 : i32
    return %c0_i32, %c0_i32_0, %c0_i32_1 : i32, i32, i32
  }
  func.func @transform_3(%arg0: i32, %arg1: i32) -> (i32, i32) {
    %c0_i32 = arith.constant 0 : i32
    %c0_i32_0 = arith.constant 0 : i32
    %c0_i32_1 = arith.constant 0 : i32
    return %c0_i32, %c0_i32_0 : i32, i32
  }
  func.func @transform_4(%arg0: i32, %arg1: i32) -> (i32, i32, i32, i32) {
    %c0_i32 = arith.constant 0 : i32
    %c0_i32_0 = arith.constant 0 : i32
    %c0_i32_1 = arith.constant 0 : i32
    return %arg0, %arg1, %c0_i32, %c0_i32_0 : i32, i32, i32, i32
  }
}

module attributes {stable_mosaic.version = 11 : i64} {
  func.func @_conv3x3_kernel(%arg0: i32, %arg1: i32, %arg2: memref<1x4x6x128xbf16, #tpu.memory_space<vmem>>, %arg3: memref<1x2x6x128xbf16, #tpu.memory_space<vmem>>, %arg4: memref<3x384x256xbf16, #tpu.memory_space<vmem>>, %arg5: memref<1x256xf32, #tpu.memory_space<vmem>>, %arg6: memref<1x4x4x256xbf16, #tpu.memory_space<vmem>>) attributes {dimension_semantics = [#tpu.dimension_semantics<parallel>, #tpu.dimension_semantics<parallel>], iteration_bounds = array<i64: 2, 1>, scalar_prefetch = 0 : i64, scratch_operands = 0 : i64, tpu.core_type = #tpu.core_type<tc>, window_params = [{transform_indices = @transform_0, window_bounds = array<i64: 1, 4, 6, 128>}, {transform_indices = @transform_1, window_bounds = array<i64: 1, 2, 6, 128>}, {pipeline_mode = #tpu.pipeline_mode<synchronous>, transform_indices = @transform_2, window_bounds = array<i64: 3, 384, 256>}, {pipeline_mode = #tpu.pipeline_mode<synchronous>, transform_indices = @transform_3, window_bounds = array<i64: 1, 256>}, {transform_indices = @transform_4, window_bounds = array<i64: 1, 4, 4, 256>}]} {
    %c0 = arith.constant 0 : index
    %c0_0 = arith.constant 0 : index
    %c0_1 = arith.constant 0 : index
    %c0_2 = arith.constant 0 : index
    %0 = vector.load %arg2[%c0, %c0_0, %c0_1, %c0_2] : memref<1x4x6x128xbf16, #tpu.memory_space<vmem>>, vector<1x4x6x128xbf16>
    %1 = vector.shape_cast %0 : vector<1x4x6x128xbf16> to vector<4x6x128xbf16>
    %c0_3 = arith.constant 0 : index
    %c0_4 = arith.constant 0 : index
    %c0_5 = arith.constant 0 : index
    %c0_6 = arith.constant 0 : index
    %2 = vector.load %arg3[%c0_3, %c0_4, %c0_5, %c0_6] : memref<1x2x6x128xbf16, #tpu.memory_space<vmem>>, vector<1x2x6x128xbf16>
    %3 = vector.shape_cast %2 : vector<1x2x6x128xbf16> to vector<2x6x128xbf16>
    %cst = arith.constant 0.000000e+00 : f32
    %4 = vector.broadcast %cst : f32 to vector<16x256xf32>
    %5 = vector.extract_strided_slice %1 {offsets = [0, 0, 0], sizes = [4, 4, 128], strides = [1, 1, 1]} : vector<4x6x128xbf16> to vector<4x4x128xbf16>
    %6 = vector.extract_strided_slice %1 {offsets = [0, 1, 0], sizes = [4, 4, 128], strides = [1, 1, 1]} : vector<4x6x128xbf16> to vector<4x4x128xbf16>
    %7 = vector.extract_strided_slice %1 {offsets = [0, 2, 0], sizes = [4, 4, 128], strides = [1, 1, 1]} : vector<4x6x128xbf16> to vector<4x4x128xbf16>
    %8 = tpu.concatenate %5, %6, %7 in 2 : vector<4x4x128xbf16>, vector<4x4x128xbf16>, vector<4x4x128xbf16> -> vector<4x4x384xbf16>
    %9 = vector.shape_cast %8 : vector<4x4x384xbf16> to vector<16x384xbf16>
    %c0_7 = arith.constant 0 : index
    %c0_8 = arith.constant 0 : index
    %c0_9 = arith.constant 0 : index
    %10 = vector.load %arg4[%c0_7, %c0_8, %c0_9] : memref<3x384x256xbf16, #tpu.memory_space<vmem>>, vector<1x384x256xbf16>
    %11 = vector.shape_cast %10 : vector<1x384x256xbf16> to vector<384x256xbf16>
    %cst_10 = arith.constant dense<0.000000e+00> : vector<16x256xf32>
    %12 = tpu.matmul %9, %11, %cst_10 {dimension_numbers = #tpu.dot_dimension_numbers<[1], [0], [0], [1], [0, 0, 1, 1], [], []>} : vector<16x384xbf16>, vector<384x256xbf16>, vector<16x256xf32> -> vector<16x256xf32>
    %13 = arith.addf %4, %12 : vector<16x256xf32>
    %14 = vector.extract_strided_slice %1 {offsets = [1, 0, 0], sizes = [3, 6, 128], strides = [1, 1, 1]} : vector<4x6x128xbf16> to vector<3x6x128xbf16>
    %15 = vector.extract_strided_slice %3 {offsets = [0, 0, 0], sizes = [1, 6, 128], strides = [1, 1, 1]} : vector<2x6x128xbf16> to vector<1x6x128xbf16>
    %16 = tpu.concatenate %14, %15 in 0 : vector<3x6x128xbf16>, vector<1x6x128xbf16> -> vector<4x6x128xbf16>
    %17 = vector.extract_strided_slice %16 {offsets = [0, 0, 0], sizes = [4, 4, 128], strides = [1, 1, 1]} : vector<4x6x128xbf16> to vector<4x4x128xbf16>
    %18 = vector.extract_strided_slice %16 {offsets = [0, 1, 0], sizes = [4, 4, 128], strides = [1, 1, 1]} : vector<4x6x128xbf16> to vector<4x4x128xbf16>
    %19 = vector.extract_strided_slice %16 {offsets = [0, 2, 0], sizes = [4, 4, 128], strides = [1, 1, 1]} : vector<4x6x128xbf16> to vector<4x4x128xbf16>
    %20 = tpu.concatenate %17, %18, %19 in 2 : vector<4x4x128xbf16>, vector<4x4x128xbf16>, vector<4x4x128xbf16> -> vector<4x4x384xbf16>
    %21 = vector.shape_cast %20 : vector<4x4x384xbf16> to vector<16x384xbf16>
    %c1 = arith.constant 1 : index
    %c0_11 = arith.constant 0 : index
    %c0_12 = arith.constant 0 : index
    %22 = vector.load %arg4[%c1, %c0_11, %c0_12] : memref<3x384x256xbf16, #tpu.memory_space<vmem>>, vector<1x384x256xbf16>
    %23 = vector.shape_cast %22 : vector<1x384x256xbf16> to vector<384x256xbf16>
    %cst_13 = arith.constant dense<0.000000e+00> : vector<16x256xf32>
    %24 = tpu.matmul %21, %23, %cst_13 {dimension_numbers = #tpu.dot_dimension_numbers<[1], [0], [0], [1], [0, 0, 1, 1], [], []>} : vector<16x384xbf16>, vector<384x256xbf16>, vector<16x256xf32> -> vector<16x256xf32>
    %25 = arith.addf %13, %24 : vector<16x256xf32>
    %26 = vector.extract_strided_slice %1 {offsets = [2, 0, 0], sizes = [2, 6, 128], strides = [1, 1, 1]} : vector<4x6x128xbf16> to vector<2x6x128xbf16>
    %27 = tpu.concatenate %26, %3 in 0 : vector<2x6x128xbf16>, vector<2x6x128xbf16> -> vector<4x6x128xbf16>
    %28 = vector.extract_strided_slice %27 {offsets = [0, 0, 0], sizes = [4, 4, 128], strides = [1, 1, 1]} : vector<4x6x128xbf16> to vector<4x4x128xbf16>
    %29 = vector.extract_strided_slice %27 {offsets = [0, 1, 0], sizes = [4, 4, 128], strides = [1, 1, 1]} : vector<4x6x128xbf16> to vector<4x4x128xbf16>
    %30 = vector.extract_strided_slice %27 {offsets = [0, 2, 0], sizes = [4, 4, 128], strides = [1, 1, 1]} : vector<4x6x128xbf16> to vector<4x4x128xbf16>
    %31 = tpu.concatenate %28, %29, %30 in 2 : vector<4x4x128xbf16>, vector<4x4x128xbf16>, vector<4x4x128xbf16> -> vector<4x4x384xbf16>
    %32 = vector.shape_cast %31 : vector<4x4x384xbf16> to vector<16x384xbf16>
    %c2 = arith.constant 2 : index
    %c0_14 = arith.constant 0 : index
    %c0_15 = arith.constant 0 : index
    %33 = vector.load %arg4[%c2, %c0_14, %c0_15] : memref<3x384x256xbf16, #tpu.memory_space<vmem>>, vector<1x384x256xbf16>
    %34 = vector.shape_cast %33 : vector<1x384x256xbf16> to vector<384x256xbf16>
    %cst_16 = arith.constant dense<0.000000e+00> : vector<16x256xf32>
    %35 = tpu.matmul %32, %34, %cst_16 {dimension_numbers = #tpu.dot_dimension_numbers<[1], [0], [0], [1], [0, 0, 1, 1], [], []>} : vector<16x384xbf16>, vector<384x256xbf16>, vector<16x256xf32> -> vector<16x256xf32>
    %36 = arith.addf %25, %35 : vector<16x256xf32>
    %c0_17 = arith.constant 0 : index
    %c0_18 = arith.constant 0 : index
    %37 = vector.load %arg5[%c0_17, %c0_18] : memref<1x256xf32, #tpu.memory_space<vmem>>, vector<1x256xf32>
    %38 = vector.broadcast %37 : vector<1x256xf32> to vector<16x256xf32>
    %39 = arith.addf %36, %38 : vector<16x256xf32>
    %cst_19 = arith.constant 0.000000e+00 : f32
    %40 = vector.broadcast %cst_19 : f32 to vector<16x256xf32>
    %41 = arith.maximumf %39, %40 : vector<16x256xf32>
    %42 = vector.shape_cast %41 : vector<16x256xf32> to vector<4x4x256xf32>
    %43 = arith.truncf %42 : vector<4x4x256xf32> to vector<4x4x256xbf16>
    %c0_20 = arith.constant 0 : index
    %c0_21 = arith.constant 0 : index
    %c0_22 = arith.constant 0 : index
    %c0_23 = arith.constant 0 : index
    %44 = vector.load %arg6[%c0_20, %c0_21, %c0_22, %c0_23] : memref<1x4x4x256xbf16, #tpu.memory_space<vmem>>, vector<1x4x4x256xbf16>
    %45 = vector.shape_cast %44 : vector<1x4x4x256xbf16> to vector<4x4x256xbf16>
    %46 = vector.shape_cast %43 : vector<4x4x256xbf16> to vector<1x4x4x256xbf16>
    tpu.vector_store %arg6[%c0_20, %c0_21, %c0_22, %c0_23], %46 {strides = array<i32>} : memref<1x4x4x256xbf16, #tpu.memory_space<vmem>>, vector<1x4x4x256xbf16>,
    return
  }
  func.func @transform_0(%arg0: i32, %arg1: i32) -> (i32, i32, i32, i32) {
    %c0_i32 = arith.constant 0 : i32
    %c0_i32_0 = arith.constant 0 : i32
    %c0_i32_1 = arith.constant 0 : i32
    return %arg0, %arg1, %c0_i32, %c0_i32_0 : i32, i32, i32, i32
  }
  func.func @transform_1(%arg0: i32, %arg1: i32) -> (i32, i32, i32, i32) {
    %c1_i32 = arith.constant 1 : i32
    %0 = arith.addi %arg1, %c1_i32 : i32
    %c2_i32 = arith.constant 2 : i32
    %1 = arith.muli %0, %c2_i32 : i32
    %c0_i32 = arith.constant 0 : i32
    %c0_i32_0 = arith.constant 0 : i32
    %c0_i32_1 = arith.constant 0 : i32
    return %arg0, %1, %c0_i32, %c0_i32_0 : i32, i32, i32, i32
  }
  func.func @transform_2(%arg0: i32, %arg1: i32) -> (i32, i32, i32) {
    %c0_i32 = arith.constant 0 : i32
    %c0_i32_0 = arith.constant 0 : i32
    %c0_i32_1 = arith.constant 0 : i32
    %c0_i32_2 = arith.constant 0 : i32
    return %c0_i32, %c0_i32_0, %c0_i32_1 : i32, i32, i32
  }
  func.func @transform_3(%arg0: i32, %arg1: i32) -> (i32, i32) {
    %c0_i32 = arith.constant 0 : i32
    %c0_i32_0 = arith.constant 0 : i32
    %c0_i32_1 = arith.constant 0 : i32
    return %c0_i32, %c0_i32_0 : i32, i32
  }
  func.func @transform_4(%arg0: i32, %arg1: i32) -> (i32, i32, i32, i32) {
    %c0_i32 = arith.constant 0 : i32
    %c0_i32_0 = arith.constant 0 : i32
    %c0_i32_1 = arith.constant 0 : i32
    return %arg0, %arg1, %c0_i32, %c0_i32_0 : i32, i32, i32, i32
  }
}

</mosaic_0001>

<llo_original>
// kernel: encoder_forward.7
$region0: #{encoder_forward.7}
  #allocation0 [shape = 'u32[]', space=smem, size = 0x4, offset = 0x4, fixed_abs, tag = 'smem constant byte address 0x4 - core index']
  #allocation1 [shape = 'u32[144,128]{1,0:T(1,128)}', space=vmem, size = 0x12000, scoped, tag = 'internal scratch']
  %s0 = inlined_call_operand.vmem [shape: bf16[2,10,10,64], index: 0, kind: input, shape index: {}, may-alias: {0,1}]
  %s1 = inlined_call_operand.vmem [shape: bf16[2,10,10,64], index: 1, kind: input, shape index: {}, may-alias: {0,1}]
  %s2 = inlined_call_operand.vmem [shape: bf16[3,192,128], index: 2, kind: input, shape index: {}]
  %s3 = inlined_call_operand.vmem [shape: f32[1,128], index: 3, kind: input, shape index: {}]
  %s4 = inlined_call_operand.vmem [shape: bf16[2,8,8,128], index: 4, kind: output, shape index: {}]
  %s5 = sld [smem:[#allocation0]]
  $region49: #{encoder_forward.7} parent=0
    _
  %s7 = ssub.s32 1, %s5
  %s8 = scalar_select 0, %s7, %s5
  loop: start=0, step=1, limit=4
  $region2: #{encoder_forward.7} parent=0 // loop_pre_header
    _
  $region3: #{encoder_forward.7} parent=0 // loop_header
    %s10 = sphi 0, %s14
    %p11 = scmp.ge.s32.totalorder %s10, 4
    %s17 = sphi 0, %s29
    %s18 = sphi 0, %s25
    %s19 = sphi 0, %s17
    %s20 = sphi 0, %s18
    %s21 = sphi 0, %s19
    %s22 = sphi 0, %s20
    %s34 = sphi 0, %s36
    %s37 = sphi 0, %s34
    %s38 = sphi 0, %s37
    %s54 = sphi 0, %s38
    %s66 = sphi 0, %s68
    %s69 = sphi 0, %s66
    %s70 = sphi 0, %s69
    %s86 = sphi 0, %s70
    %s90 = sphi 0, %s90
    %s92 = sphi 0, %s90
    %s93 = sphi 0, %s92
    %s107 = sphi 0, %s93
    %s111 = sphi 0, %s111
    %s113 = sphi 0, %s111
    %s114 = sphi 0, %s113
    %s128 = sphi 0, %s114
    %s136 = sphi 0, %s138
    %s139 = sphi 0, %s136
    %s140 = sphi 0, %s139
    %s156 = sphi 0, %s140
  $region4: #{encoder_forward.7} parent=0 // loop_header_branch
    %13 = sbr.rel (%p11) target = $region8
  $region5: #{encoder_forward.7} parent=0 // loop_body
    %s15 = ssub.s32 %s10, 1
    %s16 = ssub.s32 %s10, 2
    %s23 = sadd.s32 1, %s18
    %p24 = scmp.ge.s32.totalorder %s23, 1
    %s25 = scalar_select %p24, 0, %s23
    %s26 = sadd.s32 1, %s17
    %s27 = scalar_select %p24, %s26, %s17
    %p28 = scmp.ge.s32.totalorder %s27, 2
    %s29 = scalar_select %p28, 0, %s27
    %s30 = ssub.s32 %s17, %s29
    %s31 = ssub.s32 %s18, %s25
    %s32 = sor.u32 %s30, %s31
    %p33 = scmp.eq.s32.totalorder %s32, 0
    %s35 = sadd.s32 %s34, 1
    %s36 = scalar_select %p33, %s34, %s35
    %p39 = pneg %p33
    %p40 = scmp.eq.s32.totalorder %s10, 1
    %p41 = por %p39, %p40
    %p42 = scmp.ne.s32.totalorder %s34, %s37
    %p43 = scmp.eq.s32.totalorder %s10, 0
    %p44 = por %p42, %p43
    %p45 = scmp.ne.s32.totalorder %s34, %s37
    %p46 = scmp.eq.s32.totalorder %s15, 1
    %p47 = por %p45, %p46
    %p48 = scmp.ne.s32.totalorder %s37, %s38
    %p49 = scmp.eq.s32.totalorder %s15, 0
    %p50 = por %p48, %p49
    %p51 = scmp.ne.s32.totalorder %s37, %s38
    %p52 = scmp.eq.s32.totalorder %s16, 1
    %p53 = por %p51, %p52
    %p55 = scmp.ne.s32.totalorder %s38, %s54
    %p56 = scmp.eq.s32.totalorder %s16, 0
    %p57 = por %p55, %p56
    %s58 = sadd.s32 %s18, 1
    %s59 = smul.u32 %s58, 4
    %s60 = sadd.s32 %s25, 1
    %s61 = smul.u32 %s60, 4
    %s62 = ssub.s32 %s17, %s29
    %s63 = ssub.s32 %s59, %s61
    %s64 = sor.u32 %s62, %s63
    %p65 = scmp.eq.s32.totalorder %s64, 0
    %s67 = sadd.s32 %s66, 1
    %s68 = scalar_select %p65, %s66, %s67
    %p71 = pneg %p65
    %p72 = scmp.eq.s32.totalorder %s10, 1
    %p73 = por %p71, %p72
    %p74 = scmp.ne.s32.totalorder %s66, %s69
    %p75 = scmp.eq.s32.totalorder %s10, 0
    %p76 = por %p74, %p75
    %p77 = scmp.ne.s32.totalorder %s66, %s69
    %p78 = scmp.eq.s32.totalorder %s15, 1
    %p79 = por %p77, %p78
    %p80 = scmp.ne.s32.totalorder %s69, %s70
    %p81 = scmp.eq.s32.totalorder %s15, 0
    %p82 = por %p80, %p81
    %p83 = scmp.ne.s32.totalorder %s69, %s70
    %p84 = scmp.eq.s32.totalorder %s16, 1
    %p85 = por %p83, %p84
    %p87 = scmp.ne.s32.totalorder %s70, %s86
    %p88 = scmp.eq.s32.totalorder %s16, 0
    %p89 = por %p87, %p88
    %s91 = sadd.s32 %s90, 1
    %p94 = scmp.eq.s32.totalorder %s10, 1
    %p95 = scmp.ne.s32.totalorder %s90, %s92
    %p96 = scmp.eq.s32.totalorder %s10, 0
    %p97 = por %p95, %p96
    %p98 = scmp.ne.s32.totalorder %s90, %s92
    %p99 = scmp.eq.s32.totalorder %s15, 1
    %p100 = por %p98, %p99
    %p101 = scmp.ne.s32.totalorder %s92, %s93
    %p102 = scmp.eq.s32.totalorder %s15, 0
    %p103 = por %p101, %p102
    %p104 = scmp.ne.s32.totalorder %s92, %s93
    %p105 = scmp.eq.s32.totalorder %s16, 1
    %p106 = por %p104, %p105
    %p108 = scmp.ne.s32.totalorder %s93, %s107
    %p109 = scmp.eq.s32.totalorder %s16, 0
    %p110 = por %p108, %p109
    %s112 = sadd.s32 %s111, 1
    %p115 = scmp.eq.s32.totalorder %s10, 1
    %p116 = scmp.ne.s32.totalorder %s111, %s113
    %p117 = scmp.eq.s32.totalorder %s10, 0
    %p118 = por %p116, %p117
    %p119 = scmp.ne.s32.totalorder %s111, %s113
    %p120 = scmp.eq.s32.totalorder %s15, 1
    %p121 = por %p119, %p120
    %p122 = scmp.ne.s32.totalorder %s113, %s114
    %p123 = scmp.eq.s32.totalorder %s15, 0
    %p124 = por %p122, %p123
    %p125 = scmp.ne.s32.totalorder %s113, %s114
    %p126 = scmp.eq.s32.totalorder %s16, 1
    %p127 = por %p125, %p126
    %p129 = scmp.ne.s32.totalorder %s114, %s128
    %p130 = scmp.eq.s32.totalorder %s16, 0
    %p131 = por %p129, %p130
    %s132 = ssub.s32 %s17, %s29
    %s133 = ssub.s32 %s18, %s25
    %s134 = sor.u32 %s132, %s133
    %p135 = scmp.eq.s32.totalorder %s134, 0
    %s137 = sadd.s32 %s136, 1
    %s138 = scalar_select %p135, %s136, %s137
    %p141 = pneg %p135
    %p142 = scmp.eq.s32.totalorder %s10, 1
    %p143 = por %p141, %p142
    %p144 = scmp.ne.s32.totalorder %s136, %s139
    %p145 = scmp.eq.s32.totalorder %s10, 0
    %p146 = por %p144, %p145
    %p147 = scmp.ne.s32.totalorder %s136, %s139
    %p148 = scmp.eq.s32.totalorder %s15, 1
    %p149 = por %p147, %p148
    %p150 = scmp.ne.s32.totalorder %s139, %s140
    %p151 = scmp.eq.s32.totalorder %s15, 0
    %p152 = por %p150, %p151
    %p153 = scmp.ne.s32.totalorder %s139, %s140
    %p154 = scmp.eq.s32.totalorder %s16, 1
    %p155 = por %p153, %p154
    %p157 = scmp.ne.s32.totalorder %s140, %s156
    %p158 = scmp.eq.s32.totalorder %s16, 0
    %p159 = por %p157, %p158
    %p160 = scmp.le.s32.totalorder 1, %s10
    %p161 = scmp.lt.s32.totalorder %s10, 3
    %p162 = pnand %p160, %p161
    %p163 = pneg %p162
    // Predicated region
    $region9: #{encoder_forward.7} parent=5 // pred_check
      _
    $region10: #{encoder_forward.7} parent=5 // pred_check_branch
      %165 = sbr.rel (%p162) target = $region12
    $region11: #{encoder_forward.7} parent=5 // pred_region
      %s166 = ssub.s32 %s10, 1
      // Predicated region
      $region13: #{encoder_forward.7} parent=11 // pred_check
        %p167 = pneg %p103
      $region14: #{encoder_forward.7} parent=11 // pred_check_branch
        %169 = sbr.rel (%p167) target = $region16
      $region15: #{encoder_forward.7} parent=11 // pred_region
        _
      $region16: #{encoder_forward.7} parent=11 // pred_fallthru
        _
      // Predicated region
      $region17: #{encoder_forward.7} parent=11 // pred_check
        %p170 = pneg %p124
      $region18: #{encoder_forward.7} parent=11 // pred_check_branch
        %172 = sbr.rel (%p170) target = $region20
      $region19: #{encoder_forward.7} parent=11 // pred_region
        _
      $region20: #{encoder_forward.7} parent=11 // pred_fallthru
        _
    $region12: #{encoder_forward.7} parent=5 // pred_fallthru
      _
    %p173 = scmp.lt.s32.totalorder %s10, 2
    // Predicated region
    $region21: #{encoder_forward.7} parent=5 // pred_check
      %p174 = pneg %p173
    $region22: #{encoder_forward.7} parent=5 // pred_check_branch
      %176 = sbr.rel (%p174) target = $region24
    $region23: #{encoder_forward.7} parent=5 // pred_region
      // Predicated region
      $region25: #{encoder_forward.7} parent=23 // pred_check
        %p177 = pneg %p44
      $region26: #{encoder_forward.7} parent=23 // pred_check_branch
        %179 = sbr.rel (%p177) target = $region28
      $region27: #{encoder_forward.7} parent=23 // pred_region
        %s180 = smul.u32 8, %s18
        %s181 = ssub.s32 10, %s180
        %p182 = scmp.lt.s32.totalorder %s181, 8
        %s183 = scalar_select %p182, %s181, 8
        %s184 = smul.u32 64, %s183
        %s185 = smul.u32 %s184, 2
        %p186 = scmp.lt.s32.totalorder %s17, 1
        %s187 = scalar_select %p186, %s17, 1
        %p188 = scmp.lt.s32.totalorder %s180, 9
        %s189 = scalar_select %p188, %s180, 9
        %s190 = smul.addr %s189, 2
        %s191 = smul.addr %s187, 20
        %s192 = sadd.s32 %s190, %s191
        %s193 = smul.addr %s192, 4
        %s194 = scalar_lea.vmem %s0, %s193
        %s195 = smul.u32 8, %s18
        %s196 = ssub.s32 10, %s195
        %p197 = scmp.lt.s32.totalorder %s196, 8
        %s198 = scalar_select %p197, %s196, 8
        %s199 = smul.u32 64, %s198
        %s200 = smul.u32 %s199, 2
      $region28: #{encoder_forward.7} parent=23 // pred_fallthru
        _
      // Predicated region
      $region29: #{encoder_forward.7} parent=23 // pred_check
        %p201 = pneg %p76
      $region30: #{encoder_forward.7} parent=23 // pred_check_branch
        %203 = sbr.rel (%p201) target = $region32
      $region31: #{encoder_forward.7} parent=23 // pred_region
        %s204 = sadd.s32 %s18, 1
        %s205 = smul.u32 %s204, 4
        %s206 = smul.u32 2, %s205
        %p207 = scmp.lt.s32.totalorder %s17, 1
        %s208 = scalar_select %p207, %s17, 1
        %p209 = scmp.lt.s32.totalorder %s206, 9
        %s210 = scalar_select %p209, %s206, 9
        %s211 = smul.addr %s210, 2
        %s212 = smul.addr %s208, 20
        %s213 = sadd.s32 %s211, %s212
        %s214 = smul.addr %s213, 4
        %s215 = scalar_lea.vmem %s1, %s214
        %s216 = sadd.s32 %s18, 1
        %s217 = smul.u32 %s216, 4
        %s218 = smul.u32 2, %s217
      $region32: #{encoder_forward.7} parent=23 // pred_fallthru
        _
    $region24: #{encoder_forward.7} parent=5 // pred_fallthru
      _
    %p219 = scmp.le.s32.totalorder 1, %s10
    %p220 = scmp.lt.s32.totalorder %s10, 3
    %p221 = pnand %p219, %p220
    %p222 = pneg %p221
    // Predicated region
    $region33: #{encoder_forward.7} parent=5 // pred_check
      _
    $region34: #{encoder_forward.7} parent=5 // pred_check_branch
      %224 = sbr.rel (%p221) target = $region36
    $region35: #{encoder_forward.7} parent=5 // pred_region
      %s225 = ssub.s32 %s10, 1
      %s226 = smul.u32 8, %s20
      %s227 = ssub.s32 10, %s226
      %p228 = scmp.lt.s32.totalorder %s227, 8
      %s229 = scalar_select %p228, %s227, 8
      %s230 = smul.u32 64, %s229
      %s231 = smul.u32 %s230, 2
      %p232 = scmp.lt.s32.totalorder %s19, 1
      %s233 = scalar_select %p232, %s19, 1
      %p234 = scmp.lt.s32.totalorder %s226, 9
      %s235 = scalar_select %p234, %s226, 9
      %s236 = smul.addr %s235, 2
      %s237 = smul.addr %s233, 20
      %s238 = sadd.s32 %s236, %s237
      %s239 = smul.addr %s238, 4
      %s240 = scalar_lea.vmem %s0, %s239
      %p241 = pneg %p50
      %p242 = pneg %p47
      %s243 = sadd.s32 %s20, 1
      %s244 = smul.u32 %s243, 4
      %s245 = smul.u32 2, %s244
      %p246 = scmp.lt.s32.totalorder %s19, 1
      %s247 = scalar_select %p246, %s19, 1
      %p248 = scmp.lt.s32.totalorder %s245, 9
      %s249 = scalar_select %p248, %s245, 9
      %s250 = smul.addr %s249, 2
      %s251 = smul.addr %s247, 20
      %s252 = sadd.s32 %s250, %s251
      %s253 = smul.addr %s252, 4
      %s254 = scalar_lea.vmem %s1, %s253
      %p255 = pneg %p82
      %p256 = pneg %p79
      %p257 = pneg %p103
      %p258 = pneg %p100
      %p259 = pneg %p124
      %p260 = pneg %p121
      %p261 = pneg %p152
      %p262 = pneg %p149
      %s263 = smul.u32 8, %s20
      %p264 = scmp.lt.s32.totalorder %s19, 1
      %s265 = scalar_select %p264, %s19, 1
      %p266 = scmp.lt.s32.totalorder %s263, 7
      %s267 = scalar_select %p266, %s263, 7
      %s268 = smul.addr %s265, 8
      %s269 = sadd.s32 %s267, %s268
      %s270 = smul.addr %s269, 4
      %s271 = scalar_lea.vmem %s4, %s270
      %s272 = smul.u32 8, %s20
      %s273 = ssub.s32 10, %s272
      %p274 = scmp.lt.s32.totalorder %s273, 8
      %s275 = scalar_select %p274, %s273, 8
      %s276 = smul.u32 64, %s275
      %s277 = smul.u32 %s276, 2
      %p278 = scmp.lt.s32.totalorder %s19, 1
      %s279 = scalar_select %p278, %s19, 1
      %p280 = scmp.lt.s32.totalorder %s272, 9
      %s281 = scalar_select %p280, %s272, 9
      %s282 = smul.addr %s281, 2
      %s283 = smul.addr %s279, 20
      %s284 = sadd.s32 %s282, %s283
      %s285 = smul.addr %s284, 4
      %s286 = scalar_lea.vmem %s0, %s285
      %s287 = smul.u32 8, %s20
      %s288 = ssub.s32 10, %s287
      %p289 = scmp.lt.s32.totalorder %s288, 8
      %s290 = scalar_select %p289, %s288, 8
      %s291 = smul.u32 64, %s290
      %s292 = smul.u32 %s291, 2
      %s293 = sadd.s32 %s20, 1
      %s294 = smul.u32 %s293, 4
      %s295 = smul.u32 2, %s294
      %p296 = scmp.lt.s32.totalorder %s19, 1
      %s297 = scalar_select %p296, %s19, 1
      %p298 = scmp.lt.s32.totalorder %s295, 9
      %s299 = scalar_select %p298, %s295, 9
      %s300 = smul.addr %s299, 2
      %s301 = smul.addr %s297, 20
      %s302 = sadd.s32 %s300, %s301
      %s303 = smul.addr %s302, 4
      %s304 = scalar_lea.vmem %s1, %s303
      %s305 = sadd.s32 %s20, 1
      %s306 = smul.u32 %s305, 4
      %s307 = smul.u32 2, %s306
      %s308 = smul.u32 8, %s20
      %p309 = scmp.lt.s32.totalorder %s19, 1
      %s310 = scalar_select %p309, %s19, 1
      %p311 = scmp.lt.s32.totalorder %s308, 7
      %s312 = scalar_select %p311, %s308, 7
      %s313 = smul.addr %s310, 8
      %s314 = sadd.s32 %s312, %s313
      %s315 = smul.addr %s314, 4
      %s316 = scalar_lea.vmem %s4, %s315
      %s317 = smul.u32 8, %s20
      %v319 = vld [vmem:[%s286] sm:$0xf]
      %v320 = vld [vmem:[%s286 + $0x4] sm:$0x1]
      %v321 = vld [vmem:[%s286 + $0x8] sm:$0xf]
      %v322 = vld [vmem:[%s286 + $0xc] sm:$0x1]
      %v323 = vld [vmem:[%s286 + $0x10] sm:$0xf]
      %v324 = vld [vmem:[%s286 + $0x14] sm:$0x1]
      %v325 = vld [vmem:[%s286 + $0x18] sm:$0xf]
      %v326 = vld [vmem:[%s286 + $0x1c] sm:$0x1]
      %v327 = vld [vmem:[%s286 + $0x20] sm:$0xf]
      %v328 = vld [vmem:[%s286 + $0x24] sm:$0x1]
      %v329 = vld [vmem:[%s286 + $0x28] sm:$0xf]
      %v330 = vld [vmem:[%s286 + $0x2c] sm:$0x1]
      %v331 = vld [vmem:[%s286 + $0x30] sm:$0xf]
      %v332 = vld [vmem:[%s286 + $0x34] sm:$0x1]
      %v333 = vld [vmem:[%s286 + $0x38] sm:$0xf]
      %v334 = vld [vmem:[%s286 + $0x3c] sm:$0x1]
      %v335 = vld [vmem:[%s304] sm:$0xf]
      %v336 = vld [vmem:[%s304 + $0x4] sm:$0x1]
      %v337 = vld [vmem:[%s304 + $0x8] sm:$0xf]
      %v338 = vld [vmem:[%s304 + $0xc] sm:$0x1]
      %v355 = vunpack.c.l.b16 %v319
      %v356 = vunpack.c.l.b16 %v320
      %v357 = vunpack.c.l.b16 %v321
      %v358 = vunpack.c.l.b16 %v322
      %v359 = vunpack.c.l.b16 %v323
      %v360 = vunpack.c.l.b16 %v324
      %v361 = vunpack.c.l.b16 %v325
      %v362 = vunpack.c.l.b16 %v326
      %v363 = vunpack.c.l.b16 %v327
      %v364 = vunpack.c.l.b16 %v328
      %v365 = vunpack.c.l.b16 %v329
      %v366 = vunpack.c.l.b16 %v330
      %v367 = vunpack.c.l.b16 %v331
      %v368 = vunpack.c.l.b16 %v332
      %v369 = vunpack.c.l.b16 %v333
      %v370 = vunpack.c.l.b16 %v334
      %v371 = vpack.c.b16 %v356, %v355
      %v372 = vpack.c.b16 %v358, %v357
      %v373 = vpack.c.b16 %v360, %v359
      %v374 = vpack.c.b16 %v362, %v361
      %v375 = vpack.c.b16 %v364, %v363
      %v376 = vpack.c.b16 %v366, %v365
      %v377 = vpack.c.b16 %v368, %v367
      %v378 = vpack.c.b16 %v370, %v369
      %v380 = vshrl.u32 %v371, 16
      %v382 = vshll.u32 %v371, 16
      %v384 = vrot.slane %v382, 1
      %v385 = vor.u32 %v380, %v384
      %v387 = vshrl.u32 %v372, 16
      %v389 = vshll.u32 %v372, 16
      %v391 = vrot.slane %v389, 1
      %v392 = vor.u32 %v387, %v391
      %v394 = vshrl.u32 %v373, 16
      %v396 = vshll.u32 %v373, 16
      %v398 = vrot.slane %v396, 1
      %v399 = vor.u32 %v394, %v398
      %v401 = vshrl.u32 %v374, 16
      %v403 = vshll.u32 %v374, 16
      %v405 = vrot.slane %v403, 1
      %v406 = vor.u32 %v401, %v405
      %v408 = vshrl.u32 %v375, 16
      %v410 = vshll.u32 %v375, 16
      %v412 = vrot.slane %v410, 1
      %v413 = vor.u32 %v408, %v412
      %v415 = vshrl.u32 %v376, 16
      %v417 = vshll.u32 %v376, 16
      %v419 = vrot.slane %v417, 1
      %v420 = vor.u32 %v415, %v419
      %v422 = vshrl.u32 %v377, 16
      %v424 = vshll.u32 %v377, 16
      %v426 = vrot.slane %v424, 1
      %v427 = vor.u32 %v422, %v426
      %v429 = vshrl.u32 %v378, 16
      %v431 = vshll.u32 %v378, 16
      %v433 = vrot.slane %v431, 1
      %v434 = vor.u32 %v429, %v433
      %435 = vrot.lane.b32.xlu0 %v385, 64
      %v436 = vpop.permute.xlu0 %435
      %437 = vrot.lane.b32.xlu0 %v392, 64
      %v438 = vpop.permute.xlu0 %437
      %439 = vrot.lane.b32.xlu0 %v399, 64
      %v440 = vpop.permute.xlu0 %439
      %441 = vrot.lane.b32.xlu0 %v406, 64
      %v442 = vpop.permute.xlu0 %441
      %443 = vrot.lane.b32.xlu0 %v413, 64
      %v444 = vpop.permute.xlu0 %443
      %445 = vrot.lane.b32.xlu0 %v420, 64
      %v446 = vpop.permute.xlu0 %445
      %447 = vrot.lane.b32.xlu0 %v427, 64
      %v448 = vpop.permute.xlu0 %447
      %449 = vrot.lane.b32.xlu0 %v434, 64
      %v450 = vpop.permute.xlu0 %449
      %v451 = vrot.slane %v371, 1
      %v452 = vrot.slane %v372, 1
      %v453 = vrot.slane %v373, 1
      %v454 = vrot.slane %v374, 1
      %v455 = vrot.slane %v375, 1
      %v456 = vrot.slane %v376, 1
      %v457 = vrot.slane %v377, 1
      %v458 = vrot.slane %v378, 1
      %vm459 = vcmask 523264
      %v462 = vsel %vm459, %v319, %v436
      %v465 = vsel %vm459, %v321, %v438
      %v468 = vsel %vm459, %v323, %v440
      %v471 = vsel %vm459, %v325, %v442
      %v474 = vsel %vm459, %v327, %v444
      %v477 = vsel %vm459, %v329, %v446
      %v480 = vsel %vm459, %v331, %v448
      %v483 = vsel %vm459, %v333, %v450
      %v492 = vunpack.c.l.b16 %v462
      %v493 = vunpack.c.l.b16 %v451
      %v494 = vunpack.c.l.b16 %v465
      %v495 = vunpack.c.l.b16 %v452
      %v496 = vunpack.c.l.b16 %v468
      %v497 = vunpack.c.l.b16 %v453
      %v498 = vunpack.c.l.b16 %v471
      %v499 = vunpack.c.l.b16 %v454
      %v500 = vunpack.c.l.b16 %v474
      %v501 = vunpack.c.l.b16 %v455
      %v502 = vunpack.c.l.b16 %v477
      %v503 = vunpack.c.l.b16 %v456
      %v504 = vunpack.c.l.b16 %v480
      %v505 = vunpack.c.l.b16 %v457
      %v506 = vunpack.c.l.b16 %v483
      %v507 = vunpack.c.l.b16 %v458
      %v508 = vld [vmem:[%s2] sm:$0xf]
      %v509 = vld [vmem:[%s2 + $0x4] sm:$0xf]
      %v510 = vld [vmem:[%s2 + $0x8] sm:$0xf]
      %v511 = vld [vmem:[%s2 + $0xc] sm:$0xf]
      %v512 = vld [vmem:[%s2 + $0x10] sm:$0xf]
      %v513 = vld [vmem:[%s2 + $0x14] sm:$0xf]
      %v514 = vld [vmem:[%s2 + $0x18] sm:$0xf]
      %v515 = vld [vmem:[%s2 + $0x1c] sm:$0xf]
      %v516 = vld [vmem:[%s2 + $0x20] sm:$0xf]
      %v517 = vld [vmem:[%s2 + $0x24] sm:$0xf]
      %v518 = vld [vmem:[%s2 + $0x28] sm:$0xf]
      %v519 = vld [vmem:[%s2 + $0x2c] sm:$0xf]
      %v520 = vld [vmem:[%s2 + $0x30] sm:$0xf]
      %v521 = vld [vmem:[%s2 + $0x34] sm:$0xf]
      %v522 = vld [vmem:[%s2 + $0x38] sm:$0xf]
      %v523 = vld [vmem:[%s2 + $0x3c] sm:$0xf]
      %v524 = vld [vmem:[%s2 + $0x40] sm:$0xf]
      %v525 = vld [vmem:[%s2 + $0x44] sm:$0xf]
      %v526 = vld [vmem:[%s2 + $0x48] sm:$0xf]
      %v527 = vld [vmem:[%s2 + $0x4c] sm:$0xf]
      %v528 = vld [vmem:[%s2 + $0x50] sm:$0xf]
      %v529 = vld [vmem:[%s2 + $0x54] sm:$0xf]
      %v530 = vld [vmem:[%s2 + $0x58] sm:$0xf]
      %v531 = vld [vmem:[%s2 + $0x5c] sm:$0xf]
      %v534 = vunpack.c.l.b16 %v335
      %v535 = vunpack.c.l.b16 %v336
      %v536 = vpack.c.b16 %v535, %v534
      %v538 = vshrl.u32 %v536, 16
      %v540 = vshll.u32 %v536, 16
      %v542 = vrot.slane %v540, 1
      %v543 = vor.u32 %v538, %v542
      %544 = vrot.lane.b32.xlu0 %v543, 64
      %v545 = vpop.permute.xlu0 %544
      %v546 = vrot.slane %v536, 1
      %v549 = vsel %vm459, %v335, %v545
      %v551 = vunpack.c.l.b16 %v549
      %v552 = vunpack.c.l.b16 %v546
      %s553 = scalar_lea.vmem %s2, 96
      %v554 = vld [vmem:[%s553] sm:$0xf]
      %v555 = vld [vmem:[%s553 + $0x4] sm:$0xf]
      %v556 = vld [vmem:[%s553 + $0x8] sm:$0xf]
      %v557 = vld [vmem:[%s553 + $0xc] sm:$0xf]
      %v558 = vld [vmem:[%s553 + $0x10] sm:$0xf]
      %v559 = vld [vmem:[%s553 + $0x14] sm:$0xf]
      %v560 = vld [vmem:[%s553 + $0x18] sm:$0xf]
      %v561 = vld [vmem:[%s553 + $0x1c] sm:$0xf]
      %v562 = vld [vmem:[%s553 + $0x20] sm:$0xf]
      %v563 = vld [vmem:[%s553 + $0x24] sm:$0xf]
      %v564 = vld [vmem:[%s553 + $0x28] sm:$0xf]
      %v565 = vld [vmem:[%s553 + $0x2c] sm:$0xf]
      %v566 = vld [vmem:[%s553 + $0x30] sm:$0xf]
      %v567 = vld [vmem:[%s553 + $0x34] sm:$0xf]
      %v568 = vld [vmem:[%s553 + $0x38] sm:$0xf]
      %v569 = vld [vmem:[%s553 + $0x3c] sm:$0xf]
      %v570 = vld [vmem:[%s553 + $0x40] sm:$0xf]
      %v571 = vld [vmem:[%s553 + $0x44] sm:$0xf]
      %v572 = vld [vmem:[%s553 + $0x48] sm:$0xf]
      %v573 = vld [vmem:[%s553 + $0x4c] sm:$0xf]
      %v574 = vld [vmem:[%s553 + $0x50] sm:$0xf]
      %v575 = vld [vmem:[%s553 + $0x54] sm:$0xf]
      %v576 = vld [vmem:[%s553 + $0x58] sm:$0xf]
      %v577 = vld [vmem:[%s553 + $0x5c] sm:$0xf]
      %v578 = vpack.c.b16 %v496, %v494
      %v579 = vpack.c.b16 %v497, %v495
      %v580 = vpack.c.b16 %v500, %v498
      %v581 = vpack.c.b16 %v501, %v499
      %v582 = vpack.c.b16 %v504, %v502
      %v583 = vpack.c.b16 %v505, %v503
      %v584 = vpack.c.b16 %v551, %v506
      %v585 = vpack.c.b16 %v552, %v507
      %v614 = vunpack.c.l.b16 %v554
      %v615 = vunpack.c.l.b16 %v555
      %v616 = vunpack.c.l.b16 %v556
      %v617 = vunpack.c.l.b16 %v557
      %v618 = vunpack.c.l.b16 %v558
      %v619 = vunpack.c.l.b16 %v559
      %v620 = vunpack.c.l.b16 %v560
      %v621 = vunpack.c.l.b16 %v561
      %v622 = vunpack.c.l.b16 %v562
      %v623 = vunpack.c.l.b16 %v563
      %v624 = vunpack.c.l.b16 %v564
      %v625 = vunpack.c.l.b16 %v565
      %v626 = vunpack.c.l.b16 %v566
      %v627 = vunpack.c.l.b16 %v567
      %v628 = vunpack.c.l.b16 %v568
      %v629 = vunpack.c.l.b16 %v569
      %v630 = vunpack.c.l.b16 %v570
      %v631 = vunpack.c.l.b16 %v571
      %v632 = vunpack.c.l.b16 %v572
      %v633 = vunpack.c.l.b16 %v573
      %v634 = vunpack.c.l.b16 %v574
      %v635 = vunpack.c.l.b16 %v575
      %v636 = vunpack.c.l.b16 %v576
      %v637 = vunpack.c.l.b16 %v577
      %v638 = vpack.c.b16 %v615, %v614
      %v639 = vpack.c.b16 %v617, %v616
      %v640 = vpack.c.b16 %v619, %v618
      %v641 = vpack.c.b16 %v621, %v620
      %v642 = vpack.c.b16 %v623, %v622
      %v643 = vpack.c.b16 %v625, %v624
      %v644 = vpack.c.b16 %v627, %v626
      %v645 = vpack.c.b16 %v629, %v628
      %v646 = vpack.c.b16 %v631, %v630
      %v647 = vpack.c.b16 %v633, %v632
      %v648 = vpack.c.b16 %v635, %v634
      %v649 = vpack.c.b16 %v637, %v636
      %v663 = vsel %vm459, %v579, 0
      %v666 = vsel %vm459, %v581, 0
      %v669 = vsel %vm459, %v583, 0
      %v672 = vsel %vm459, %v585, 0
      %674 = vmatprep.subr.bf16.mxu0 0
      %675 = vmatpush1.bf16.msra.mxu0 %v645
      %676 = vmatprep.subr.bf16.mxu0 0
      %677 = vmatpush1.bf16.msra.mxu0 %v644
      %678 = vmatprep.subr.bf16.mxu0 0
      %679 = vmatpush1.bf16.msra.mxu0 %v643
      %680 = vmatprep.subr.bf16.mxu0 0
      %681 = vmatpush1.bf16.msra.mxu0 %v642
      %682 = vmatprep.subr.bf16.mxu0 0
      %683 = vmatpush1.bf16.msra.mxu0 %v641
      %684 = vmatprep.subr.bf16.mxu0 0
      %685 = vmatpush1.bf16.msra.mxu0 %v640
      %686 = vmatprep.subr.bf16.mxu0 0
      %687 = vmatpush1.bf16.msra.mxu0 %v639
      %688 = vmatprep.subr.bf16.mxu0 0
      %689 = vmatpush1.bf16.msra.mxu0 %v638
      %690 = vmatprep.subr.bf16.mxu0 0
      %691 = vmatpush2.bf16.msra.mxu0 0
      %692 = vmatprep.subr.bf16.mxu0 0
      %693 = vmatpush2.bf16.msra.mxu0 0
      %694 = vmatprep.subr.bf16.mxu0 0
      %695 = vmatpush2.bf16.msra.mxu0 0
      %696 = vmatprep.subr.bf16.mxu0 0
      %697 = vmatpush2.bf16.msra.mxu0 0
      %698 = vmatprep.subr.bf16.mxu0 0
      %699 = vmatpush2.bf16.msra.mxu0 %v649
      %700 = vmatprep.subr.bf16.mxu0 0
      %701 = vmatpush2.bf16.msra.mxu0 %v648
      %702 = vmatprep.subr.bf16.mxu0 0
      %703 = vmatpush2.bf16.msra.mxu0 %v647
      %704 = vmatprep.subr.bf16.mxu0 0
      %705 = vmatpush2.bf16.msra.mxu0 %v646
      %706 = vmatprep.mubr.bf16.mxu0 %v663
      %707 = vmatmul.mubr.bf16.gmra.mxu0 %v578
      %v708 = vpop.f32.mrf.mxu0
      %v709 = vadd.f32 0.0, %v708
      %v710 = vpop.f32.mrf.mxu0
      %v711 = vpop.f32.mrf.mxu0
      %v712 = vadd.f32 0.0, %v711
      %v713 = vpop.f32.mrf.mxu0
      %714 = vmatprep.mubr.bf16.mxu0 %v666
      %715 = vmatmul.mubr.bf16.gmra.mxu0 %v580
      %v716 = vpop.f32.mrf.mxu0
      %v717 = vadd.f32 0.0, %v716
      %v718 = vpop.f32.mrf.mxu0
      %v719 = vpop.f32.mrf.mxu0
      %v720 = vadd.f32 0.0, %v719
      %v721 = vpop.f32.mrf.mxu0
      %722 = vmatprep.mubr.bf16.mxu0 %v669
      %723 = vmatmul.mubr.bf16.gmra.mxu0 %v582
      %v724 = vpop.f32.mrf.mxu0
      %v725 = vadd.f32 0.0, %v724
      %v726 = vpop.f32.mrf.mxu0
      %v727 = vpop.f32.mrf.mxu0
      %v728 = vadd.f32 0.0, %v727
      %v729 = vpop.f32.mrf.mxu0
      %730 = vmatprep.mubr.bf16.mxu0 %v672
      %731 = vmatmul.mubr.bf16.gmra.mxu0 %v584
      %v732 = vpop.f32.mrf.mxu0
      %v733 = vadd.f32 0.0, %v732
      %v734 = vpop.f32.mrf.mxu0
      %v735 = vpop.f32.mrf.mxu0
      %v736 = vadd.f32 0.0, %v735
      %v737 = vpop.f32.mrf.mxu0
      %738 = vdwg.mxu0
      %v739 = vpack.c.b16 %v494, %v492
      %v740 = vpack.c.b16 %v495, %v493
      %v741 = vpack.c.b16 %v498, %v496
      %v742 = vpack.c.b16 %v499, %v497
      %v743 = vpack.c.b16 %v502, %v500
      %v744 = vpack.c.b16 %v503, %v501
      %v745 = vpack.c.b16 %v506, %v504
      %v746 = vpack.c.b16 %v507, %v505
      %v775 = vunpack.c.l.b16 %v508
      %v776 = vunpack.c.l.b16 %v509
      %v777 = vunpack.c.l.b16 %v510
      %v778 = vunpack.c.l.b16 %v511
      %v779 = vunpack.c.l.b16 %v512
      %v780 = vunpack.c.l.b16 %v513
      %v781 = vunpack.c.l.b16 %v514
      %v782 = vunpack.c.l.b16 %v515
      %v783 = vunpack.c.l.b16 %v516
      %v784 = vunpack.c.l.b16 %v517
      %v785 = vunpack.c.l.b16 %v518
      %v786 = vunpack.c.l.b16 %v519
      %v787 = vunpack.c.l.b16 %v520
      %v788 = vunpack.c.l.b16 %v521
      %v789 = vunpack.c.l.b16 %v522
      %v790 = vunpack.c.l.b16 %v523
      %v791 = vunpack.c.l.b16 %v524
      %v792 = vunpack.c.l.b16 %v525
      %v793 = vunpack.c.l.b16 %v526
      %v794 = vunpack.c.l.b16 %v527
      %v795 = vunpack.c.l.b16 %v528
      %v796 = vunpack.c.l.b16 %v529
      %v797 = vunpack.c.l.b16 %v530
      %v798 = vunpack.c.l.b16 %v531
      %v799 = vpack.c.b16 %v776, %v775
      %v800 = vpack.c.b16 %v778, %v777
      %v801 = vpack.c.b16 %v780, %v779
      %v802 = vpack.c.b16 %v782, %v781
      %v803 = vpack.c.b16 %v784, %v783
      %v804 = vpack.c.b16 %v786, %v785
      %v805 = vpack.c.b16 %v788, %v787
      %v806 = vpack.c.b16 %v790, %v789
      %v807 = vpack.c.b16 %v792, %v791
      %v808 = vpack.c.b16 %v794, %v793
      %v809 = vpack.c.b16 %v796, %v795
      %v810 = vpack.c.b16 %v798, %v797
      %v824 = vsel %vm459, %v740, 0
      %v827 = vsel %vm459, %v742, 0
      %v830 = vsel %vm459, %v744, 0
      %v833 = vsel %vm459, %v746, 0
      %835 = vmatprep.subr.bf16.mxu0 0
      %836 = vmatpush1.bf16.msra.mxu0 %v806
      %837 = vmatprep.subr.bf16.mxu0 0
      %838 = vmatpush1.bf16.msra.mxu0 %v805
      %839 = vmatprep.subr.bf16.mxu0 0
      %840 = vmatpush1.bf16.msra.mxu0 %v804
      %841 = vmatprep.subr.bf16.mxu0 0
      %842 = vmatpush1.bf16.msra.mxu0 %v803
      %843 = vmatprep.subr.bf16.mxu0 0
      %844 = vmatpush1.bf16.msra.mxu0 %v802
      %845 = vmatprep.subr.bf16.mxu0 0
      %846 = vmatpush1.bf16.msra.mxu0 %v801
      %847 = vmatprep.subr.bf16.mxu0 0
      %848 = vmatpush1.bf16.msra.mxu0 %v800
      %849 = vmatprep.subr.bf16.mxu0 0
      %850 = vmatpush1.bf16.msra.mxu0 %v799
      %851 = vmatprep.subr.bf16.mxu0 0
      %852 = vmatpush2.bf16.msra.mxu0 0
      %853 = vmatprep.subr.bf16.mxu0 0
      %854 = vmatpush2.bf16.msra.mxu0 0
      %855 = vmatprep.subr.bf16.mxu0 0
      %856 = vmatpush2.bf16.msra.mxu0 0
      %857 = vmatprep.subr.bf16.mxu0 0
      %858 = vmatpush2.bf16.msra.mxu0 0
      %859 = vmatprep.subr.bf16.mxu0 0
      %860 = vmatpush2.bf16.msra.mxu0 %v810
      %861 = vmatprep.subr.bf16.mxu0 0
      %862 = vmatpush2.bf16.msra.mxu0 %v809
      %863 = vmatprep.subr.bf16.mxu0 0
      %864 = vmatpush2.bf16.msra.mxu0 %v808
      %865 = vmatprep.subr.bf16.mxu0 0
      %866 = vmatpush2.bf16.msra.mxu0 %v807
      %867 = vmatprep.mubr.bf16.mxu0 %v824
      %868 = vmatmul.mubr.bf16.gmra.mxu0 %v739
      %v869 = vpop.f32.mrf.mxu0
      %v870 = vadd.f32 %v709, %v869
      %v871 = vpop.f32.mrf.mxu0
      %v872 = vpop.f32.mrf.mxu0
      %v873 = vadd.f32 %v712, %v872
      %v874 = vpop.f32.mrf.mxu0
      %875 = vmatprep.mubr.bf16.mxu0 %v827
      %876 = vmatmul.mubr.bf16.gmra.mxu0 %v741
      %v877 = vpop.f32.mrf.mxu0
      %v878 = vadd.f32 %v717, %v877
      %v879 = vpop.f32.mrf.mxu0
      %v880 = vpop.f32.mrf.mxu0
      %v881 = vadd.f32 %v720, %v880
      %v882 = vpop.f32.mrf.mxu0
      %883 = vmatprep.mubr.bf16.mxu0 %v830
      %884 = vmatmul.mubr.bf16.gmra.mxu0 %v743
      %v885 = vpop.f32.mrf.mxu0
      %v886 = vadd.f32 %v725, %v885
      %v887 = vpop.f32.mrf.mxu0
      %v888 = vpop.f32.mrf.mxu0
      %v889 = vadd.f32 %v728, %v888
      %v890 = vpop.f32.mrf.mxu0
      %891 = vmatprep.mubr.bf16.mxu0 %v833
      %892 = vmatmul.mubr.bf16.gmra.mxu0 %v745
      %v893 = vpop.f32.mrf.mxu0
      %v894 = vadd.f32 %v733, %v893
      %v895 = vpop.f32.mrf.mxu0
      %v896 = vpop.f32.mrf.mxu0
      %v897 = vadd.f32 %v736, %v896
      %v898 = vpop.f32.mrf.mxu0
      %899 = vdwg.mxu0
      %v902 = vunpack.c.l.b16 %v337
      %v903 = vunpack.c.l.b16 %v338
      %v904 = vpack.c.b16 %v903, %v902
      %v906 = vshrl.u32 %v904, 16
      %v908 = vshll.u32 %v904, 16
      %v910 = vrot.slane %v908, 1
      %v911 = vor.u32 %v906, %v910
      %912 = vrot.lane.b32.xlu0 %v911, 64
      %v913 = vpop.permute.xlu0 %912
      %v914 = vrot.slane %v904, 1
      %v917 = vsel %vm459, %v337, %v913
      %v919 = vunpack.c.l.b16 %v917
      %v920 = vunpack.c.l.b16 %v914
      %s921 = scalar_lea.vmem %s2, 192
      %v922 = vld [vmem:[%s921] sm:$0xf]
      %v923 = vld [vmem:[%s921 + $0x4] sm:$0xf]
      %v924 = vld [vmem:[%s921 + $0x8] sm:$0xf]
      %v925 = vld [vmem:[%s921 + $0xc] sm:$0xf]
      %v926 = vld [vmem:[%s921 + $0x10] sm:$0xf]
      %v927 = vld [vmem:[%s921 + $0x14] sm:$0xf]
      %v928 = vld [vmem:[%s921 + $0x18] sm:$0xf]
      %v929 = vld [vmem:[%s921 + $0x1c] sm:$0xf]
      %v930 = vld [vmem:[%s921 + $0x20] sm:$0xf]
      %v931 = vld [vmem:[%s921 + $0x24] sm:$0xf]
      %v932 = vld [vmem:[%s921 + $0x28] sm:$0xf]
      %v933 = vld [vmem:[%s921 + $0x2c] sm:$0xf]
      %v934 = vld [vmem:[%s921 + $0x30] sm:$0xf]
      %v935 = vld [vmem:[%s921 + $0x34] sm:$0xf]
      %v936 = vld [vmem:[%s921 + $0x38] sm:$0xf]
      %v937 = vld [vmem:[%s921 + $0x3c] sm:$0xf]
      %v938 = vld [vmem:[%s921 + $0x40] sm:$0xf]
      %v939 = vld [vmem:[%s921 + $0x44] sm:$0xf]
      %v940 = vld [vmem:[%s921 + $0x48] sm:$0xf]
      %v941 = vld [vmem:[%s921 + $0x4c] sm:$0xf]
      %v942 = vld [vmem:[%s921 + $0x50] sm:$0xf]
      %v943 = vld [vmem:[%s921 + $0x54] sm:$0xf]
      %v944 = vld [vmem:[%s921 + $0x58] sm:$0xf]
      %v945 = vld [vmem:[%s921 + $0x5c] sm:$0xf]
      %v946 = vpack.c.b16 %v919, %v551
      %v947 = vpack.c.b16 %v920, %v552
      %v973 = vunpack.c.l.b16 %v922
      %v974 = vunpack.c.l.b16 %v923
      %v975 = vunpack.c.l.b16 %v924
      %v976 = vunpack.c.l.b16 %v925
      %v977 = vunpack.c.l.b16 %v926
      %v978 = vunpack.c.l.b16 %v927
      %v979 = vunpack.c.l.b16 %v928
      %v980 = vunpack.c.l.b16 %v929
      %v981 = vunpack.c.l.b16 %v930
      %v982 = vunpack.c.l.b16 %v931
      %v983 = vunpack.c.l.b16 %v932
      %v984 = vunpack.c.l.b16 %v933
      %v985 = vunpack.c.l.b16 %v934
      %v986 = vunpack.c.l.b16 %v935
      %v987 = vunpack.c.l.b16 %v936
      %v988 = vunpack.c.l.b16 %v937
      %v989 = vunpack.c.l.b16 %v938
      %v990 = vunpack.c.l.b16 %v939
      %v991 = vunpack.c.l.b16 %v940
      %v992 = vunpack.c.l.b16 %v941
      %v993 = vunpack.c.l.b16 %v942
      %v994 = vunpack.c.l.b16 %v943
      %v995 = vunpack.c.l.b16 %v944
      %v996 = vunpack.c.l.b16 %v945
      %v997 = vpack.c.b16 %v974, %v973
      %v998 = vpack.c.b16 %v976, %v975
      %v999 = vpack.c.b16 %v978, %v977
      %v1000 = vpack.c.b16 %v980, %v979
      %v1001 = vpack.c.b16 %v982, %v981
      %v1002 = vpack.c.b16 %v984, %v983
      %v1003 = vpack.c.b16 %v986, %v985
      %v1004 = vpack.c.b16 %v988, %v987
      %v1005 = vpack.c.b16 %v990, %v989
      %v1006 = vpack.c.b16 %v992, %v991
      %v1007 = vpack.c.b16 %v994, %v993
      %v1008 = vpack.c.b16 %v996, %v995
      %v1022 = vsel %vm459, %v947, 0
      %1024 = vmatprep.subr.bf16.mxu0 0
      %1025 = vmatpush1.bf16.msra.mxu0 %v1004
      %1026 = vmatprep.subr.bf16.mxu0 0
      %1027 = vmatpush1.bf16.msra.mxu0 %v1003
      %1028 = vmatprep.subr.bf16.mxu0 0
      %1029 = vmatpush1.bf16.msra.mxu0 %v1002
      %1030 = vmatprep.subr.bf16.mxu0 0
      %1031 = vmatpush1.bf16.msra.mxu0 %v1001
      %1032 = vmatprep.subr.bf16.mxu0 0
      %1033 = vmatpush1.bf16.msra.mxu0 %v1000
      %1034 = vmatprep.subr.bf16.mxu0 0
      %1035 = vmatpush1.bf16.msra.mxu0 %v999
      %1036 = vmatprep.subr.bf16.mxu0 0
      %1037 = vmatpush1.bf16.msra.mxu0 %v998
      %1038 = vmatprep.subr.bf16.mxu0 0
      %1039 = vmatpush1.bf16.msra.mxu0 %v997
      %1040 = vmatprep.subr.bf16.mxu0 0
      %1041 = vmatpush2.bf16.msra.mxu0 0
      %1042 = vmatprep.subr.bf16.mxu0 0
      %1043 = vmatpush2.bf16.msra.mxu0 0
      %1044 = vmatprep.subr.bf16.mxu0 0
      %1045 = vmatpush2.bf16.msra.mxu0 0
      %1046 = vmatprep.subr.bf16.mxu0 0
      %1047 = vmatpush2.bf16.msra.mxu0 0
      %1048 = vmatprep.subr.bf16.mxu0 0
      %1049 = vmatpush2.bf16.msra.mxu0 %v1008
      %1050 = vmatprep.subr.bf16.mxu0 0
      %1051 = vmatpush2.bf16.msra.mxu0 %v1007
      %1052 = vmatprep.subr.bf16.mxu0 0
      %1053 = vmatpush2.bf16.msra.mxu0 %v1006
      %1054 = vmatprep.subr.bf16.mxu0 0
      %1055 = vmatpush2.bf16.msra.mxu0 %v1005
      %1056 = vmatprep.mubr.bf16.mxu0 %v827
      %1057 = vmatmul.mubr.bf16.gmra.mxu0 %v741
      %v1058 = vpop.f32.mrf.mxu0
      %v1059 = vadd.f32 0.0, %v1058
      %v1060 = vpop.f32.mrf.mxu0
      %v1061 = vpop.f32.mrf.mxu0
      %v1062 = vadd.f32 0.0, %v1061
      %v1063 = vpop.f32.mrf.mxu0
      %1064 = vmatprep.mubr.bf16.mxu0 %v830
      %1065 = vmatmul.mubr.bf16.gmra.mxu0 %v743
      %v1066 = vpop.f32.mrf.mxu0
      %v1067 = vadd.f32 0.0, %v1066
      %v1068 = vpop.f32.mrf.mxu0
      %v1069 = vpop.f32.mrf.mxu0
      %v1070 = vadd.f32 0.0, %v1069
      %v1071 = vpop.f32.mrf.mxu0
      %1072 = vmatprep.mubr.bf16.mxu0 %v833
      %1073 = vmatmul.mubr.bf16.gmra.mxu0 %v745
      %v1074 = vpop.f32.mrf.mxu0
      %v1075 = vadd.f32 0.0, %v1074
      %v1076 = vpop.f32.mrf.mxu0
      %v1077 = vpop.f32.mrf.mxu0
      %v1078 = vadd.f32 0.0, %v1077
      %v1079 = vpop.f32.mrf.mxu0
      %1080 = vmatprep.mubr.bf16.mxu0 %v1022
      %1081 = vmatmul.mubr.bf16.gmra.mxu0 %v946
      %v1082 = vpop.f32.mrf.mxu0
      %v1083 = vadd.f32 0.0, %v1082
      %v1084 = vpop.f32.mrf.mxu0
      %v1085 = vpop.f32.mrf.mxu0
      %v1086 = vadd.f32 0.0, %v1085
      %v1087 = vpop.f32.mrf.mxu0
      %1088 = vdwg.mxu0
      %v1089 = vadd.f32 %v870, %v1059
      %v1090 = vadd.f32 %v873, %v1062
      %v1091 = vadd.f32 %v878, %v1067
      %v1092 = vadd.f32 %v881, %v1070
      %v1093 = vadd.f32 %v886, %v1075
      %v1094 = vadd.f32 %v889, %v1078
      %v1095 = vadd.f32 %v894, %v1083
      %v1096 = vadd.f32 %v897, %v1086
      %v1097 = vld [vmem:[%s3] sm:$0x1]
      %v1099 = vlaneseq
      %v1100 = vshrl.u32 %v1099, 7
      %v1101 = vsub.s32 0, %v1100
      %v1102 = vrot.slane %v1097, %v1101
      %v1104 = vadd.f32 %v1089, %v1102
      %v1105 = vadd.f32 %v1090, %v1102
      %v1106 = vadd.f32 %v1091, %v1102
      %v1107 = vadd.f32 %v1092, %v1102
      %v1108 = vadd.f32 %v1093, %v1102
      %v1109 = vadd.f32 %v1094, %v1102
      %v1110 = vadd.f32 %v1095, %v1102
      %v1111 = vadd.f32 %v1096, %v1102
      %v1112 = vmax.f32 %v1104, 0.0
      %v1113 = vmax.f32 %v1105, 0.0
      %v1114 = vmax.f32 %v1106, 0.0
      %v1115 = vmax.f32 %v1107, 0.0
      %v1116 = vmax.f32 %v1108, 0.0
      %v1117 = vmax.f32 %v1109, 0.0
      %v1118 = vmax.f32 %v1110, 0.0
      %v1119 = vmax.f32 %v1111, 0.0
      %v1120 = vpack.c.bf16 %v1112, %v1112
      %v1121 = vpack.c.bf16 %v1113, %v1113
      %v1122 = vpack.c.bf16 %v1114, %v1114
      %v1123 = vpack.c.bf16 %v1115, %v1115
      %v1124 = vpack.c.bf16 %v1116, %v1116
      %v1125 = vpack.c.bf16 %v1117, %v1117
      %v1126 = vpack.c.bf16 %v1118, %v1118
      %v1127 = vpack.c.bf16 %v1119, %v1119
      %1128 = vst [vmem:[%s316] sm:$0xf] %v1120
      %1129 = vst [vmem:[%s316 + $0x4] sm:$0xf] %v1121
      %1130 = vst [vmem:[%s316 + $0x8] sm:$0xf] %v1122
      %1131 = vst [vmem:[%s316 + $0xc] sm:$0xf] %v1123
      %1132 = vst [vmem:[%s316 + $0x10] sm:$0xf] %v1124
      %1133 = vst [vmem:[%s316 + $0x14] sm:$0xf] %v1125
      %1134 = vst [vmem:[%s316 + $0x18] sm:$0xf] %v1126
      %1135 = vst [vmem:[%s316 + $0x1c] sm:$0xf] %v1127
      %s1136 = smul.u32 8, %s20
      %p1137 = scmp.lt.s32.totalorder %s19, 1
      %s1138 = scalar_select %p1137, %s19, 1
      %p1139 = scmp.lt.s32.totalorder %s1136, 7
      %s1140 = scalar_select %p1139, %s1136, 7
      %s1141 = smul.addr %s1138, 8
      %s1142 = sadd.s32 %s1140, %s1141
      %s1143 = smul.addr %s1142, 4
      %s1144 = scalar_lea.vmem %s4, %s1143
      // Predicated region
      $region37: #{encoder_forward.7} parent=35 // pred_check
        %p1145 = pneg %p149
      $region38: #{encoder_forward.7} parent=35 // pred_check_branch
        %1147 = sbr.rel (%p1145) target = $region40
      $region39: #{encoder_forward.7} parent=35 // pred_region
        %s1148 = smul.u32 8, %s20
      $region40: #{encoder_forward.7} parent=35 // pred_fallthru
        _
    $region36: #{encoder_forward.7} parent=5 // pred_fallthru
      _
    %p1149 = scmp.le.s32.totalorder 2, %s10
    // Predicated region
    $region41: #{encoder_forward.7} parent=5 // pred_check
      %p1150 = pneg %p1149
    $region42: #{encoder_forward.7} parent=5 // pred_check_branch
      %1152 = sbr.rel (%p1150) target = $region44
    $region43: #{encoder_forward.7} parent=5 // pred_region
      %s1153 = ssub.s32 %s10, 2
      // Predicated region
      $region45: #{encoder_forward.7} parent=43 // pred_check
        %p1154 = pneg %p155
      $region46: #{encoder_forward.7} parent=43 // pred_check_branch
        %1156 = sbr.rel (%p1154) target = $region48
      $region47: #{encoder_forward.7} parent=43 // pred_region
        %s1157 = smul.u32 8, %s22
        %p1158 = scmp.lt.s32.totalorder %s21, 1
        %s1159 = scalar_select %p1158, %s21, 1
        %p1160 = scmp.lt.s32.totalorder %s1157, 7
        %s1161 = scalar_select %p1160, %s1157, 7
        %s1162 = smul.addr %s1159, 8
        %s1163 = sadd.s32 %s1161, %s1162
        %s1164 = smul.addr %s1163, 4
        %s1165 = scalar_lea.vmem %s4, %s1164
      $region48: #{encoder_forward.7} parent=43 // pred_fallthru
        _
    $region44: #{encoder_forward.7} parent=5 // pred_fallthru
      _
  $region6: #{encoder_forward.7} parent=0 // loop_footer
    %s14 = sadd.s32 1, %s10
  $region7: #{encoder_forward.7} parent=0 // loop_footer_branch
    %9 = sbr.rel target = $region3
  $region8: #{encoder_forward.7} parent=0 // loop_exit
    _

// kernel: encoder_forward.5
$region0: #{encoder_forward.5}
  #allocation0 [shape = 'u32[]', space=smem, size = 0x4, offset = 0x4, fixed_abs, tag = 'smem constant byte address 0x4 - core index']
  #allocation1 [shape = 'u32[144,128]{1,0:T(1,128)}', space=vmem, size = 0x12000, scoped, tag = 'internal scratch']
  %s0 = inlined_call_operand.vmem [shape: bf16[2,18,18,4], index: 0, kind: input, shape index: {}, may-alias: {0,1}]
  %s1 = inlined_call_operand.vmem [shape: bf16[2,18,18,4], index: 1, kind: input, shape index: {}, may-alias: {0,1}]
  %s2 = inlined_call_operand.vmem [shape: bf16[3,12,64], index: 2, kind: input, shape index: {}]
  %s3 = inlined_call_operand.vmem [shape: f32[1,64], index: 3, kind: input, shape index: {}]
  %s4 = inlined_call_operand.vmem [shape: bf16[2,16,16,64], index: 4, kind: output, shape index: {}]
  %s5 = sld [smem:[#allocation0]]
  $region49: #{encoder_forward.5} parent=0
    _
  %s7 = ssub.s32 1, %s5
  %s8 = scalar_select 0, %s7, %s5
  loop: start=0, step=1, limit=4
  $region2: #{encoder_forward.5} parent=0 // loop_pre_header
    _
  $region3: #{encoder_forward.5} parent=0 // loop_header
    %s10 = sphi 0, %s14
    %p11 = scmp.ge.s32.totalorder %s10, 4
    %s17 = sphi 0, %s29
    %s18 = sphi 0, %s25
    %s19 = sphi 0, %s17
    %s20 = sphi 0, %s18
    %s21 = sphi 0, %s19
    %s22 = sphi 0, %s20
    %s34 = sphi 0, %s36
    %s37 = sphi 0, %s34
    %s38 = sphi 0, %s37
    %s54 = sphi 0, %s38
    %s66 = sphi 0, %s68
    %s69 = sphi 0, %s66
    %s70 = sphi 0, %s69
    %s86 = sphi 0, %s70
    %s90 = sphi 0, %s90
    %s92 = sphi 0, %s90
    %s93 = sphi 0, %s92
    %s107 = sphi 0, %s93
    %s111 = sphi 0, %s111
    %s113 = sphi 0, %s111
    %s114 = sphi 0, %s113
    %s128 = sphi 0, %s114
    %s136 = sphi 0, %s138
    %s139 = sphi 0, %s136
    %s140 = sphi 0, %s139
    %s156 = sphi 0, %s140
  $region4: #{encoder_forward.5} parent=0 // loop_header_branch
    %13 = sbr.rel (%p11) target = $region8
  $region5: #{encoder_forward.5} parent=0 // loop_body
    %s15 = ssub.s32 %s10, 1
    %s16 = ssub.s32 %s10, 2
    %s23 = sadd.s32 1, %s18
    %p24 = scmp.ge.s32.totalorder %s23, 1
    %s25 = scalar_select %p24, 0, %s23
    %s26 = sadd.s32 1, %s17
    %s27 = scalar_select %p24, %s26, %s17
    %p28 = scmp.ge.s32.totalorder %s27, 2
    %s29 = scalar_select %p28, 0, %s27
    %s30 = ssub.s32 %s17, %s29
    %s31 = ssub.s32 %s18, %s25
    %s32 = sor.u32 %s30, %s31
    %p33 = scmp.eq.s32.totalorder %s32, 0
    %s35 = sadd.s32 %s34, 1
    %s36 = scalar_select %p33, %s34, %s35
    %p39 = pneg %p33
    %p40 = scmp.eq.s32.totalorder %s10, 1
    %p41 = por %p39, %p40
    %p42 = scmp.ne.s32.totalorder %s34, %s37
    %p43 = scmp.eq.s32.totalorder %s10, 0
    %p44 = por %p42, %p43
    %p45 = scmp.ne.s32.totalorder %s34, %s37
    %p46 = scmp.eq.s32.totalorder %s15, 1
    %p47 = por %p45, %p46
    %p48 = scmp.ne.s32.totalorder %s37, %s38
    %p49 = scmp.eq.s32.totalorder %s15, 0
    %p50 = por %p48, %p49
    %p51 = scmp.ne.s32.totalorder %s37, %s38
    %p52 = scmp.eq.s32.totalorder %s16, 1
    %p53 = por %p51, %p52
    %p55 = scmp.ne.s32.totalorder %s38, %s54
    %p56 = scmp.eq.s32.totalorder %s16, 0
    %p57 = por %p55, %p56
    %s58 = sadd.s32 %s18, 1
    %s59 = smul.u32 %s58, 8
    %s60 = sadd.s32 %s25, 1
    %s61 = smul.u32 %s60, 8
    %s62 = ssub.s32 %s17, %s29
    %s63 = ssub.s32 %s59, %s61
    %s64 = sor.u32 %s62, %s63
    %p65 = scmp.eq.s32.totalorder %s64, 0
    %s67 = sadd.s32 %s66, 1
    %s68 = scalar_select %p65, %s66, %s67
    %p71 = pneg %p65
    %p72 = scmp.eq.s32.totalorder %s10, 1
    %p73 = por %p71, %p72
    %p74 = scmp.ne.s32.totalorder %s66, %s69
    %p75 = scmp.eq.s32.totalorder %s10, 0
    %p76 = por %p74, %p75
    %p77 = scmp.ne.s32.totalorder %s66, %s69
    %p78 = scmp.eq.s32.totalorder %s15, 1
    %p79 = por %p77, %p78
    %p80 = scmp.ne.s32.totalorder %s69, %s70
    %p81 = scmp.eq.s32.totalorder %s15, 0
    %p82 = por %p80, %p81
    %p83 = scmp.ne.s32.totalorder %s69, %s70
    %p84 = scmp.eq.s32.totalorder %s16, 1
    %p85 = por %p83, %p84
    %p87 = scmp.ne.s32.totalorder %s70, %s86
    %p88 = scmp.eq.s32.totalorder %s16, 0
    %p89 = por %p87, %p88
    %s91 = sadd.s32 %s90, 1
    %p94 = scmp.eq.s32.totalorder %s10, 1
    %p95 = scmp.ne.s32.totalorder %s90, %s92
    %p96 = scmp.eq.s32.totalorder %s10, 0
    %p97 = por %p95, %p96
    %p98 = scmp.ne.s32.totalorder %s90, %s92
    %p99 = scmp.eq.s32.totalorder %s15, 1
    %p100 = por %p98, %p99
    %p101 = scmp.ne.s32.totalorder %s92, %s93
    %p102 = scmp.eq.s32.totalorder %s15, 0
    %p103 = por %p101, %p102
    %p104 = scmp.ne.s32.totalorder %s92, %s93
    %p105 = scmp.eq.s32.totalorder %s16, 1
    %p106 = por %p104, %p105
    %p108 = scmp.ne.s32.totalorder %s93, %s107
    %p109 = scmp.eq.s32.totalorder %s16, 0
    %p110 = por %p108, %p109
    %s112 = sadd.s32 %s111, 1
    %p115 = scmp.eq.s32.totalorder %s10, 1
    %p116 = scmp.ne.s32.totalorder %s111, %s113
    %p117 = scmp.eq.s32.totalorder %s10, 0
    %p118 = por %p116, %p117
    %p119 = scmp.ne.s32.totalorder %s111, %s113
    %p120 = scmp.eq.s32.totalorder %s15, 1
    %p121 = por %p119, %p120
    %p122 = scmp.ne.s32.totalorder %s113, %s114
    %p123 = scmp.eq.s32.totalorder %s15, 0
    %p124 = por %p122, %p123
    %p125 = scmp.ne.s32.totalorder %s113, %s114
    %p126 = scmp.eq.s32.totalorder %s16, 1
    %p127 = por %p125, %p126
    %p129 = scmp.ne.s32.totalorder %s114, %s128
    %p130 = scmp.eq.s32.totalorder %s16, 0
    %p131 = por %p129, %p130
    %s132 = ssub.s32 %s17, %s29
    %s133 = ssub.s32 %s18, %s25
    %s134 = sor.u32 %s132, %s133
    %p135 = scmp.eq.s32.totalorder %s134, 0
    %s137 = sadd.s32 %s136, 1
    %s138 = scalar_select %p135, %s136, %s137
    %p141 = pneg %p135
    %p142 = scmp.eq.s32.totalorder %s10, 1
    %p143 = por %p141, %p142
    %p144 = scmp.ne.s32.totalorder %s136, %s139
    %p145 = scmp.eq.s32.totalorder %s10, 0
    %p146 = por %p144, %p145
    %p147 = scmp.ne.s32.totalorder %s136, %s139
    %p148 = scmp.eq.s32.totalorder %s15, 1
    %p149 = por %p147, %p148
    %p150 = scmp.ne.s32.totalorder %s139, %s140
    %p151 = scmp.eq.s32.totalorder %s15, 0
    %p152 = por %p150, %p151
    %p153 = scmp.ne.s32.totalorder %s139, %s140
    %p154 = scmp.eq.s32.totalorder %s16, 1
    %p155 = por %p153, %p154
    %p157 = scmp.ne.s32.totalorder %s140, %s156
    %p158 = scmp.eq.s32.totalorder %s16, 0
    %p159 = por %p157, %p158
    %p160 = scmp.le.s32.totalorder 1, %s10
    %p161 = scmp.lt.s32.totalorder %s10, 3
    %p162 = pnand %p160, %p161
    %p163 = pneg %p162
    // Predicated region
    $region9: #{encoder_forward.5} parent=5 // pred_check
      _
    $region10: #{encoder_forward.5} parent=5 // pred_check_branch
      %165 = sbr.rel (%p162) target = $region12
    $region11: #{encoder_forward.5} parent=5 // pred_region
      %s166 = ssub.s32 %s10, 1
      // Predicated region
      $region13: #{encoder_forward.5} parent=11 // pred_check
        %p167 = pneg %p103
      $region14: #{encoder_forward.5} parent=11 // pred_check_branch
        %169 = sbr.rel (%p167) target = $region16
      $region15: #{encoder_forward.5} parent=11 // pred_region
        _
      $region16: #{encoder_forward.5} parent=11 // pred_fallthru
        _
      // Predicated region
      $region17: #{encoder_forward.5} parent=11 // pred_check
        %p170 = pneg %p124
      $region18: #{encoder_forward.5} parent=11 // pred_check_branch
        %172 = sbr.rel (%p170) target = $region20
      $region19: #{encoder_forward.5} parent=11 // pred_region
        _
      $region20: #{encoder_forward.5} parent=11 // pred_fallthru
        _
    $region12: #{encoder_forward.5} parent=5 // pred_fallthru
      _
    %p173 = scmp.lt.s32.totalorder %s10, 2
    // Predicated region
    $region21: #{encoder_forward.5} parent=5 // pred_check
      %p174 = pneg %p173
    $region22: #{encoder_forward.5} parent=5 // pred_check_branch
      %176 = sbr.rel (%p174) target = $region24
    $region23: #{encoder_forward.5} parent=5 // pred_region
      // Predicated region
      $region25: #{encoder_forward.5} parent=23 // pred_check
        %p177 = pneg %p44
      $region26: #{encoder_forward.5} parent=23 // pred_check_branch
        %179 = sbr.rel (%p177) target = $region28
      $region27: #{encoder_forward.5} parent=23 // pred_region
        %s180 = smul.u32 16, %s18
        %s181 = ssub.s32 18, %s180
        %p182 = scmp.lt.s32.totalorder %s181, 16
        %s183 = scalar_select %p182, %s181, 16
        %s184 = smul.u32 64, %s183
        %s185 = smul.u32 %s184, 3
        %p186 = scmp.lt.s32.totalorder %s17, 1
        %s187 = scalar_select %p186, %s17, 1
        %p188 = scmp.lt.s32.totalorder %s180, 17
        %s189 = scalar_select %p188, %s180, 17
        %s190 = smul.addr %s189, 3
        %s191 = smul.addr %s187, 54
        %s192 = sadd.s32 %s190, %s191
        %s193 = smul.addr %s192, 4
        %s194 = scalar_lea.vmem %s0, %s193
        %s195 = smul.u32 16, %s18
        %s196 = ssub.s32 18, %s195
        %p197 = scmp.lt.s32.totalorder %s196, 16
        %s198 = scalar_select %p197, %s196, 16
        %s199 = smul.u32 64, %s198
        %s200 = smul.u32 %s199, 3
      $region28: #{encoder_forward.5} parent=23 // pred_fallthru
        _
      // Predicated region
      $region29: #{encoder_forward.5} parent=23 // pred_check
        %p201 = pneg %p76
      $region30: #{encoder_forward.5} parent=23 // pred_check_branch
        %203 = sbr.rel (%p201) target = $region32
      $region31: #{encoder_forward.5} parent=23 // pred_region
        %s204 = sadd.s32 %s18, 1
        %s205 = smul.u32 %s204, 8
        %s206 = smul.u32 2, %s205
        %p207 = scmp.lt.s32.totalorder %s17, 1
        %s208 = scalar_select %p207, %s17, 1
        %p209 = scmp.lt.s32.totalorder %s206, 17
        %s210 = scalar_select %p209, %s206, 17
        %s211 = smul.addr %s210, 3
        %s212 = smul.addr %s208, 54
        %s213 = sadd.s32 %s211, %s212
        %s214 = smul.addr %s213, 4
        %s215 = scalar_lea.vmem %s1, %s214
        %s216 = sadd.s32 %s18, 1
        %s217 = smul.u32 %s216, 8
        %s218 = smul.u32 2, %s217
      $region32: #{encoder_forward.5} parent=23 // pred_fallthru
        _
    $region24: #{encoder_forward.5} parent=5 // pred_fallthru
      _
    %p219 = scmp.le.s32.totalorder 1, %s10
    %p220 = scmp.lt.s32.totalorder %s10, 3
    %p221 = pnand %p219, %p220
    %p222 = pneg %p221
    // Predicated region
    $region33: #{encoder_forward.5} parent=5 // pred_check
      _
    $region34: #{encoder_forward.5} parent=5 // pred_check_branch
      %224 = sbr.rel (%p221) target = $region36
    $region35: #{encoder_forward.5} parent=5 // pred_region
      %s225 = ssub.s32 %s10, 1
      %s226 = smul.u32 16, %s20
      %s227 = ssub.s32 18, %s226
      %p228 = scmp.lt.s32.totalorder %s227, 16
      %s229 = scalar_select %p228, %s227, 16
      %s230 = smul.u32 64, %s229
      %s231 = smul.u32 %s230, 3
      %p232 = scmp.lt.s32.totalorder %s19, 1
      %s233 = scalar_select %p232, %s19, 1
      %p234 = scmp.lt.s32.totalorder %s226, 17
      %s235 = scalar_select %p234, %s226, 17
      %s236 = smul.addr %s235, 3
      %s237 = smul.addr %s233, 54
      %s238 = sadd.s32 %s236, %s237
      %s239 = smul.addr %s238, 4
      %s240 = scalar_lea.vmem %s0, %s239
      %p241 = pneg %p50
      %p242 = pneg %p47
      %s243 = sadd.s32 %s20, 1
      %s244 = smul.u32 %s243, 8
      %s245 = smul.u32 2, %s244
      %p246 = scmp.lt.s32.totalorder %s19, 1
      %s247 = scalar_select %p246, %s19, 1
      %p248 = scmp.lt.s32.totalorder %s245, 17
      %s249 = scalar_select %p248, %s245, 17
      %s250 = smul.addr %s249, 3
      %s251 = smul.addr %s247, 54
      %s252 = sadd.s32 %s250, %s251
      %s253 = smul.addr %s252, 4
      %s254 = scalar_lea.vmem %s1, %s253
      %p255 = pneg %p82
      %p256 = pneg %p79
      %p257 = pneg %p103
      %p258 = pneg %p100
      %p259 = pneg %p124
      %p260 = pneg %p121
      %p261 = pneg %p152
      %p262 = pneg %p149
      %s263 = smul.u32 16, %s20
      %p264 = scmp.lt.s32.totalorder %s19, 1
      %s265 = scalar_select %p264, %s19, 1
      %p266 = scmp.lt.s32.totalorder %s263, 15
      %s267 = scalar_select %p266, %s263, 15
      %s268 = smul.addr %s267, 2
      %s269 = smul.addr %s265, 32
      %s270 = sadd.s32 %s268, %s269
      %s271 = smul.addr %s270, 4
      %s272 = scalar_lea.vmem %s4, %s271
      %s273 = smul.u32 16, %s20
      %s274 = ssub.s32 18, %s273
      %p275 = scmp.lt.s32.totalorder %s274, 16
      %s276 = scalar_select %p275, %s274, 16
      %s277 = smul.u32 64, %s276
      %s278 = smul.u32 %s277, 3
      %p279 = scmp.lt.s32.totalorder %s19, 1
      %s280 = scalar_select %p279, %s19, 1
      %p281 = scmp.lt.s32.totalorder %s273, 17
      %s282 = scalar_select %p281, %s273, 17
      %s283 = smul.addr %s282, 3
      %s284 = smul.addr %s280, 54
      %s285 = sadd.s32 %s283, %s284
      %s286 = smul.addr %s285, 4
      %s287 = scalar_lea.vmem %s0, %s286
      %s288 = smul.u32 16, %s20
      %s289 = ssub.s32 18, %s288
      %p290 = scmp.lt.s32.totalorder %s289, 16
      %s291 = scalar_select %p290, %s289, 16
      %s292 = smul.u32 64, %s291
      %s293 = smul.u32 %s292, 3
      %s294 = sadd.s32 %s20, 1
      %s295 = smul.u32 %s294, 8
      %s296 = smul.u32 2, %s295
      %p297 = scmp.lt.s32.totalorder %s19, 1
      %s298 = scalar_select %p297, %s19, 1
      %p299 = scmp.lt.s32.totalorder %s296, 17
      %s300 = scalar_select %p299, %s296, 17
      %s301 = smul.addr %s300, 3
      %s302 = smul.addr %s298, 54
      %s303 = sadd.s32 %s301, %s302
      %s304 = smul.addr %s303, 4
      %s305 = scalar_lea.vmem %s1, %s304
      %s306 = sadd.s32 %s20, 1
      %s307 = smul.u32 %s306, 8
      %s308 = smul.u32 2, %s307
      %s309 = smul.u32 16, %s20
      %p310 = scmp.lt.s32.totalorder %s19, 1
      %s311 = scalar_select %p310, %s19, 1
      %p312 = scmp.lt.s32.totalorder %s309, 15
      %s313 = scalar_select %p312, %s309, 15
      %s314 = smul.addr %s313, 2
      %s315 = smul.addr %s311, 32
      %s316 = sadd.s32 %s314, %s315
      %s317 = smul.addr %s316, 4
      %s318 = scalar_lea.vmem %s4, %s317
      %s319 = smul.u32 16, %s20
      %v321 = vld [vmem:[%s287] sm:$0xf]
      %v322 = vld [vmem:[%s287 + $0x4] sm:$0xf]
      %v323 = vld [vmem:[%s287 + $0x8] sm:$0x1]
      %v324 = vld [vmem:[%s287 + $0xc] sm:$0xf]
      %v325 = vld [vmem:[%s287 + $0x10] sm:$0xf]
      %v326 = vld [vmem:[%s287 + $0x14] sm:$0x1]
      %v327 = vld [vmem:[%s287 + $0x18] sm:$0xf]
      %v328 = vld [vmem:[%s287 + $0x1c] sm:$0xf]
      %v329 = vld [vmem:[%s287 + $0x20] sm:$0x1]
      %v330 = vld [vmem:[%s287 + $0x24] sm:$0xf]
      %v331 = vld [vmem:[%s287 + $0x28] sm:$0xf]
      %v332 = vld [vmem:[%s287 + $0x2c] sm:$0x1]
      %v333 = vld [vmem:[%s287 + $0x30] sm:$0xf]
      %v334 = vld [vmem:[%s287 + $0x34] sm:$0xf]
      %v335 = vld [vmem:[%s287 + $0x38] sm:$0x1]
      %v336 = vld [vmem:[%s287 + $0x3c] sm:$0xf]
      %v337 = vld [vmem:[%s287 + $0x40] sm:$0xf]
      %v338 = vld [vmem:[%s287 + $0x44] sm:$0x1]
      %v339 = vld [vmem:[%s287 + $0x48] sm:$0xf]
      %v340 = vld [vmem:[%s287 + $0x4c] sm:$0xf]
      %v341 = vld [vmem:[%s287 + $0x50] sm:$0x1]
      %v342 = vld [vmem:[%s287 + $0x54] sm:$0xf]
      %v343 = vld [vmem:[%s287 + $0x58] sm:$0xf]
      %v344 = vld [vmem:[%s287 + $0x5c] sm:$0x1]
      %v345 = vld [vmem:[%s287 + $0x60] sm:$0xf]
      %v346 = vld [vmem:[%s287 + $0x64] sm:$0xf]
      %v347 = vld [vmem:[%s287 + $0x68] sm:$0x1]
      %v348 = vld [vmem:[%s287 + $0x6c] sm:$0xf]
      %v349 = vld [vmem:[%s287 + $0x70] sm:$0xf]
      %v350 = vld [vmem:[%s287 + $0x74] sm:$0x1]
      %v351 = vld [vmem:[%s287 + $0x78] sm:$0xf]
      %v352 = vld [vmem:[%s287 + $0x7c] sm:$0xf]
      %v353 = vld [vmem:[%s287 + $0x80] sm:$0x1]
      %v354 = vld [vmem:[%s287 + $0x84] sm:$0xf]
      %v355 = vld [vmem:[%s287 + $0x88] sm:$0xf]
      %v356 = vld [vmem:[%s287 + $0x8c] sm:$0x1]
      %v357 = vld [vmem:[%s287 + $0x90] sm:$0xf]
      %v358 = vld [vmem:[%s287 + $0x94] sm:$0xf]
      %v359 = vld [vmem:[%s287 + $0x98] sm:$0x1]
      %v360 = vld [vmem:[%s287 + $0x9c] sm:$0xf]
      %v361 = vld [vmem:[%s287 + $0xa0] sm:$0xf]
      %v362 = vld [vmem:[%s287 + $0xa4] sm:$0x1]
      %v363 = vld [vmem:[%s287 + $0xa8] sm:$0xf]
      %v364 = vld [vmem:[%s287 + $0xac] sm:$0xf]
      %v365 = vld [vmem:[%s287 + $0xb0] sm:$0x1]
      %v366 = vld [vmem:[%s287 + $0xb4] sm:$0xf]
      %v367 = vld [vmem:[%s287 + $0xb8] sm:$0xf]
      %v368 = vld [vmem:[%s287 + $0xbc] sm:$0x1]
      %v369 = vld [vmem:[%s305] sm:$0xf]
      %v370 = vld [vmem:[%s305 + $0x4] sm:$0xf]
      %v371 = vld [vmem:[%s305 + $0x8] sm:$0x1]
      %v372 = vld [vmem:[%s305 + $0xc] sm:$0xf]
      %v373 = vld [vmem:[%s305 + $0x10] sm:$0xf]
      %v374 = vld [vmem:[%s305 + $0x14] sm:$0x1]
      %v407 = vunpack.c.l.b16 %v321
      %v408 = vunpack.c.l.b16 %v322
      %v409 = vunpack.c.l.b16 %v324
      %v410 = vunpack.c.l.b16 %v325
      %v411 = vunpack.c.l.b16 %v327
      %v412 = vunpack.c.l.b16 %v328
      %v413 = vunpack.c.l.b16 %v330
      %v414 = vunpack.c.l.b16 %v331
      %v415 = vunpack.c.l.b16 %v333
      %v416 = vunpack.c.l.b16 %v334
      %v417 = vunpack.c.l.b16 %v336
      %v418 = vunpack.c.l.b16 %v337
      %v419 = vunpack.c.l.b16 %v339
      %v420 = vunpack.c.l.b16 %v340
      %v421 = vunpack.c.l.b16 %v342
      %v422 = vunpack.c.l.b16 %v343
      %v423 = vunpack.c.l.b16 %v345
      %v424 = vunpack.c.l.b16 %v346
      %v425 = vunpack.c.l.b16 %v348
      %v426 = vunpack.c.l.b16 %v349
      %v427 = vunpack.c.l.b16 %v351
      %v428 = vunpack.c.l.b16 %v352
      %v429 = vunpack.c.l.b16 %v354
      %v430 = vunpack.c.l.b16 %v355
      %v431 = vunpack.c.l.b16 %v357
      %v432 = vunpack.c.l.b16 %v358
      %v433 = vunpack.c.l.b16 %v360
      %v434 = vunpack.c.l.b16 %v361
      %v435 = vunpack.c.l.b16 %v363
      %v436 = vunpack.c.l.b16 %v364
      %v437 = vunpack.c.l.b16 %v366
      %v438 = vunpack.c.l.b16 %v367
      %v439 = vpack.c.b16 %v408, %v407
      %v440 = vpack.c.b16 %v410, %v409
      %v441 = vpack.c.b16 %v412, %v411
      %v442 = vpack.c.b16 %v414, %v413
      %v443 = vpack.c.b16 %v416, %v415
      %v444 = vpack.c.b16 %v418, %v417
      %v445 = vpack.c.b16 %v420, %v419
      %v446 = vpack.c.b16 %v422, %v421
      %v447 = vpack.c.b16 %v424, %v423
      %v448 = vpack.c.b16 %v426, %v425
      %v449 = vpack.c.b16 %v428, %v427
      %v450 = vpack.c.b16 %v430, %v429
      %v451 = vpack.c.b16 %v432, %v431
      %v452 = vpack.c.b16 %v434, %v433
      %v453 = vpack.c.b16 %v436, %v435
      %v454 = vpack.c.b16 %v438, %v437
      %v471 = vunpack.c.l.b16 %v323
      %v472 = vunpack.c.l.b16 %v326
      %v473 = vunpack.c.l.b16 %v329
      %v474 = vunpack.c.l.b16 %v332
      %v475 = vunpack.c.l.b16 %v335
      %v476 = vunpack.c.l.b16 %v338
      %v477 = vunpack.c.l.b16 %v341
      %v478 = vunpack.c.l.b16 %v344
      %v479 = vunpack.c.l.b16 %v347
      %v480 = vunpack.c.l.b16 %v350
      %v481 = vunpack.c.l.b16 %v353
      %v482 = vunpack.c.l.b16 %v356
      %v483 = vunpack.c.l.b16 %v359
      %v484 = vunpack.c.l.b16 %v362
      %v485 = vunpack.c.l.b16 %v365
      %v486 = vunpack.c.l.b16 %v368
      %v487 = vpack.c.b16 %v471, %v471
      %v488 = vpack.c.b16 %v472, %v472
      %v489 = vpack.c.b16 %v473, %v473
      %v490 = vpack.c.b16 %v474, %v474
      %v491 = vpack.c.b16 %v475, %v475
      %v492 = vpack.c.b16 %v476, %v476
      %v493 = vpack.c.b16 %v477, %v477
      %v494 = vpack.c.b16 %v478, %v478
      %v495 = vpack.c.b16 %v479, %v479
      %v496 = vpack.c.b16 %v480, %v480
      %v497 = vpack.c.b16 %v481, %v481
      %v498 = vpack.c.b16 %v482, %v482
      %v499 = vpack.c.b16 %v483, %v483
      %v500 = vpack.c.b16 %v484, %v484
      %v501 = vpack.c.b16 %v485, %v485
      %v502 = vpack.c.b16 %v486, %v486
      %vm503 = vsmask.f32 7424
      %v505 = vshrl.u32 %v439, 16
      %v507 = vshll.u32 %v439, 16
      %v509 = vrot.slane %v507, 1
      %v510 = vor.u32 %v505, %v509
      %v512 = vshll.u32 %v487, 16
      %v514 = vrot.slane %v512, 1
      %v515 = vsel %vm503, %v510, %v514
      %v517 = vshrl.u32 %v440, 16
      %v519 = vshll.u32 %v440, 16
      %v521 = vrot.slane %v519, 1
      %v522 = vor.u32 %v517, %v521
      %v524 = vshll.u32 %v488, 16
      %v526 = vrot.slane %v524, 1
      %v527 = vsel %vm503, %v522, %v526
      %v529 = vshrl.u32 %v441, 16
      %v531 = vshll.u32 %v441, 16
      %v533 = vrot.slane %v531, 1
      %v534 = vor.u32 %v529, %v533
      %v536 = vshll.u32 %v489, 16
      %v538 = vrot.slane %v536, 1
      %v539 = vsel %vm503, %v534, %v538
      %v541 = vshrl.u32 %v442, 16
      %v543 = vshll.u32 %v442, 16
      %v545 = vrot.slane %v543, 1
      %v546 = vor.u32 %v541, %v545
      %v548 = vshll.u32 %v490, 16
      %v550 = vrot.slane %v548, 1
      %v551 = vsel %vm503, %v546, %v550
      %v553 = vshrl.u32 %v443, 16
      %v555 = vshll.u32 %v443, 16
      %v557 = vrot.slane %v555, 1
      %v558 = vor.u32 %v553, %v557
      %v560 = vshll.u32 %v491, 16
      %v562 = vrot.slane %v560, 1
      %v563 = vsel %vm503, %v558, %v562
      %v565 = vshrl.u32 %v444, 16
      %v567 = vshll.u32 %v444, 16
      %v569 = vrot.slane %v567, 1
      %v570 = vor.u32 %v565, %v569
      %v572 = vshll.u32 %v492, 16
      %v574 = vrot.slane %v572, 1
      %v575 = vsel %vm503, %v570, %v574
      %v577 = vshrl.u32 %v445, 16
      %v579 = vshll.u32 %v445, 16
      %v581 = vrot.slane %v579, 1
      %v582 = vor.u32 %v577, %v581
      %v584 = vshll.u32 %v493, 16
      %v586 = vrot.slane %v584, 1
      %v587 = vsel %vm503, %v582, %v586
      %v589 = vshrl.u32 %v446, 16
      %v591 = vshll.u32 %v446, 16
      %v593 = vrot.slane %v591, 1
      %v594 = vor.u32 %v589, %v593
      %v596 = vshll.u32 %v494, 16
      %v598 = vrot.slane %v596, 1
      %v599 = vsel %vm503, %v594, %v598
      %v601 = vshrl.u32 %v447, 16
      %v603 = vshll.u32 %v447, 16
      %v605 = vrot.slane %v603, 1
      %v606 = vor.u32 %v601, %v605
      %v608 = vshll.u32 %v495, 16
      %v610 = vrot.slane %v608, 1
      %v611 = vsel %vm503, %v606, %v610
      %v613 = vshrl.u32 %v448, 16
      %v615 = vshll.u32 %v448, 16
      %v617 = vrot.slane %v615, 1
      %v618 = vor.u32 %v613, %v617
      %v620 = vshll.u32 %v496, 16
      %v622 = vrot.slane %v620, 1
      %v623 = vsel %vm503, %v618, %v622
      %v625 = vshrl.u32 %v449, 16
      %v627 = vshll.u32 %v449, 16
      %v629 = vrot.slane %v627, 1
      %v630 = vor.u32 %v625, %v629
      %v632 = vshll.u32 %v497, 16
      %v634 = vrot.slane %v632, 1
      %v635 = vsel %vm503, %v630, %v634
      %v637 = vshrl.u32 %v450, 16
      %v639 = vshll.u32 %v450, 16
      %v641 = vrot.slane %v639, 1
      %v642 = vor.u32 %v637, %v641
      %v644 = vshll.u32 %v498, 16
      %v646 = vrot.slane %v644, 1
      %v647 = vsel %vm503, %v642, %v646
      %v649 = vshrl.u32 %v451, 16
      %v651 = vshll.u32 %v451, 16
      %v653 = vrot.slane %v651, 1
      %v654 = vor.u32 %v649, %v653
      %v656 = vshll.u32 %v499, 16
      %v658 = vrot.slane %v656, 1
      %v659 = vsel %vm503, %v654, %v658
      %v661 = vshrl.u32 %v452, 16
      %v663 = vshll.u32 %v452, 16
      %v665 = vrot.slane %v663, 1
      %v666 = vor.u32 %v661, %v665
      %v668 = vshll.u32 %v500, 16
      %v670 = vrot.slane %v668, 1
      %v671 = vsel %vm503, %v666, %v670
      %v673 = vshrl.u32 %v453, 16
      %v675 = vshll.u32 %v453, 16
      %v677 = vrot.slane %v675, 1
      %v678 = vor.u32 %v673, %v677
      %v680 = vshll.u32 %v501, 16
      %v682 = vrot.slane %v680, 1
      %v683 = vsel %vm503, %v678, %v682
      %v685 = vshrl.u32 %v454, 16
      %v687 = vshll.u32 %v454, 16
      %v689 = vrot.slane %v687, 1
      %v690 = vor.u32 %v685, %v689
      %v692 = vshll.u32 %v502, 16
      %v694 = vrot.slane %v692, 1
      %v695 = vsel %vm503, %v690, %v694
      %696 = vrot.lane.b32.xlu0 %v515, 4
      %v697 = vpop.permute.xlu0 %696
      %698 = vrot.lane.b32.xlu0 %v527, 4
      %v699 = vpop.permute.xlu0 %698
      %700 = vrot.lane.b32.xlu0 %v539, 4
      %v701 = vpop.permute.xlu0 %700
      %702 = vrot.lane.b32.xlu0 %v551, 4
      %v703 = vpop.permute.xlu0 %702
      %704 = vrot.lane.b32.xlu0 %v563, 4
      %v705 = vpop.permute.xlu0 %704
      %706 = vrot.lane.b32.xlu0 %v575, 4
      %v707 = vpop.permute.xlu0 %706
      %708 = vrot.lane.b32.xlu0 %v587, 4
      %v709 = vpop.permute.xlu0 %708
      %710 = vrot.lane.b32.xlu0 %v599, 4
      %v711 = vpop.permute.xlu0 %710
      %712 = vrot.lane.b32.xlu0 %v611, 4
      %v713 = vpop.permute.xlu0 %712
      %714 = vrot.lane.b32.xlu0 %v623, 4
      %v715 = vpop.permute.xlu0 %714
      %716 = vrot.lane.b32.xlu0 %v635, 4
      %v717 = vpop.permute.xlu0 %716
      %718 = vrot.lane.b32.xlu0 %v647, 4
      %v719 = vpop.permute.xlu0 %718
      %720 = vrot.lane.b32.xlu0 %v659, 4
      %v721 = vpop.permute.xlu0 %720
      %722 = vrot.lane.b32.xlu0 %v671, 4
      %v723 = vpop.permute.xlu0 %722
      %724 = vrot.lane.b32.xlu0 %v683, 4
      %v725 = vpop.permute.xlu0 %724
      %726 = vrot.lane.b32.xlu0 %v695, 4
      %v727 = vpop.permute.xlu0 %726
      %vm728 = vcmask 1046528
      %v729 = vrot.slane %v439, 1
      %v730 = vrot.slane %v487, 1
      %v731 = vsel %vm728, %v729, %v730
      %v732 = vrot.slane %v440, 1
      %v733 = vrot.slane %v488, 1
      %v734 = vsel %vm728, %v732, %v733
      %v735 = vrot.slane %v441, 1
      %v736 = vrot.slane %v489, 1
      %v737 = vsel %vm728, %v735, %v736
      %v738 = vrot.slane %v442, 1
      %v739 = vrot.slane %v490, 1
      %v740 = vsel %vm728, %v738, %v739
      %v741 = vrot.slane %v443, 1
      %v742 = vrot.slane %v491, 1
      %v743 = vsel %vm728, %v741, %v742
      %v744 = vrot.slane %v444, 1
      %v745 = vrot.slane %v492, 1
      %v746 = vsel %vm728, %v744, %v745
      %v747 = vrot.slane %v445, 1
      %v748 = vrot.slane %v493, 1
      %v749 = vsel %vm728, %v747, %v748
      %v750 = vrot.slane %v446, 1
      %v751 = vrot.slane %v494, 1
      %v752 = vsel %vm728, %v750, %v751
      %v753 = vrot.slane %v447, 1
      %v754 = vrot.slane %v495, 1
      %v755 = vsel %vm728, %v753, %v754
      %v756 = vrot.slane %v448, 1
      %v757 = vrot.slane %v496, 1
      %v758 = vsel %vm728, %v756, %v757
      %v759 = vrot.slane %v449, 1
      %v760 = vrot.slane %v497, 1
      %v761 = vsel %vm728, %v759, %v760
      %v762 = vrot.slane %v450, 1
      %v763 = vrot.slane %v498, 1
      %v764 = vsel %vm728, %v762, %v763
      %v765 = vrot.slane %v451, 1
      %v766 = vrot.slane %v499, 1
      %v767 = vsel %vm728, %v765, %v766
      %v768 = vrot.slane %v452, 1
      %v769 = vrot.slane %v500, 1
      %v770 = vsel %vm728, %v768, %v769
      %v771 = vrot.slane %v453, 1
      %v772 = vrot.slane %v501, 1
      %v773 = vsel %vm728, %v771, %v772
      %v774 = vrot.slane %v454, 1
      %v775 = vrot.slane %v502, 1
      %v776 = vsel %vm728, %v774, %v775
      %777 = vrot.lane.b32.xlu0 %v731, 8
      %v778 = vpop.permute.xlu0 %777
      %779 = vrot.lane.b32.xlu0 %v734, 8
      %v780 = vpop.permute.xlu0 %779
      %781 = vrot.lane.b32.xlu0 %v737, 8
      %v782 = vpop.permute.xlu0 %781
      %783 = vrot.lane.b32.xlu0 %v740, 8
      %v784 = vpop.permute.xlu0 %783
      %785 = vrot.lane.b32.xlu0 %v743, 8
      %v786 = vpop.permute.xlu0 %785
      %787 = vrot.lane.b32.xlu0 %v746, 8
      %v788 = vpop.permute.xlu0 %787
      %789 = vrot.lane.b32.xlu0 %v749, 8
      %v790 = vpop.permute.xlu0 %789
      %791 = vrot.lane.b32.xlu0 %v752, 8
      %v792 = vpop.permute.xlu0 %791
      %793 = vrot.lane.b32.xlu0 %v755, 8
      %v794 = vpop.permute.xlu0 %793
      %795 = vrot.lane.b32.xlu0 %v758, 8
      %v796 = vpop.permute.xlu0 %795
      %797 = vrot.lane.b32.xlu0 %v761, 8
      %v798 = vpop.permute.xlu0 %797
      %799 = vrot.lane.b32.xlu0 %v764, 8
      %v800 = vpop.permute.xlu0 %799
      %801 = vrot.lane.b32.xlu0 %v767, 8
      %v802 = vpop.permute.xlu0 %801
      %803 = vrot.lane.b32.xlu0 %v770, 8
      %v804 = vpop.permute.xlu0 %803
      %805 = vrot.lane.b32.xlu0 %v773, 8
      %v806 = vpop.permute.xlu0 %805
      %807 = vrot.lane.b32.xlu0 %v776, 8
      %v808 = vpop.permute.xlu0 %807
      %vm809 = vcmask 31744
      %v811 = vsel %vm809, %v439, %v697
      %v813 = vsel %vm809, %v440, %v699
      %v815 = vsel %vm809, %v441, %v701
      %v817 = vsel %vm809, %v442, %v703
      %v819 = vsel %vm809, %v443, %v705
      %v821 = vsel %vm809, %v444, %v707
      %v823 = vsel %vm809, %v445, %v709
      %v825 = vsel %vm809, %v446, %v711
      %v827 = vsel %vm809, %v447, %v713
      %v829 = vsel %vm809, %v448, %v715
      %v831 = vsel %vm809, %v449, %v717
      %v833 = vsel %vm809, %v450, %v719
      %v835 = vsel %vm809, %v451, %v721
      %v837 = vsel %vm809, %v452, %v723
      %v839 = vsel %vm809, %v453, %v725
      %v841 = vsel %vm809, %v454, %v727
      %vm842 = vcmask 64512
      %v844 = vsel %vm842, %v811, %v778
      %v846 = vsel %vm842, %v813, %v780
      %v848 = vsel %vm842, %v815, %v782
      %v850 = vsel %vm842, %v817, %v784
      %v852 = vsel %vm842, %v819, %v786
      %v854 = vsel %vm842, %v821, %v788
      %v856 = vsel %vm842, %v823, %v790
      %v858 = vsel %vm842, %v825, %v792
      %v860 = vsel %vm842, %v827, %v794
      %v862 = vsel %vm842, %v829, %v796
      %v864 = vsel %vm842, %v831, %v798
      %v866 = vsel %vm842, %v833, %v800
      %v868 = vsel %vm842, %v835, %v802
      %v870 = vsel %vm842, %v837, %v804
      %v872 = vsel %vm842, %v839, %v806
      %v874 = vsel %vm842, %v841, %v808
      %v875 = vld [vmem:[%s2] sm:$0xf]
      %v876 = vld [vmem:[%s2 + $0x4] sm:$0x3]
      %v879 = vunpack.c.l.b16 %v369
      %v880 = vunpack.c.l.b16 %v370
      %v881 = vpack.c.b16 %v880, %v879
      %v883 = vunpack.c.l.b16 %v371
      %v884 = vpack.c.b16 %v883, %v883
      %v886 = vshrl.u32 %v881, 16
      %v888 = vshll.u32 %v881, 16
      %v890 = vrot.slane %v888, 1
      %v891 = vor.u32 %v886, %v890
      %v893 = vshll.u32 %v884, 16
      %v895 = vrot.slane %v893, 1
      %v896 = vsel %vm503, %v891, %v895
      %897 = vrot.lane.b32.xlu0 %v896, 4
      %v898 = vpop.permute.xlu0 %897
      %v899 = vrot.slane %v881, 1
      %v900 = vrot.slane %v884, 1
      %v901 = vsel %vm728, %v899, %v900
      %902 = vrot.lane.b32.xlu0 %v901, 8
      %v903 = vpop.permute.xlu0 %902
      %v905 = vsel %vm809, %v881, %v898
      %v907 = vsel %vm842, %v905, %v903
      %s908 = scalar_lea.vmem %s2, 8
      %v909 = vld [vmem:[%s908] sm:$0xf]
      %v910 = vld [vmem:[%s908 + $0x4] sm:$0x3]
      %v913 = vunpack.c.l.b16 %v909
      %v914 = vunpack.c.l.b16 %v910
      %v915 = vpack.c.b16 %v914, %v913
      %vm916 = vcmask 97280
      %v917 = vsel %vm916, %v846, 0
      %v919 = vsel %vm916, %v848, 0
      %v921 = vsel %vm916, %v850, 0
      %v923 = vsel %vm916, %v852, 0
      %v925 = vsel %vm916, %v854, 0
      %v927 = vsel %vm916, %v856, 0
      %v929 = vsel %vm916, %v858, 0
      %v931 = vsel %vm916, %v860, 0
      %v933 = vsel %vm916, %v862, 0
      %v935 = vsel %vm916, %v864, 0
      %v937 = vsel %vm916, %v866, 0
      %v939 = vsel %vm916, %v868, 0
      %v941 = vsel %vm916, %v870, 0
      %v943 = vsel %vm916, %v872, 0
      %v945 = vsel %vm916, %v874, 0
      %v947 = vsel %vm916, %v907, 0
      %vm949 = vcmask 1045504
      %v951 = vsel %vm949, %v915, 0
      %953 = vmatprep.subr.bf16.mxu0 0
      %954 = vmatpush1.bf16.msra.mxu0 0
      %955 = vmatprep.subr.bf16.mxu0 0
      %956 = vmatpush1.bf16.msra.mxu0 0
      %957 = vmatprep.subr.bf16.mxu0 0
      %958 = vmatpush1.bf16.msra.mxu0 0
      %959 = vmatprep.subr.bf16.mxu0 0
      %960 = vmatpush1.bf16.msra.mxu0 0
      %961 = vmatprep.subr.bf16.mxu0 0
      %962 = vmatpush1.bf16.msra.mxu0 0
      %963 = vmatprep.subr.bf16.mxu0 0
      %964 = vmatpush1.bf16.msra.mxu0 0
      %965 = vmatprep.subr.bf16.mxu0 0
      %966 = vmatpush1.bf16.msra.mxu0 0
      %967 = vmatprep.subr.bf16.mxu0 0
      %968 = vmatpush1.bf16.msra.mxu0 %v951
      %969 = vmatprep.subr.bf16.mxu0 0
      %970 = vmatpush2.bf16.msra.mxu0 0
      %971 = vmatprep.subr.bf16.mxu0 0
      %972 = vmatpush2.bf16.msra.mxu0 0
      %973 = vmatprep.subr.bf16.mxu0 0
      %974 = vmatpush2.bf16.msra.mxu0 0
      %975 = vmatprep.subr.bf16.mxu0 0
      %976 = vmatpush2.bf16.msra.mxu0 0
      %977 = vmatprep.subr.bf16.mxu0 0
      %978 = vmatpush2.bf16.msra.mxu0 0
      %979 = vmatprep.subr.bf16.mxu0 0
      %980 = vmatpush2.bf16.msra.mxu0 0
      %981 = vmatprep.subr.bf16.mxu0 0
      %982 = vmatpush2.bf16.msra.mxu0 0
      %983 = vmatprep.subr.bf16.mxu0 0
      %984 = vmatpush2.bf16.msra.mxu0 0
      %985 = vmatprep.mubr.bf16.mxu0 0
      %986 = vmatmul.mubr.bf16.gmra.mxu0 %v917
      %v987 = vpop.f32.mrf.mxu0
      %v988 = vadd.f32 0.0, %v987
      %v989 = vpop.f32.mrf.mxu0
      %v990 = vpop.f32.mrf.mxu0
      %v991 = vadd.f32 0.0, %v990
      %v992 = vpop.f32.mrf.mxu0
      %993 = vmatprep.mubr.bf16.mxu0 0
      %994 = vmatmul.mubr.bf16.gmra.mxu0 %v919
      %v995 = vpop.f32.mrf.mxu0
      %v996 = vadd.f32 0.0, %v995
      %v997 = vpop.f32.mrf.mxu0
      %v998 = vpop.f32.mrf.mxu0
      %v999 = vadd.f32 0.0, %v998
      %v1000 = vpop.f32.mrf.mxu0
      %1001 = vmatprep.mubr.bf16.mxu0 0
      %1002 = vmatmul.mubr.bf16.gmra.mxu0 %v921
      %v1003 = vpop.f32.mrf.mxu0
      %v1004 = vadd.f32 0.0, %v1003
      %v1005 = vpop.f32.mrf.mxu0
      %v1006 = vpop.f32.mrf.mxu0
      %v1007 = vadd.f32 0.0, %v1006
      %v1008 = vpop.f32.mrf.mxu0
      %1009 = vmatprep.mubr.bf16.mxu0 0
      %1010 = vmatmul.mubr.bf16.gmra.mxu0 %v923
      %v1011 = vpop.f32.mrf.mxu0
      %v1012 = vadd.f32 0.0, %v1011
      %v1013 = vpop.f32.mrf.mxu0
      %v1014 = vpop.f32.mrf.mxu0
      %v1015 = vadd.f32 0.0, %v1014
      %v1016 = vpop.f32.mrf.mxu0
      %1017 = vmatprep.mubr.bf16.mxu0 0
      %1018 = vmatmul.mubr.bf16.gmra.mxu0 %v925
      %v1019 = vpop.f32.mrf.mxu0
      %v1020 = vadd.f32 0.0, %v1019
      %v1021 = vpop.f32.mrf.mxu0
      %v1022 = vpop.f32.mrf.mxu0
      %v1023 = vadd.f32 0.0, %v1022
      %v1024 = vpop.f32.mrf.mxu0
      %1025 = vmatprep.mubr.bf16.mxu0 0
      %1026 = vmatmul.mubr.bf16.gmra.mxu0 %v927
      %v1027 = vpop.f32.mrf.mxu0
      %v1028 = vadd.f32 0.0, %v1027
      %v1029 = vpop.f32.mrf.mxu0
      %v1030 = vpop.f32.mrf.mxu0
      %v1031 = vadd.f32 0.0, %v1030
      %v1032 = vpop.f32.mrf.mxu0
      %1033 = vmatprep.mubr.bf16.mxu0 0
      %1034 = vmatmul.mubr.bf16.gmra.mxu0 %v929
      %v1035 = vpop.f32.mrf.mxu0
      %v1036 = vadd.f32 0.0, %v1035
      %v1037 = vpop.f32.mrf.mxu0
      %v1038 = vpop.f32.mrf.mxu0
      %v1039 = vadd.f32 0.0, %v1038
      %v1040 = vpop.f32.mrf.mxu0
      %1041 = vmatprep.mubr.bf16.mxu0 0
      %1042 = vmatmul.mubr.bf16.gmra.mxu0 %v931
      %v1043 = vpop.f32.mrf.mxu0
      %v1044 = vadd.f32 0.0, %v1043
      %v1045 = vpop.f32.mrf.mxu0
      %v1046 = vpop.f32.mrf.mxu0
      %v1047 = vadd.f32 0.0, %v1046
      %v1048 = vpop.f32.mrf.mxu0
      %1049 = vmatprep.mubr.bf16.mxu0 0
      %1050 = vmatmul.mubr.bf16.gmra.mxu0 %v933
      %v1051 = vpop.f32.mrf.mxu0
      %v1052 = vadd.f32 0.0, %v1051
      %v1053 = vpop.f32.mrf.mxu0
      %v1054 = vpop.f32.mrf.mxu0
      %v1055 = vadd.f32 0.0, %v1054
      %v1056 = vpop.f32.mrf.mxu0
      %1057 = vmatprep.mubr.bf16.mxu0 0
      %1058 = vmatmul.mubr.bf16.gmra.mxu0 %v935
      %v1059 = vpop.f32.mrf.mxu0
      %v1060 = vadd.f32 0.0, %v1059
      %v1061 = vpop.f32.mrf.mxu0
      %v1062 = vpop.f32.mrf.mxu0
      %v1063 = vadd.f32 0.0, %v1062
      %v1064 = vpop.f32.mrf.mxu0
      %1065 = vmatprep.mubr.bf16.mxu0 0
      %1066 = vmatmul.mubr.bf16.gmra.mxu0 %v937
      %v1067 = vpop.f32.mrf.mxu0
      %v1068 = vadd.f32 0.0, %v1067
      %v1069 = vpop.f32.mrf.mxu0
      %v1070 = vpop.f32.mrf.mxu0
      %v1071 = vadd.f32 0.0, %v1070
      %v1072 = vpop.f32.mrf.mxu0
      %1073 = vmatprep.mubr.bf16.mxu0 0
      %1074 = vmatmul.mubr.bf16.gmra.mxu0 %v939
      %v1075 = vpop.f32.mrf.mxu0
      %v1076 = vadd.f32 0.0, %v1075
      %v1077 = vpop.f32.mrf.mxu0
      %v1078 = vpop.f32.mrf.mxu0
      %v1079 = vadd.f32 0.0, %v1078
      %v1080 = vpop.f32.mrf.mxu0
      %1081 = vmatprep.mubr.bf16.mxu0 0
      %1082 = vmatmul.mubr.bf16.gmra.mxu0 %v941
      %v1083 = vpop.f32.mrf.mxu0
      %v1084 = vadd.f32 0.0, %v1083
      %v1085 = vpop.f32.mrf.mxu0
      %v1086 = vpop.f32.mrf.mxu0
      %v1087 = vadd.f32 0.0, %v1086
      %v1088 = vpop.f32.mrf.mxu0
      %1089 = vmatprep.mubr.bf16.mxu0 0
      %1090 = vmatmul.mubr.bf16.gmra.mxu0 %v943
      %v1091 = vpop.f32.mrf.mxu0
      %v1092 = vadd.f32 0.0, %v1091
      %v1093 = vpop.f32.mrf.mxu0
      %v1094 = vpop.f32.mrf.mxu0
      %v1095 = vadd.f32 0.0, %v1094
      %v1096 = vpop.f32.mrf.mxu0
      %1097 = vmatprep.mubr.bf16.mxu0 0
      %1098 = vmatmul.mubr.bf16.gmra.mxu0 %v945
      %v1099 = vpop.f32.mrf.mxu0
      %v1100 = vadd.f32 0.0, %v1099
      %v1101 = vpop.f32.mrf.mxu0
      %v1102 = vpop.f32.mrf.mxu0
      %v1103 = vadd.f32 0.0, %v1102
      %v1104 = vpop.f32.mrf.mxu0
      %1105 = vmatprep.mubr.bf16.mxu0 0
      %1106 = vmatmul.mubr.bf16.gmra.mxu0 %v947
      %v1107 = vpop.f32.mrf.mxu0
      %v1108 = vadd.f32 0.0, %v1107
      %v1109 = vpop.f32.mrf.mxu0
      %v1110 = vpop.f32.mrf.mxu0
      %v1111 = vadd.f32 0.0, %v1110
      %v1112 = vpop.f32.mrf.mxu0
      %1113 = vdwg.mxu0
      %v1116 = vunpack.c.l.b16 %v875
      %v1117 = vunpack.c.l.b16 %v876
      %v1118 = vpack.c.b16 %v1117, %v1116
      %v1119 = vsel %vm916, %v844, 0
      %v1122 = vsel %vm949, %v1118, 0
      %1124 = vmatprep.subr.bf16.mxu0 0
      %1125 = vmatpush1.bf16.msra.mxu0 0
      %1126 = vmatprep.subr.bf16.mxu0 0
      %1127 = vmatpush1.bf16.msra.mxu0 0
      %1128 = vmatprep.subr.bf16.mxu0 0
      %1129 = vmatpush1.bf16.msra.mxu0 0
      %1130 = vmatprep.subr.bf16.mxu0 0
      %1131 = vmatpush1.bf16.msra.mxu0 0
      %1132 = vmatprep.subr.bf16.mxu0 0
      %1133 = vmatpush1.bf16.msra.mxu0 0
      %1134 = vmatprep.subr.bf16.mxu0 0
      %1135 = vmatpush1.bf16.msra.mxu0 0
      %1136 = vmatprep.subr.bf16.mxu0 0
      %1137 = vmatpush1.bf16.msra.mxu0 0
      %1138 = vmatprep.subr.bf16.mxu0 0
      %1139 = vmatpush1.bf16.msra.mxu0 %v1122
      %1140 = vmatprep.subr.bf16.mxu0 0
      %1141 = vmatpush2.bf16.msra.mxu0 0
      %1142 = vmatprep.subr.bf16.mxu0 0
      %1143 = vmatpush2.bf16.msra.mxu0 0
      %1144 = vmatprep.subr.bf16.mxu0 0
      %1145 = vmatpush2.bf16.msra.mxu0 0
      %1146 = vmatprep.subr.bf16.mxu0 0
      %1147 = vmatpush2.bf16.msra.mxu0 0
      %1148 = vmatprep.subr.bf16.mxu0 0
      %1149 = vmatpush2.bf16.msra.mxu0 0
      %1150 = vmatprep.subr.bf16.mxu0 0
      %1151 = vmatpush2.bf16.msra.mxu0 0
      %1152 = vmatprep.subr.bf16.mxu0 0
      %1153 = vmatpush2.bf16.msra.mxu0 0
      %1154 = vmatprep.subr.bf16.mxu0 0
      %1155 = vmatpush2.bf16.msra.mxu0 0
      %1156 = vmatprep.mubr.bf16.mxu0 0
      %1157 = vmatmul.mubr.bf16.gmra.mxu0 %v1119
      %v1158 = vpop.f32.mrf.mxu0
      %v1159 = vadd.f32 %v988, %v1158
      %v1160 = vpop.f32.mrf.mxu0
      %v1161 = vpop.f32.mrf.mxu0
      %v1162 = vadd.f32 %v991, %v1161
      %v1163 = vpop.f32.mrf.mxu0
      %1164 = vmatprep.mubr.bf16.mxu0 0
      %1165 = vmatmul.mubr.bf16.gmra.mxu0 %v917
      %v1166 = vpop.f32.mrf.mxu0
      %v1167 = vadd.f32 %v996, %v1166
      %v1168 = vpop.f32.mrf.mxu0
      %v1169 = vpop.f32.mrf.mxu0
      %v1170 = vadd.f32 %v999, %v1169
      %v1171 = vpop.f32.mrf.mxu0
      %1172 = vmatprep.mubr.bf16.mxu0 0
      %1173 = vmatmul.mubr.bf16.gmra.mxu0 %v919
      %v1174 = vpop.f32.mrf.mxu0
      %v1175 = vadd.f32 %v1004, %v1174
      %v1176 = vpop.f32.mrf.mxu0
      %v1177 = vpop.f32.mrf.mxu0
      %v1178 = vadd.f32 %v1007, %v1177
      %v1179 = vpop.f32.mrf.mxu0
      %1180 = vmatprep.mubr.bf16.mxu0 0
      %1181 = vmatmul.mubr.bf16.gmra.mxu0 %v921
      %v1182 = vpop.f32.mrf.mxu0
      %v1183 = vadd.f32 %v1012, %v1182
      %v1184 = vpop.f32.mrf.mxu0
      %v1185 = vpop.f32.mrf.mxu0
      %v1186 = vadd.f32 %v1015, %v1185
      %v1187 = vpop.f32.mrf.mxu0
      %1188 = vmatprep.mubr.bf16.mxu0 0
      %1189 = vmatmul.mubr.bf16.gmra.mxu0 %v923
      %v1190 = vpop.f32.mrf.mxu0
      %v1191 = vadd.f32 %v1020, %v1190
      %v1192 = vpop.f32.mrf.mxu0
      %v1193 = vpop.f32.mrf.mxu0
      %v1194 = vadd.f32 %v1023, %v1193
      %v1195 = vpop.f32.mrf.mxu0
      %1196 = vmatprep.mubr.bf16.mxu0 0
      %1197 = vmatmul.mubr.bf16.gmra.mxu0 %v925
      %v1198 = vpop.f32.mrf.mxu0
      %v1199 = vadd.f32 %v1028, %v1198
      %v1200 = vpop.f32.mrf.mxu0
      %v1201 = vpop.f32.mrf.mxu0
      %v1202 = vadd.f32 %v1031, %v1201
      %v1203 = vpop.f32.mrf.mxu0
      %1204 = vmatprep.mubr.bf16.mxu0 0
      %1205 = vmatmul.mubr.bf16.gmra.mxu0 %v927
      %v1206 = vpop.f32.mrf.mxu0
      %v1207 = vadd.f32 %v1036, %v1206
      %v1208 = vpop.f32.mrf.mxu0
      %v1209 = vpop.f32.mrf.mxu0
      %v1210 = vadd.f32 %v1039, %v1209
      %v1211 = vpop.f32.mrf.mxu0
      %1212 = vmatprep.mubr.bf16.mxu0 0
      %1213 = vmatmul.mubr.bf16.gmra.mxu0 %v929
      %v1214 = vpop.f32.mrf.mxu0
      %v1215 = vadd.f32 %v1044, %v1214
      %v1216 = vpop.f32.mrf.mxu0
      %v1217 = vpop.f32.mrf.mxu0
      %v1218 = vadd.f32 %v1047, %v1217
      %v1219 = vpop.f32.mrf.mxu0
      %1220 = vmatprep.mubr.bf16.mxu0 0
      %1221 = vmatmul.mubr.bf16.gmra.mxu0 %v931
      %v1222 = vpop.f32.mrf.mxu0
      %v1223 = vadd.f32 %v1052, %v1222
      %v1224 = vpop.f32.mrf.mxu0
      %v1225 = vpop.f32.mrf.mxu0
      %v1226 = vadd.f32 %v1055, %v1225
      %v1227 = vpop.f32.mrf.mxu0
      %1228 = vmatprep.mubr.bf16.mxu0 0
      %1229 = vmatmul.mubr.bf16.gmra.mxu0 %v933
      %v1230 = vpop.f32.mrf.mxu0
      %v1231 = vadd.f32 %v1060, %v1230
      %v1232 = vpop.f32.mrf.mxu0
      %v1233 = vpop.f32.mrf.mxu0
      %v1234 = vadd.f32 %v1063, %v1233
      %v1235 = vpop.f32.mrf.mxu0
      %1236 = vmatprep.mubr.bf16.mxu0 0
      %1237 = vmatmul.mubr.bf16.gmra.mxu0 %v935
      %v1238 = vpop.f32.mrf.mxu0
      %v1239 = vadd.f32 %v1068, %v1238
      %v1240 = vpop.f32.mrf.mxu0
      %v1241 = vpop.f32.mrf.mxu0
      %v1242 = vadd.f32 %v1071, %v1241
      %v1243 = vpop.f32.mrf.mxu0
      %1244 = vmatprep.mubr.bf16.mxu0 0
      %1245 = vmatmul.mubr.bf16.gmra.mxu0 %v937
      %v1246 = vpop.f32.mrf.mxu0
      %v1247 = vadd.f32 %v1076, %v1246
      %v1248 = vpop.f32.mrf.mxu0
      %v1249 = vpop.f32.mrf.mxu0
      %v1250 = vadd.f32 %v1079, %v1249
      %v1251 = vpop.f32.mrf.mxu0
      %1252 = vmatprep.mubr.bf16.mxu0 0
      %1253 = vmatmul.mubr.bf16.gmra.mxu0 %v939
      %v1254 = vpop.f32.mrf.mxu0
      %v1255 = vadd.f32 %v1084, %v1254
      %v1256 = vpop.f32.mrf.mxu0
      %v1257 = vpop.f32.mrf.mxu0
      %v1258 = vadd.f32 %v1087, %v1257
      %v1259 = vpop.f32.mrf.mxu0
      %1260 = vmatprep.mubr.bf16.mxu0 0
      %1261 = vmatmul.mubr.bf16.gmra.mxu0 %v941
      %v1262 = vpop.f32.mrf.mxu0
      %v1263 = vadd.f32 %v1092, %v1262
      %v1264 = vpop.f32.mrf.mxu0
      %v1265 = vpop.f32.mrf.mxu0
      %v1266 = vadd.f32 %v1095, %v1265
      %v1267 = vpop.f32.mrf.mxu0
      %1268 = vmatprep.mubr.bf16.mxu0 0
      %1269 = vmatmul.mubr.bf16.gmra.mxu0 %v943
      %v1270 = vpop.f32.mrf.mxu0
      %v1271 = vadd.f32 %v1100, %v1270
      %v1272 = vpop.f32.mrf.mxu0
      %v1273 = vpop.f32.mrf.mxu0
      %v1274 = vadd.f32 %v1103, %v1273
      %v1275 = vpop.f32.mrf.mxu0
      %1276 = vmatprep.mubr.bf16.mxu0 0
      %1277 = vmatmul.mubr.bf16.gmra.mxu0 %v945
      %v1278 = vpop.f32.mrf.mxu0
      %v1279 = vadd.f32 %v1108, %v1278
      %v1280 = vpop.f32.mrf.mxu0
      %v1281 = vpop.f32.mrf.mxu0
      %v1282 = vadd.f32 %v1111, %v1281
      %v1283 = vpop.f32.mrf.mxu0
      %1284 = vdwg.mxu0
      %v1287 = vunpack.c.l.b16 %v372
      %v1288 = vunpack.c.l.b16 %v373
      %v1289 = vpack.c.b16 %v1288, %v1287
      %v1291 = vunpack.c.l.b16 %v374
      %v1292 = vpack.c.b16 %v1291, %v1291
      %v1294 = vshrl.u32 %v1289, 16
      %v1296 = vshll.u32 %v1289, 16
      %v1298 = vrot.slane %v1296, 1
      %v1299 = vor.u32 %v1294, %v1298
      %v1301 = vshll.u32 %v1292, 16
      %v1303 = vrot.slane %v1301, 1
      %v1304 = vsel %vm503, %v1299, %v1303
      %1305 = vrot.lane.b32.xlu0 %v1304, 4
      %v1306 = vpop.permute.xlu0 %1305
      %v1307 = vrot.slane %v1289, 1
      %v1308 = vrot.slane %v1292, 1
      %v1309 = vsel %vm728, %v1307, %v1308
      %1310 = vrot.lane.b32.xlu0 %v1309, 8
      %v1311 = vpop.permute.xlu0 %1310
      %v1313 = vsel %vm809, %v1289, %v1306
      %v1315 = vsel %vm842, %v1313, %v1311
      %s1316 = scalar_lea.vmem %s2, 16
      %v1317 = vld [vmem:[%s1316] sm:$0xf]
      %v1318 = vld [vmem:[%s1316 + $0x4] sm:$0x3]
      %v1321 = vunpack.c.l.b16 %v1317
      %v1322 = vunpack.c.l.b16 %v1318
      %v1323 = vpack.c.b16 %v1322, %v1321
      %v1324 = vsel %vm916, %v1315, 0
      %v1327 = vsel %vm949, %v1323, 0
      %1329 = vmatprep.subr.bf16.mxu0 0
      %1330 = vmatpush1.bf16.msra.mxu0 0
      %1331 = vmatprep.subr.bf16.mxu0 0
      %1332 = vmatpush1.bf16.msra.mxu0 0
      %1333 = vmatprep.subr.bf16.mxu0 0
      %1334 = vmatpush1.bf16.msra.mxu0 0
      %1335 = vmatprep.subr.bf16.mxu0 0
      %1336 = vmatpush1.bf16.msra.mxu0 0
      %1337 = vmatprep.subr.bf16.mxu0 0
      %1338 = vmatpush1.bf16.msra.mxu0 0
      %1339 = vmatprep.subr.bf16.mxu0 0
      %1340 = vmatpush1.bf16.msra.mxu0 0
      %1341 = vmatprep.subr.bf16.mxu0 0
      %1342 = vmatpush1.bf16.msra.mxu0 0
      %1343 = vmatprep.subr.bf16.mxu0 0
      %1344 = vmatpush1.bf16.msra.mxu0 %v1327
      %1345 = vmatprep.subr.bf16.mxu0 0
      %1346 = vmatpush2.bf16.msra.mxu0 0
      %1347 = vmatprep.subr.bf16.mxu0 0
      %1348 = vmatpush2.bf16.msra.mxu0 0
      %1349 = vmatprep.subr.bf16.mxu0 0
      %1350 = vmatpush2.bf16.msra.mxu0 0
      %1351 = vmatprep.subr.bf16.mxu0 0
      %1352 = vmatpush2.bf16.msra.mxu0 0
      %1353 = vmatprep.subr.bf16.mxu0 0
      %1354 = vmatpush2.bf16.msra.mxu0 0
      %1355 = vmatprep.subr.bf16.mxu0 0
      %1356 = vmatpush2.bf16.msra.mxu0 0
      %1357 = vmatprep.subr.bf16.mxu0 0
      %1358 = vmatpush2.bf16.msra.mxu0 0
      %1359 = vmatprep.subr.bf16.mxu0 0
      %1360 = vmatpush2.bf16.msra.mxu0 0
      %1361 = vmatprep.mubr.bf16.mxu0 0
      %1362 = vmatmul.mubr.bf16.gmra.mxu0 %v919
      %v1363 = vpop.f32.mrf.mxu0
      %v1364 = vadd.f32 0.0, %v1363
      %v1365 = vpop.f32.mrf.mxu0
      %v1366 = vpop.f32.mrf.mxu0
      %v1367 = vadd.f32 0.0, %v1366
      %v1368 = vpop.f32.mrf.mxu0
      %1369 = vmatprep.mubr.bf16.mxu0 0
      %1370 = vmatmul.mubr.bf16.gmra.mxu0 %v921
      %v1371 = vpop.f32.mrf.mxu0
      %v1372 = vadd.f32 0.0, %v1371
      %v1373 = vpop.f32.mrf.mxu0
      %v1374 = vpop.f32.mrf.mxu0
      %v1375 = vadd.f32 0.0, %v1374
      %v1376 = vpop.f32.mrf.mxu0
      %1377 = vmatprep.mubr.bf16.mxu0 0
      %1378 = vmatmul.mubr.bf16.gmra.mxu0 %v923
      %v1379 = vpop.f32.mrf.mxu0
      %v1380 = vadd.f32 0.0, %v1379
      %v1381 = vpop.f32.mrf.mxu0
      %v1382 = vpop.f32.mrf.mxu0
      %v1383 = vadd.f32 0.0, %v1382
      %v1384 = vpop.f32.mrf.mxu0
      %1385 = vmatprep.mubr.bf16.mxu0 0
      %1386 = vmatmul.mubr.bf16.gmra.mxu0 %v925
      %v1387 = vpop.f32.mrf.mxu0
      %v1388 = vadd.f32 0.0, %v1387
      %v1389 = vpop.f32.mrf.mxu0
      %v1390 = vpop.f32.mrf.mxu0
      %v1391 = vadd.f32 0.0, %v1390
      %v1392 = vpop.f32.mrf.mxu0
      %1393 = vmatprep.mubr.bf16.mxu0 0
      %1394 = vmatmul.mubr.bf16.gmra.mxu0 %v927
      %v1395 = vpop.f32.mrf.mxu0
      %v1396 = vadd.f32 0.0, %v1395
      %v1397 = vpop.f32.mrf.mxu0
      %v1398 = vpop.f32.mrf.mxu0
      %v1399 = vadd.f32 0.0, %v1398
      %v1400 = vpop.f32.mrf.mxu0
      %1401 = vmatprep.mubr.bf16.mxu0 0
      %1402 = vmatmul.mubr.bf16.gmra.mxu0 %v929
      %v1403 = vpop.f32.mrf.mxu0
      %v1404 = vadd.f32 0.0, %v1403
      %v1405 = vpop.f32.mrf.mxu0
      %v1406 = vpop.f32.mrf.mxu0
      %v1407 = vadd.f32 0.0, %v1406
      %v1408 = vpop.f32.mrf.mxu0
      %1409 = vmatprep.mubr.bf16.mxu0 0
      %1410 = vmatmul.mubr.bf16.gmra.mxu0 %v931
      %v1411 = vpop.f32.mrf.mxu0
      %v1412 = vadd.f32 0.0, %v1411
      %v1413 = vpop.f32.mrf.mxu0
      %v1414 = vpop.f32.mrf.mxu0
      %v1415 = vadd.f32 0.0, %v1414
      %v1416 = vpop.f32.mrf.mxu0
      %1417 = vmatprep.mubr.bf16.mxu0 0
      %1418 = vmatmul.mubr.bf16.gmra.mxu0 %v933
      %v1419 = vpop.f32.mrf.mxu0
      %v1420 = vadd.f32 0.0, %v1419
      %v1421 = vpop.f32.mrf.mxu0
      %v1422 = vpop.f32.mrf.mxu0
      %v1423 = vadd.f32 0.0, %v1422
      %v1424 = vpop.f32.mrf.mxu0
      %1425 = vmatprep.mubr.bf16.mxu0 0
      %1426 = vmatmul.mubr.bf16.gmra.mxu0 %v935
      %v1427 = vpop.f32.mrf.mxu0
      %v1428 = vadd.f32 0.0, %v1427
      %v1429 = vpop.f32.mrf.mxu0
      %v1430 = vpop.f32.mrf.mxu0
      %v1431 = vadd.f32 0.0, %v1430
      %v1432 = vpop.f32.mrf.mxu0
      %1433 = vmatprep.mubr.bf16.mxu0 0
      %1434 = vmatmul.mubr.bf16.gmra.mxu0 %v937
      %v1435 = vpop.f32.mrf.mxu0
      %v1436 = vadd.f32 0.0, %v1435
      %v1437 = vpop.f32.mrf.mxu0
      %v1438 = vpop.f32.mrf.mxu0
      %v1439 = vadd.f32 0.0, %v1438
      %v1440 = vpop.f32.mrf.mxu0
      %1441 = vmatprep.mubr.bf16.mxu0 0
      %1442 = vmatmul.mubr.bf16.gmra.mxu0 %v939
      %v1443 = vpop.f32.mrf.mxu0
      %v1444 = vadd.f32 0.0, %v1443
      %v1445 = vpop.f32.mrf.mxu0
      %v1446 = vpop.f32.mrf.mxu0
      %v1447 = vadd.f32 0.0, %v1446
      %v1448 = vpop.f32.mrf.mxu0
      %1449 = vmatprep.mubr.bf16.mxu0 0
      %1450 = vmatmul.mubr.bf16.gmra.mxu0 %v941
      %v1451 = vpop.f32.mrf.mxu0
      %v1452 = vadd.f32 0.0, %v1451
      %v1453 = vpop.f32.mrf.mxu0
      %v1454 = vpop.f32.mrf.mxu0
      %v1455 = vadd.f32 0.0, %v1454
      %v1456 = vpop.f32.mrf.mxu0
      %1457 = vmatprep.mubr.bf16.mxu0 0
      %1458 = vmatmul.mubr.bf16.gmra.mxu0 %v943
      %v1459 = vpop.f32.mrf.mxu0
      %v1460 = vadd.f32 0.0, %v1459
      %v1461 = vpop.f32.mrf.mxu0
      %v1462 = vpop.f32.mrf.mxu0
      %v1463 = vadd.f32 0.0, %v1462
      %v1464 = vpop.f32.mrf.mxu0
      %1465 = vmatprep.mubr.bf16.mxu0 0
      %1466 = vmatmul.mubr.bf16.gmra.mxu0 %v945
      %v1467 = vpop.f32.mrf.mxu0
      %v1468 = vadd.f32 0.0, %v1467
      %v1469 = vpop.f32.mrf.mxu0
      %v1470 = vpop.f32.mrf.mxu0
      %v1471 = vadd.f32 0.0, %v1470
      %v1472 = vpop.f32.mrf.mxu0
      %1473 = vmatprep.mubr.bf16.mxu0 0
      %1474 = vmatmul.mubr.bf16.gmra.mxu0 %v947
      %v1475 = vpop.f32.mrf.mxu0
      %v1476 = vadd.f32 0.0, %v1475
      %v1477 = vpop.f32.mrf.mxu0
      %v1478 = vpop.f32.mrf.mxu0
      %v1479 = vadd.f32 0.0, %v1478
      %v1480 = vpop.f32.mrf.mxu0
      %1481 = vmatprep.mubr.bf16.mxu0 0
      %1482 = vmatmul.mubr.bf16.gmra.mxu0 %v1324
      %v1483 = vpop.f32.mrf.mxu0
      %v1484 = vadd.f32 0.0, %v1483
      %v1485 = vpop.f32.mrf.mxu0
      %v1486 = vpop.f32.mrf.mxu0
      %v1487 = vadd.f32 0.0, %v1486
      %v1488 = vpop.f32.mrf.mxu0
      %1489 = vdwg.mxu0
      %v1490 = vadd.f32 %v1159, %v1364
      %v1491 = vadd.f32 %v1162, %v1367
      %v1492 = vadd.f32 %v1167, %v1372
      %v1493 = vadd.f32 %v1170, %v1375
      %v1494 = vadd.f32 %v1175, %v1380
      %v1495 = vadd.f32 %v1178, %v1383
      %v1496 = vadd.f32 %v1183, %v1388
      %v1497 = vadd.f32 %v1186, %v1391
      %v1498 = vadd.f32 %v1191, %v1396
      %v1499 = vadd.f32 %v1194, %v1399
      %v1500 = vadd.f32 %v1199, %v1404
      %v1501 = vadd.f32 %v1202, %v1407
      %v1502 = vadd.f32 %v1207, %v1412
      %v1503 = vadd.f32 %v1210, %v1415
      %v1504 = vadd.f32 %v1215, %v1420
      %v1505 = vadd.f32 %v1218, %v1423
      %v1506 = vadd.f32 %v1223, %v1428
      %v1507 = vadd.f32 %v1226, %v1431
      %v1508 = vadd.f32 %v1231, %v1436
      %v1509 = vadd.f32 %v1234, %v1439
      %v1510 = vadd.f32 %v1239, %v1444
      %v1511 = vadd.f32 %v1242, %v1447
      %v1512 = vadd.f32 %v1247, %v1452
      %v1513 = vadd.f32 %v1250, %v1455
      %v1514 = vadd.f32 %v1255, %v1460
      %v1515 = vadd.f32 %v1258, %v1463
      %v1516 = vadd.f32 %v1263, %v1468
      %v1517 = vadd.f32 %v1266, %v1471
      %v1518 = vadd.f32 %v1271, %v1476
      %v1519 = vadd.f32 %v1274, %v1479
      %v1520 = vadd.f32 %v1279, %v1484
      %v1521 = vadd.f32 %v1282, %v1487
      %v1522 = vld [vmem:[%s3] sm:$0x1]
      %v1524 = vlaneseq
      %v1525 = vshrl.u32 %v1524, 7
      %v1526 = vsub.s32 0, %v1525
      %v1527 = vrot.slane %v1522, %v1526
      %v1529 = vadd.f32 %v1490, %v1527
      %v1530 = vadd.f32 %v1491, %v1527
      %v1531 = vadd.f32 %v1492, %v1527
      %v1532 = vadd.f32 %v1493, %v1527
      %v1533 = vadd.f32 %v1494, %v1527
      %v1534 = vadd.f32 %v1495, %v1527
      %v1535 = vadd.f32 %v1496, %v1527
      %v1536 = vadd.f32 %v1497, %v1527
      %v1537 = vadd.f32 %v1498, %v1527
      %v1538 = vadd.f32 %v1499, %v1527
      %v1539 = vadd.f32 %v1500, %v1527
      %v1540 = vadd.f32 %v1501, %v1527
      %v1541 = vadd.f32 %v1502, %v1527
      %v1542 = vadd.f32 %v1503, %v1527
      %v1543 = vadd.f32 %v1504, %v1527
      %v1544 = vadd.f32 %v1505, %v1527
      %v1545 = vadd.f32 %v1506, %v1527
      %v1546 = vadd.f32 %v1507, %v1527
      %v1547 = vadd.f32 %v1508, %v1527
      %v1548 = vadd.f32 %v1509, %v1527
      %v1549 = vadd.f32 %v1510, %v1527
      %v1550 = vadd.f32 %v1511, %v1527
      %v1551 = vadd.f32 %v1512, %v1527
      %v1552 = vadd.f32 %v1513, %v1527
      %v1553 = vadd.f32 %v1514, %v1527
      %v1554 = vadd.f32 %v1515, %v1527
      %v1555 = vadd.f32 %v1516, %v1527
      %v1556 = vadd.f32 %v1517, %v1527
      %v1557 = vadd.f32 %v1518, %v1527
      %v1558 = vadd.f32 %v1519, %v1527
      %v1559 = vadd.f32 %v1520, %v1527
      %v1560 = vadd.f32 %v1521, %v1527
      %v1561 = vmax.f32 %v1529, 0.0
      %v1562 = vmax.f32 %v1530, 0.0
      %v1563 = vmax.f32 %v1531, 0.0
      %v1564 = vmax.f32 %v1532, 0.0
      %v1565 = vmax.f32 %v1533, 0.0
      %v1566 = vmax.f32 %v1534, 0.0
      %v1567 = vmax.f32 %v1535, 0.0
      %v1568 = vmax.f32 %v1536, 0.0
      %v1569 = vmax.f32 %v1537, 0.0
      %v1570 = vmax.f32 %v1538, 0.0
      %v1571 = vmax.f32 %v1539, 0.0
      %v1572 = vmax.f32 %v1540, 0.0
      %v1573 = vmax.f32 %v1541, 0.0
      %v1574 = vmax.f32 %v1542, 0.0
      %v1575 = vmax.f32 %v1543, 0.0
      %v1576 = vmax.f32 %v1544, 0.0
      %v1577 = vmax.f32 %v1545, 0.0
      %v1578 = vmax.f32 %v1546, 0.0
      %v1579 = vmax.f32 %v1547, 0.0
      %v1580 = vmax.f32 %v1548, 0.0
      %v1581 = vmax.f32 %v1549, 0.0
      %v1582 = vmax.f32 %v1550, 0.0
      %v1583 = vmax.f32 %v1551, 0.0
      %v1584 = vmax.f32 %v1552, 0.0
      %v1585 = vmax.f32 %v1553, 0.0
      %v1586 = vmax.f32 %v1554, 0.0
      %v1587 = vmax.f32 %v1555, 0.0
      %v1588 = vmax.f32 %v1556, 0.0
      %v1589 = vmax.f32 %v1557, 0.0
      %v1590 = vmax.f32 %v1558, 0.0
      %v1591 = vmax.f32 %v1559, 0.0
      %v1592 = vmax.f32 %v1560, 0.0
      %v1593 = vpack.c.bf16 %v1562, %v1561
      %v1594 = vpack.c.bf16 %v1564, %v1563
      %v1595 = vpack.c.bf16 %v1566, %v1565
      %v1596 = vpack.c.bf16 %v1568, %v1567
      %v1597 = vpack.c.bf16 %v1570, %v1569
      %v1598 = vpack.c.bf16 %v1572, %v1571
      %v1599 = vpack.c.bf16 %v1574, %v1573
      %v1600 = vpack.c.bf16 %v1576, %v1575
      %v1601 = vpack.c.bf16 %v1578, %v1577
      %v1602 = vpack.c.bf16 %v1580, %v1579
      %v1603 = vpack.c.bf16 %v1582, %v1581
      %v1604 = vpack.c.bf16 %v1584, %v1583
      %v1605 = vpack.c.bf16 %v1586, %v1585
      %v1606 = vpack.c.bf16 %v1588, %v1587
      %v1607 = vpack.c.bf16 %v1590, %v1589
      %v1608 = vpack.c.bf16 %v1592, %v1591
      %v1625 = vunpack.c.l.b16 %v1593
      %v1626 = vunpack.c.h.b16 %v1593
      %v1627 = vunpack.c.l.b16 %v1594
      %v1628 = vunpack.c.h.b16 %v1594
      %v1629 = vunpack.c.l.b16 %v1595
      %v1630 = vunpack.c.h.b16 %v1595
      %v1631 = vunpack.c.l.b16 %v1596
      %v1632 = vunpack.c.h.b16 %v1596
      %v1633 = vunpack.c.l.b16 %v1597
      %v1634 = vunpack.c.h.b16 %v1597
      %v1635 = vunpack.c.l.b16 %v1598
      %v1636 = vunpack.c.h.b16 %v1598
      %v1637 = vunpack.c.l.b16 %v1599
      %v1638 = vunpack.c.h.b16 %v1599
      %v1639 = vunpack.c.l.b16 %v1600
      %v1640 = vunpack.c.h.b16 %v1600
      %v1641 = vunpack.c.l.b16 %v1601
      %v1642 = vunpack.c.h.b16 %v1601
      %v1643 = vunpack.c.l.b16 %v1602
      %v1644 = vunpack.c.h.b16 %v1602
      %v1645 = vunpack.c.l.b16 %v1603
      %v1646 = vunpack.c.h.b16 %v1603
      %v1647 = vunpack.c.l.b16 %v1604
      %v1648 = vunpack.c.h.b16 %v1604
      %v1649 = vunpack.c.l.b16 %v1605
      %v1650 = vunpack.c.h.b16 %v1605
      %v1651 = vunpack.c.l.b16 %v1606
      %v1652 = vunpack.c.h.b16 %v1606
      %v1653 = vunpack.c.l.b16 %v1607
      %v1654 = vunpack.c.h.b16 %v1607
      %v1655 = vunpack.c.l.b16 %v1608
      %v1656 = vunpack.c.h.b16 %v1608
      %v1657 = vpack.c.b16 %v1625, %v1625
      %v1658 = vpack.c.b16 %v1626, %v1626
      %v1659 = vpack.c.b16 %v1627, %v1627
      %v1660 = vpack.c.b16 %v1628, %v1628
      %v1661 = vpack.c.b16 %v1629, %v1629
      %v1662 = vpack.c.b16 %v1630, %v1630
      %v1663 = vpack.c.b16 %v1631, %v1631
      %v1664 = vpack.c.b16 %v1632, %v1632
      %v1665 = vpack.c.b16 %v1633, %v1633
      %v1666 = vpack.c.b16 %v1634, %v1634
      %v1667 = vpack.c.b16 %v1635, %v1635
      %v1668 = vpack.c.b16 %v1636, %v1636
      %v1669 = vpack.c.b16 %v1637, %v1637
      %v1670 = vpack.c.b16 %v1638, %v1638
      %v1671 = vpack.c.b16 %v1639, %v1639
      %v1672 = vpack.c.b16 %v1640, %v1640
      %v1673 = vpack.c.b16 %v1641, %v1641
      %v1674 = vpack.c.b16 %v1642, %v1642
      %v1675 = vpack.c.b16 %v1643, %v1643
      %v1676 = vpack.c.b16 %v1644, %v1644
      %v1677 = vpack.c.b16 %v1645, %v1645
      %v1678 = vpack.c.b16 %v1646, %v1646
      %v1679 = vpack.c.b16 %v1647, %v1647
      %v1680 = vpack.c.b16 %v1648, %v1648
      %v1681 = vpack.c.b16 %v1649, %v1649
      %v1682 = vpack.c.b16 %v1650, %v1650
      %v1683 = vpack.c.b16 %v1651, %v1651
      %v1684 = vpack.c.b16 %v1652, %v1652
      %v1685 = vpack.c.b16 %v1653, %v1653
      %v1686 = vpack.c.b16 %v1654, %v1654
      %v1687 = vpack.c.b16 %v1655, %v1655
      %v1688 = vpack.c.b16 %v1656, %v1656
      %vm1721 = vcmask 519168
      %1722 = vst.msk [vmem:[%s318] sm:$0xf] %vm1721, %v1657
      %1723 = vst.msk [vmem:[%s318 + $0x4] sm:$0xf] %vm1721, %v1658
      %1724 = vst.msk [vmem:[%s318 + $0x8] sm:$0xf] %vm1721, %v1659
      %1725 = vst.msk [vmem:[%s318 + $0xc] sm:$0xf] %vm1721, %v1660
      %1726 = vst.msk [vmem:[%s318 + $0x10] sm:$0xf] %vm1721, %v1661
      %1727 = vst.msk [vmem:[%s318 + $0x14] sm:$0xf] %vm1721, %v1662
      %1728 = vst.msk [vmem:[%s318 + $0x18] sm:$0xf] %vm1721, %v1663
      %1729 = vst.msk [vmem:[%s318 + $0x1c] sm:$0xf] %vm1721, %v1664
      %1730 = vst.msk [vmem:[%s318 + $0x20] sm:$0xf] %vm1721, %v1665
      %1731 = vst.msk [vmem:[%s318 + $0x24] sm:$0xf] %vm1721, %v1666
      %1732 = vst.msk [vmem:[%s318 + $0x28] sm:$0xf] %vm1721, %v1667
      %1733 = vst.msk [vmem:[%s318 + $0x2c] sm:$0xf] %vm1721, %v1668
      %1734 = vst.msk [vmem:[%s318 + $0x30] sm:$0xf] %vm1721, %v1669
      %1735 = vst.msk [vmem:[%s318 + $0x34] sm:$0xf] %vm1721, %v1670
      %1736 = vst.msk [vmem:[%s318 + $0x38] sm:$0xf] %vm1721, %v1671
      %1737 = vst.msk [vmem:[%s318 + $0x3c] sm:$0xf] %vm1721, %v1672
      %1738 = vst.msk [vmem:[%s318 + $0x40] sm:$0xf] %vm1721, %v1673
      %1739 = vst.msk [vmem:[%s318 + $0x44] sm:$0xf] %vm1721, %v1674
      %1740 = vst.msk [vmem:[%s318 + $0x48] sm:$0xf] %vm1721, %v1675
      %1741 = vst.msk [vmem:[%s318 + $0x4c] sm:$0xf] %vm1721, %v1676
      %1742 = vst.msk [vmem:[%s318 + $0x50] sm:$0xf] %vm1721, %v1677
      %1743 = vst.msk [vmem:[%s318 + $0x54] sm:$0xf] %vm1721, %v1678
      %1744 = vst.msk [vmem:[%s318 + $0x58] sm:$0xf] %vm1721, %v1679
      %1745 = vst.msk [vmem:[%s318 + $0x5c] sm:$0xf] %vm1721, %v1680
      %1746 = vst.msk [vmem:[%s318 + $0x60] sm:$0xf] %vm1721, %v1681
      %1747 = vst.msk [vmem:[%s318 + $0x64] sm:$0xf] %vm1721, %v1682
      %1748 = vst.msk [vmem:[%s318 + $0x68] sm:$0xf] %vm1721, %v1683
      %1749 = vst.msk [vmem:[%s318 + $0x6c] sm:$0xf] %vm1721, %v1684
      %1750 = vst.msk [vmem:[%s318 + $0x70] sm:$0xf] %vm1721, %v1685
      %1751 = vst.msk [vmem:[%s318 + $0x74] sm:$0xf] %vm1721, %v1686
      %1752 = vst.msk [vmem:[%s318 + $0x78] sm:$0xf] %vm1721, %v1687
      %1753 = vst.msk [vmem:[%s318 + $0x7c] sm:$0xf] %vm1721, %v1688
      %s1754 = smul.u32 16, %s20
      %p1755 = scmp.lt.s32.totalorder %s19, 1
      %s1756 = scalar_select %p1755, %s19, 1
      %p1757 = scmp.lt.s32.totalorder %s1754, 15
      %s1758 = scalar_select %p1757, %s1754, 15
      %s1759 = smul.addr %s1758, 2
      %s1760 = smul.addr %s1756, 32
      %s1761 = sadd.s32 %s1759, %s1760
      %s1762 = smul.addr %s1761, 4
      %s1763 = scalar_lea.vmem %s4, %s1762
      // Predicated region
      $region37: #{encoder_forward.5} parent=35 // pred_check
        %p1764 = pneg %p149
      $region38: #{encoder_forward.5} parent=35 // pred_check_branch
        %1766 = sbr.rel (%p1764) target = $region40
      $region39: #{encoder_forward.5} parent=35 // pred_region
        %s1767 = smul.u32 16, %s20
      $region40: #{encoder_forward.5} parent=35 // pred_fallthru
        _
    $region36: #{encoder_forward.5} parent=5 // pred_fallthru
      _
    %p1768 = scmp.le.s32.totalorder 2, %s10
    // Predicated region
    $region41: #{encoder_forward.5} parent=5 // pred_check
      %p1769 = pneg %p1768
    $region42: #{encoder_forward.5} parent=5 // pred_check_branch
      %1771 = sbr.rel (%p1769) target = $region44
    $region43: #{encoder_forward.5} parent=5 // pred_region
      %s1772 = ssub.s32 %s10, 2
      // Predicated region
      $region45: #{encoder_forward.5} parent=43 // pred_check
        %p1773 = pneg %p155
      $region46: #{encoder_forward.5} parent=43 // pred_check_branch
        %1775 = sbr.rel (%p1773) target = $region48
      $region47: #{encoder_forward.5} parent=43 // pred_region
        %s1776 = smul.u32 16, %s22
        %p1777 = scmp.lt.s32.totalorder %s21, 1
        %s1778 = scalar_select %p1777, %s21, 1
        %p1779 = scmp.lt.s32.totalorder %s1776, 15
        %s1780 = scalar_select %p1779, %s1776, 15
        %s1781 = smul.addr %s1780, 2
        %s1782 = smul.addr %s1778, 32
        %s1783 = sadd.s32 %s1781, %s1782
        %s1784 = smul.addr %s1783, 4
        %s1785 = scalar_lea.vmem %s4, %s1784
      $region48: #{encoder_forward.5} parent=43 // pred_fallthru
        _
    $region44: #{encoder_forward.5} parent=5 // pred_fallthru
      _
  $region6: #{encoder_forward.5} parent=0 // loop_footer
    %s14 = sadd.s32 1, %s10
  $region7: #{encoder_forward.5} parent=0 // loop_footer_branch
    %9 = sbr.rel target = $region3
  $region8: #{encoder_forward.5} parent=0 // loop_exit
    _

// kernel: encoder_forward.6
$region0: #{encoder_forward.6}
  #allocation0 [shape = 'u32[]', space=smem, size = 0x4, offset = 0x4, fixed_abs, tag = 'smem constant byte address 0x4 - core index']
  #allocation1 [shape = 'u32[144,128]{1,0:T(1,128)}', space=vmem, size = 0x12000, scoped, tag = 'internal scratch']
  %s0 = inlined_call_operand.vmem [shape: bf16[2,18,18,64], index: 0, kind: input, shape index: {}, may-alias: {0,1}]
  %s1 = inlined_call_operand.vmem [shape: bf16[2,18,18,64], index: 1, kind: input, shape index: {}, may-alias: {0,1}]
  %s2 = inlined_call_operand.vmem [shape: bf16[3,192,64], index: 2, kind: input, shape index: {}]
  %s3 = inlined_call_operand.vmem [shape: f32[1,64], index: 3, kind: input, shape index: {}]
  %s4 = inlined_call_operand.vmem [shape: bf16[2,8,8,64], index: 4, kind: output, shape index: {}]
  %s5 = sld [smem:[#allocation0]]
  $region49: #{encoder_forward.6} parent=0
    _
  %s7 = ssub.s32 1, %s5
  %s8 = scalar_select 0, %s7, %s5
  loop: start=0, step=1, limit=4
  $region2: #{encoder_forward.6} parent=0 // loop_pre_header
    _
  $region3: #{encoder_forward.6} parent=0 // loop_header
    %s10 = sphi 0, %s14
    %p11 = scmp.ge.s32.totalorder %s10, 4
    %s17 = sphi 0, %s29
    %s18 = sphi 0, %s25
    %s19 = sphi 0, %s17
    %s20 = sphi 0, %s18
    %s21 = sphi 0, %s19
    %s22 = sphi 0, %s20
    %s34 = sphi 0, %s36
    %s37 = sphi 0, %s34
    %s38 = sphi 0, %s37
    %s54 = sphi 0, %s38
    %s66 = sphi 0, %s68
    %s69 = sphi 0, %s66
    %s70 = sphi 0, %s69
    %s86 = sphi 0, %s70
    %s90 = sphi 0, %s90
    %s92 = sphi 0, %s90
    %s93 = sphi 0, %s92
    %s107 = sphi 0, %s93
    %s111 = sphi 0, %s111
    %s113 = sphi 0, %s111
    %s114 = sphi 0, %s113
    %s128 = sphi 0, %s114
    %s136 = sphi 0, %s138
    %s139 = sphi 0, %s136
    %s140 = sphi 0, %s139
    %s156 = sphi 0, %s140
  $region4: #{encoder_forward.6} parent=0 // loop_header_branch
    %13 = sbr.rel (%p11) target = $region8
  $region5: #{encoder_forward.6} parent=0 // loop_body
    %s15 = ssub.s32 %s10, 1
    %s16 = ssub.s32 %s10, 2
    %s23 = sadd.s32 1, %s18
    %p24 = scmp.ge.s32.totalorder %s23, 1
    %s25 = scalar_select %p24, 0, %s23
    %s26 = sadd.s32 1, %s17
    %s27 = scalar_select %p24, %s26, %s17
    %p28 = scmp.ge.s32.totalorder %s27, 2
    %s29 = scalar_select %p28, 0, %s27
    %s30 = ssub.s32 %s17, %s29
    %s31 = ssub.s32 %s18, %s25
    %s32 = sor.u32 %s30, %s31
    %p33 = scmp.eq.s32.totalorder %s32, 0
    %s35 = sadd.s32 %s34, 1
    %s36 = scalar_select %p33, %s34, %s35
    %p39 = pneg %p33
    %p40 = scmp.eq.s32.totalorder %s10, 1
    %p41 = por %p39, %p40
    %p42 = scmp.ne.s32.totalorder %s34, %s37
    %p43 = scmp.eq.s32.totalorder %s10, 0
    %p44 = por %p42, %p43
    %p45 = scmp.ne.s32.totalorder %s34, %s37
    %p46 = scmp.eq.s32.totalorder %s15, 1
    %p47 = por %p45, %p46
    %p48 = scmp.ne.s32.totalorder %s37, %s38
    %p49 = scmp.eq.s32.totalorder %s15, 0
    %p50 = por %p48, %p49
    %p51 = scmp.ne.s32.totalorder %s37, %s38
    %p52 = scmp.eq.s32.totalorder %s16, 1
    %p53 = por %p51, %p52
    %p55 = scmp.ne.s32.totalorder %s38, %s54
    %p56 = scmp.eq.s32.totalorder %s16, 0
    %p57 = por %p55, %p56
    %s58 = sadd.s32 %s18, 1
    %s59 = smul.u32 %s58, 8
    %s60 = sadd.s32 %s25, 1
    %s61 = smul.u32 %s60, 8
    %s62 = ssub.s32 %s17, %s29
    %s63 = ssub.s32 %s59, %s61
    %s64 = sor.u32 %s62, %s63
    %p65 = scmp.eq.s32.totalorder %s64, 0
    %s67 = sadd.s32 %s66, 1
    %s68 = scalar_select %p65, %s66, %s67
    %p71 = pneg %p65
    %p72 = scmp.eq.s32.totalorder %s10, 1
    %p73 = por %p71, %p72
    %p74 = scmp.ne.s32.totalorder %s66, %s69
    %p75 = scmp.eq.s32.totalorder %s10, 0
    %p76 = por %p74, %p75
    %p77 = scmp.ne.s32.totalorder %s66, %s69
    %p78 = scmp.eq.s32.totalorder %s15, 1
    %p79 = por %p77, %p78
    %p80 = scmp.ne.s32.totalorder %s69, %s70
    %p81 = scmp.eq.s32.totalorder %s15, 0
    %p82 = por %p80, %p81
    %p83 = scmp.ne.s32.totalorder %s69, %s70
    %p84 = scmp.eq.s32.totalorder %s16, 1
    %p85 = por %p83, %p84
    %p87 = scmp.ne.s32.totalorder %s70, %s86
    %p88 = scmp.eq.s32.totalorder %s16, 0
    %p89 = por %p87, %p88
    %s91 = sadd.s32 %s90, 1
    %p94 = scmp.eq.s32.totalorder %s10, 1
    %p95 = scmp.ne.s32.totalorder %s90, %s92
    %p96 = scmp.eq.s32.totalorder %s10, 0
    %p97 = por %p95, %p96
    %p98 = scmp.ne.s32.totalorder %s90, %s92
    %p99 = scmp.eq.s32.totalorder %s15, 1
    %p100 = por %p98, %p99
    %p101 = scmp.ne.s32.totalorder %s92, %s93
    %p102 = scmp.eq.s32.totalorder %s15, 0
    %p103 = por %p101, %p102
    %p104 = scmp.ne.s32.totalorder %s92, %s93
    %p105 = scmp.eq.s32.totalorder %s16, 1
    %p106 = por %p104, %p105
    %p108 = scmp.ne.s32.totalorder %s93, %s107
    %p109 = scmp.eq.s32.totalorder %s16, 0
    %p110 = por %p108, %p109
    %s112 = sadd.s32 %s111, 1
    %p115 = scmp.eq.s32.totalorder %s10, 1
    %p116 = scmp.ne.s32.totalorder %s111, %s113
    %p117 = scmp.eq.s32.totalorder %s10, 0
    %p118 = por %p116, %p117
    %p119 = scmp.ne.s32.totalorder %s111, %s113
    %p120 = scmp.eq.s32.totalorder %s15, 1
    %p121 = por %p119, %p120
    %p122 = scmp.ne.s32.totalorder %s113, %s114
    %p123 = scmp.eq.s32.totalorder %s15, 0
    %p124 = por %p122, %p123
    %p125 = scmp.ne.s32.totalorder %s113, %s114
    %p126 = scmp.eq.s32.totalorder %s16, 1
    %p127 = por %p125, %p126
    %p129 = scmp.ne.s32.totalorder %s114, %s128
    %p130 = scmp.eq.s32.totalorder %s16, 0
    %p131 = por %p129, %p130
    %s132 = ssub.s32 %s17, %s29
    %s133 = ssub.s32 %s18, %s25
    %s134 = sor.u32 %s132, %s133
    %p135 = scmp.eq.s32.totalorder %s134, 0
    %s137 = sadd.s32 %s136, 1
    %s138 = scalar_select %p135, %s136, %s137
    %p141 = pneg %p135
    %p142 = scmp.eq.s32.totalorder %s10, 1
    %p143 = por %p141, %p142
    %p144 = scmp.ne.s32.totalorder %s136, %s139
    %p145 = scmp.eq.s32.totalorder %s10, 0
    %p146 = por %p144, %p145
    %p147 = scmp.ne.s32.totalorder %s136, %s139
    %p148 = scmp.eq.s32.totalorder %s15, 1
    %p149 = por %p147, %p148
    %p150 = scmp.ne.s32.totalorder %s139, %s140
    %p151 = scmp.eq.s32.totalorder %s15, 0
    %p152 = por %p150, %p151
    %p153 = scmp.ne.s32.totalorder %s139, %s140
    %p154 = scmp.eq.s32.totalorder %s16, 1
    %p155 = por %p153, %p154
    %p157 = scmp.ne.s32.totalorder %s140, %s156
    %p158 = scmp.eq.s32.totalorder %s16, 0
    %p159 = por %p157, %p158
    %p160 = scmp.le.s32.totalorder 1, %s10
    %p161 = scmp.lt.s32.totalorder %s10, 3
    %p162 = pnand %p160, %p161
    %p163 = pneg %p162
    // Predicated region
    $region9: #{encoder_forward.6} parent=5 // pred_check
      _
    $region10: #{encoder_forward.6} parent=5 // pred_check_branch
      %165 = sbr.rel (%p162) target = $region12
    $region11: #{encoder_forward.6} parent=5 // pred_region
      %s166 = ssub.s32 %s10, 1
      // Predicated region
      $region13: #{encoder_forward.6} parent=11 // pred_check
        %p167 = pneg %p103
      $region14: #{encoder_forward.6} parent=11 // pred_check_branch
        %169 = sbr.rel (%p167) target = $region16
      $region15: #{encoder_forward.6} parent=11 // pred_region
        _
      $region16: #{encoder_forward.6} parent=11 // pred_fallthru
        _
      // Predicated region
      $region17: #{encoder_forward.6} parent=11 // pred_check
        %p170 = pneg %p124
      $region18: #{encoder_forward.6} parent=11 // pred_check_branch
        %172 = sbr.rel (%p170) target = $region20
      $region19: #{encoder_forward.6} parent=11 // pred_region
        _
      $region20: #{encoder_forward.6} parent=11 // pred_fallthru
        _
    $region12: #{encoder_forward.6} parent=5 // pred_fallthru
      _
    %p173 = scmp.lt.s32.totalorder %s10, 2
    // Predicated region
    $region21: #{encoder_forward.6} parent=5 // pred_check
      %p174 = pneg %p173
    $region22: #{encoder_forward.6} parent=5 // pred_check_branch
      %176 = sbr.rel (%p174) target = $region24
    $region23: #{encoder_forward.6} parent=5 // pred_region
      // Predicated region
      $region25: #{encoder_forward.6} parent=23 // pred_check
        %p177 = pneg %p44
      $region26: #{encoder_forward.6} parent=23 // pred_check_branch
        %179 = sbr.rel (%p177) target = $region28
      $region27: #{encoder_forward.6} parent=23 // pred_region
        %s180 = smul.u32 16, %s18
        %s181 = ssub.s32 18, %s180
        %p182 = scmp.lt.s32.totalorder %s181, 16
        %s183 = scalar_select %p182, %s181, 16
        %s184 = smul.u32 64, %s183
        %s185 = smul.u32 %s184, 3
        %p186 = scmp.lt.s32.totalorder %s17, 1
        %s187 = scalar_select %p186, %s17, 1
        %p188 = scmp.lt.s32.totalorder %s180, 17
        %s189 = scalar_select %p188, %s180, 17
        %s190 = smul.addr %s189, 3
        %s191 = smul.addr %s187, 54
        %s192 = sadd.s32 %s190, %s191
        %s193 = smul.addr %s192, 4
        %s194 = scalar_lea.vmem %s0, %s193
        %s195 = smul.u32 16, %s18
        %s196 = ssub.s32 18, %s195
        %p197 = scmp.lt.s32.totalorder %s196, 16
        %s198 = scalar_select %p197, %s196, 16
        %s199 = smul.u32 64, %s198
        %s200 = smul.u32 %s199, 3
      $region28: #{encoder_forward.6} parent=23 // pred_fallthru
        _
      // Predicated region
      $region29: #{encoder_forward.6} parent=23 // pred_check
        %p201 = pneg %p76
      $region30: #{encoder_forward.6} parent=23 // pred_check_branch
        %203 = sbr.rel (%p201) target = $region32
      $region31: #{encoder_forward.6} parent=23 // pred_region
        %s204 = sadd.s32 %s18, 1
        %s205 = smul.u32 %s204, 8
        %s206 = smul.u32 2, %s205
        %p207 = scmp.lt.s32.totalorder %s17, 1
        %s208 = scalar_select %p207, %s17, 1
        %p209 = scmp.lt.s32.totalorder %s206, 17
        %s210 = scalar_select %p209, %s206, 17
        %s211 = smul.addr %s210, 3
        %s212 = smul.addr %s208, 54
        %s213 = sadd.s32 %s211, %s212
        %s214 = smul.addr %s213, 4
        %s215 = scalar_lea.vmem %s1, %s214
        %s216 = sadd.s32 %s18, 1
        %s217 = smul.u32 %s216, 8
        %s218 = smul.u32 2, %s217
      $region32: #{encoder_forward.6} parent=23 // pred_fallthru
        _
    $region24: #{encoder_forward.6} parent=5 // pred_fallthru
      _
    %p219 = scmp.le.s32.totalorder 1, %s10
    %p220 = scmp.lt.s32.totalorder %s10, 3
    %p221 = pnand %p219, %p220
    %p222 = pneg %p221
    // Predicated region
    $region33: #{encoder_forward.6} parent=5 // pred_check
      _
    $region34: #{encoder_forward.6} parent=5 // pred_check_branch
      %224 = sbr.rel (%p221) target = $region36
    $region35: #{encoder_forward.6} parent=5 // pred_region
      %s225 = ssub.s32 %s10, 1
      %s226 = smul.u32 16, %s20
      %s227 = ssub.s32 18, %s226
      %p228 = scmp.lt.s32.totalorder %s227, 16
      %s229 = scalar_select %p228, %s227, 16
      %s230 = smul.u32 64, %s229
      %s231 = smul.u32 %s230, 3
      %p232 = scmp.lt.s32.totalorder %s19, 1
      %s233 = scalar_select %p232, %s19, 1
      %p234 = scmp.lt.s32.totalorder %s226, 17
      %s235 = scalar_select %p234, %s226, 17
      %s236 = smul.addr %s235, 3
      %s237 = smul.addr %s233, 54
      %s238 = sadd.s32 %s236, %s237
      %s239 = smul.addr %s238, 4
      %s240 = scalar_lea.vmem %s0, %s239
      %p241 = pneg %p50
      %p242 = pneg %p47
      %s243 = sadd.s32 %s20, 1
      %s244 = smul.u32 %s243, 8
      %s245 = smul.u32 2, %s244
      %p246 = scmp.lt.s32.totalorder %s19, 1
      %s247 = scalar_select %p246, %s19, 1
      %p248 = scmp.lt.s32.totalorder %s245, 17
      %s249 = scalar_select %p248, %s245, 17
      %s250 = smul.addr %s249, 3
      %s251 = smul.addr %s247, 54
      %s252 = sadd.s32 %s250, %s251
      %s253 = smul.addr %s252, 4
      %s254 = scalar_lea.vmem %s1, %s253
      %p255 = pneg %p82
      %p256 = pneg %p79
      %p257 = pneg %p103
      %p258 = pneg %p100
      %p259 = pneg %p124
      %p260 = pneg %p121
      %p261 = pneg %p152
      %p262 = pneg %p149
      %s263 = smul.u32 8, %s20
      %p264 = scmp.lt.s32.totalorder %s19, 1
      %s265 = scalar_select %p264, %s19, 1
      %p266 = scmp.lt.s32.totalorder %s263, 7
      %s267 = scalar_select %p266, %s263, 7
      %s268 = smul.addr %s265, 8
      %s269 = sadd.s32 %s267, %s268
      %s270 = smul.addr %s269, 4
      %s271 = scalar_lea.vmem %s4, %s270
      %s272 = smul.u32 16, %s20
      %s273 = ssub.s32 18, %s272
      %p274 = scmp.lt.s32.totalorder %s273, 16
      %s275 = scalar_select %p274, %s273, 16
      %s276 = smul.u32 64, %s275
      %s277 = smul.u32 %s276, 3
      %p278 = scmp.lt.s32.totalorder %s19, 1
      %s279 = scalar_select %p278, %s19, 1
      %p280 = scmp.lt.s32.totalorder %s272, 17
      %s281 = scalar_select %p280, %s272, 17
      %s282 = smul.addr %s281, 3
      %s283 = smul.addr %s279, 54
      %s284 = sadd.s32 %s282, %s283
      %s285 = smul.addr %s284, 4
      %s286 = scalar_lea.vmem %s0, %s285
      %s287 = smul.u32 16, %s20
      %s288 = ssub.s32 18, %s287
      %p289 = scmp.lt.s32.totalorder %s288, 16
      %s290 = scalar_select %p289, %s288, 16
      %s291 = smul.u32 64, %s290
      %s292 = smul.u32 %s291, 3
      %s293 = sadd.s32 %s20, 1
      %s294 = smul.u32 %s293, 8
      %s295 = smul.u32 2, %s294
      %p296 = scmp.lt.s32.totalorder %s19, 1
      %s297 = scalar_select %p296, %s19, 1
      %p298 = scmp.lt.s32.totalorder %s295, 17
      %s299 = scalar_select %p298, %s295, 17
      %s300 = smul.addr %s299, 3
      %s301 = smul.addr %s297, 54
      %s302 = sadd.s32 %s300, %s301
      %s303 = smul.addr %s302, 4
      %s304 = scalar_lea.vmem %s1, %s303
      %s305 = sadd.s32 %s20, 1
      %s306 = smul.u32 %s305, 8
      %s307 = smul.u32 2, %s306
      %s308 = smul.u32 8, %s20
      %p309 = scmp.lt.s32.totalorder %s19, 1
      %s310 = scalar_select %p309, %s19, 1
      %p311 = scmp.lt.s32.totalorder %s308, 7
      %s312 = scalar_select %p311, %s308, 7
      %s313 = smul.addr %s310, 8
      %s314 = sadd.s32 %s312, %s313
      %s315 = smul.addr %s314, 4
      %s316 = scalar_lea.vmem %s4, %s315
      %s317 = smul.u32 8, %s20
      %v319 = vld [vmem:[%s286] sm:$0xf]
      %v320 = vld [vmem:[%s286 + $0x4] sm:$0xf]
      %v321 = vld [vmem:[%s286 + $0x8] sm:$0x1]
      %v322 = vld [vmem:[%s286 + $0xc] sm:$0xf]
      %v323 = vld [vmem:[%s286 + $0x10] sm:$0xf]
      %v324 = vld [vmem:[%s286 + $0x14] sm:$0x1]
      %v325 = vld [vmem:[%s286 + $0x18] sm:$0xf]
      %v326 = vld [vmem:[%s286 + $0x1c] sm:$0xf]
      %v327 = vld [vmem:[%s286 + $0x20] sm:$0x1]
      %v328 = vld [vmem:[%s286 + $0x24] sm:$0xf]
      %v329 = vld [vmem:[%s286 + $0x28] sm:$0xf]
      %v330 = vld [vmem:[%s286 + $0x2c] sm:$0x1]
      %v331 = vld [vmem:[%s286 + $0x30] sm:$0xf]
      %v332 = vld [vmem:[%s286 + $0x34] sm:$0xf]
      %v333 = vld [vmem:[%s286 + $0x38] sm:$0x1]
      %v334 = vld [vmem:[%s286 + $0x3c] sm:$0xf]
      %v335 = vld [vmem:[%s286 + $0x40] sm:$0xf]
      %v336 = vld [vmem:[%s286 + $0x44] sm:$0x1]
      %v337 = vld [vmem:[%s286 + $0x48] sm:$0xf]
      %v338 = vld [vmem:[%s286 + $0x4c] sm:$0xf]
      %v339 = vld [vmem:[%s286 + $0x50] sm:$0x1]
      %v340 = vld [vmem:[%s286 + $0x54] sm:$0xf]
      %v341 = vld [vmem:[%s286 + $0x58] sm:$0xf]
      %v342 = vld [vmem:[%s286 + $0x5c] sm:$0x1]
      %v343 = vld [vmem:[%s286 + $0x60] sm:$0xf]
      %v344 = vld [vmem:[%s286 + $0x64] sm:$0xf]
      %v345 = vld [vmem:[%s286 + $0x68] sm:$0x1]
      %v346 = vld [vmem:[%s286 + $0x6c] sm:$0xf]
      %v347 = vld [vmem:[%s286 + $0x70] sm:$0xf]
      %v348 = vld [vmem:[%s286 + $0x74] sm:$0x1]
      %v349 = vld [vmem:[%s286 + $0x78] sm:$0xf]
      %v350 = vld [vmem:[%s286 + $0x7c] sm:$0xf]
      %v351 = vld [vmem:[%s286 + $0x80] sm:$0x1]
      %v352 = vld [vmem:[%s286 + $0x84] sm:$0xf]
      %v353 = vld [vmem:[%s286 + $0x88] sm:$0xf]
      %v354 = vld [vmem:[%s286 + $0x8c] sm:$0x1]
      %v355 = vld [vmem:[%s286 + $0x90] sm:$0xf]
      %v356 = vld [vmem:[%s286 + $0x94] sm:$0xf]
      %v357 = vld [vmem:[%s286 + $0x98] sm:$0x1]
      %v358 = vld [vmem:[%s286 + $0x9c] sm:$0xf]
      %v359 = vld [vmem:[%s286 + $0xa0] sm:$0xf]
      %v360 = vld [vmem:[%s286 + $0xa4] sm:$0x1]
      %v361 = vld [vmem:[%s286 + $0xa8] sm:$0xf]
      %v362 = vld [vmem:[%s286 + $0xac] sm:$0xf]
      %v363 = vld [vmem:[%s286 + $0xb0] sm:$0x1]
      %v364 = vld [vmem:[%s286 + $0xb4] sm:$0xf]
      %v365 = vld [vmem:[%s286 + $0xb8] sm:$0xf]
      %v366 = vld [vmem:[%s286 + $0xbc] sm:$0x1]
      %v367 = vld [vmem:[%s304] sm:$0xf]
      %v368 = vld [vmem:[%s304 + $0x4] sm:$0xf]
      %v369 = vld [vmem:[%s304 + $0x8] sm:$0x1]
      %v370 = vld [vmem:[%s304 + $0xc] sm:$0xf]
      %v371 = vld [vmem:[%s304 + $0x10] sm:$0xf]
      %v372 = vld [vmem:[%s304 + $0x14] sm:$0x1]
      %v405 = vunpack.c.l.b16 %v319
      %v406 = vunpack.c.l.b16 %v320
      %v407 = vunpack.c.l.b16 %v322
      %v408 = vunpack.c.l.b16 %v323
      %v409 = vunpack.c.l.b16 %v325
      %v410 = vunpack.c.l.b16 %v326
      %v411 = vunpack.c.l.b16 %v328
      %v412 = vunpack.c.l.b16 %v329
      %v413 = vunpack.c.l.b16 %v331
      %v414 = vunpack.c.l.b16 %v332
      %v415 = vunpack.c.l.b16 %v334
      %v416 = vunpack.c.l.b16 %v335
      %v417 = vunpack.c.l.b16 %v337
      %v418 = vunpack.c.l.b16 %v338
      %v419 = vunpack.c.l.b16 %v340
      %v420 = vunpack.c.l.b16 %v341
      %v421 = vunpack.c.l.b16 %v343
      %v422 = vunpack.c.l.b16 %v344
      %v423 = vunpack.c.l.b16 %v346
      %v424 = vunpack.c.l.b16 %v347
      %v425 = vunpack.c.l.b16 %v349
      %v426 = vunpack.c.l.b16 %v350
      %v427 = vunpack.c.l.b16 %v352
      %v428 = vunpack.c.l.b16 %v353
      %v429 = vunpack.c.l.b16 %v355
      %v430 = vunpack.c.l.b16 %v356
      %v431 = vunpack.c.l.b16 %v358
      %v432 = vunpack.c.l.b16 %v359
      %v433 = vunpack.c.l.b16 %v361
      %v434 = vunpack.c.l.b16 %v362
      %v435 = vunpack.c.l.b16 %v364
      %v436 = vunpack.c.l.b16 %v365
      %v437 = vpack.c.b16 %v406, %v405
      %v438 = vpack.c.b16 %v408, %v407
      %v439 = vpack.c.b16 %v410, %v409
      %v440 = vpack.c.b16 %v412, %v411
      %v441 = vpack.c.b16 %v414, %v413
      %v442 = vpack.c.b16 %v416, %v415
      %v443 = vpack.c.b16 %v418, %v417
      %v444 = vpack.c.b16 %v420, %v419
      %v445 = vpack.c.b16 %v422, %v421
      %v446 = vpack.c.b16 %v424, %v423
      %v447 = vpack.c.b16 %v426, %v425
      %v448 = vpack.c.b16 %v428, %v427
      %v449 = vpack.c.b16 %v430, %v429
      %v450 = vpack.c.b16 %v432, %v431
      %v451 = vpack.c.b16 %v434, %v433
      %v452 = vpack.c.b16 %v436, %v435
      %v469 = vunpack.c.l.b16 %v321
      %v470 = vunpack.c.l.b16 %v324
      %v471 = vunpack.c.l.b16 %v327
      %v472 = vunpack.c.l.b16 %v330
      %v473 = vunpack.c.l.b16 %v333
      %v474 = vunpack.c.l.b16 %v336
      %v475 = vunpack.c.l.b16 %v339
      %v476 = vunpack.c.l.b16 %v342
      %v477 = vunpack.c.l.b16 %v345
      %v478 = vunpack.c.l.b16 %v348
      %v479 = vunpack.c.l.b16 %v351
      %v480 = vunpack.c.l.b16 %v354
      %v481 = vunpack.c.l.b16 %v357
      %v482 = vunpack.c.l.b16 %v360
      %v483 = vunpack.c.l.b16 %v363
      %v484 = vunpack.c.l.b16 %v366
      %v485 = vpack.c.b16 %v469, %v469
      %v486 = vpack.c.b16 %v470, %v470
      %v487 = vpack.c.b16 %v471, %v471
      %v488 = vpack.c.b16 %v472, %v472
      %v489 = vpack.c.b16 %v473, %v473
      %v490 = vpack.c.b16 %v474, %v474
      %v491 = vpack.c.b16 %v475, %v475
      %v492 = vpack.c.b16 %v476, %v476
      %v493 = vpack.c.b16 %v477, %v477
      %v494 = vpack.c.b16 %v478, %v478
      %v495 = vpack.c.b16 %v479, %v479
      %v496 = vpack.c.b16 %v480, %v480
      %v497 = vpack.c.b16 %v481, %v481
      %v498 = vpack.c.b16 %v482, %v482
      %v499 = vpack.c.b16 %v483, %v483
      %v500 = vpack.c.b16 %v484, %v484
      %vm501 = vsmask.f32 7424
      %v503 = vshrl.u32 %v437, 16
      %v505 = vshll.u32 %v437, 16
      %v507 = vrot.slane %v505, 1
      %v508 = vor.u32 %v503, %v507
      %v510 = vshll.u32 %v485, 16
      %v512 = vrot.slane %v510, 1
      %v513 = vsel %vm501, %v508, %v512
      %v515 = vshrl.u32 %v438, 16
      %v517 = vshll.u32 %v438, 16
      %v519 = vrot.slane %v517, 1
      %v520 = vor.u32 %v515, %v519
      %v522 = vshll.u32 %v486, 16
      %v524 = vrot.slane %v522, 1
      %v525 = vsel %vm501, %v520, %v524
      %v527 = vshrl.u32 %v439, 16
      %v529 = vshll.u32 %v439, 16
      %v531 = vrot.slane %v529, 1
      %v532 = vor.u32 %v527, %v531
      %v534 = vshll.u32 %v487, 16
      %v536 = vrot.slane %v534, 1
      %v537 = vsel %vm501, %v532, %v536
      %v539 = vshrl.u32 %v440, 16
      %v541 = vshll.u32 %v440, 16
      %v543 = vrot.slane %v541, 1
      %v544 = vor.u32 %v539, %v543
      %v546 = vshll.u32 %v488, 16
      %v548 = vrot.slane %v546, 1
      %v549 = vsel %vm501, %v544, %v548
      %v551 = vshrl.u32 %v441, 16
      %v553 = vshll.u32 %v441, 16
      %v555 = vrot.slane %v553, 1
      %v556 = vor.u32 %v551, %v555
      %v558 = vshll.u32 %v489, 16
      %v560 = vrot.slane %v558, 1
      %v561 = vsel %vm501, %v556, %v560
      %v563 = vshrl.u32 %v442, 16
      %v565 = vshll.u32 %v442, 16
      %v567 = vrot.slane %v565, 1
      %v568 = vor.u32 %v563, %v567
      %v570 = vshll.u32 %v490, 16
      %v572 = vrot.slane %v570, 1
      %v573 = vsel %vm501, %v568, %v572
      %v575 = vshrl.u32 %v443, 16
      %v577 = vshll.u32 %v443, 16
      %v579 = vrot.slane %v577, 1
      %v580 = vor.u32 %v575, %v579
      %v582 = vshll.u32 %v491, 16
      %v584 = vrot.slane %v582, 1
      %v585 = vsel %vm501, %v580, %v584
      %v587 = vshrl.u32 %v444, 16
      %v589 = vshll.u32 %v444, 16
      %v591 = vrot.slane %v589, 1
      %v592 = vor.u32 %v587, %v591
      %v594 = vshll.u32 %v492, 16
      %v596 = vrot.slane %v594, 1
      %v597 = vsel %vm501, %v592, %v596
      %v599 = vshrl.u32 %v445, 16
      %v601 = vshll.u32 %v445, 16
      %v603 = vrot.slane %v601, 1
      %v604 = vor.u32 %v599, %v603
      %v606 = vshll.u32 %v493, 16
      %v608 = vrot.slane %v606, 1
      %v609 = vsel %vm501, %v604, %v608
      %v611 = vshrl.u32 %v446, 16
      %v613 = vshll.u32 %v446, 16
      %v615 = vrot.slane %v613, 1
      %v616 = vor.u32 %v611, %v615
      %v618 = vshll.u32 %v494, 16
      %v620 = vrot.slane %v618, 1
      %v621 = vsel %vm501, %v616, %v620
      %v623 = vshrl.u32 %v447, 16
      %v625 = vshll.u32 %v447, 16
      %v627 = vrot.slane %v625, 1
      %v628 = vor.u32 %v623, %v627
      %v630 = vshll.u32 %v495, 16
      %v632 = vrot.slane %v630, 1
      %v633 = vsel %vm501, %v628, %v632
      %v635 = vshrl.u32 %v448, 16
      %v637 = vshll.u32 %v448, 16
      %v639 = vrot.slane %v637, 1
      %v640 = vor.u32 %v635, %v639
      %v642 = vshll.u32 %v496, 16
      %v644 = vrot.slane %v642, 1
      %v645 = vsel %vm501, %v640, %v644
      %v647 = vshrl.u32 %v449, 16
      %v649 = vshll.u32 %v449, 16
      %v651 = vrot.slane %v649, 1
      %v652 = vor.u32 %v647, %v651
      %v654 = vshll.u32 %v497, 16
      %v656 = vrot.slane %v654, 1
      %v657 = vsel %vm501, %v652, %v656
      %v659 = vshrl.u32 %v450, 16
      %v661 = vshll.u32 %v450, 16
      %v663 = vrot.slane %v661, 1
      %v664 = vor.u32 %v659, %v663
      %v666 = vshll.u32 %v498, 16
      %v668 = vrot.slane %v666, 1
      %v669 = vsel %vm501, %v664, %v668
      %v671 = vshrl.u32 %v451, 16
      %v673 = vshll.u32 %v451, 16
      %v675 = vrot.slane %v673, 1
      %v676 = vor.u32 %v671, %v675
      %v678 = vshll.u32 %v499, 16
      %v680 = vrot.slane %v678, 1
      %v681 = vsel %vm501, %v676, %v680
      %v683 = vshrl.u32 %v452, 16
      %v685 = vshll.u32 %v452, 16
      %v687 = vrot.slane %v685, 1
      %v688 = vor.u32 %v683, %v687
      %v690 = vshll.u32 %v500, 16
      %v692 = vrot.slane %v690, 1
      %v693 = vsel %vm501, %v688, %v692
      %694 = vrot.lane.b32.xlu0 %v513, 64
      %v695 = vpop.permute.xlu0 %694
      %696 = vrot.lane.b32.xlu0 %v525, 64
      %v697 = vpop.permute.xlu0 %696
      %698 = vrot.lane.b32.xlu0 %v537, 64
      %v699 = vpop.permute.xlu0 %698
      %700 = vrot.lane.b32.xlu0 %v549, 64
      %v701 = vpop.permute.xlu0 %700
      %702 = vrot.lane.b32.xlu0 %v561, 64
      %v703 = vpop.permute.xlu0 %702
      %704 = vrot.lane.b32.xlu0 %v573, 64
      %v705 = vpop.permute.xlu0 %704
      %706 = vrot.lane.b32.xlu0 %v585, 64
      %v707 = vpop.permute.xlu0 %706
      %708 = vrot.lane.b32.xlu0 %v597, 64
      %v709 = vpop.permute.xlu0 %708
      %710 = vrot.lane.b32.xlu0 %v609, 64
      %v711 = vpop.permute.xlu0 %710
      %712 = vrot.lane.b32.xlu0 %v621, 64
      %v713 = vpop.permute.xlu0 %712
      %714 = vrot.lane.b32.xlu0 %v633, 64
      %v715 = vpop.permute.xlu0 %714
      %716 = vrot.lane.b32.xlu0 %v645, 64
      %v717 = vpop.permute.xlu0 %716
      %718 = vrot.lane.b32.xlu0 %v657, 64
      %v719 = vpop.permute.xlu0 %718
      %720 = vrot.lane.b32.xlu0 %v669, 64
      %v721 = vpop.permute.xlu0 %720
      %722 = vrot.lane.b32.xlu0 %v681, 64
      %v723 = vpop.permute.xlu0 %722
      %724 = vrot.lane.b32.xlu0 %v693, 64
      %v725 = vpop.permute.xlu0 %724
      %vm726 = vcmask 1046528
      %v727 = vrot.slane %v437, 1
      %v728 = vrot.slane %v485, 1
      %v729 = vsel %vm726, %v727, %v728
      %v730 = vrot.slane %v438, 1
      %v731 = vrot.slane %v486, 1
      %v732 = vsel %vm726, %v730, %v731
      %v733 = vrot.slane %v439, 1
      %v734 = vrot.slane %v487, 1
      %v735 = vsel %vm726, %v733, %v734
      %v736 = vrot.slane %v440, 1
      %v737 = vrot.slane %v488, 1
      %v738 = vsel %vm726, %v736, %v737
      %v739 = vrot.slane %v441, 1
      %v740 = vrot.slane %v489, 1
      %v741 = vsel %vm726, %v739, %v740
      %v742 = vrot.slane %v442, 1
      %v743 = vrot.slane %v490, 1
      %v744 = vsel %vm726, %v742, %v743
      %v745 = vrot.slane %v443, 1
      %v746 = vrot.slane %v491, 1
      %v747 = vsel %vm726, %v745, %v746
      %v748 = vrot.slane %v444, 1
      %v749 = vrot.slane %v492, 1
      %v750 = vsel %vm726, %v748, %v749
      %v751 = vrot.slane %v445, 1
      %v752 = vrot.slane %v493, 1
      %v753 = vsel %vm726, %v751, %v752
      %v754 = vrot.slane %v446, 1
      %v755 = vrot.slane %v494, 1
      %v756 = vsel %vm726, %v754, %v755
      %v757 = vrot.slane %v447, 1
      %v758 = vrot.slane %v495, 1
      %v759 = vsel %vm726, %v757, %v758
      %v760 = vrot.slane %v448, 1
      %v761 = vrot.slane %v496, 1
      %v762 = vsel %vm726, %v760, %v761
      %v763 = vrot.slane %v449, 1
      %v764 = vrot.slane %v497, 1
      %v765 = vsel %vm726, %v763, %v764
      %v766 = vrot.slane %v450, 1
      %v767 = vrot.slane %v498, 1
      %v768 = vsel %vm726, %v766, %v767
      %v769 = vrot.slane %v451, 1
      %v770 = vrot.slane %v499, 1
      %v771 = vsel %vm726, %v769, %v770
      %v772 = vrot.slane %v452, 1
      %v773 = vrot.slane %v500, 1
      %v774 = vsel %vm726, %v772, %v773
      %vm775 = vcmask 523264
      %v777 = vsel %vm775, %v437, %v695
      %v780 = vsel %vm775, %v438, %v697
      %v783 = vsel %vm775, %v439, %v699
      %v786 = vsel %vm775, %v440, %v701
      %v789 = vsel %vm775, %v441, %v703
      %v792 = vsel %vm775, %v442, %v705
      %v795 = vsel %vm775, %v443, %v707
      %v798 = vsel %vm775, %v444, %v709
      %v801 = vsel %vm775, %v445, %v711
      %v804 = vsel %vm775, %v446, %v713
      %v807 = vsel %vm775, %v447, %v715
      %v810 = vsel %vm775, %v448, %v717
      %v813 = vsel %vm775, %v449, %v719
      %v816 = vsel %vm775, %v450, %v721
      %v819 = vsel %vm775, %v451, %v723
      %v822 = vsel %vm775, %v452, %v725
      %v824 = vld [vmem:[%s2] sm:$0xf]
      %v825 = vld [vmem:[%s2 + $0x4] sm:$0xf]
      %v826 = vld [vmem:[%s2 + $0x8] sm:$0xf]
      %v827 = vld [vmem:[%s2 + $0xc] sm:$0xf]
      %v828 = vld [vmem:[%s2 + $0x10] sm:$0xf]
      %v829 = vld [vmem:[%s2 + $0x14] sm:$0xf]
      %v830 = vld [vmem:[%s2 + $0x18] sm:$0xf]
      %v831 = vld [vmem:[%s2 + $0x1c] sm:$0xf]
      %v832 = vld [vmem:[%s2 + $0x20] sm:$0xf]
      %v833 = vld [vmem:[%s2 + $0x24] sm:$0xf]
      %v834 = vld [vmem:[%s2 + $0x28] sm:$0xf]
      %v835 = vld [vmem:[%s2 + $0x2c] sm:$0xf]
      %v836 = vld [vmem:[%s2 + $0x30] sm:$0xf]
      %v837 = vld [vmem:[%s2 + $0x34] sm:$0xf]
      %v838 = vld [vmem:[%s2 + $0x38] sm:$0xf]
      %v839 = vld [vmem:[%s2 + $0x3c] sm:$0xf]
      %v840 = vld [vmem:[%s2 + $0x40] sm:$0xf]
      %v841 = vld [vmem:[%s2 + $0x44] sm:$0xf]
      %v842 = vld [vmem:[%s2 + $0x48] sm:$0xf]
      %v843 = vld [vmem:[%s2 + $0x4c] sm:$0xf]
      %v844 = vld [vmem:[%s2 + $0x50] sm:$0xf]
      %v845 = vld [vmem:[%s2 + $0x54] sm:$0xf]
      %v846 = vld [vmem:[%s2 + $0x58] sm:$0xf]
      %v847 = vld [vmem:[%s2 + $0x5c] sm:$0xf]
      %v850 = vunpack.c.l.b16 %v367
      %v851 = vunpack.c.l.b16 %v368
      %v852 = vpack.c.b16 %v851, %v850
      %v854 = vunpack.c.l.b16 %v369
      %v855 = vpack.c.b16 %v854, %v854
      %v857 = vshrl.u32 %v852, 16
      %v859 = vshll.u32 %v852, 16
      %v861 = vrot.slane %v859, 1
      %v862 = vor.u32 %v857, %v861
      %v864 = vshll.u32 %v855, 16
      %v866 = vrot.slane %v864, 1
      %v867 = vsel %vm501, %v862, %v866
      %868 = vrot.lane.b32.xlu0 %v867, 64
      %v869 = vpop.permute.xlu0 %868
      %v870 = vrot.slane %v852, 1
      %v871 = vrot.slane %v855, 1
      %v872 = vsel %vm726, %v870, %v871
      %v874 = vsel %vm775, %v852, %v869
      %s876 = scalar_lea.vmem %s2, 96
      %v877 = vld [vmem:[%s876] sm:$0xf]
      %v878 = vld [vmem:[%s876 + $0x4] sm:$0xf]
      %v879 = vld [vmem:[%s876 + $0x8] sm:$0xf]
      %v880 = vld [vmem:[%s876 + $0xc] sm:$0xf]
      %v881 = vld [vmem:[%s876 + $0x10] sm:$0xf]
      %v882 = vld [vmem:[%s876 + $0x14] sm:$0xf]
      %v883 = vld [vmem:[%s876 + $0x18] sm:$0xf]
      %v884 = vld [vmem:[%s876 + $0x1c] sm:$0xf]
      %v885 = vld [vmem:[%s876 + $0x20] sm:$0xf]
      %v886 = vld [vmem:[%s876 + $0x24] sm:$0xf]
      %v887 = vld [vmem:[%s876 + $0x28] sm:$0xf]
      %v888 = vld [vmem:[%s876 + $0x2c] sm:$0xf]
      %v889 = vld [vmem:[%s876 + $0x30] sm:$0xf]
      %v890 = vld [vmem:[%s876 + $0x34] sm:$0xf]
      %v891 = vld [vmem:[%s876 + $0x38] sm:$0xf]
      %v892 = vld [vmem:[%s876 + $0x3c] sm:$0xf]
      %v893 = vld [vmem:[%s876 + $0x40] sm:$0xf]
      %v894 = vld [vmem:[%s876 + $0x44] sm:$0xf]
      %v895 = vld [vmem:[%s876 + $0x48] sm:$0xf]
      %v896 = vld [vmem:[%s876 + $0x4c] sm:$0xf]
      %v897 = vld [vmem:[%s876 + $0x50] sm:$0xf]
      %v898 = vld [vmem:[%s876 + $0x54] sm:$0xf]
      %v899 = vld [vmem:[%s876 + $0x58] sm:$0xf]
      %v900 = vld [vmem:[%s876 + $0x5c] sm:$0xf]
      %v925 = vunpack.c.l.b16 %v877
      %v926 = vunpack.c.l.b16 %v878
      %v927 = vunpack.c.l.b16 %v879
      %v928 = vunpack.c.l.b16 %v880
      %v929 = vunpack.c.l.b16 %v881
      %v930 = vunpack.c.l.b16 %v882
      %v931 = vunpack.c.l.b16 %v883
      %v932 = vunpack.c.l.b16 %v884
      %v933 = vunpack.c.l.b16 %v885
      %v934 = vunpack.c.l.b16 %v886
      %v935 = vunpack.c.l.b16 %v887
      %v936 = vunpack.c.l.b16 %v888
      %v937 = vunpack.c.l.b16 %v889
      %v938 = vunpack.c.l.b16 %v890
      %v939 = vunpack.c.l.b16 %v891
      %v940 = vunpack.c.l.b16 %v892
      %v941 = vunpack.c.l.b16 %v893
      %v942 = vunpack.c.l.b16 %v894
      %v943 = vunpack.c.l.b16 %v895
      %v944 = vunpack.c.l.b16 %v896
      %v945 = vunpack.c.l.b16 %v897
      %v946 = vunpack.c.l.b16 %v898
      %v947 = vunpack.c.l.b16 %v899
      %v948 = vunpack.c.l.b16 %v900
      %v949 = vpack.c.b16 %v926, %v925
      %v950 = vpack.c.b16 %v928, %v927
      %v951 = vpack.c.b16 %v930, %v929
      %v952 = vpack.c.b16 %v932, %v931
      %v953 = vpack.c.b16 %v934, %v933
      %v954 = vpack.c.b16 %v936, %v935
      %v955 = vpack.c.b16 %v938, %v937
      %v956 = vpack.c.b16 %v940, %v939
      %v957 = vpack.c.b16 %v942, %v941
      %v958 = vpack.c.b16 %v944, %v943
      %v959 = vpack.c.b16 %v946, %v945
      %v960 = vpack.c.b16 %v948, %v947
      %v974 = vsel %vm775, %v732, 0
      %v977 = vsel %vm775, %v735, 0
      %v980 = vsel %vm775, %v738, 0
      %v983 = vsel %vm775, %v741, 0
      %v986 = vsel %vm775, %v744, 0
      %v989 = vsel %vm775, %v747, 0
      %v992 = vsel %vm775, %v750, 0
      %v995 = vsel %vm775, %v753, 0
      %v998 = vsel %vm775, %v756, 0
      %v1001 = vsel %vm775, %v759, 0
      %v1004 = vsel %vm775, %v762, 0
      %v1007 = vsel %vm775, %v765, 0
      %v1010 = vsel %vm775, %v768, 0
      %v1013 = vsel %vm775, %v771, 0
      %v1016 = vsel %vm775, %v774, 0
      %v1019 = vsel %vm775, %v872, 0
      %1021 = vmatprep.subr.bf16.mxu0 0
      %1022 = vmatpush1.bf16.msra.mxu0 %v956
      %1023 = vmatprep.subr.bf16.mxu0 0
      %1024 = vmatpush1.bf16.msra.mxu0 %v955
      %1025 = vmatprep.subr.bf16.mxu0 0
      %1026 = vmatpush1.bf16.msra.mxu0 %v954
      %1027 = vmatprep.subr.bf16.mxu0 0
      %1028 = vmatpush1.bf16.msra.mxu0 %v953
      %1029 = vmatprep.subr.bf16.mxu0 0
      %1030 = vmatpush1.bf16.msra.mxu0 %v952
      %1031 = vmatprep.subr.bf16.mxu0 0
      %1032 = vmatpush1.bf16.msra.mxu0 %v951
      %1033 = vmatprep.subr.bf16.mxu0 0
      %1034 = vmatpush1.bf16.msra.mxu0 %v950
      %1035 = vmatprep.subr.bf16.mxu0 0
      %1036 = vmatpush1.bf16.msra.mxu0 %v949
      %1037 = vmatprep.subr.bf16.mxu0 0
      %1038 = vmatpush2.bf16.msra.mxu0 0
      %1039 = vmatprep.subr.bf16.mxu0 0
      %1040 = vmatpush2.bf16.msra.mxu0 0
      %1041 = vmatprep.subr.bf16.mxu0 0
      %1042 = vmatpush2.bf16.msra.mxu0 0
      %1043 = vmatprep.subr.bf16.mxu0 0
      %1044 = vmatpush2.bf16.msra.mxu0 0
      %1045 = vmatprep.subr.bf16.mxu0 0
      %1046 = vmatpush2.bf16.msra.mxu0 %v960
      %1047 = vmatprep.subr.bf16.mxu0 0
      %1048 = vmatpush2.bf16.msra.mxu0 %v959
      %1049 = vmatprep.subr.bf16.mxu0 0
      %1050 = vmatpush2.bf16.msra.mxu0 %v958
      %1051 = vmatprep.subr.bf16.mxu0 0
      %1052 = vmatpush2.bf16.msra.mxu0 %v957
      %1053 = vmatprep.mubr.bf16.mxu0 %v974
      %1054 = vmatmul.mubr.bf16.gmra.mxu0 %v780
      %v1055 = vpop.f32.mrf.mxu0
      %v1056 = vadd.f32 0.0, %v1055
      %v1057 = vpop.f32.mrf.mxu0
      %v1058 = vpop.f32.mrf.mxu0
      %v1059 = vadd.f32 0.0, %v1058
      %v1060 = vpop.f32.mrf.mxu0
      %1061 = vmatprep.mubr.bf16.mxu0 %v977
      %1062 = vmatmul.mubr.bf16.gmra.mxu0 %v783
      %v1063 = vpop.f32.mrf.mxu0
      %v1064 = vadd.f32 0.0, %v1063
      %v1065 = vpop.f32.mrf.mxu0
      %v1066 = vpop.f32.mrf.mxu0
      %v1067 = vadd.f32 0.0, %v1066
      %v1068 = vpop.f32.mrf.mxu0
      %1069 = vmatprep.mubr.bf16.mxu0 %v980
      %1070 = vmatmul.mubr.bf16.gmra.mxu0 %v786
      %v1071 = vpop.f32.mrf.mxu0
      %v1072 = vadd.f32 0.0, %v1071
      %v1073 = vpop.f32.mrf.mxu0
      %v1074 = vpop.f32.mrf.mxu0
      %v1075 = vadd.f32 0.0, %v1074
      %v1076 = vpop.f32.mrf.mxu0
      %1077 = vmatprep.mubr.bf16.mxu0 %v983
      %1078 = vmatmul.mubr.bf16.gmra.mxu0 %v789
      %v1079 = vpop.f32.mrf.mxu0
      %v1080 = vadd.f32 0.0, %v1079
      %v1081 = vpop.f32.mrf.mxu0
      %v1082 = vpop.f32.mrf.mxu0
      %v1083 = vadd.f32 0.0, %v1082
      %v1084 = vpop.f32.mrf.mxu0
      %1085 = vmatprep.mubr.bf16.mxu0 %v986
      %1086 = vmatmul.mubr.bf16.gmra.mxu0 %v792
      %v1087 = vpop.f32.mrf.mxu0
      %v1088 = vadd.f32 0.0, %v1087
      %v1089 = vpop.f32.mrf.mxu0
      %v1090 = vpop.f32.mrf.mxu0
      %v1091 = vadd.f32 0.0, %v1090
      %v1092 = vpop.f32.mrf.mxu0
      %1093 = vmatprep.mubr.bf16.mxu0 %v989
      %1094 = vmatmul.mubr.bf16.gmra.mxu0 %v795
      %v1095 = vpop.f32.mrf.mxu0
      %v1096 = vadd.f32 0.0, %v1095
      %v1097 = vpop.f32.mrf.mxu0
      %v1098 = vpop.f32.mrf.mxu0
      %v1099 = vadd.f32 0.0, %v1098
      %v1100 = vpop.f32.mrf.mxu0
      %1101 = vmatprep.mubr.bf16.mxu0 %v992
      %1102 = vmatmul.mubr.bf16.gmra.mxu0 %v798
      %v1103 = vpop.f32.mrf.mxu0
      %v1104 = vadd.f32 0.0, %v1103
      %v1105 = vpop.f32.mrf.mxu0
      %v1106 = vpop.f32.mrf.mxu0
      %v1107 = vadd.f32 0.0, %v1106
      %v1108 = vpop.f32.mrf.mxu0
      %1109 = vmatprep.mubr.bf16.mxu0 %v995
      %1110 = vmatmul.mubr.bf16.gmra.mxu0 %v801
      %v1111 = vpop.f32.mrf.mxu0
      %v1112 = vadd.f32 0.0, %v1111
      %v1113 = vpop.f32.mrf.mxu0
      %v1114 = vpop.f32.mrf.mxu0
      %v1115 = vadd.f32 0.0, %v1114
      %v1116 = vpop.f32.mrf.mxu0
      %1117 = vmatprep.mubr.bf16.mxu0 %v998
      %1118 = vmatmul.mubr.bf16.gmra.mxu0 %v804
      %v1119 = vpop.f32.mrf.mxu0
      %v1120 = vadd.f32 0.0, %v1119
      %v1121 = vpop.f32.mrf.mxu0
      %v1122 = vpop.f32.mrf.mxu0
      %v1123 = vadd.f32 0.0, %v1122
      %v1124 = vpop.f32.mrf.mxu0
      %1125 = vmatprep.mubr.bf16.mxu0 %v1001
      %1126 = vmatmul.mubr.bf16.gmra.mxu0 %v807
      %v1127 = vpop.f32.mrf.mxu0
      %v1128 = vadd.f32 0.0, %v1127
      %v1129 = vpop.f32.mrf.mxu0
      %v1130 = vpop.f32.mrf.mxu0
      %v1131 = vadd.f32 0.0, %v1130
      %v1132 = vpop.f32.mrf.mxu0
      %1133 = vmatprep.mubr.bf16.mxu0 %v1004
      %1134 = vmatmul.mubr.bf16.gmra.mxu0 %v810
      %v1135 = vpop.f32.mrf.mxu0
      %v1136 = vadd.f32 0.0, %v1135
      %v1137 = vpop.f32.mrf.mxu0
      %v1138 = vpop.f32.mrf.mxu0
      %v1139 = vadd.f32 0.0, %v1138
      %v1140 = vpop.f32.mrf.mxu0
      %1141 = vmatprep.mubr.bf16.mxu0 %v1007
      %1142 = vmatmul.mubr.bf16.gmra.mxu0 %v813
      %v1143 = vpop.f32.mrf.mxu0
      %v1144 = vadd.f32 0.0, %v1143
      %v1145 = vpop.f32.mrf.mxu0
      %v1146 = vpop.f32.mrf.mxu0
      %v1147 = vadd.f32 0.0, %v1146
      %v1148 = vpop.f32.mrf.mxu0
      %1149 = vmatprep.mubr.bf16.mxu0 %v1010
      %1150 = vmatmul.mubr.bf16.gmra.mxu0 %v816
      %v1151 = vpop.f32.mrf.mxu0
      %v1152 = vadd.f32 0.0, %v1151
      %v1153 = vpop.f32.mrf.mxu0
      %v1154 = vpop.f32.mrf.mxu0
      %v1155 = vadd.f32 0.0, %v1154
      %v1156 = vpop.f32.mrf.mxu0
      %1157 = vmatprep.mubr.bf16.mxu0 %v1013
      %1158 = vmatmul.mubr.bf16.gmra.mxu0 %v819
      %v1159 = vpop.f32.mrf.mxu0
      %v1160 = vadd.f32 0.0, %v1159
      %v1161 = vpop.f32.mrf.mxu0
      %v1162 = vpop.f32.mrf.mxu0
      %v1163 = vadd.f32 0.0, %v1162
      %v1164 = vpop.f32.mrf.mxu0
      %1165 = vmatprep.mubr.bf16.mxu0 %v1016
      %1166 = vmatmul.mubr.bf16.gmra.mxu0 %v822
      %v1167 = vpop.f32.mrf.mxu0
      %v1168 = vadd.f32 0.0, %v1167
      %v1169 = vpop.f32.mrf.mxu0
      %v1170 = vpop.f32.mrf.mxu0
      %v1171 = vadd.f32 0.0, %v1170
      %v1172 = vpop.f32.mrf.mxu0
      %1173 = vmatprep.mubr.bf16.mxu0 %v1019
      %1174 = vmatmul.mubr.bf16.gmra.mxu0 %v874
      %v1175 = vpop.f32.mrf.mxu0
      %v1176 = vadd.f32 0.0, %v1175
      %v1177 = vpop.f32.mrf.mxu0
      %v1178 = vpop.f32.mrf.mxu0
      %v1179 = vadd.f32 0.0, %v1178
      %v1180 = vpop.f32.mrf.mxu0
      %1181 = vdwg.mxu0
      %v1206 = vunpack.c.l.b16 %v824
      %v1207 = vunpack.c.l.b16 %v825
      %v1208 = vunpack.c.l.b16 %v826
      %v1209 = vunpack.c.l.b16 %v827
      %v1210 = vunpack.c.l.b16 %v828
      %v1211 = vunpack.c.l.b16 %v829
      %v1212 = vunpack.c.l.b16 %v830
      %v1213 = vunpack.c.l.b16 %v831
      %v1214 = vunpack.c.l.b16 %v832
      %v1215 = vunpack.c.l.b16 %v833
      %v1216 = vunpack.c.l.b16 %v834
      %v1217 = vunpack.c.l.b16 %v835
      %v1218 = vunpack.c.l.b16 %v836
      %v1219 = vunpack.c.l.b16 %v837
      %v1220 = vunpack.c.l.b16 %v838
      %v1221 = vunpack.c.l.b16 %v839
      %v1222 = vunpack.c.l.b16 %v840
      %v1223 = vunpack.c.l.b16 %v841
      %v1224 = vunpack.c.l.b16 %v842
      %v1225 = vunpack.c.l.b16 %v843
      %v1226 = vunpack.c.l.b16 %v844
      %v1227 = vunpack.c.l.b16 %v845
      %v1228 = vunpack.c.l.b16 %v846
      %v1229 = vunpack.c.l.b16 %v847
      %v1230 = vpack.c.b16 %v1207, %v1206
      %v1231 = vpack.c.b16 %v1209, %v1208
      %v1232 = vpack.c.b16 %v1211, %v1210
      %v1233 = vpack.c.b16 %v1213, %v1212
      %v1234 = vpack.c.b16 %v1215, %v1214
      %v1235 = vpack.c.b16 %v1217, %v1216
      %v1236 = vpack.c.b16 %v1219, %v1218
      %v1237 = vpack.c.b16 %v1221, %v1220
      %v1238 = vpack.c.b16 %v1223, %v1222
      %v1239 = vpack.c.b16 %v1225, %v1224
      %v1240 = vpack.c.b16 %v1227, %v1226
      %v1241 = vpack.c.b16 %v1229, %v1228
      %v1255 = vsel %vm775, %v729, 0
      %1257 = vmatprep.subr.bf16.mxu0 0
      %1258 = vmatpush1.bf16.msra.mxu0 %v1237
      %1259 = vmatprep.subr.bf16.mxu0 0
      %1260 = vmatpush1.bf16.msra.mxu0 %v1236
      %1261 = vmatprep.subr.bf16.mxu0 0
      %1262 = vmatpush1.bf16.msra.mxu0 %v1235
      %1263 = vmatprep.subr.bf16.mxu0 0
      %1264 = vmatpush1.bf16.msra.mxu0 %v1234
      %1265 = vmatprep.subr.bf16.mxu0 0
      %1266 = vmatpush1.bf16.msra.mxu0 %v1233
      %1267 = vmatprep.subr.bf16.mxu0 0
      %1268 = vmatpush1.bf16.msra.mxu0 %v1232
      %1269 = vmatprep.subr.bf16.mxu0 0
      %1270 = vmatpush1.bf16.msra.mxu0 %v1231
      %1271 = vmatprep.subr.bf16.mxu0 0
      %1272 = vmatpush1.bf16.msra.mxu0 %v1230
      %1273 = vmatprep.subr.bf16.mxu0 0
      %1274 = vmatpush2.bf16.msra.mxu0 0
      %1275 = vmatprep.subr.bf16.mxu0 0
      %1276 = vmatpush2.bf16.msra.mxu0 0
      %1277 = vmatprep.subr.bf16.mxu0 0
      %1278 = vmatpush2.bf16.msra.mxu0 0
      %1279 = vmatprep.subr.bf16.mxu0 0
      %1280 = vmatpush2.bf16.msra.mxu0 0
      %1281 = vmatprep.subr.bf16.mxu0 0
      %1282 = vmatpush2.bf16.msra.mxu0 %v1241
      %1283 = vmatprep.subr.bf16.mxu0 0
      %1284 = vmatpush2.bf16.msra.mxu0 %v1240
      %1285 = vmatprep.subr.bf16.mxu0 0
      %1286 = vmatpush2.bf16.msra.mxu0 %v1239
      %1287 = vmatprep.subr.bf16.mxu0 0
      %1288 = vmatpush2.bf16.msra.mxu0 %v1238
      %1289 = vmatprep.mubr.bf16.mxu0 %v1255
      %1290 = vmatmul.mubr.bf16.gmra.mxu0 %v777
      %v1291 = vpop.f32.mrf.mxu0
      %v1292 = vadd.f32 %v1056, %v1291
      %v1293 = vpop.f32.mrf.mxu0
      %v1294 = vpop.f32.mrf.mxu0
      %v1295 = vadd.f32 %v1059, %v1294
      %v1296 = vpop.f32.mrf.mxu0
      %1297 = vmatprep.mubr.bf16.mxu0 %v974
      %1298 = vmatmul.mubr.bf16.gmra.mxu0 %v780
      %v1299 = vpop.f32.mrf.mxu0
      %v1300 = vadd.f32 %v1064, %v1299
      %v1301 = vpop.f32.mrf.mxu0
      %v1302 = vpop.f32.mrf.mxu0
      %v1303 = vadd.f32 %v1067, %v1302
      %v1304 = vpop.f32.mrf.mxu0
      %1305 = vmatprep.mubr.bf16.mxu0 %v977
      %1306 = vmatmul.mubr.bf16.gmra.mxu0 %v783
      %v1307 = vpop.f32.mrf.mxu0
      %v1308 = vadd.f32 %v1072, %v1307
      %v1309 = vpop.f32.mrf.mxu0
      %v1310 = vpop.f32.mrf.mxu0
      %v1311 = vadd.f32 %v1075, %v1310
      %v1312 = vpop.f32.mrf.mxu0
      %1313 = vmatprep.mubr.bf16.mxu0 %v980
      %1314 = vmatmul.mubr.bf16.gmra.mxu0 %v786
      %v1315 = vpop.f32.mrf.mxu0
      %v1316 = vadd.f32 %v1080, %v1315
      %v1317 = vpop.f32.mrf.mxu0
      %v1318 = vpop.f32.mrf.mxu0
      %v1319 = vadd.f32 %v1083, %v1318
      %v1320 = vpop.f32.mrf.mxu0
      %1321 = vmatprep.mubr.bf16.mxu0 %v983
      %1322 = vmatmul.mubr.bf16.gmra.mxu0 %v789
      %v1323 = vpop.f32.mrf.mxu0
      %v1324 = vadd.f32 %v1088, %v1323
      %v1325 = vpop.f32.mrf.mxu0
      %v1326 = vpop.f32.mrf.mxu0
      %v1327 = vadd.f32 %v1091, %v1326
      %v1328 = vpop.f32.mrf.mxu0
      %1329 = vmatprep.mubr.bf16.mxu0 %v986
      %1330 = vmatmul.mubr.bf16.gmra.mxu0 %v792
      %v1331 = vpop.f32.mrf.mxu0
      %v1332 = vadd.f32 %v1096, %v1331
      %v1333 = vpop.f32.mrf.mxu0
      %v1334 = vpop.f32.mrf.mxu0
      %v1335 = vadd.f32 %v1099, %v1334
      %v1336 = vpop.f32.mrf.mxu0
      %1337 = vmatprep.mubr.bf16.mxu0 %v989
      %1338 = vmatmul.mubr.bf16.gmra.mxu0 %v795
      %v1339 = vpop.f32.mrf.mxu0
      %v1340 = vadd.f32 %v1104, %v1339
      %v1341 = vpop.f32.mrf.mxu0
      %v1342 = vpop.f32.mrf.mxu0
      %v1343 = vadd.f32 %v1107, %v1342
      %v1344 = vpop.f32.mrf.mxu0
      %1345 = vmatprep.mubr.bf16.mxu0 %v992
      %1346 = vmatmul.mubr.bf16.gmra.mxu0 %v798
      %v1347 = vpop.f32.mrf.mxu0
      %v1348 = vadd.f32 %v1112, %v1347
      %v1349 = vpop.f32.mrf.mxu0
      %v1350 = vpop.f32.mrf.mxu0
      %v1351 = vadd.f32 %v1115, %v1350
      %v1352 = vpop.f32.mrf.mxu0
      %1353 = vmatprep.mubr.bf16.mxu0 %v995
      %1354 = vmatmul.mubr.bf16.gmra.mxu0 %v801
      %v1355 = vpop.f32.mrf.mxu0
      %v1356 = vadd.f32 %v1120, %v1355
      %v1357 = vpop.f32.mrf.mxu0
      %v1358 = vpop.f32.mrf.mxu0
      %v1359 = vadd.f32 %v1123, %v1358
      %v1360 = vpop.f32.mrf.mxu0
      %1361 = vmatprep.mubr.bf16.mxu0 %v998
      %1362 = vmatmul.mubr.bf16.gmra.mxu0 %v804
      %v1363 = vpop.f32.mrf.mxu0
      %v1364 = vadd.f32 %v1128, %v1363
      %v1365 = vpop.f32.mrf.mxu0
      %v1366 = vpop.f32.mrf.mxu0
      %v1367 = vadd.f32 %v1131, %v1366
      %v1368 = vpop.f32.mrf.mxu0
      %1369 = vmatprep.mubr.bf16.mxu0 %v1001
      %1370 = vmatmul.mubr.bf16.gmra.mxu0 %v807
      %v1371 = vpop.f32.mrf.mxu0
      %v1372 = vadd.f32 %v1136, %v1371
      %v1373 = vpop.f32.mrf.mxu0
      %v1374 = vpop.f32.mrf.mxu0
      %v1375 = vadd.f32 %v1139, %v1374
      %v1376 = vpop.f32.mrf.mxu0
      %1377 = vmatprep.mubr.bf16.mxu0 %v1004
      %1378 = vmatmul.mubr.bf16.gmra.mxu0 %v810
      %v1379 = vpop.f32.mrf.mxu0
      %v1380 = vadd.f32 %v1144, %v1379
      %v1381 = vpop.f32.mrf.mxu0
      %v1382 = vpop.f32.mrf.mxu0
      %v1383 = vadd.f32 %v1147, %v1382
      %v1384 = vpop.f32.mrf.mxu0
      %1385 = vmatprep.mubr.bf16.mxu0 %v1007
      %1386 = vmatmul.mubr.bf16.gmra.mxu0 %v813
      %v1387 = vpop.f32.mrf.mxu0
      %v1388 = vadd.f32 %v1152, %v1387
      %v1389 = vpop.f32.mrf.mxu0
      %v1390 = vpop.f32.mrf.mxu0
      %v1391 = vadd.f32 %v1155, %v1390
      %v1392 = vpop.f32.mrf.mxu0
      %1393 = vmatprep.mubr.bf16.mxu0 %v1010
      %1394 = vmatmul.mubr.bf16.gmra.mxu0 %v816
      %v1395 = vpop.f32.mrf.mxu0
      %v1396 = vadd.f32 %v1160, %v1395
      %v1397 = vpop.f32.mrf.mxu0
      %v1398 = vpop.f32.mrf.mxu0
      %v1399 = vadd.f32 %v1163, %v1398
      %v1400 = vpop.f32.mrf.mxu0
      %1401 = vmatprep.mubr.bf16.mxu0 %v1013
      %1402 = vmatmul.mubr.bf16.gmra.mxu0 %v819
      %v1403 = vpop.f32.mrf.mxu0
      %v1404 = vadd.f32 %v1168, %v1403
      %v1405 = vpop.f32.mrf.mxu0
      %v1406 = vpop.f32.mrf.mxu0
      %v1407 = vadd.f32 %v1171, %v1406
      %v1408 = vpop.f32.mrf.mxu0
      %1409 = vmatprep.mubr.bf16.mxu0 %v1016
      %1410 = vmatmul.mubr.bf16.gmra.mxu0 %v822
      %v1411 = vpop.f32.mrf.mxu0
      %v1412 = vadd.f32 %v1176, %v1411
      %v1413 = vpop.f32.mrf.mxu0
      %v1414 = vpop.f32.mrf.mxu0
      %v1415 = vadd.f32 %v1179, %v1414
      %v1416 = vpop.f32.mrf.mxu0
      %1417 = vdwg.mxu0
      %v1420 = vunpack.c.l.b16 %v370
      %v1421 = vunpack.c.l.b16 %v371
      %v1422 = vpack.c.b16 %v1421, %v1420
      %v1424 = vunpack.c.l.b16 %v372
      %v1425 = vpack.c.b16 %v1424, %v1424
      %v1427 = vshrl.u32 %v1422, 16
      %v1429 = vshll.u32 %v1422, 16
      %v1431 = vrot.slane %v1429, 1
      %v1432 = vor.u32 %v1427, %v1431
      %v1434 = vshll.u32 %v1425, 16
      %v1436 = vrot.slane %v1434, 1
      %v1437 = vsel %vm501, %v1432, %v1436
      %1438 = vrot.lane.b32.xlu0 %v1437, 64
      %v1439 = vpop.permute.xlu0 %1438
      %v1440 = vrot.slane %v1422, 1
      %v1441 = vrot.slane %v1425, 1
      %v1442 = vsel %vm726, %v1440, %v1441
      %v1444 = vsel %vm775, %v1422, %v1439
      %s1446 = scalar_lea.vmem %s2, 192
      %v1447 = vld [vmem:[%s1446] sm:$0xf]
      %v1448 = vld [vmem:[%s1446 + $0x4] sm:$0xf]
      %v1449 = vld [vmem:[%s1446 + $0x8] sm:$0xf]
      %v1450 = vld [vmem:[%s1446 + $0xc] sm:$0xf]
      %v1451 = vld [vmem:[%s1446 + $0x10] sm:$0xf]
      %v1452 = vld [vmem:[%s1446 + $0x14] sm:$0xf]
      %v1453 = vld [vmem:[%s1446 + $0x18] sm:$0xf]
      %v1454 = vld [vmem:[%s1446 + $0x1c] sm:$0xf]
      %v1455 = vld [vmem:[%s1446 + $0x20] sm:$0xf]
      %v1456 = vld [vmem:[%s1446 + $0x24] sm:$0xf]
      %v1457 = vld [vmem:[%s1446 + $0x28] sm:$0xf]
      %v1458 = vld [vmem:[%s1446 + $0x2c] sm:$0xf]
      %v1459 = vld [vmem:[%s1446 + $0x30] sm:$0xf]
      %v1460 = vld [vmem:[%s1446 + $0x34] sm:$0xf]
      %v1461 = vld [vmem:[%s1446 + $0x38] sm:$0xf]
      %v1462 = vld [vmem:[%s1446 + $0x3c] sm:$0xf]
      %v1463 = vld [vmem:[%s1446 + $0x40] sm:$0xf]
      %v1464 = vld [vmem:[%s1446 + $0x44] sm:$0xf]
      %v1465 = vld [vmem:[%s1446 + $0x48] sm:$0xf]
      %v1466 = vld [vmem:[%s1446 + $0x4c] sm:$0xf]
      %v1467 = vld [vmem:[%s1446 + $0x50] sm:$0xf]
      %v1468 = vld [vmem:[%s1446 + $0x54] sm:$0xf]
      %v1469 = vld [vmem:[%s1446 + $0x58] sm:$0xf]
      %v1470 = vld [vmem:[%s1446 + $0x5c] sm:$0xf]
      %v1495 = vunpack.c.l.b16 %v1447
      %v1496 = vunpack.c.l.b16 %v1448
      %v1497 = vunpack.c.l.b16 %v1449
      %v1498 = vunpack.c.l.b16 %v1450
      %v1499 = vunpack.c.l.b16 %v1451
      %v1500 = vunpack.c.l.b16 %v1452
      %v1501 = vunpack.c.l.b16 %v1453
      %v1502 = vunpack.c.l.b16 %v1454
      %v1503 = vunpack.c.l.b16 %v1455
      %v1504 = vunpack.c.l.b16 %v1456
      %v1505 = vunpack.c.l.b16 %v1457
      %v1506 = vunpack.c.l.b16 %v1458
      %v1507 = vunpack.c.l.b16 %v1459
      %v1508 = vunpack.c.l.b16 %v1460
      %v1509 = vunpack.c.l.b16 %v1461
      %v1510 = vunpack.c.l.b16 %v1462
      %v1511 = vunpack.c.l.b16 %v1463
      %v1512 = vunpack.c.l.b16 %v1464
      %v1513 = vunpack.c.l.b16 %v1465
      %v1514 = vunpack.c.l.b16 %v1466
      %v1515 = vunpack.c.l.b16 %v1467
      %v1516 = vunpack.c.l.b16 %v1468
      %v1517 = vunpack.c.l.b16 %v1469
      %v1518 = vunpack.c.l.b16 %v1470
      %v1519 = vpack.c.b16 %v1496, %v1495
      %v1520 = vpack.c.b16 %v1498, %v1497
      %v1521 = vpack.c.b16 %v1500, %v1499
      %v1522 = vpack.c.b16 %v1502, %v1501
      %v1523 = vpack.c.b16 %v1504, %v1503
      %v1524 = vpack.c.b16 %v1506, %v1505
      %v1525 = vpack.c.b16 %v1508, %v1507
      %v1526 = vpack.c.b16 %v1510, %v1509
      %v1527 = vpack.c.b16 %v1512, %v1511
      %v1528 = vpack.c.b16 %v1514, %v1513
      %v1529 = vpack.c.b16 %v1516, %v1515
      %v1530 = vpack.c.b16 %v1518, %v1517
      %v1544 = vsel %vm775, %v1442, 0
      %1546 = vmatprep.subr.bf16.mxu0 0
      %1547 = vmatpush1.bf16.msra.mxu0 %v1526
      %1548 = vmatprep.subr.bf16.mxu0 0
      %1549 = vmatpush1.bf16.msra.mxu0 %v1525
      %1550 = vmatprep.subr.bf16.mxu0 0
      %1551 = vmatpush1.bf16.msra.mxu0 %v1524
      %1552 = vmatprep.subr.bf16.mxu0 0
      %1553 = vmatpush1.bf16.msra.mxu0 %v1523
      %1554 = vmatprep.subr.bf16.mxu0 0
      %1555 = vmatpush1.bf16.msra.mxu0 %v1522
      %1556 = vmatprep.subr.bf16.mxu0 0
      %1557 = vmatpush1.bf16.msra.mxu0 %v1521
      %1558 = vmatprep.subr.bf16.mxu0 0
      %1559 = vmatpush1.bf16.msra.mxu0 %v1520
      %1560 = vmatprep.subr.bf16.mxu0 0
      %1561 = vmatpush1.bf16.msra.mxu0 %v1519
      %1562 = vmatprep.subr.bf16.mxu0 0
      %1563 = vmatpush2.bf16.msra.mxu0 0
      %1564 = vmatprep.subr.bf16.mxu0 0
      %1565 = vmatpush2.bf16.msra.mxu0 0
      %1566 = vmatprep.subr.bf16.mxu0 0
      %1567 = vmatpush2.bf16.msra.mxu0 0
      %1568 = vmatprep.subr.bf16.mxu0 0
      %1569 = vmatpush2.bf16.msra.mxu0 0
      %1570 = vmatprep.subr.bf16.mxu0 0
      %1571 = vmatpush2.bf16.msra.mxu0 %v1530
      %1572 = vmatprep.subr.bf16.mxu0 0
      %1573 = vmatpush2.bf16.msra.mxu0 %v1529
      %1574 = vmatprep.subr.bf16.mxu0 0
      %1575 = vmatpush2.bf16.msra.mxu0 %v1528
      %1576 = vmatprep.subr.bf16.mxu0 0
      %1577 = vmatpush2.bf16.msra.mxu0 %v1527
      %1578 = vmatprep.mubr.bf16.mxu0 %v977
      %1579 = vmatmul.mubr.bf16.gmra.mxu0 %v783
      %v1580 = vpop.f32.mrf.mxu0
      %v1581 = vadd.f32 0.0, %v1580
      %v1582 = vpop.f32.mrf.mxu0
      %v1583 = vpop.f32.mrf.mxu0
      %v1584 = vadd.f32 0.0, %v1583
      %v1585 = vpop.f32.mrf.mxu0
      %1586 = vmatprep.mubr.bf16.mxu0 %v980
      %1587 = vmatmul.mubr.bf16.gmra.mxu0 %v786
      %v1588 = vpop.f32.mrf.mxu0
      %v1589 = vadd.f32 0.0, %v1588
      %v1590 = vpop.f32.mrf.mxu0
      %v1591 = vpop.f32.mrf.mxu0
      %v1592 = vadd.f32 0.0, %v1591
      %v1593 = vpop.f32.mrf.mxu0
      %1594 = vmatprep.mubr.bf16.mxu0 %v983
      %1595 = vmatmul.mubr.bf16.gmra.mxu0 %v789
      %v1596 = vpop.f32.mrf.mxu0
      %v1597 = vadd.f32 0.0, %v1596
      %v1598 = vpop.f32.mrf.mxu0
      %v1599 = vpop.f32.mrf.mxu0
      %v1600 = vadd.f32 0.0, %v1599
      %v1601 = vpop.f32.mrf.mxu0
      %1602 = vmatprep.mubr.bf16.mxu0 %v986
      %1603 = vmatmul.mubr.bf16.gmra.mxu0 %v792
      %v1604 = vpop.f32.mrf.mxu0
      %v1605 = vadd.f32 0.0, %v1604
      %v1606 = vpop.f32.mrf.mxu0
      %v1607 = vpop.f32.mrf.mxu0
      %v1608 = vadd.f32 0.0, %v1607
      %v1609 = vpop.f32.mrf.mxu0
      %1610 = vmatprep.mubr.bf16.mxu0 %v989
      %1611 = vmatmul.mubr.bf16.gmra.mxu0 %v795
      %v1612 = vpop.f32.mrf.mxu0
      %v1613 = vadd.f32 0.0, %v1612
      %v1614 = vpop.f32.mrf.mxu0
      %v1615 = vpop.f32.mrf.mxu0
      %v1616 = vadd.f32 0.0, %v1615
      %v1617 = vpop.f32.mrf.mxu0
      %1618 = vmatprep.mubr.bf16.mxu0 %v992
      %1619 = vmatmul.mubr.bf16.gmra.mxu0 %v798
      %v1620 = vpop.f32.mrf.mxu0
      %v1621 = vadd.f32 0.0, %v1620
      %v1622 = vpop.f32.mrf.mxu0
      %v1623 = vpop.f32.mrf.mxu0
      %v1624 = vadd.f32 0.0, %v1623
      %v1625 = vpop.f32.mrf.mxu0
      %1626 = vmatprep.mubr.bf16.mxu0 %v995
      %1627 = vmatmul.mubr.bf16.gmra.mxu0 %v801
      %v1628 = vpop.f32.mrf.mxu0
      %v1629 = vadd.f32 0.0, %v1628
      %v1630 = vpop.f32.mrf.mxu0
      %v1631 = vpop.f32.mrf.mxu0
      %v1632 = vadd.f32 0.0, %v1631
      %v1633 = vpop.f32.mrf.mxu0
      %1634 = vmatprep.mubr.bf16.mxu0 %v998
      %1635 = vmatmul.mubr.bf16.gmra.mxu0 %v804
      %v1636 = vpop.f32.mrf.mxu0
      %v1637 = vadd.f32 0.0, %v1636
      %v1638 = vpop.f32.mrf.mxu0
      %v1639 = vpop.f32.mrf.mxu0
      %v1640 = vadd.f32 0.0, %v1639
      %v1641 = vpop.f32.mrf.mxu0
      %1642 = vmatprep.mubr.bf16.mxu0 %v1001
      %1643 = vmatmul.mubr.bf16.gmra.mxu0 %v807
      %v1644 = vpop.f32.mrf.mxu0
      %v1645 = vadd.f32 0.0, %v1644
      %v1646 = vpop.f32.mrf.mxu0
      %v1647 = vpop.f32.mrf.mxu0
      %v1648 = vadd.f32 0.0, %v1647
      %v1649 = vpop.f32.mrf.mxu0
      %1650 = vmatprep.mubr.bf16.mxu0 %v1004
      %1651 = vmatmul.mubr.bf16.gmra.mxu0 %v810
      %v1652 = vpop.f32.mrf.mxu0
      %v1653 = vadd.f32 0.0, %v1652
      %v1654 = vpop.f32.mrf.mxu0
      %v1655 = vpop.f32.mrf.mxu0
      %v1656 = vadd.f32 0.0, %v1655
      %v1657 = vpop.f32.mrf.mxu0
      %1658 = vmatprep.mubr.bf16.mxu0 %v1007
      %1659 = vmatmul.mubr.bf16.gmra.mxu0 %v813
      %v1660 = vpop.f32.mrf.mxu0
      %v1661 = vadd.f32 0.0, %v1660
      %v1662 = vpop.f32.mrf.mxu0
      %v1663 = vpop.f32.mrf.mxu0
      %v1664 = vadd.f32 0.0, %v1663
      %v1665 = vpop.f32.mrf.mxu0
      %1666 = vmatprep.mubr.bf16.mxu0 %v1010
      %1667 = vmatmul.mubr.bf16.gmra.mxu0 %v816
      %v1668 = vpop.f32.mrf.mxu0
      %v1669 = vadd.f32 0.0, %v1668
      %v1670 = vpop.f32.mrf.mxu0
      %v1671 = vpop.f32.mrf.mxu0
      %v1672 = vadd.f32 0.0, %v1671
      %v1673 = vpop.f32.mrf.mxu0
      %1674 = vmatprep.mubr.bf16.mxu0 %v1013
      %1675 = vmatmul.mubr.bf16.gmra.mxu0 %v819
      %v1676 = vpop.f32.mrf.mxu0
      %v1677 = vadd.f32 0.0, %v1676
      %v1678 = vpop.f32.mrf.mxu0
      %v1679 = vpop.f32.mrf.mxu0
      %v1680 = vadd.f32 0.0, %v1679
      %v1681 = vpop.f32.mrf.mxu0
      %1682 = vmatprep.mubr.bf16.mxu0 %v1016
      %1683 = vmatmul.mubr.bf16.gmra.mxu0 %v822
      %v1684 = vpop.f32.mrf.mxu0
      %v1685 = vadd.f32 0.0, %v1684
      %v1686 = vpop.f32.mrf.mxu0
      %v1687 = vpop.f32.mrf.mxu0
      %v1688 = vadd.f32 0.0, %v1687
      %v1689 = vpop.f32.mrf.mxu0
      %1690 = vmatprep.mubr.bf16.mxu0 %v1019
      %1691 = vmatmul.mubr.bf16.gmra.mxu0 %v874
      %v1692 = vpop.f32.mrf.mxu0
      %v1693 = vadd.f32 0.0, %v1692
      %v1694 = vpop.f32.mrf.mxu0
      %v1695 = vpop.f32.mrf.mxu0
      %v1696 = vadd.f32 0.0, %v1695
      %v1697 = vpop.f32.mrf.mxu0
      %1698 = vmatprep.mubr.bf16.mxu0 %v1544
      %1699 = vmatmul.mubr.bf16.gmra.mxu0 %v1444
      %v1700 = vpop.f32.mrf.mxu0
      %v1701 = vadd.f32 0.0, %v1700
      %v1702 = vpop.f32.mrf.mxu0
      %v1703 = vpop.f32.mrf.mxu0
      %v1704 = vadd.f32 0.0, %v1703
      %v1705 = vpop.f32.mrf.mxu0
      %1706 = vdwg.mxu0
      %v1707 = vadd.f32 %v1292, %v1581
      %v1708 = vadd.f32 %v1295, %v1584
      %v1709 = vadd.f32 %v1300, %v1589
      %v1710 = vadd.f32 %v1303, %v1592
      %v1711 = vadd.f32 %v1308, %v1597
      %v1712 = vadd.f32 %v1311, %v1600
      %v1713 = vadd.f32 %v1316, %v1605
      %v1714 = vadd.f32 %v1319, %v1608
      %v1715 = vadd.f32 %v1324, %v1613
      %v1716 = vadd.f32 %v1327, %v1616
      %v1717 = vadd.f32 %v1332, %v1621
      %v1718 = vadd.f32 %v1335, %v1624
      %v1719 = vadd.f32 %v1340, %v1629
      %v1720 = vadd.f32 %v1343, %v1632
      %v1721 = vadd.f32 %v1348, %v1637
      %v1722 = vadd.f32 %v1351, %v1640
      %v1723 = vadd.f32 %v1356, %v1645
      %v1724 = vadd.f32 %v1359, %v1648
      %v1725 = vadd.f32 %v1364, %v1653
      %v1726 = vadd.f32 %v1367, %v1656
      %v1727 = vadd.f32 %v1372, %v1661
      %v1728 = vadd.f32 %v1375, %v1664
      %v1729 = vadd.f32 %v1380, %v1669
      %v1730 = vadd.f32 %v1383, %v1672
      %v1731 = vadd.f32 %v1388, %v1677
      %v1732 = vadd.f32 %v1391, %v1680
      %v1733 = vadd.f32 %v1396, %v1685
      %v1734 = vadd.f32 %v1399, %v1688
      %v1735 = vadd.f32 %v1404, %v1693
      %v1736 = vadd.f32 %v1407, %v1696
      %v1737 = vadd.f32 %v1412, %v1701
      %v1738 = vadd.f32 %v1415, %v1704
      %v1739 = vld [vmem:[%s3] sm:$0x1]
      %v1741 = vlaneseq
      %v1742 = vshrl.u32 %v1741, 7
      %v1743 = vsub.s32 0, %v1742
      %v1744 = vrot.slane %v1739, %v1743
      %v1746 = vadd.f32 %v1707, %v1744
      %v1747 = vadd.f32 %v1708, %v1744
      %v1748 = vadd.f32 %v1709, %v1744
      %v1749 = vadd.f32 %v1710, %v1744
      %v1750 = vadd.f32 %v1711, %v1744
      %v1751 = vadd.f32 %v1712, %v1744
      %v1752 = vadd.f32 %v1713, %v1744
      %v1753 = vadd.f32 %v1714, %v1744
      %v1754 = vadd.f32 %v1715, %v1744
      %v1755 = vadd.f32 %v1716, %v1744
      %v1756 = vadd.f32 %v1717, %v1744
      %v1757 = vadd.f32 %v1718, %v1744
      %v1758 = vadd.f32 %v1719, %v1744
      %v1759 = vadd.f32 %v1720, %v1744
      %v1760 = vadd.f32 %v1721, %v1744
      %v1761 = vadd.f32 %v1722, %v1744
      %v1762 = vadd.f32 %v1723, %v1744
      %v1763 = vadd.f32 %v1724, %v1744
      %v1764 = vadd.f32 %v1725, %v1744
      %v1765 = vadd.f32 %v1726, %v1744
      %v1766 = vadd.f32 %v1727, %v1744
      %v1767 = vadd.f32 %v1728, %v1744
      %v1768 = vadd.f32 %v1729, %v1744
      %v1769 = vadd.f32 %v1730, %v1744
      %v1770 = vadd.f32 %v1731, %v1744
      %v1771 = vadd.f32 %v1732, %v1744
      %v1772 = vadd.f32 %v1733, %v1744
      %v1773 = vadd.f32 %v1734, %v1744
      %v1774 = vadd.f32 %v1735, %v1744
      %v1775 = vadd.f32 %v1736, %v1744
      %v1776 = vadd.f32 %v1737, %v1744
      %v1777 = vadd.f32 %v1738, %v1744
      %v1778 = vmax.f32 %v1746, 0.0
      %v1779 = vmax.f32 %v1747, 0.0
      %v1780 = vmax.f32 %v1748, 0.0
      %v1781 = vmax.f32 %v1749, 0.0
      %v1782 = vmax.f32 %v1750, 0.0
      %v1783 = vmax.f32 %v1751, 0.0
      %v1784 = vmax.f32 %v1752, 0.0
      %v1785 = vmax.f32 %v1753, 0.0
      %v1786 = vmax.f32 %v1754, 0.0
      %v1787 = vmax.f32 %v1755, 0.0
      %v1788 = vmax.f32 %v1756, 0.0
      %v1789 = vmax.f32 %v1757, 0.0
      %v1790 = vmax.f32 %v1758, 0.0
      %v1791 = vmax.f32 %v1759, 0.0
      %v1792 = vmax.f32 %v1760, 0.0
      %v1793 = vmax.f32 %v1761, 0.0
      %v1794 = vmax.f32 %v1762, 0.0
      %v1795 = vmax.f32 %v1763, 0.0
      %v1796 = vmax.f32 %v1764, 0.0
      %v1797 = vmax.f32 %v1765, 0.0
      %v1798 = vmax.f32 %v1766, 0.0
      %v1799 = vmax.f32 %v1767, 0.0
      %v1800 = vmax.f32 %v1768, 0.0
      %v1801 = vmax.f32 %v1769, 0.0
      %v1802 = vmax.f32 %v1770, 0.0
      %v1803 = vmax.f32 %v1771, 0.0
      %v1804 = vmax.f32 %v1772, 0.0
      %v1805 = vmax.f32 %v1773, 0.0
      %v1806 = vmax.f32 %v1774, 0.0
      %v1807 = vmax.f32 %v1775, 0.0
      %v1808 = vmax.f32 %v1776, 0.0
      %v1809 = vmax.f32 %v1777, 0.0
      %v1810 = vsel %vm775, %v1778, -inf
      %v1811 = vsel %vm775, %v1780, -inf
      %v1812 = vmax.f32 %v1810, %v1811
      %v1813 = vsel %vm775, %v1779, -inf
      %v1814 = vsel %vm775, %v1781, -inf
      %v1815 = vmax.f32 %v1813, %v1814
      %v1816 = vsel %vm775, %v1782, -inf
      %v1817 = vsel %vm775, %v1784, -inf
      %v1818 = vmax.f32 %v1816, %v1817
      %v1819 = vsel %vm775, %v1783, -inf
      %v1820 = vsel %vm775, %v1785, -inf
      %v1821 = vmax.f32 %v1819, %v1820
      %v1822 = vsel %vm775, %v1786, -inf
      %v1823 = vsel %vm775, %v1788, -inf
      %v1824 = vmax.f32 %v1822, %v1823
      %v1825 = vsel %vm775, %v1787, -inf
      %v1826 = vsel %vm775, %v1789, -inf
      %v1827 = vmax.f32 %v1825, %v1826
      %v1828 = vsel %vm775, %v1790, -inf
      %v1829 = vsel %vm775, %v1792, -inf
      %v1830 = vmax.f32 %v1828, %v1829
      %v1831 = vsel %vm775, %v1791, -inf
      %v1832 = vsel %vm775, %v1793, -inf
      %v1833 = vmax.f32 %v1831, %v1832
      %v1834 = vsel %vm775, %v1794, -inf
      %v1835 = vsel %vm775, %v1796, -inf
      %v1836 = vmax.f32 %v1834, %v1835
      %v1837 = vsel %vm775, %v1795, -inf
      %v1838 = vsel %vm775, %v1797, -inf
      %v1839 = vmax.f32 %v1837, %v1838
      %v1840 = vsel %vm775, %v1798, -inf
      %v1841 = vsel %vm775, %v1800, -inf
      %v1842 = vmax.f32 %v1840, %v1841
      %v1843 = vsel %vm775, %v1799, -inf
      %v1844 = vsel %vm775, %v1801, -inf
      %v1845 = vmax.f32 %v1843, %v1844
      %v1846 = vsel %vm775, %v1802, -inf
      %v1847 = vsel %vm775, %v1804, -inf
      %v1848 = vmax.f32 %v1846, %v1847
      %v1849 = vsel %vm775, %v1803, -inf
      %v1850 = vsel %vm775, %v1805, -inf
      %v1851 = vmax.f32 %v1849, %v1850
      %v1852 = vsel %vm775, %v1806, -inf
      %v1853 = vsel %vm775, %v1808, -inf
      %v1854 = vmax.f32 %v1852, %v1853
      %v1855 = vsel %vm775, %v1807, -inf
      %v1856 = vsel %vm775, %v1809, -inf
      %v1857 = vmax.f32 %v1855, %v1856
      %v1874 = vcombine.high %v1812, %v1812
      %v1876 = vunpack.c.l.s4 1983009808
      %v1877 = vunpack.c.0.s8 %v1876
      %v1878 = vlaneseq
      %v1879 = vshrl.u32 %v1878, 7
      %v1880 = vsub.s32 %v1877, %v1879
      %v1881 = vrot.slane %v1812, %v1880
      %v1883 = vunpack.c.l.s4 1983009808
      %v1884 = vunpack.c.0.s8 %v1883
      %v1885 = vlaneseq
      %v1886 = vshrl.u32 %v1885, 7
      %v1887 = vsub.s32 %v1884, %v1886
      %v1888 = vrot.slane %v1874, %v1887
      %v1889 = vcombine.high %v1881, %v1881
      %v1890 = vcombine.high %v1888, %v1888
      %v1891 = vcombine.high %v1815, %v1815
      %v1893 = vunpack.c.l.s4 1983009808
      %v1894 = vunpack.c.0.s8 %v1893
      %v1895 = vlaneseq
      %v1896 = vshrl.u32 %v1895, 7
      %v1897 = vsub.s32 %v1894, %v1896
      %v1898 = vrot.slane %v1815, %v1897
      %v1900 = vunpack.c.l.s4 1983009808
      %v1901 = vunpack.c.0.s8 %v1900
      %v1902 = vlaneseq
      %v1903 = vshrl.u32 %v1902, 7
      %v1904 = vsub.s32 %v1901, %v1903
      %v1905 = vrot.slane %v1891, %v1904
      %v1906 = vcombine.high %v1898, %v1898
      %v1907 = vcombine.high %v1905, %v1905
      %v1908 = vcombine.high %v1818, %v1818
      %v1910 = vunpack.c.l.s4 1983009808
      %v1911 = vunpack.c.0.s8 %v1910
      %v1912 = vlaneseq
      %v1913 = vshrl.u32 %v1912, 7
      %v1914 = vsub.s32 %v1911, %v1913
      %v1915 = vrot.slane %v1818, %v1914
      %v1917 = vunpack.c.l.s4 1983009808
      %v1918 = vunpack.c.0.s8 %v1917
      %v1919 = vlaneseq
      %v1920 = vshrl.u32 %v1919, 7
      %v1921 = vsub.s32 %v1918, %v1920
      %v1922 = vrot.slane %v1908, %v1921
      %v1923 = vcombine.high %v1915, %v1915
      %v1924 = vcombine.high %v1922, %v1922
      %v1925 = vcombine.high %v1821, %v1821
      %v1927 = vunpack.c.l.s4 1983009808
      %v1928 = vunpack.c.0.s8 %v1927
      %v1929 = vlaneseq
      %v1930 = vshrl.u32 %v1929, 7
      %v1931 = vsub.s32 %v1928, %v1930
      %v1932 = vrot.slane %v1821, %v1931
      %v1934 = vunpack.c.l.s4 1983009808
      %v1935 = vunpack.c.0.s8 %v1934
      %v1936 = vlaneseq
      %v1937 = vshrl.u32 %v1936, 7
      %v1938 = vsub.s32 %v1935, %v1937
      %v1939 = vrot.slane %v1925, %v1938
      %v1940 = vcombine.high %v1932, %v1932
      %v1941 = vcombine.high %v1939, %v1939
      %v1942 = vcombine.high %v1824, %v1824
      %v1944 = vunpack.c.l.s4 1983009808
      %v1945 = vunpack.c.0.s8 %v1944
      %v1946 = vlaneseq
      %v1947 = vshrl.u32 %v1946, 7
      %v1948 = vsub.s32 %v1945, %v1947
      %v1949 = vrot.slane %v1824, %v1948
      %v1951 = vunpack.c.l.s4 1983009808
      %v1952 = vunpack.c.0.s8 %v1951
      %v1953 = vlaneseq
      %v1954 = vshrl.u32 %v1953, 7
      %v1955 = vsub.s32 %v1952, %v1954
      %v1956 = vrot.slane %v1942, %v1955
      %v1957 = vcombine.high %v1949, %v1949
      %v1958 = vcombine.high %v1956, %v1956
      %v1959 = vcombine.high %v1827, %v1827
      %v1961 = vunpack.c.l.s4 1983009808
      %v1962 = vunpack.c.0.s8 %v1961
      %v1963 = vlaneseq
      %v1964 = vshrl.u32 %v1963, 7
      %v1965 = vsub.s32 %v1962, %v1964
      %v1966 = vrot.slane %v1827, %v1965
      %v1968 = vunpack.c.l.s4 1983009808
      %v1969 = vunpack.c.0.s8 %v1968
      %v1970 = vlaneseq
      %v1971 = vshrl.u32 %v1970, 7
      %v1972 = vsub.s32 %v1969, %v1971
      %v1973 = vrot.slane %v1959, %v1972
      %v1974 = vcombine.high %v1966, %v1966
      %v1975 = vcombine.high %v1973, %v1973
      %v1976 = vcombine.high %v1830, %v1830
      %v1978 = vunpack.c.l.s4 1983009808
      %v1979 = vunpack.c.0.s8 %v1978
      %v1980 = vlaneseq
      %v1981 = vshrl.u32 %v1980, 7
      %v1982 = vsub.s32 %v1979, %v1981
      %v1983 = vrot.slane %v1830, %v1982
      %v1985 = vunpack.c.l.s4 1983009808
      %v1986 = vunpack.c.0.s8 %v1985
      %v1987 = vlaneseq
      %v1988 = vshrl.u32 %v1987, 7
      %v1989 = vsub.s32 %v1986, %v1988
      %v1990 = vrot.slane %v1976, %v1989
      %v1991 = vcombine.high %v1983, %v1983
      %v1992 = vcombine.high %v1990, %v1990
      %v1993 = vcombine.high %v1833, %v1833
      %v1995 = vunpack.c.l.s4 1983009808
      %v1996 = vunpack.c.0.s8 %v1995
      %v1997 = vlaneseq
      %v1998 = vshrl.u32 %v1997, 7
      %v1999 = vsub.s32 %v1996, %v1998
      %v2000 = vrot.slane %v1833, %v1999
      %v2002 = vunpack.c.l.s4 1983009808
      %v2003 = vunpack.c.0.s8 %v2002
      %v2004 = vlaneseq
      %v2005 = vshrl.u32 %v2004, 7
      %v2006 = vsub.s32 %v2003, %v2005
      %v2007 = vrot.slane %v1993, %v2006
      %v2008 = vcombine.high %v2000, %v2000
      %v2009 = vcombine.high %v2007, %v2007
      %v2010 = vcombine.high %v1836, %v1836
      %v2012 = vunpack.c.l.s4 1983009808
      %v2013 = vunpack.c.0.s8 %v2012
      %v2014 = vlaneseq
      %v2015 = vshrl.u32 %v2014, 7
      %v2016 = vsub.s32 %v2013, %v2015
      %v2017 = vrot.slane %v1836, %v2016
      %v2019 = vunpack.c.l.s4 1983009808
      %v2020 = vunpack.c.0.s8 %v2019
      %v2021 = vlaneseq
      %v2022 = vshrl.u32 %v2021, 7
      %v2023 = vsub.s32 %v2020, %v2022
      %v2024 = vrot.slane %v2010, %v2023
      %v2025 = vcombine.high %v2017, %v2017
      %v2026 = vcombine.high %v2024, %v2024
      %v2027 = vcombine.high %v1839, %v1839
      %v2029 = vunpack.c.l.s4 1983009808
      %v2030 = vunpack.c.0.s8 %v2029
      %v2031 = vlaneseq
      %v2032 = vshrl.u32 %v2031, 7
      %v2033 = vsub.s32 %v2030, %v2032
      %v2034 = vrot.slane %v1839, %v2033
      %v2036 = vunpack.c.l.s4 1983009808
      %v2037 = vunpack.c.0.s8 %v2036
      %v2038 = vlaneseq
      %v2039 = vshrl.u32 %v2038, 7
      %v2040 = vsub.s32 %v2037, %v2039
      %v2041 = vrot.slane %v2027, %v2040
      %v2042 = vcombine.high %v2034, %v2034
      %v2043 = vcombine.high %v2041, %v2041
      %v2044 = vcombine.high %v1842, %v1842
      %v2046 = vunpack.c.l.s4 1983009808
      %v2047 = vunpack.c.0.s8 %v2046
      %v2048 = vlaneseq
      %v2049 = vshrl.u32 %v2048, 7
      %v2050 = vsub.s32 %v2047, %v2049
      %v2051 = vrot.slane %v1842, %v2050
      %v2053 = vunpack.c.l.s4 1983009808
      %v2054 = vunpack.c.0.s8 %v2053
      %v2055 = vlaneseq
      %v2056 = vshrl.u32 %v2055, 7
      %v2057 = vsub.s32 %v2054, %v2056
      %v2058 = vrot.slane %v2044, %v2057
      %v2059 = vcombine.high %v2051, %v2051
      %v2060 = vcombine.high %v2058, %v2058
      %v2061 = vcombine.high %v1845, %v1845
      %v2063 = vunpack.c.l.s4 1983009808
      %v2064 = vunpack.c.0.s8 %v2063
      %v2065 = vlaneseq
      %v2066 = vshrl.u32 %v2065, 7
      %v2067 = vsub.s32 %v2064, %v2066
      %v2068 = vrot.slane %v1845, %v2067
      %v2070 = vunpack.c.l.s4 1983009808
      %v2071 = vunpack.c.0.s8 %v2070
      %v2072 = vlaneseq
      %v2073 = vshrl.u32 %v2072, 7
      %v2074 = vsub.s32 %v2071, %v2073
      %v2075 = vrot.slane %v2061, %v2074
      %v2076 = vcombine.high %v2068, %v2068
      %v2077 = vcombine.high %v2075, %v2075
      %v2078 = vcombine.high %v1848, %v1848
      %v2080 = vunpack.c.l.s4 1983009808
      %v2081 = vunpack.c.0.s8 %v2080
      %v2082 = vlaneseq
      %v2083 = vshrl.u32 %v2082, 7
      %v2084 = vsub.s32 %v2081, %v2083
      %v2085 = vrot.slane %v1848, %v2084
      %v2087 = vunpack.c.l.s4 1983009808
      %v2088 = vunpack.c.0.s8 %v2087
      %v2089 = vlaneseq
      %v2090 = vshrl.u32 %v2089, 7
      %v2091 = vsub.s32 %v2088, %v2090
      %v2092 = vrot.slane %v2078, %v2091
      %v2093 = vcombine.high %v2085, %v2085
      %v2094 = vcombine.high %v2092, %v2092
      %v2095 = vcombine.high %v1851, %v1851
      %v2097 = vunpack.c.l.s4 1983009808
      %v2098 = vunpack.c.0.s8 %v2097
      %v2099 = vlaneseq
      %v2100 = vshrl.u32 %v2099, 7
      %v2101 = vsub.s32 %v2098, %v2100
      %v2102 = vrot.slane %v1851, %v2101
      %v2104 = vunpack.c.l.s4 1983009808
      %v2105 = vunpack.c.0.s8 %v2104
      %v2106 = vlaneseq
      %v2107 = vshrl.u32 %v2106, 7
      %v2108 = vsub.s32 %v2105, %v2107
      %v2109 = vrot.slane %v2095, %v2108
      %v2110 = vcombine.high %v2102, %v2102
      %v2111 = vcombine.high %v2109, %v2109
      %v2112 = vcombine.high %v1854, %v1854
      %v2114 = vunpack.c.l.s4 1983009808
      %v2115 = vunpack.c.0.s8 %v2114
      %v2116 = vlaneseq
      %v2117 = vshrl.u32 %v2116, 7
      %v2118 = vsub.s32 %v2115, %v2117
      %v2119 = vrot.slane %v1854, %v2118
      %v2121 = vunpack.c.l.s4 1983009808
      %v2122 = vunpack.c.0.s8 %v2121
      %v2123 = vlaneseq
      %v2124 = vshrl.u32 %v2123, 7
      %v2125 = vsub.s32 %v2122, %v2124
      %v2126 = vrot.slane %v2112, %v2125
      %v2127 = vcombine.high %v2119, %v2119
      %v2128 = vcombine.high %v2126, %v2126
      %v2129 = vcombine.high %v1857, %v1857
      %v2131 = vunpack.c.l.s4 1983009808
      %v2132 = vunpack.c.0.s8 %v2131
      %v2133 = vlaneseq
      %v2134 = vshrl.u32 %v2133, 7
      %v2135 = vsub.s32 %v2132, %v2134
      %v2136 = vrot.slane %v1857, %v2135
      %v2138 = vunpack.c.l.s4 1983009808
      %v2139 = vunpack.c.0.s8 %v2138
      %v2140 = vlaneseq
      %v2141 = vshrl.u32 %v2140, 7
      %v2142 = vsub.s32 %v2139, %v2141
      %v2143 = vrot.slane %v2129, %v2142
      %v2144 = vcombine.high %v2136, %v2136
      %v2145 = vcombine.high %v2143, %v2143
      %vm2210 = vcmask 517120
      %v2211 = vsel %vm2210, %v1881, -inf
      %v2212 = vrot.slane %v2211, 4
      %v2213 = vmax.f32 %v2211, %v2212
      %v2214 = vrot.slane %v2213, 2
      %v2215 = vmax.f32 %v2213, %v2214
      %v2216 = vrot.slane %v2215, 1
      %v2217 = vmax.f32 %v2215, %v2216
      %v2218 = vsel %vm2210, %v1889, -inf
      %v2219 = vrot.slane %v2218, 4
      %v2220 = vmax.f32 %v2218, %v2219
      %v2221 = vrot.slane %v2220, 2
      %v2222 = vmax.f32 %v2220, %v2221
      %v2223 = vrot.slane %v2222, 1
      %v2224 = vmax.f32 %v2222, %v2223
      %v2225 = vsel %vm2210, %v1888, -inf
      %v2226 = vrot.slane %v2225, 4
      %v2227 = vmax.f32 %v2225, %v2226
      %v2228 = vrot.slane %v2227, 2
      %v2229 = vmax.f32 %v2227, %v2228
      %v2230 = vrot.slane %v2229, 1
      %v2231 = vmax.f32 %v2229, %v2230
      %v2232 = vsel %vm2210, %v1890, -inf
      %v2233 = vrot.slane %v2232, 4
      %v2234 = vmax.f32 %v2232, %v2233
      %v2235 = vrot.slane %v2234, 2
      %v2236 = vmax.f32 %v2234, %v2235
      %v2237 = vrot.slane %v2236, 1
      %v2238 = vmax.f32 %v2236, %v2237
      %v2239 = vsel %vm2210, %v1898, -inf
      %v2240 = vrot.slane %v2239, 4
      %v2241 = vmax.f32 %v2239, %v2240
      %v2242 = vrot.slane %v2241, 2
      %v2243 = vmax.f32 %v2241, %v2242
      %v2244 = vrot.slane %v2243, 1
      %v2245 = vmax.f32 %v2243, %v2244
      %v2246 = vsel %vm2210, %v1906, -inf
      %v2247 = vrot.slane %v2246, 4
      %v2248 = vmax.f32 %v2246, %v2247
      %v2249 = vrot.slane %v2248, 2
      %v2250 = vmax.f32 %v2248, %v2249
      %v2251 = vrot.slane %v2250, 1
      %v2252 = vmax.f32 %v2250, %v2251
      %v2253 = vsel %vm2210, %v1905, -inf
      %v2254 = vrot.slane %v2253, 4
      %v2255 = vmax.f32 %v2253, %v2254
      %v2256 = vrot.slane %v2255, 2
      %v2257 = vmax.f32 %v2255, %v2256
      %v2258 = vrot.slane %v2257, 1
      %v2259 = vmax.f32 %v2257, %v2258
      %v2260 = vsel %vm2210, %v1907, -inf
      %v2261 = vrot.slane %v2260, 4
      %v2262 = vmax.f32 %v2260, %v2261
      %v2263 = vrot.slane %v2262, 2
      %v2264 = vmax.f32 %v2262, %v2263
      %v2265 = vrot.slane %v2264, 1
      %v2266 = vmax.f32 %v2264, %v2265
      %v2267 = vsel %vm2210, %v1915, -inf
      %v2268 = vrot.slane %v2267, 4
      %v2269 = vmax.f32 %v2267, %v2268
      %v2270 = vrot.slane %v2269, 2
      %v2271 = vmax.f32 %v2269, %v2270
      %v2272 = vrot.slane %v2271, 1
      %v2273 = vmax.f32 %v2271, %v2272
      %v2274 = vsel %vm2210, %v1923, -inf
      %v2275 = vrot.slane %v2274, 4
      %v2276 = vmax.f32 %v2274, %v2275
      %v2277 = vrot.slane %v2276, 2
      %v2278 = vmax.f32 %v2276, %v2277
      %v2279 = vrot.slane %v2278, 1
      %v2280 = vmax.f32 %v2278, %v2279
      %v2281 = vsel %vm2210, %v1922, -inf
      %v2282 = vrot.slane %v2281, 4
      %v2283 = vmax.f32 %v2281, %v2282
      %v2284 = vrot.slane %v2283, 2
      %v2285 = vmax.f32 %v2283, %v2284
      %v2286 = vrot.slane %v2285, 1
      %v2287 = vmax.f32 %v2285, %v2286
      %v2288 = vsel %vm2210, %v1924, -inf
      %v2289 = vrot.slane %v2288, 4
      %v2290 = vmax.f32 %v2288, %v2289
      %v2291 = vrot.slane %v2290, 2
      %v2292 = vmax.f32 %v2290, %v2291
      %v2293 = vrot.slane %v2292, 1
      %v2294 = vmax.f32 %v2292, %v2293
      %v2295 = vsel %vm2210, %v1932, -inf
      %v2296 = vrot.slane %v2295, 4
      %v2297 = vmax.f32 %v2295, %v2296
      %v2298 = vrot.slane %v2297, 2
      %v2299 = vmax.f32 %v2297, %v2298
      %v2300 = vrot.slane %v2299, 1
      %v2301 = vmax.f32 %v2299, %v2300
      %v2302 = vsel %vm2210, %v1940, -inf
      %v2303 = vrot.slane %v2302, 4
      %v2304 = vmax.f32 %v2302, %v2303
      %v2305 = vrot.slane %v2304, 2
      %v2306 = vmax.f32 %v2304, %v2305
      %v2307 = vrot.slane %v2306, 1
      %v2308 = vmax.f32 %v2306, %v2307
      %v2309 = vsel %vm2210, %v1939, -inf
      %v2310 = vrot.slane %v2309, 4
      %v2311 = vmax.f32 %v2309, %v2310
      %v2312 = vrot.slane %v2311, 2
      %v2313 = vmax.f32 %v2311, %v2312
      %v2314 = vrot.slane %v2313, 1
      %v2315 = vmax.f32 %v2313, %v2314
      %v2316 = vsel %vm2210, %v1941, -inf
      %v2317 = vrot.slane %v2316, 4
      %v2318 = vmax.f32 %v2316, %v2317
      %v2319 = vrot.slane %v2318, 2
      %v2320 = vmax.f32 %v2318, %v2319
      %v2321 = vrot.slane %v2320, 1
      %v2322 = vmax.f32 %v2320, %v2321
      %v2323 = vsel %vm2210, %v1949, -inf
      %v2324 = vrot.slane %v2323, 4
      %v2325 = vmax.f32 %v2323, %v2324
      %v2326 = vrot.slane %v2325, 2
      %v2327 = vmax.f32 %v2325, %v2326
      %v2328 = vrot.slane %v2327, 1
      %v2329 = vmax.f32 %v2327, %v2328
      %v2330 = vsel %vm2210, %v1957, -inf
      %v2331 = vrot.slane %v2330, 4
      %v2332 = vmax.f32 %v2330, %v2331
      %v2333 = vrot.slane %v2332, 2
      %v2334 = vmax.f32 %v2332, %v2333
      %v2335 = vrot.slane %v2334, 1
      %v2336 = vmax.f32 %v2334, %v2335
      %v2337 = vsel %vm2210, %v1956, -inf
      %v2338 = vrot.slane %v2337, 4
      %v2339 = vmax.f32 %v2337, %v2338
      %v2340 = vrot.slane %v2339, 2
      %v2341 = vmax.f32 %v2339, %v2340
      %v2342 = vrot.slane %v2341, 1
      %v2343 = vmax.f32 %v2341, %v2342
      %v2344 = vsel %vm2210, %v1958, -inf
      %v2345 = vrot.slane %v2344, 4
      %v2346 = vmax.f32 %v2344, %v2345
      %v2347 = vrot.slane %v2346, 2
      %v2348 = vmax.f32 %v2346, %v2347
      %v2349 = vrot.slane %v2348, 1
      %v2350 = vmax.f32 %v2348, %v2349
      %v2351 = vsel %vm2210, %v1966, -inf
      %v2352 = vrot.slane %v2351, 4
      %v2353 = vmax.f32 %v2351, %v2352
      %v2354 = vrot.slane %v2353, 2
      %v2355 = vmax.f32 %v2353, %v2354
      %v2356 = vrot.slane %v2355, 1
      %v2357 = vmax.f32 %v2355, %v2356
      %v2358 = vsel %vm2210, %v1974, -inf
      %v2359 = vrot.slane %v2358, 4
      %v2360 = vmax.f32 %v2358, %v2359
      %v2361 = vrot.slane %v2360, 2
      %v2362 = vmax.f32 %v2360, %v2361
      %v2363 = vrot.slane %v2362, 1
      %v2364 = vmax.f32 %v2362, %v2363
      %v2365 = vsel %vm2210, %v1973, -inf
      %v2366 = vrot.slane %v2365, 4
      %v2367 = vmax.f32 %v2365, %v2366
      %v2368 = vrot.slane %v2367, 2
      %v2369 = vmax.f32 %v2367, %v2368
      %v2370 = vrot.slane %v2369, 1
      %v2371 = vmax.f32 %v2369, %v2370
      %v2372 = vsel %vm2210, %v1975, -inf
      %v2373 = vrot.slane %v2372, 4
      %v2374 = vmax.f32 %v2372, %v2373
      %v2375 = vrot.slane %v2374, 2
      %v2376 = vmax.f32 %v2374, %v2375
      %v2377 = vrot.slane %v2376, 1
      %v2378 = vmax.f32 %v2376, %v2377
      %v2379 = vsel %vm2210, %v1983, -inf
      %v2380 = vrot.slane %v2379, 4
      %v2381 = vmax.f32 %v2379, %v2380
      %v2382 = vrot.slane %v2381, 2
      %v2383 = vmax.f32 %v2381, %v2382
      %v2384 = vrot.slane %v2383, 1
      %v2385 = vmax.f32 %v2383, %v2384
      %v2386 = vsel %vm2210, %v1991, -inf
      %v2387 = vrot.slane %v2386, 4
      %v2388 = vmax.f32 %v2386, %v2387
      %v2389 = vrot.slane %v2388, 2
      %v2390 = vmax.f32 %v2388, %v2389
      %v2391 = vrot.slane %v2390, 1
      %v2392 = vmax.f32 %v2390, %v2391
      %v2393 = vsel %vm2210, %v1990, -inf
      %v2394 = vrot.slane %v2393, 4
      %v2395 = vmax.f32 %v2393, %v2394
      %v2396 = vrot.slane %v2395, 2
      %v2397 = vmax.f32 %v2395, %v2396
      %v2398 = vrot.slane %v2397, 1
      %v2399 = vmax.f32 %v2397, %v2398
      %v2400 = vsel %vm2210, %v1992, -inf
      %v2401 = vrot.slane %v2400, 4
      %v2402 = vmax.f32 %v2400, %v2401
      %v2403 = vrot.slane %v2402, 2
      %v2404 = vmax.f32 %v2402, %v2403
      %v2405 = vrot.slane %v2404, 1
      %v2406 = vmax.f32 %v2404, %v2405
      %v2407 = vsel %vm2210, %v2000, -inf
      %v2408 = vrot.slane %v2407, 4
      %v2409 = vmax.f32 %v2407, %v2408
      %v2410 = vrot.slane %v2409, 2
      %v2411 = vmax.f32 %v2409, %v2410
      %v2412 = vrot.slane %v2411, 1
      %v2413 = vmax.f32 %v2411, %v2412
      %v2414 = vsel %vm2210, %v2008, -inf
      %v2415 = vrot.slane %v2414, 4
      %v2416 = vmax.f32 %v2414, %v2415
      %v2417 = vrot.slane %v2416, 2
      %v2418 = vmax.f32 %v2416, %v2417
      %v2419 = vrot.slane %v2418, 1
      %v2420 = vmax.f32 %v2418, %v2419
      %v2421 = vsel %vm2210, %v2007, -inf
      %v2422 = vrot.slane %v2421, 4
      %v2423 = vmax.f32 %v2421, %v2422
      %v2424 = vrot.slane %v2423, 2
      %v2425 = vmax.f32 %v2423, %v2424
      %v2426 = vrot.slane %v2425, 1
      %v2427 = vmax.f32 %v2425, %v2426
      %v2428 = vsel %vm2210, %v2009, -inf
      %v2429 = vrot.slane %v2428, 4
      %v2430 = vmax.f32 %v2428, %v2429
      %v2431 = vrot.slane %v2430, 2
      %v2432 = vmax.f32 %v2430, %v2431
      %v2433 = vrot.slane %v2432, 1
      %v2434 = vmax.f32 %v2432, %v2433
      %v2435 = vsel %vm2210, %v2017, -inf
      %v2436 = vrot.slane %v2435, 4
      %v2437 = vmax.f32 %v2435, %v2436
      %v2438 = vrot.slane %v2437, 2
      %v2439 = vmax.f32 %v2437, %v2438
      %v2440 = vrot.slane %v2439, 1
      %v2441 = vmax.f32 %v2439, %v2440
      %v2442 = vsel %vm2210, %v2025, -inf
      %v2443 = vrot.slane %v2442, 4
      %v2444 = vmax.f32 %v2442, %v2443
      %v2445 = vrot.slane %v2444, 2
      %v2446 = vmax.f32 %v2444, %v2445
      %v2447 = vrot.slane %v2446, 1
      %v2448 = vmax.f32 %v2446, %v2447
      %v2449 = vsel %vm2210, %v2024, -inf
      %v2450 = vrot.slane %v2449, 4
      %v2451 = vmax.f32 %v2449, %v2450
      %v2452 = vrot.slane %v2451, 2
      %v2453 = vmax.f32 %v2451, %v2452
      %v2454 = vrot.slane %v2453, 1
      %v2455 = vmax.f32 %v2453, %v2454
      %v2456 = vsel %vm2210, %v2026, -inf
      %v2457 = vrot.slane %v2456, 4
      %v2458 = vmax.f32 %v2456, %v2457
      %v2459 = vrot.slane %v2458, 2
      %v2460 = vmax.f32 %v2458, %v2459
      %v2461 = vrot.slane %v2460, 1
      %v2462 = vmax.f32 %v2460, %v2461
      %v2463 = vsel %vm2210, %v2034, -inf
      %v2464 = vrot.slane %v2463, 4
      %v2465 = vmax.f32 %v2463, %v2464
      %v2466 = vrot.slane %v2465, 2
      %v2467 = vmax.f32 %v2465, %v2466
      %v2468 = vrot.slane %v2467, 1
      %v2469 = vmax.f32 %v2467, %v2468
      %v2470 = vsel %vm2210, %v2042, -inf
      %v2471 = vrot.slane %v2470, 4
      %v2472 = vmax.f32 %v2470, %v2471
      %v2473 = vrot.slane %v2472, 2
      %v2474 = vmax.f32 %v2472, %v2473
      %v2475 = vrot.slane %v2474, 1
      %v2476 = vmax.f32 %v2474, %v2475
      %v2477 = vsel %vm2210, %v2041, -inf
      %v2478 = vrot.slane %v2477, 4
      %v2479 = vmax.f32 %v2477, %v2478
      %v2480 = vrot.slane %v2479, 2
      %v2481 = vmax.f32 %v2479, %v2480
      %v2482 = vrot.slane %v2481, 1
      %v2483 = vmax.f32 %v2481, %v2482
      %v2484 = vsel %vm2210, %v2043, -inf
      %v2485 = vrot.slane %v2484, 4
      %v2486 = vmax.f32 %v2484, %v2485
      %v2487 = vrot.slane %v2486, 2
      %v2488 = vmax.f32 %v2486, %v2487
      %v2489 = vrot.slane %v2488, 1
      %v2490 = vmax.f32 %v2488, %v2489
      %v2491 = vsel %vm2210, %v2051, -inf
      %v2492 = vrot.slane %v2491, 4
      %v2493 = vmax.f32 %v2491, %v2492
      %v2494 = vrot.slane %v2493, 2
      %v2495 = vmax.f32 %v2493, %v2494
      %v2496 = vrot.slane %v2495, 1
      %v2497 = vmax.f32 %v2495, %v2496
      %v2498 = vsel %vm2210, %v2059, -inf
      %v2499 = vrot.slane %v2498, 4
      %v2500 = vmax.f32 %v2498, %v2499
      %v2501 = vrot.slane %v2500, 2
      %v2502 = vmax.f32 %v2500, %v2501
      %v2503 = vrot.slane %v2502, 1
      %v2504 = vmax.f32 %v2502, %v2503
      %v2505 = vsel %vm2210, %v2058, -inf
      %v2506 = vrot.slane %v2505, 4
      %v2507 = vmax.f32 %v2505, %v2506
      %v2508 = vrot.slane %v2507, 2
      %v2509 = vmax.f32 %v2507, %v2508
      %v2510 = vrot.slane %v2509, 1
      %v2511 = vmax.f32 %v2509, %v2510
      %v2512 = vsel %vm2210, %v2060, -inf
      %v2513 = vrot.slane %v2512, 4
      %v2514 = vmax.f32 %v2512, %v2513
      %v2515 = vrot.slane %v2514, 2
      %v2516 = vmax.f32 %v2514, %v2515
      %v2517 = vrot.slane %v2516, 1
      %v2518 = vmax.f32 %v2516, %v2517
      %v2519 = vsel %vm2210, %v2068, -inf
      %v2520 = vrot.slane %v2519, 4
      %v2521 = vmax.f32 %v2519, %v2520
      %v2522 = vrot.slane %v2521, 2
      %v2523 = vmax.f32 %v2521, %v2522
      %v2524 = vrot.slane %v2523, 1
      %v2525 = vmax.f32 %v2523, %v2524
      %v2526 = vsel %vm2210, %v2076, -inf
      %v2527 = vrot.slane %v2526, 4
      %v2528 = vmax.f32 %v2526, %v2527
      %v2529 = vrot.slane %v2528, 2
      %v2530 = vmax.f32 %v2528, %v2529
      %v2531 = vrot.slane %v2530, 1
      %v2532 = vmax.f32 %v2530, %v2531
      %v2533 = vsel %vm2210, %v2075, -inf
      %v2534 = vrot.slane %v2533, 4
      %v2535 = vmax.f32 %v2533, %v2534
      %v2536 = vrot.slane %v2535, 2
      %v2537 = vmax.f32 %v2535, %v2536
      %v2538 = vrot.slane %v2537, 1
      %v2539 = vmax.f32 %v2537, %v2538
      %v2540 = vsel %vm2210, %v2077, -inf
      %v2541 = vrot.slane %v2540, 4
      %v2542 = vmax.f32 %v2540, %v2541
      %v2543 = vrot.slane %v2542, 2
      %v2544 = vmax.f32 %v2542, %v2543
      %v2545 = vrot.slane %v2544, 1
      %v2546 = vmax.f32 %v2544, %v2545
      %v2547 = vsel %vm2210, %v2085, -inf
      %v2548 = vrot.slane %v2547, 4
      %v2549 = vmax.f32 %v2547, %v2548
      %v2550 = vrot.slane %v2549, 2
      %v2551 = vmax.f32 %v2549, %v2550
      %v2552 = vrot.slane %v2551, 1
      %v2553 = vmax.f32 %v2551, %v2552
      %v2554 = vsel %vm2210, %v2093, -inf
      %v2555 = vrot.slane %v2554, 4
      %v2556 = vmax.f32 %v2554, %v2555
      %v2557 = vrot.slane %v2556, 2
      %v2558 = vmax.f32 %v2556, %v2557
      %v2559 = vrot.slane %v2558, 1
      %v2560 = vmax.f32 %v2558, %v2559
      %v2561 = vsel %vm2210, %v2092, -inf
      %v2562 = vrot.slane %v2561, 4
      %v2563 = vmax.f32 %v2561, %v2562
      %v2564 = vrot.slane %v2563, 2
      %v2565 = vmax.f32 %v2563, %v2564
      %v2566 = vrot.slane %v2565, 1
      %v2567 = vmax.f32 %v2565, %v2566
      %v2568 = vsel %vm2210, %v2094, -inf
      %v2569 = vrot.slane %v2568, 4
      %v2570 = vmax.f32 %v2568, %v2569
      %v2571 = vrot.slane %v2570, 2
      %v2572 = vmax.f32 %v2570, %v2571
      %v2573 = vrot.slane %v2572, 1
      %v2574 = vmax.f32 %v2572, %v2573
      %v2575 = vsel %vm2210, %v2102, -inf
      %v2576 = vrot.slane %v2575, 4
      %v2577 = vmax.f32 %v2575, %v2576
      %v2578 = vrot.slane %v2577, 2
      %v2579 = vmax.f32 %v2577, %v2578
      %v2580 = vrot.slane %v2579, 1
      %v2581 = vmax.f32 %v2579, %v2580
      %v2582 = vsel %vm2210, %v2110, -inf
      %v2583 = vrot.slane %v2582, 4
      %v2584 = vmax.f32 %v2582, %v2583
      %v2585 = vrot.slane %v2584, 2
      %v2586 = vmax.f32 %v2584, %v2585
      %v2587 = vrot.slane %v2586, 1
      %v2588 = vmax.f32 %v2586, %v2587
      %v2589 = vsel %vm2210, %v2109, -inf
      %v2590 = vrot.slane %v2589, 4
      %v2591 = vmax.f32 %v2589, %v2590
      %v2592 = vrot.slane %v2591, 2
      %v2593 = vmax.f32 %v2591, %v2592
      %v2594 = vrot.slane %v2593, 1
      %v2595 = vmax.f32 %v2593, %v2594
      %v2596 = vsel %vm2210, %v2111, -inf
      %v2597 = vrot.slane %v2596, 4
      %v2598 = vmax.f32 %v2596, %v2597
      %v2599 = vrot.slane %v2598, 2
      %v2600 = vmax.f32 %v2598, %v2599
      %v2601 = vrot.slane %v2600, 1
      %v2602 = vmax.f32 %v2600, %v2601
      %v2603 = vsel %vm2210, %v2119, -inf
      %v2604 = vrot.slane %v2603, 4
      %v2605 = vmax.f32 %v2603, %v2604
      %v2606 = vrot.slane %v2605, 2
      %v2607 = vmax.f32 %v2605, %v2606
      %v2608 = vrot.slane %v2607, 1
      %v2609 = vmax.f32 %v2607, %v2608
      %v2610 = vsel %vm2210, %v2127, -inf
      %v2611 = vrot.slane %v2610, 4
      %v2612 = vmax.f32 %v2610, %v2611
      %v2613 = vrot.slane %v2612, 2
      %v2614 = vmax.f32 %v2612, %v2613
      %v2615 = vrot.slane %v2614, 1
      %v2616 = vmax.f32 %v2614, %v2615
      %v2617 = vsel %vm2210, %v2126, -inf
      %v2618 = vrot.slane %v2617, 4
      %v2619 = vmax.f32 %v2617, %v2618
      %v2620 = vrot.slane %v2619, 2
      %v2621 = vmax.f32 %v2619, %v2620
      %v2622 = vrot.slane %v2621, 1
      %v2623 = vmax.f32 %v2621, %v2622
      %v2624 = vsel %vm2210, %v2128, -inf
      %v2625 = vrot.slane %v2624, 4
      %v2626 = vmax.f32 %v2624, %v2625
      %v2627 = vrot.slane %v2626, 2
      %v2628 = vmax.f32 %v2626, %v2627
      %v2629 = vrot.slane %v2628, 1
      %v2630 = vmax.f32 %v2628, %v2629
      %v2631 = vsel %vm2210, %v2136, -inf
      %v2632 = vrot.slane %v2631, 4
      %v2633 = vmax.f32 %v2631, %v2632
      %v2634 = vrot.slane %v2633, 2
      %v2635 = vmax.f32 %v2633, %v2634
      %v2636 = vrot.slane %v2635, 1
      %v2637 = vmax.f32 %v2635, %v2636
      %v2638 = vsel %vm2210, %v2144, -inf
      %v2639 = vrot.slane %v2638, 4
      %v2640 = vmax.f32 %v2638, %v2639
      %v2641 = vrot.slane %v2640, 2
      %v2642 = vmax.f32 %v2640, %v2641
      %v2643 = vrot.slane %v2642, 1
      %v2644 = vmax.f32 %v2642, %v2643
      %v2645 = vsel %vm2210, %v2143, -inf
      %v2646 = vrot.slane %v2645, 4
      %v2647 = vmax.f32 %v2645, %v2646
      %v2648 = vrot.slane %v2647, 2
      %v2649 = vmax.f32 %v2647, %v2648
      %v2650 = vrot.slane %v2649, 1
      %v2651 = vmax.f32 %v2649, %v2650
      %v2652 = vsel %vm2210, %v2145, -inf
      %v2653 = vrot.slane %v2652, 4
      %v2654 = vmax.f32 %v2652, %v2653
      %v2655 = vrot.slane %v2654, 2
      %v2656 = vmax.f32 %v2654, %v2655
      %v2657 = vrot.slane %v2656, 1
      %v2658 = vmax.f32 %v2656, %v2657
      %v2659 = vpack.c.bf16 %v2217, %v2217
      %v2660 = vpack.c.bf16 %v2224, %v2224
      %v2661 = vpack.c.bf16 %v2231, %v2231
      %v2662 = vpack.c.bf16 %v2238, %v2238
      %v2663 = vpack.c.bf16 %v2245, %v2245
      %v2664 = vpack.c.bf16 %v2252, %v2252
      %v2665 = vpack.c.bf16 %v2259, %v2259
      %v2666 = vpack.c.bf16 %v2266, %v2266
      %v2667 = vpack.c.bf16 %v2273, %v2273
      %v2668 = vpack.c.bf16 %v2280, %v2280
      %v2669 = vpack.c.bf16 %v2287, %v2287
      %v2670 = vpack.c.bf16 %v2294, %v2294
      %v2671 = vpack.c.bf16 %v2301, %v2301
      %v2672 = vpack.c.bf16 %v2308, %v2308
      %v2673 = vpack.c.bf16 %v2315, %v2315
      %v2674 = vpack.c.bf16 %v2322, %v2322
      %v2675 = vpack.c.bf16 %v2329, %v2329
      %v2676 = vpack.c.bf16 %v2336, %v2336
      %v2677 = vpack.c.bf16 %v2343, %v2343
      %v2678 = vpack.c.bf16 %v2350, %v2350
      %v2679 = vpack.c.bf16 %v2357, %v2357
      %v2680 = vpack.c.bf16 %v2364, %v2364
      %v2681 = vpack.c.bf16 %v2371, %v2371
      %v2682 = vpack.c.bf16 %v2378, %v2378
      %v2683 = vpack.c.bf16 %v2385, %v2385
      %v2684 = vpack.c.bf16 %v2392, %v2392
      %v2685 = vpack.c.bf16 %v2399, %v2399
      %v2686 = vpack.c.bf16 %v2406, %v2406
      %v2687 = vpack.c.bf16 %v2413, %v2413
      %v2688 = vpack.c.bf16 %v2420, %v2420
      %v2689 = vpack.c.bf16 %v2427, %v2427
      %v2690 = vpack.c.bf16 %v2434, %v2434
      %v2691 = vpack.c.bf16 %v2441, %v2441
      %v2692 = vpack.c.bf16 %v2448, %v2448
      %v2693 = vpack.c.bf16 %v2455, %v2455
      %v2694 = vpack.c.bf16 %v2462, %v2462
      %v2695 = vpack.c.bf16 %v2469, %v2469
      %v2696 = vpack.c.bf16 %v2476, %v2476
      %v2697 = vpack.c.bf16 %v2483, %v2483
      %v2698 = vpack.c.bf16 %v2490, %v2490
      %v2699 = vpack.c.bf16 %v2497, %v2497
      %v2700 = vpack.c.bf16 %v2504, %v2504
      %v2701 = vpack.c.bf16 %v2511, %v2511
      %v2702 = vpack.c.bf16 %v2518, %v2518
      %v2703 = vpack.c.bf16 %v2525, %v2525
      %v2704 = vpack.c.bf16 %v2532, %v2532
      %v2705 = vpack.c.bf16 %v2539, %v2539
      %v2706 = vpack.c.bf16 %v2546, %v2546
      %v2707 = vpack.c.bf16 %v2553, %v2553
      %v2708 = vpack.c.bf16 %v2560, %v2560
      %v2709 = vpack.c.bf16 %v2567, %v2567
      %v2710 = vpack.c.bf16 %v2574, %v2574
      %v2711 = vpack.c.bf16 %v2581, %v2581
      %v2712 = vpack.c.bf16 %v2588, %v2588
      %v2713 = vpack.c.bf16 %v2595, %v2595
      %v2714 = vpack.c.bf16 %v2602, %v2602
      %v2715 = vpack.c.bf16 %v2609, %v2609
      %v2716 = vpack.c.bf16 %v2616, %v2616
      %v2717 = vpack.c.bf16 %v2623, %v2623
      %v2718 = vpack.c.bf16 %v2630, %v2630
      %v2719 = vpack.c.bf16 %v2637, %v2637
      %v2720 = vpack.c.bf16 %v2644, %v2644
      %v2721 = vpack.c.bf16 %v2651, %v2651
      %v2722 = vpack.c.bf16 %v2658, %v2658
      %v2787 = vunpack.c.l.b16 %v2659
      %v2788 = vunpack.c.l.b16 %v2660
      %v2789 = vunpack.c.l.b16 %v2661
      %v2790 = vunpack.c.l.b16 %v2662
      %v2791 = vunpack.c.l.b16 %v2663
      %v2792 = vunpack.c.l.b16 %v2664
      %v2793 = vunpack.c.l.b16 %v2665
      %v2794 = vunpack.c.l.b16 %v2666
      %v2795 = vunpack.c.l.b16 %v2667
      %v2796 = vunpack.c.l.b16 %v2668
      %v2797 = vunpack.c.l.b16 %v2669
      %v2798 = vunpack.c.l.b16 %v2670
      %v2799 = vunpack.c.l.b16 %v2671
      %v2800 = vunpack.c.l.b16 %v2672
      %v2801 = vunpack.c.l.b16 %v2673
      %v2802 = vunpack.c.l.b16 %v2674
      %v2803 = vunpack.c.l.b16 %v2675
      %v2804 = vunpack.c.l.b16 %v2676
      %v2805 = vunpack.c.l.b16 %v2677
      %v2806 = vunpack.c.l.b16 %v2678
      %v2807 = vunpack.c.l.b16 %v2679
      %v2808 = vunpack.c.l.b16 %v2680
      %v2809 = vunpack.c.l.b16 %v2681
      %v2810 = vunpack.c.l.b16 %v2682
      %v2811 = vunpack.c.l.b16 %v2683
      %v2812 = vunpack.c.l.b16 %v2684
      %v2813 = vunpack.c.l.b16 %v2685
      %v2814 = vunpack.c.l.b16 %v2686
      %v2815 = vunpack.c.l.b16 %v2687
      %v2816 = vunpack.c.l.b16 %v2688
      %v2817 = vunpack.c.l.b16 %v2689
      %v2818 = vunpack.c.l.b16 %v2690
      %v2819 = vunpack.c.l.b16 %v2691
      %v2820 = vunpack.c.l.b16 %v2692
      %v2821 = vunpack.c.l.b16 %v2693
      %v2822 = vunpack.c.l.b16 %v2694
      %v2823 = vunpack.c.l.b16 %v2695
      %v2824 = vunpack.c.l.b16 %v2696
      %v2825 = vunpack.c.l.b16 %v2697
      %v2826 = vunpack.c.l.b16 %v2698
      %v2827 = vunpack.c.l.b16 %v2699
      %v2828 = vunpack.c.l.b16 %v2700
      %v2829 = vunpack.c.l.b16 %v2701
      %v2830 = vunpack.c.l.b16 %v2702
      %v2831 = vunpack.c.l.b16 %v2703
      %v2832 = vunpack.c.l.b16 %v2704
      %v2833 = vunpack.c.l.b16 %v2705
      %v2834 = vunpack.c.l.b16 %v2706
      %v2835 = vunpack.c.l.b16 %v2707
      %v2836 = vunpack.c.l.b16 %v2708
      %v2837 = vunpack.c.l.b16 %v2709
      %v2838 = vunpack.c.l.b16 %v2710
      %v2839 = vunpack.c.l.b16 %v2711
      %v2840 = vunpack.c.l.b16 %v2712
      %v2841 = vunpack.c.l.b16 %v2713
      %v2842 = vunpack.c.l.b16 %v2714
      %v2843 = vunpack.c.l.b16 %v2715
      %v2844 = vunpack.c.l.b16 %v2716
      %v2845 = vunpack.c.l.b16 %v2717
      %v2846 = vunpack.c.l.b16 %v2718
      %v2847 = vunpack.c.l.b16 %v2719
      %v2848 = vunpack.c.l.b16 %v2720
      %v2849 = vunpack.c.l.b16 %v2721
      %v2850 = vunpack.c.l.b16 %v2722
      %v2851 = vpack.c.b16 %v2787, %v2787
      %v2852 = vpack.c.b16 %v2788, %v2788
      %v2853 = vpack.c.b16 %v2789, %v2789
      %v2854 = vpack.c.b16 %v2790, %v2790
      %v2855 = vpack.c.b16 %v2791, %v2791
      %v2856 = vpack.c.b16 %v2792, %v2792
      %v2857 = vpack.c.b16 %v2793, %v2793
      %v2858 = vpack.c.b16 %v2794, %v2794
      %v2859 = vpack.c.b16 %v2795, %v2795
      %v2860 = vpack.c.b16 %v2796, %v2796
      %v2861 = vpack.c.b16 %v2797, %v2797
      %v2862 = vpack.c.b16 %v2798, %v2798
      %v2863 = vpack.c.b16 %v2799, %v2799
      %v2864 = vpack.c.b16 %v2800, %v2800
      %v2865 = vpack.c.b16 %v2801, %v2801
      %v2866 = vpack.c.b16 %v2802, %v2802
      %v2867 = vpack.c.b16 %v2803, %v2803
      %v2868 = vpack.c.b16 %v2804, %v2804
      %v2869 = vpack.c.b16 %v2805, %v2805
      %v2870 = vpack.c.b16 %v2806, %v2806
      %v2871 = vpack.c.b16 %v2807, %v2807
      %v2872 = vpack.c.b16 %v2808, %v2808
      %v2873 = vpack.c.b16 %v2809, %v2809
      %v2874 = vpack.c.b16 %v2810, %v2810
      %v2875 = vpack.c.b16 %v2811, %v2811
      %v2876 = vpack.c.b16 %v2812, %v2812
      %v2877 = vpack.c.b16 %v2813, %v2813
      %v2878 = vpack.c.b16 %v2814, %v2814
      %v2879 = vpack.c.b16 %v2815, %v2815
      %v2880 = vpack.c.b16 %v2816, %v2816
      %v2881 = vpack.c.b16 %v2817, %v2817
      %v2882 = vpack.c.b16 %v2818, %v2818
      %v2883 = vpack.c.b16 %v2819, %v2819
      %v2884 = vpack.c.b16 %v2820, %v2820
      %v2885 = vpack.c.b16 %v2821, %v2821
      %v2886 = vpack.c.b16 %v2822, %v2822
      %v2887 = vpack.c.b16 %v2823, %v2823
      %v2888 = vpack.c.b16 %v2824, %v2824
      %v2889 = vpack.c.b16 %v2825, %v2825
      %v2890 = vpack.c.b16 %v2826, %v2826
      %v2891 = vpack.c.b16 %v2827, %v2827
      %v2892 = vpack.c.b16 %v2828, %v2828
      %v2893 = vpack.c.b16 %v2829, %v2829
      %v2894 = vpack.c.b16 %v2830, %v2830
      %v2895 = vpack.c.b16 %v2831, %v2831
      %v2896 = vpack.c.b16 %v2832, %v2832
      %v2897 = vpack.c.b16 %v2833, %v2833
      %v2898 = vpack.c.b16 %v2834, %v2834
      %v2899 = vpack.c.b16 %v2835, %v2835
      %v2900 = vpack.c.b16 %v2836, %v2836
      %v2901 = vpack.c.b16 %v2837, %v2837
      %v2902 = vpack.c.b16 %v2838, %v2838
      %v2903 = vpack.c.b16 %v2839, %v2839
      %v2904 = vpack.c.b16 %v2840, %v2840
      %v2905 = vpack.c.b16 %v2841, %v2841
      %v2906 = vpack.c.b16 %v2842, %v2842
      %v2907 = vpack.c.b16 %v2843, %v2843
      %v2908 = vpack.c.b16 %v2844, %v2844
      %v2909 = vpack.c.b16 %v2845, %v2845
      %v2910 = vpack.c.b16 %v2846, %v2846
      %v2911 = vpack.c.b16 %v2847, %v2847
      %v2912 = vpack.c.b16 %v2848, %v2848
      %v2913 = vpack.c.b16 %v2849, %v2849
      %v2914 = vpack.c.b16 %v2850, %v2850
      %v2915 = vunpack.c.l.b16 %v2851
      %v2916 = vunpack.c.l.b16 %v2852
      %v2917 = vunpack.c.l.b16 %v2853
      %v2918 = vunpack.c.l.b16 %v2854
      %v2919 = vunpack.c.l.b16 %v2855
      %v2920 = vunpack.c.l.b16 %v2856
      %v2921 = vunpack.c.l.b16 %v2857
      %v2922 = vunpack.c.l.b16 %v2858
      %v2923 = vunpack.c.l.b16 %v2859
      %v2924 = vunpack.c.l.b16 %v2860
      %v2925 = vunpack.c.l.b16 %v2861
      %v2926 = vunpack.c.l.b16 %v2862
      %v2927 = vunpack.c.l.b16 %v2863
      %v2928 = vunpack.c.l.b16 %v2864
      %v2929 = vunpack.c.l.b16 %v2865
      %v2930 = vunpack.c.l.b16 %v2866
      %v2931 = vunpack.c.l.b16 %v2867
      %v2932 = vunpack.c.l.b16 %v2868
      %v2933 = vunpack.c.l.b16 %v2869
      %v2934 = vunpack.c.l.b16 %v2870
      %v2935 = vunpack.c.l.b16 %v2871
      %v2936 = vunpack.c.l.b16 %v2872
      %v2937 = vunpack.c.l.b16 %v2873
      %v2938 = vunpack.c.l.b16 %v2874
      %v2939 = vunpack.c.l.b16 %v2875
      %v2940 = vunpack.c.l.b16 %v2876
      %v2941 = vunpack.c.l.b16 %v2877
      %v2942 = vunpack.c.l.b16 %v2878
      %v2943 = vunpack.c.l.b16 %v2879
      %v2944 = vunpack.c.l.b16 %v2880
      %v2945 = vunpack.c.l.b16 %v2881
      %v2946 = vunpack.c.l.b16 %v2882
      %v2947 = vunpack.c.l.b16 %v2883
      %v2948 = vunpack.c.l.b16 %v2884
      %v2949 = vunpack.c.l.b16 %v2885
      %v2950 = vunpack.c.l.b16 %v2886
      %v2951 = vunpack.c.l.b16 %v2887
      %v2952 = vunpack.c.l.b16 %v2888
      %v2953 = vunpack.c.l.b16 %v2889
      %v2954 = vunpack.c.l.b16 %v2890
      %v2955 = vunpack.c.l.b16 %v2891
      %v2956 = vunpack.c.l.b16 %v2892
      %v2957 = vunpack.c.l.b16 %v2893
      %v2958 = vunpack.c.l.b16 %v2894
      %v2959 = vunpack.c.l.b16 %v2895
      %v2960 = vunpack.c.l.b16 %v2896
      %v2961 = vunpack.c.l.b16 %v2897
      %v2962 = vunpack.c.l.b16 %v2898
      %v2963 = vunpack.c.l.b16 %v2899
      %v2964 = vunpack.c.l.b16 %v2900
      %v2965 = vunpack.c.l.b16 %v2901
      %v2966 = vunpack.c.l.b16 %v2902
      %v2967 = vunpack.c.l.b16 %v2903
      %v2968 = vunpack.c.l.b16 %v2904
      %v2969 = vunpack.c.l.b16 %v2905
      %v2970 = vunpack.c.l.b16 %v2906
      %v2971 = vunpack.c.l.b16 %v2907
      %v2972 = vunpack.c.l.b16 %v2908
      %v2973 = vunpack.c.l.b16 %v2909
      %v2974 = vunpack.c.l.b16 %v2910
      %v2975 = vunpack.c.l.b16 %v2911
      %v2976 = vunpack.c.l.b16 %v2912
      %v2977 = vunpack.c.l.b16 %v2913
      %v2978 = vunpack.c.l.b16 %v2914
      %vm2979 = vcmask 1041409
      %v2980 = vsel %vm2979, %v2916, %v2915
      %vm2981 = vcmask 1042434
      %v2982 = vsel %vm2981, %v2917, %v2980
      %vm2983 = vcmask 1043459
      %v2984 = vsel %vm2983, %v2918, %v2982
      %vm2985 = vcmask 1044484
      %v2986 = vsel %vm2985, %v2919, %v2984
      %vm2987 = vcmask 1045509
      %v2988 = vsel %vm2987, %v2920, %v2986
      %vm2989 = vcmask 1046534
      %v2990 = vsel %vm2989, %v2921, %v2988
      %vm2991 = vcmask 1047559
      %v2992 = vsel %vm2991, %v2922, %v2990
      %v2993 = vsel %vm2979, %v2924, %v2923
      %v2994 = vsel %vm2981, %v2925, %v2993
      %v2995 = vsel %vm2983, %v2926, %v2994
      %v2996 = vsel %vm2985, %v2927, %v2995
      %v2997 = vsel %vm2987, %v2928, %v2996
      %v2998 = vsel %vm2989, %v2929, %v2997
      %v2999 = vsel %vm2991, %v2930, %v2998
      %v3000 = vsel %vm2979, %v2932, %v2931
      %v3001 = vsel %vm2981, %v2933, %v3000
      %v3002 = vsel %vm2983, %v2934, %v3001
      %v3003 = vsel %vm2985, %v2935, %v3002
      %v3004 = vsel %vm2987, %v2936, %v3003
      %v3005 = vsel %vm2989, %v2937, %v3004
      %v3006 = vsel %vm2991, %v2938, %v3005
      %v3007 = vsel %vm2979, %v2940, %v2939
      %v3008 = vsel %vm2981, %v2941, %v3007
      %v3009 = vsel %vm2983, %v2942, %v3008
      %v3010 = vsel %vm2985, %v2943, %v3009
      %v3011 = vsel %vm2987, %v2944, %v3010
      %v3012 = vsel %vm2989, %v2945, %v3011
      %v3013 = vsel %vm2991, %v2946, %v3012
      %v3014 = vsel %vm2979, %v2948, %v2947
      %v3015 = vsel %vm2981, %v2949, %v3014
      %v3016 = vsel %vm2983, %v2950, %v3015
      %v3017 = vsel %vm2985, %v2951, %v3016
      %v3018 = vsel %vm2987, %v2952, %v3017
      %v3019 = vsel %vm2989, %v2953, %v3018
      %v3020 = vsel %vm2991, %v2954, %v3019
      %v3021 = vsel %vm2979, %v2956, %v2955
      %v3022 = vsel %vm2981, %v2957, %v3021
      %v3023 = vsel %vm2983, %v2958, %v3022
      %v3024 = vsel %vm2985, %v2959, %v3023
      %v3025 = vsel %vm2987, %v2960, %v3024
      %v3026 = vsel %vm2989, %v2961, %v3025
      %v3027 = vsel %vm2991, %v2962, %v3026
      %v3028 = vsel %vm2979, %v2964, %v2963
      %v3029 = vsel %vm2981, %v2965, %v3028
      %v3030 = vsel %vm2983, %v2966, %v3029
      %v3031 = vsel %vm2985, %v2967, %v3030
      %v3032 = vsel %vm2987, %v2968, %v3031
      %v3033 = vsel %vm2989, %v2969, %v3032
      %v3034 = vsel %vm2991, %v2970, %v3033
      %v3035 = vsel %vm2979, %v2972, %v2971
      %v3036 = vsel %vm2981, %v2973, %v3035
      %v3037 = vsel %vm2983, %v2974, %v3036
      %v3038 = vsel %vm2985, %v2975, %v3037
      %v3039 = vsel %vm2987, %v2976, %v3038
      %v3040 = vsel %vm2989, %v2977, %v3039
      %v3041 = vsel %vm2991, %v2978, %v3040
      %v3042 = vpack.c.b16 %v2992, %v2992
      %v3043 = vpack.c.b16 %v2999, %v2999
      %v3044 = vpack.c.b16 %v3006, %v3006
      %v3045 = vpack.c.b16 %v3013, %v3013
      %v3046 = vpack.c.b16 %v3020, %v3020
      %v3047 = vpack.c.b16 %v3027, %v3027
      %v3048 = vpack.c.b16 %v3034, %v3034
      %v3049 = vpack.c.b16 %v3041, %v3041
      %vm3058 = vcmask 519168
      %3059 = vst.msk [vmem:[%s316] sm:$0xf] %vm3058, %v3042
      %3060 = vst.msk [vmem:[%s316 + $0x4] sm:$0xf] %vm3058, %v3043
      %3061 = vst.msk [vmem:[%s316 + $0x8] sm:$0xf] %vm3058, %v3044
      %3062 = vst.msk [vmem:[%s316 + $0xc] sm:$0xf] %vm3058, %v3045
      %3063 = vst.msk [vmem:[%s316 + $0x10] sm:$0xf] %vm3058, %v3046
      %3064 = vst.msk [vmem:[%s316 + $0x14] sm:$0xf] %vm3058, %v3047
      %3065 = vst.msk [vmem:[%s316 + $0x18] sm:$0xf] %vm3058, %v3048
      %3066 = vst.msk [vmem:[%s316 + $0x1c] sm:$0xf] %vm3058, %v3049
      %s3067 = smul.u32 8, %s20
      %p3068 = scmp.lt.s32.totalorder %s19, 1
      %s3069 = scalar_select %p3068, %s19, 1
      %p3070 = scmp.lt.s32.totalorder %s3067, 7
      %s3071 = scalar_select %p3070, %s3067, 7
      %s3072 = smul.addr %s3069, 8
      %s3073 = sadd.s32 %s3071, %s3072
      %s3074 = smul.addr %s3073, 4
      %s3075 = scalar_lea.vmem %s4, %s3074
      // Predicated region
      $region37: #{encoder_forward.6} parent=35 // pred_check
        %p3076 = pneg %p149
      $region38: #{encoder_forward.6} parent=35 // pred_check_branch
        %3078 = sbr.rel (%p3076) target = $region40
      $region39: #{encoder_forward.6} parent=35 // pred_region
        %s3079 = smul.u32 8, %s20
      $region40: #{encoder_forward.6} parent=35 // pred_fallthru
        _
    $region36: #{encoder_forward.6} parent=5 // pred_fallthru
      _
    %p3080 = scmp.le.s32.totalorder 2, %s10
    // Predicated region
    $region41: #{encoder_forward.6} parent=5 // pred_check
      %p3081 = pneg %p3080
    $region42: #{encoder_forward.6} parent=5 // pred_check_branch
      %3083 = sbr.rel (%p3081) target = $region44
    $region43: #{encoder_forward.6} parent=5 // pred_region
      %s3084 = ssub.s32 %s10, 2
      // Predicated region
      $region45: #{encoder_forward.6} parent=43 // pred_check
        %p3085 = pneg %p155
      $region46: #{encoder_forward.6} parent=43 // pred_check_branch
        %3087 = sbr.rel (%p3085) target = $region48
      $region47: #{encoder_forward.6} parent=43 // pred_region
        %s3088 = smul.u32 8, %s22
        %p3089 = scmp.lt.s32.totalorder %s21, 1
        %s3090 = scalar_select %p3089, %s21, 1
        %p3091 = scmp.lt.s32.totalorder %s3088, 7
        %s3092 = scalar_select %p3091, %s3088, 7
        %s3093 = smul.addr %s3090, 8
        %s3094 = sadd.s32 %s3092, %s3093
        %s3095 = smul.addr %s3094, 4
        %s3096 = scalar_lea.vmem %s4, %s3095
      $region48: #{encoder_forward.6} parent=43 // pred_fallthru
        _
    $region44: #{encoder_forward.6} parent=5 // pred_fallthru
      _
  $region6: #{encoder_forward.6} parent=0 // loop_footer
    %s14 = sadd.s32 1, %s10
  $region7: #{encoder_forward.6} parent=0 // loop_footer_branch
    %9 = sbr.rel target = $region3
  $region8: #{encoder_forward.6} parent=0 // loop_exit
    _

// kernel: encoder_forward.8
$region0: #{encoder_forward.8}
  #allocation0 [shape = 'u32[]', space=smem, size = 0x4, offset = 0x4, fixed_abs, tag = 'smem constant byte address 0x4 - core index']
  #allocation1 [shape = 'u32[144,128]{1,0:T(1,128)}', space=vmem, size = 0x12000, scoped, tag = 'internal scratch']
  %s0 = inlined_call_operand.vmem [shape: bf16[2,10,10,128], index: 0, kind: input, shape index: {}, may-alias: {0,1}]
  %s1 = inlined_call_operand.vmem [shape: bf16[2,10,10,128], index: 1, kind: input, shape index: {}, may-alias: {0,1}]
  %s2 = inlined_call_operand.vmem [shape: bf16[3,384,128], index: 2, kind: input, shape index: {}]
  %s3 = inlined_call_operand.vmem [shape: f32[1,128], index: 3, kind: input, shape index: {}]
  %s4 = inlined_call_operand.vmem [shape: bf16[2,4,4,128], index: 4, kind: output, shape index: {}]
  %s5 = sld [smem:[#allocation0]]
  $region49: #{encoder_forward.8} parent=0
    _
  %s7 = ssub.s32 1, %s5
  %s8 = scalar_select 0, %s7, %s5
  loop: start=0, step=1, limit=4
  $region2: #{encoder_forward.8} parent=0 // loop_pre_header
    _
  $region3: #{encoder_forward.8} parent=0 // loop_header
    %s10 = sphi 0, %s14
    %p11 = scmp.ge.s32.totalorder %s10, 4
    %s17 = sphi 0, %s29
    %s18 = sphi 0, %s25
    %s19 = sphi 0, %s17
    %s20 = sphi 0, %s18
    %s21 = sphi 0, %s19
    %s22 = sphi 0, %s20
    %s34 = sphi 0, %s36
    %s37 = sphi 0, %s34
    %s38 = sphi 0, %s37
    %s54 = sphi 0, %s38
    %s66 = sphi 0, %s68
    %s69 = sphi 0, %s66
    %s70 = sphi 0, %s69
    %s86 = sphi 0, %s70
    %s90 = sphi 0, %s90
    %s92 = sphi 0, %s90
    %s93 = sphi 0, %s92
    %s107 = sphi 0, %s93
    %s111 = sphi 0, %s111
    %s113 = sphi 0, %s111
    %s114 = sphi 0, %s113
    %s128 = sphi 0, %s114
    %s136 = sphi 0, %s138
    %s139 = sphi 0, %s136
    %s140 = sphi 0, %s139
    %s156 = sphi 0, %s140
  $region4: #{encoder_forward.8} parent=0 // loop_header_branch
    %13 = sbr.rel (%p11) target = $region8
  $region5: #{encoder_forward.8} parent=0 // loop_body
    %s15 = ssub.s32 %s10, 1
    %s16 = ssub.s32 %s10, 2
    %s23 = sadd.s32 1, %s18
    %p24 = scmp.ge.s32.totalorder %s23, 1
    %s25 = scalar_select %p24, 0, %s23
    %s26 = sadd.s32 1, %s17
    %s27 = scalar_select %p24, %s26, %s17
    %p28 = scmp.ge.s32.totalorder %s27, 2
    %s29 = scalar_select %p28, 0, %s27
    %s30 = ssub.s32 %s17, %s29
    %s31 = ssub.s32 %s18, %s25
    %s32 = sor.u32 %s30, %s31
    %p33 = scmp.eq.s32.totalorder %s32, 0
    %s35 = sadd.s32 %s34, 1
    %s36 = scalar_select %p33, %s34, %s35
    %p39 = pneg %p33
    %p40 = scmp.eq.s32.totalorder %s10, 1
    %p41 = por %p39, %p40
    %p42 = scmp.ne.s32.totalorder %s34, %s37
    %p43 = scmp.eq.s32.totalorder %s10, 0
    %p44 = por %p42, %p43
    %p45 = scmp.ne.s32.totalorder %s34, %s37
    %p46 = scmp.eq.s32.totalorder %s15, 1
    %p47 = por %p45, %p46
    %p48 = scmp.ne.s32.totalorder %s37, %s38
    %p49 = scmp.eq.s32.totalorder %s15, 0
    %p50 = por %p48, %p49
    %p51 = scmp.ne.s32.totalorder %s37, %s38
    %p52 = scmp.eq.s32.totalorder %s16, 1
    %p53 = por %p51, %p52
    %p55 = scmp.ne.s32.totalorder %s38, %s54
    %p56 = scmp.eq.s32.totalorder %s16, 0
    %p57 = por %p55, %p56
    %s58 = sadd.s32 %s18, 1
    %s59 = smul.u32 %s58, 4
    %s60 = sadd.s32 %s25, 1
    %s61 = smul.u32 %s60, 4
    %s62 = ssub.s32 %s17, %s29
    %s63 = ssub.s32 %s59, %s61
    %s64 = sor.u32 %s62, %s63
    %p65 = scmp.eq.s32.totalorder %s64, 0
    %s67 = sadd.s32 %s66, 1
    %s68 = scalar_select %p65, %s66, %s67
    %p71 = pneg %p65
    %p72 = scmp.eq.s32.totalorder %s10, 1
    %p73 = por %p71, %p72
    %p74 = scmp.ne.s32.totalorder %s66, %s69
    %p75 = scmp.eq.s32.totalorder %s10, 0
    %p76 = por %p74, %p75
    %p77 = scmp.ne.s32.totalorder %s66, %s69
    %p78 = scmp.eq.s32.totalorder %s15, 1
    %p79 = por %p77, %p78
    %p80 = scmp.ne.s32.totalorder %s69, %s70
    %p81 = scmp.eq.s32.totalorder %s15, 0
    %p82 = por %p80, %p81
    %p83 = scmp.ne.s32.totalorder %s69, %s70
    %p84 = scmp.eq.s32.totalorder %s16, 1
    %p85 = por %p83, %p84
    %p87 = scmp.ne.s32.totalorder %s70, %s86
    %p88 = scmp.eq.s32.totalorder %s16, 0
    %p89 = por %p87, %p88
    %s91 = sadd.s32 %s90, 1
    %p94 = scmp.eq.s32.totalorder %s10, 1
    %p95 = scmp.ne.s32.totalorder %s90, %s92
    %p96 = scmp.eq.s32.totalorder %s10, 0
    %p97 = por %p95, %p96
    %p98 = scmp.ne.s32.totalorder %s90, %s92
    %p99 = scmp.eq.s32.totalorder %s15, 1
    %p100 = por %p98, %p99
    %p101 = scmp.ne.s32.totalorder %s92, %s93
    %p102 = scmp.eq.s32.totalorder %s15, 0
    %p103 = por %p101, %p102
    %p104 = scmp.ne.s32.totalorder %s92, %s93
    %p105 = scmp.eq.s32.totalorder %s16, 1
    %p106 = por %p104, %p105
    %p108 = scmp.ne.s32.totalorder %s93, %s107
    %p109 = scmp.eq.s32.totalorder %s16, 0
    %p110 = por %p108, %p109
    %s112 = sadd.s32 %s111, 1
    %p115 = scmp.eq.s32.totalorder %s10, 1
    %p116 = scmp.ne.s32.totalorder %s111, %s113
    %p117 = scmp.eq.s32.totalorder %s10, 0
    %p118 = por %p116, %p117
    %p119 = scmp.ne.s32.totalorder %s111, %s113
    %p120 = scmp.eq.s32.totalorder %s15, 1
    %p121 = por %p119, %p120
    %p122 = scmp.ne.s32.totalorder %s113, %s114
    %p123 = scmp.eq.s32.totalorder %s15, 0
    %p124 = por %p122, %p123
    %p125 = scmp.ne.s32.totalorder %s113, %s114
    %p126 = scmp.eq.s32.totalorder %s16, 1
    %p127 = por %p125, %p126
    %p129 = scmp.ne.s32.totalorder %s114, %s128
    %p130 = scmp.eq.s32.totalorder %s16, 0
    %p131 = por %p129, %p130
    %s132 = ssub.s32 %s17, %s29
    %s133 = ssub.s32 %s18, %s25
    %s134 = sor.u32 %s132, %s133
    %p135 = scmp.eq.s32.totalorder %s134, 0
    %s137 = sadd.s32 %s136, 1
    %s138 = scalar_select %p135, %s136, %s137
    %p141 = pneg %p135
    %p142 = scmp.eq.s32.totalorder %s10, 1
    %p143 = por %p141, %p142
    %p144 = scmp.ne.s32.totalorder %s136, %s139
    %p145 = scmp.eq.s32.totalorder %s10, 0
    %p146 = por %p144, %p145
    %p147 = scmp.ne.s32.totalorder %s136, %s139
    %p148 = scmp.eq.s32.totalorder %s15, 1
    %p149 = por %p147, %p148
    %p150 = scmp.ne.s32.totalorder %s139, %s140
    %p151 = scmp.eq.s32.totalorder %s15, 0
    %p152 = por %p150, %p151
    %p153 = scmp.ne.s32.totalorder %s139, %s140
    %p154 = scmp.eq.s32.totalorder %s16, 1
    %p155 = por %p153, %p154
    %p157 = scmp.ne.s32.totalorder %s140, %s156
    %p158 = scmp.eq.s32.totalorder %s16, 0
    %p159 = por %p157, %p158
    %p160 = scmp.le.s32.totalorder 1, %s10
    %p161 = scmp.lt.s32.totalorder %s10, 3
    %p162 = pnand %p160, %p161
    %p163 = pneg %p162
    // Predicated region
    $region9: #{encoder_forward.8} parent=5 // pred_check
      _
    $region10: #{encoder_forward.8} parent=5 // pred_check_branch
      %165 = sbr.rel (%p162) target = $region12
    $region11: #{encoder_forward.8} parent=5 // pred_region
      %s166 = ssub.s32 %s10, 1
      // Predicated region
      $region13: #{encoder_forward.8} parent=11 // pred_check
        %p167 = pneg %p103
      $region14: #{encoder_forward.8} parent=11 // pred_check_branch
        %169 = sbr.rel (%p167) target = $region16
      $region15: #{encoder_forward.8} parent=11 // pred_region
        _
      $region16: #{encoder_forward.8} parent=11 // pred_fallthru
        _
      // Predicated region
      $region17: #{encoder_forward.8} parent=11 // pred_check
        %p170 = pneg %p124
      $region18: #{encoder_forward.8} parent=11 // pred_check_branch
        %172 = sbr.rel (%p170) target = $region20
      $region19: #{encoder_forward.8} parent=11 // pred_region
        _
      $region20: #{encoder_forward.8} parent=11 // pred_fallthru
        _
    $region12: #{encoder_forward.8} parent=5 // pred_fallthru
      _
    %p173 = scmp.lt.s32.totalorder %s10, 2
    // Predicated region
    $region21: #{encoder_forward.8} parent=5 // pred_check
      %p174 = pneg %p173
    $region22: #{encoder_forward.8} parent=5 // pred_check_branch
      %176 = sbr.rel (%p174) target = $region24
    $region23: #{encoder_forward.8} parent=5 // pred_region
      // Predicated region
      $region25: #{encoder_forward.8} parent=23 // pred_check
        %p177 = pneg %p44
      $region26: #{encoder_forward.8} parent=23 // pred_check_branch
        %179 = sbr.rel (%p177) target = $region28
      $region27: #{encoder_forward.8} parent=23 // pred_region
        %s180 = smul.u32 8, %s18
        %s181 = ssub.s32 10, %s180
        %p182 = scmp.lt.s32.totalorder %s181, 8
        %s183 = scalar_select %p182, %s181, 8
        %s184 = smul.u32 64, %s183
        %s185 = smul.u32 %s184, 2
        %p186 = scmp.lt.s32.totalorder %s17, 1
        %s187 = scalar_select %p186, %s17, 1
        %p188 = scmp.lt.s32.totalorder %s180, 9
        %s189 = scalar_select %p188, %s180, 9
        %s190 = smul.addr %s189, 2
        %s191 = smul.addr %s187, 20
        %s192 = sadd.s32 %s190, %s191
        %s193 = smul.addr %s192, 4
        %s194 = scalar_lea.vmem %s0, %s193
        %s195 = smul.u32 8, %s18
        %s196 = ssub.s32 10, %s195
        %p197 = scmp.lt.s32.totalorder %s196, 8
        %s198 = scalar_select %p197, %s196, 8
        %s199 = smul.u32 64, %s198
        %s200 = smul.u32 %s199, 2
      $region28: #{encoder_forward.8} parent=23 // pred_fallthru
        _
      // Predicated region
      $region29: #{encoder_forward.8} parent=23 // pred_check
        %p201 = pneg %p76
      $region30: #{encoder_forward.8} parent=23 // pred_check_branch
        %203 = sbr.rel (%p201) target = $region32
      $region31: #{encoder_forward.8} parent=23 // pred_region
        %s204 = sadd.s32 %s18, 1
        %s205 = smul.u32 %s204, 4
        %s206 = smul.u32 2, %s205
        %p207 = scmp.lt.s32.totalorder %s17, 1
        %s208 = scalar_select %p207, %s17, 1
        %p209 = scmp.lt.s32.totalorder %s206, 9
        %s210 = scalar_select %p209, %s206, 9
        %s211 = smul.addr %s210, 2
        %s212 = smul.addr %s208, 20
        %s213 = sadd.s32 %s211, %s212
        %s214 = smul.addr %s213, 4
        %s215 = scalar_lea.vmem %s1, %s214
        %s216 = sadd.s32 %s18, 1
        %s217 = smul.u32 %s216, 4
        %s218 = smul.u32 2, %s217
      $region32: #{encoder_forward.8} parent=23 // pred_fallthru
        _
    $region24: #{encoder_forward.8} parent=5 // pred_fallthru
      _
    %p219 = scmp.le.s32.totalorder 1, %s10
    %p220 = scmp.lt.s32.totalorder %s10, 3
    %p221 = pnand %p219, %p220
    %p222 = pneg %p221
    // Predicated region
    $region33: #{encoder_forward.8} parent=5 // pred_check
      _
    $region34: #{encoder_forward.8} parent=5 // pred_check_branch
      %224 = sbr.rel (%p221) target = $region36
    $region35: #{encoder_forward.8} parent=5 // pred_region
      %s225 = ssub.s32 %s10, 1
      %s226 = smul.u32 8, %s20
      %s227 = ssub.s32 10, %s226
      %p228 = scmp.lt.s32.totalorder %s227, 8
      %s229 = scalar_select %p228, %s227, 8
      %s230 = smul.u32 64, %s229
      %s231 = smul.u32 %s230, 2
      %p232 = scmp.lt.s32.totalorder %s19, 1
      %s233 = scalar_select %p232, %s19, 1
      %p234 = scmp.lt.s32.totalorder %s226, 9
      %s235 = scalar_select %p234, %s226, 9
      %s236 = smul.addr %s235, 2
      %s237 = smul.addr %s233, 20
      %s238 = sadd.s32 %s236, %s237
      %s239 = smul.addr %s238, 4
      %s240 = scalar_lea.vmem %s0, %s239
      %p241 = pneg %p50
      %p242 = pneg %p47
      %s243 = sadd.s32 %s20, 1
      %s244 = smul.u32 %s243, 4
      %s245 = smul.u32 2, %s244
      %p246 = scmp.lt.s32.totalorder %s19, 1
      %s247 = scalar_select %p246, %s19, 1
      %p248 = scmp.lt.s32.totalorder %s245, 9
      %s249 = scalar_select %p248, %s245, 9
      %s250 = smul.addr %s249, 2
      %s251 = smul.addr %s247, 20
      %s252 = sadd.s32 %s250, %s251
      %s253 = smul.addr %s252, 4
      %s254 = scalar_lea.vmem %s1, %s253
      %p255 = pneg %p82
      %p256 = pneg %p79
      %p257 = pneg %p103
      %p258 = pneg %p100
      %p259 = pneg %p124
      %p260 = pneg %p121
      %p261 = pneg %p152
      %p262 = pneg %p149
      %s263 = smul.u32 4, %s20
      %p264 = scmp.lt.s32.totalorder %s19, 1
      %s265 = scalar_select %p264, %s19, 1
      %p266 = scmp.lt.s32.totalorder %s263, 3
      %s267 = scalar_select %p266, %s263, 3
      %s268 = smul.addr %s265, 4
      %s269 = sadd.s32 %s267, %s268
      %s270 = smul.addr %s269, 2
      %s271 = scalar_lea.vmem %s4, %s270
      %s272 = smul.u32 8, %s20
      %s273 = ssub.s32 10, %s272
      %p274 = scmp.lt.s32.totalorder %s273, 8
      %s275 = scalar_select %p274, %s273, 8
      %s276 = smul.u32 64, %s275
      %s277 = smul.u32 %s276, 2
      %p278 = scmp.lt.s32.totalorder %s19, 1
      %s279 = scalar_select %p278, %s19, 1
      %p280 = scmp.lt.s32.totalorder %s272, 9
      %s281 = scalar_select %p280, %s272, 9
      %s282 = smul.addr %s281, 2
      %s283 = smul.addr %s279, 20
      %s284 = sadd.s32 %s282, %s283
      %s285 = smul.addr %s284, 4
      %s286 = scalar_lea.vmem %s0, %s285
      %s287 = smul.u32 8, %s20
      %s288 = ssub.s32 10, %s287
      %p289 = scmp.lt.s32.totalorder %s288, 8
      %s290 = scalar_select %p289, %s288, 8
      %s291 = smul.u32 64, %s290
      %s292 = smul.u32 %s291, 2
      %s293 = sadd.s32 %s20, 1
      %s294 = smul.u32 %s293, 4
      %s295 = smul.u32 2, %s294
      %p296 = scmp.lt.s32.totalorder %s19, 1
      %s297 = scalar_select %p296, %s19, 1
      %p298 = scmp.lt.s32.totalorder %s295, 9
      %s299 = scalar_select %p298, %s295, 9
      %s300 = smul.addr %s299, 2
      %s301 = smul.addr %s297, 20
      %s302 = sadd.s32 %s300, %s301
      %s303 = smul.addr %s302, 4
      %s304 = scalar_lea.vmem %s1, %s303
      %s305 = sadd.s32 %s20, 1
      %s306 = smul.u32 %s305, 4
      %s307 = smul.u32 2, %s306
      %s308 = smul.u32 4, %s20
      %p309 = scmp.lt.s32.totalorder %s19, 1
      %s310 = scalar_select %p309, %s19, 1
      %p311 = scmp.lt.s32.totalorder %s308, 3
      %s312 = scalar_select %p311, %s308, 3
      %s313 = smul.addr %s310, 4
      %s314 = sadd.s32 %s312, %s313
      %s315 = smul.addr %s314, 2
      %s316 = scalar_lea.vmem %s4, %s315
      %s317 = smul.u32 4, %s20
      %v319 = vld [vmem:[%s286] sm:$0xf]
      %v320 = vld [vmem:[%s286 + $0x4] sm:$0x1]
      %v321 = vld [vmem:[%s286 + $0x8] sm:$0xf]
      %v322 = vld [vmem:[%s286 + $0xc] sm:$0x1]
      %v323 = vld [vmem:[%s286 + $0x10] sm:$0xf]
      %v324 = vld [vmem:[%s286 + $0x14] sm:$0x1]
      %v325 = vld [vmem:[%s286 + $0x18] sm:$0xf]
      %v326 = vld [vmem:[%s286 + $0x1c] sm:$0x1]
      %v327 = vld [vmem:[%s286 + $0x20] sm:$0xf]
      %v328 = vld [vmem:[%s286 + $0x24] sm:$0x1]
      %v329 = vld [vmem:[%s286 + $0x28] sm:$0xf]
      %v330 = vld [vmem:[%s286 + $0x2c] sm:$0x1]
      %v331 = vld [vmem:[%s286 + $0x30] sm:$0xf]
      %v332 = vld [vmem:[%s286 + $0x34] sm:$0x1]
      %v333 = vld [vmem:[%s286 + $0x38] sm:$0xf]
      %v334 = vld [vmem:[%s286 + $0x3c] sm:$0x1]
      %v335 = vld [vmem:[%s304] sm:$0xf]
      %v336 = vld [vmem:[%s304 + $0x4] sm:$0x1]
      %v337 = vld [vmem:[%s304 + $0x8] sm:$0xf]
      %v338 = vld [vmem:[%s304 + $0xc] sm:$0x1]
      %v355 = vunpack.c.l.b16 %v319
      %v356 = vunpack.c.l.b16 %v320
      %v357 = vunpack.c.l.b16 %v321
      %v358 = vunpack.c.l.b16 %v322
      %v359 = vunpack.c.l.b16 %v323
      %v360 = vunpack.c.l.b16 %v324
      %v361 = vunpack.c.l.b16 %v325
      %v362 = vunpack.c.l.b16 %v326
      %v363 = vunpack.c.l.b16 %v327
      %v364 = vunpack.c.l.b16 %v328
      %v365 = vunpack.c.l.b16 %v329
      %v366 = vunpack.c.l.b16 %v330
      %v367 = vunpack.c.l.b16 %v331
      %v368 = vunpack.c.l.b16 %v332
      %v369 = vunpack.c.l.b16 %v333
      %v370 = vunpack.c.l.b16 %v334
      %v371 = vpack.c.b16 %v356, %v355
      %v372 = vpack.c.b16 %v358, %v357
      %v373 = vpack.c.b16 %v360, %v359
      %v374 = vpack.c.b16 %v362, %v361
      %v375 = vpack.c.b16 %v364, %v363
      %v376 = vpack.c.b16 %v366, %v365
      %v377 = vpack.c.b16 %v368, %v367
      %v378 = vpack.c.b16 %v370, %v369
      %v380 = vshrl.u32 %v371, 16
      %v382 = vshll.u32 %v371, 16
      %v384 = vrot.slane %v382, 1
      %v385 = vor.u32 %v380, %v384
      %v387 = vshrl.u32 %v372, 16
      %v389 = vshll.u32 %v372, 16
      %v391 = vrot.slane %v389, 1
      %v392 = vor.u32 %v387, %v391
      %v394 = vshrl.u32 %v373, 16
      %v396 = vshll.u32 %v373, 16
      %v398 = vrot.slane %v396, 1
      %v399 = vor.u32 %v394, %v398
      %v401 = vshrl.u32 %v374, 16
      %v403 = vshll.u32 %v374, 16
      %v405 = vrot.slane %v403, 1
      %v406 = vor.u32 %v401, %v405
      %v408 = vshrl.u32 %v375, 16
      %v410 = vshll.u32 %v375, 16
      %v412 = vrot.slane %v410, 1
      %v413 = vor.u32 %v408, %v412
      %v415 = vshrl.u32 %v376, 16
      %v417 = vshll.u32 %v376, 16
      %v419 = vrot.slane %v417, 1
      %v420 = vor.u32 %v415, %v419
      %v422 = vshrl.u32 %v377, 16
      %v424 = vshll.u32 %v377, 16
      %v426 = vrot.slane %v424, 1
      %v427 = vor.u32 %v422, %v426
      %v429 = vshrl.u32 %v378, 16
      %v431 = vshll.u32 %v378, 16
      %v433 = vrot.slane %v431, 1
      %v434 = vor.u32 %v429, %v433
      %v435 = vrot.slane %v371, 1
      %v436 = vrot.slane %v372, 1
      %v437 = vrot.slane %v373, 1
      %v438 = vrot.slane %v374, 1
      %v439 = vrot.slane %v375, 1
      %v440 = vrot.slane %v376, 1
      %v441 = vrot.slane %v377, 1
      %v442 = vrot.slane %v378, 1
      %v443 = vunpack.c.l.b16 %v385
      %v444 = vunpack.c.l.b16 %v435
      %v445 = vunpack.c.l.b16 %v392
      %v446 = vunpack.c.l.b16 %v436
      %v447 = vunpack.c.l.b16 %v399
      %v448 = vunpack.c.l.b16 %v437
      %v449 = vunpack.c.l.b16 %v406
      %v450 = vunpack.c.l.b16 %v438
      %v451 = vunpack.c.l.b16 %v413
      %v452 = vunpack.c.l.b16 %v439
      %v453 = vunpack.c.l.b16 %v420
      %v454 = vunpack.c.l.b16 %v440
      %v455 = vunpack.c.l.b16 %v427
      %v456 = vunpack.c.l.b16 %v441
      %v457 = vunpack.c.l.b16 %v434
      %v458 = vunpack.c.l.b16 %v442
      %v459 = vld [vmem:[%s2] sm:$0xf]
      %v460 = vld [vmem:[%s2 + $0x4] sm:$0xf]
      %v461 = vld [vmem:[%s2 + $0x8] sm:$0xf]
      %v462 = vld [vmem:[%s2 + $0xc] sm:$0xf]
      %v463 = vld [vmem:[%s2 + $0x10] sm:$0xf]
      %v464 = vld [vmem:[%s2 + $0x14] sm:$0xf]
      %v465 = vld [vmem:[%s2 + $0x18] sm:$0xf]
      %v466 = vld [vmem:[%s2 + $0x1c] sm:$0xf]
      %v467 = vld [vmem:[%s2 + $0x20] sm:$0xf]
      %v468 = vld [vmem:[%s2 + $0x24] sm:$0xf]
      %v469 = vld [vmem:[%s2 + $0x28] sm:$0xf]
      %v470 = vld [vmem:[%s2 + $0x2c] sm:$0xf]
      %v471 = vld [vmem:[%s2 + $0x30] sm:$0xf]
      %v472 = vld [vmem:[%s2 + $0x34] sm:$0xf]
      %v473 = vld [vmem:[%s2 + $0x38] sm:$0xf]
      %v474 = vld [vmem:[%s2 + $0x3c] sm:$0xf]
      %v475 = vld [vmem:[%s2 + $0x40] sm:$0xf]
      %v476 = vld [vmem:[%s2 + $0x44] sm:$0xf]
      %v477 = vld [vmem:[%s2 + $0x48] sm:$0xf]
      %v478 = vld [vmem:[%s2 + $0x4c] sm:$0xf]
      %v479 = vld [vmem:[%s2 + $0x50] sm:$0xf]
      %v480 = vld [vmem:[%s2 + $0x54] sm:$0xf]
      %v481 = vld [vmem:[%s2 + $0x58] sm:$0xf]
      %v482 = vld [vmem:[%s2 + $0x5c] sm:$0xf]
      %v483 = vld [vmem:[%s2 + $0x60] sm:$0xf]
      %v484 = vld [vmem:[%s2 + $0x64] sm:$0xf]
      %v485 = vld [vmem:[%s2 + $0x68] sm:$0xf]
      %v486 = vld [vmem:[%s2 + $0x6c] sm:$0xf]
      %v487 = vld [vmem:[%s2 + $0x70] sm:$0xf]
      %v488 = vld [vmem:[%s2 + $0x74] sm:$0xf]
      %v489 = vld [vmem:[%s2 + $0x78] sm:$0xf]
      %v490 = vld [vmem:[%s2 + $0x7c] sm:$0xf]
      %v491 = vld [vmem:[%s2 + $0x80] sm:$0xf]
      %v492 = vld [vmem:[%s2 + $0x84] sm:$0xf]
      %v493 = vld [vmem:[%s2 + $0x88] sm:$0xf]
      %v494 = vld [vmem:[%s2 + $0x8c] sm:$0xf]
      %v495 = vld [vmem:[%s2 + $0x90] sm:$0xf]
      %v496 = vld [vmem:[%s2 + $0x94] sm:$0xf]
      %v497 = vld [vmem:[%s2 + $0x98] sm:$0xf]
      %v498 = vld [vmem:[%s2 + $0x9c] sm:$0xf]
      %v499 = vld [vmem:[%s2 + $0xa0] sm:$0xf]
      %v500 = vld [vmem:[%s2 + $0xa4] sm:$0xf]
      %v501 = vld [vmem:[%s2 + $0xa8] sm:$0xf]
      %v502 = vld [vmem:[%s2 + $0xac] sm:$0xf]
      %v503 = vld [vmem:[%s2 + $0xb0] sm:$0xf]
      %v504 = vld [vmem:[%s2 + $0xb4] sm:$0xf]
      %v505 = vld [vmem:[%s2 + $0xb8] sm:$0xf]
      %v506 = vld [vmem:[%s2 + $0xbc] sm:$0xf]
      %v509 = vunpack.c.l.b16 %v335
      %v510 = vunpack.c.l.b16 %v336
      %v511 = vpack.c.b16 %v510, %v509
      %v513 = vshrl.u32 %v511, 16
      %v515 = vshll.u32 %v511, 16
      %v517 = vrot.slane %v515, 1
      %v518 = vor.u32 %v513, %v517
      %v519 = vrot.slane %v511, 1
      %v520 = vunpack.c.l.b16 %v518
      %v521 = vunpack.c.l.b16 %v519
      %s522 = scalar_lea.vmem %s2, 192
      %v523 = vld [vmem:[%s522] sm:$0xf]
      %v524 = vld [vmem:[%s522 + $0x4] sm:$0xf]
      %v525 = vld [vmem:[%s522 + $0x8] sm:$0xf]
      %v526 = vld [vmem:[%s522 + $0xc] sm:$0xf]
      %v527 = vld [vmem:[%s522 + $0x10] sm:$0xf]
      %v528 = vld [vmem:[%s522 + $0x14] sm:$0xf]
      %v529 = vld [vmem:[%s522 + $0x18] sm:$0xf]
      %v530 = vld [vmem:[%s522 + $0x1c] sm:$0xf]
      %v531 = vld [vmem:[%s522 + $0x20] sm:$0xf]
      %v532 = vld [vmem:[%s522 + $0x24] sm:$0xf]
      %v533 = vld [vmem:[%s522 + $0x28] sm:$0xf]
      %v534 = vld [vmem:[%s522 + $0x2c] sm:$0xf]
      %v535 = vld [vmem:[%s522 + $0x30] sm:$0xf]
      %v536 = vld [vmem:[%s522 + $0x34] sm:$0xf]
      %v537 = vld [vmem:[%s522 + $0x38] sm:$0xf]
      %v538 = vld [vmem:[%s522 + $0x3c] sm:$0xf]
      %v539 = vld [vmem:[%s522 + $0x40] sm:$0xf]
      %v540 = vld [vmem:[%s522 + $0x44] sm:$0xf]
      %v541 = vld [vmem:[%s522 + $0x48] sm:$0xf]
      %v542 = vld [vmem:[%s522 + $0x4c] sm:$0xf]
      %v543 = vld [vmem:[%s522 + $0x50] sm:$0xf]
      %v544 = vld [vmem:[%s522 + $0x54] sm:$0xf]
      %v545 = vld [vmem:[%s522 + $0x58] sm:$0xf]
      %v546 = vld [vmem:[%s522 + $0x5c] sm:$0xf]
      %v547 = vld [vmem:[%s522 + $0x60] sm:$0xf]
      %v548 = vld [vmem:[%s522 + $0x64] sm:$0xf]
      %v549 = vld [vmem:[%s522 + $0x68] sm:$0xf]
      %v550 = vld [vmem:[%s522 + $0x6c] sm:$0xf]
      %v551 = vld [vmem:[%s522 + $0x70] sm:$0xf]
      %v552 = vld [vmem:[%s522 + $0x74] sm:$0xf]
      %v553 = vld [vmem:[%s522 + $0x78] sm:$0xf]
      %v554 = vld [vmem:[%s522 + $0x7c] sm:$0xf]
      %v555 = vld [vmem:[%s522 + $0x80] sm:$0xf]
      %v556 = vld [vmem:[%s522 + $0x84] sm:$0xf]
      %v557 = vld [vmem:[%s522 + $0x88] sm:$0xf]
      %v558 = vld [vmem:[%s522 + $0x8c] sm:$0xf]
      %v559 = vld [vmem:[%s522 + $0x90] sm:$0xf]
      %v560 = vld [vmem:[%s522 + $0x94] sm:$0xf]
      %v561 = vld [vmem:[%s522 + $0x98] sm:$0xf]
      %v562 = vld [vmem:[%s522 + $0x9c] sm:$0xf]
      %v563 = vld [vmem:[%s522 + $0xa0] sm:$0xf]
      %v564 = vld [vmem:[%s522 + $0xa4] sm:$0xf]
      %v565 = vld [vmem:[%s522 + $0xa8] sm:$0xf]
      %v566 = vld [vmem:[%s522 + $0xac] sm:$0xf]
      %v567 = vld [vmem:[%s522 + $0xb0] sm:$0xf]
      %v568 = vld [vmem:[%s522 + $0xb4] sm:$0xf]
      %v569 = vld [vmem:[%s522 + $0xb8] sm:$0xf]
      %v570 = vld [vmem:[%s522 + $0xbc] sm:$0xf]
      %v571 = vpack.c.b16 %v359, %v357
      %v572 = vpack.c.b16 %v447, %v445
      %v573 = vpack.c.b16 %v448, %v446
      %v574 = vpack.c.b16 %v363, %v361
      %v575 = vpack.c.b16 %v451, %v449
      %v576 = vpack.c.b16 %v452, %v450
      %v577 = vpack.c.b16 %v367, %v365
      %v578 = vpack.c.b16 %v455, %v453
      %v579 = vpack.c.b16 %v456, %v454
      %v580 = vpack.c.b16 %v509, %v369
      %v581 = vpack.c.b16 %v520, %v457
      %v582 = vpack.c.b16 %v521, %v458
      %v643 = vunpack.c.l.b16 %v523
      %v644 = vunpack.c.l.b16 %v524
      %v645 = vunpack.c.l.b16 %v525
      %v646 = vunpack.c.l.b16 %v526
      %v647 = vunpack.c.l.b16 %v527
      %v648 = vunpack.c.l.b16 %v528
      %v649 = vunpack.c.l.b16 %v529
      %v650 = vunpack.c.l.b16 %v530
      %v651 = vunpack.c.l.b16 %v531
      %v652 = vunpack.c.l.b16 %v532
      %v653 = vunpack.c.l.b16 %v533
      %v654 = vunpack.c.l.b16 %v534
      %v655 = vunpack.c.l.b16 %v535
      %v656 = vunpack.c.l.b16 %v536
      %v657 = vunpack.c.l.b16 %v537
      %v658 = vunpack.c.l.b16 %v538
      %v659 = vunpack.c.l.b16 %v539
      %v660 = vunpack.c.l.b16 %v540
      %v661 = vunpack.c.l.b16 %v541
      %v662 = vunpack.c.l.b16 %v542
      %v663 = vunpack.c.l.b16 %v543
      %v664 = vunpack.c.l.b16 %v544
      %v665 = vunpack.c.l.b16 %v545
      %v666 = vunpack.c.l.b16 %v546
      %v667 = vunpack.c.l.b16 %v547
      %v668 = vunpack.c.l.b16 %v548
      %v669 = vunpack.c.l.b16 %v549
      %v670 = vunpack.c.l.b16 %v550
      %v671 = vunpack.c.l.b16 %v551
      %v672 = vunpack.c.l.b16 %v552
      %v673 = vunpack.c.l.b16 %v553
      %v674 = vunpack.c.l.b16 %v554
      %v675 = vunpack.c.l.b16 %v555
      %v676 = vunpack.c.l.b16 %v556
      %v677 = vunpack.c.l.b16 %v557
      %v678 = vunpack.c.l.b16 %v558
      %v679 = vunpack.c.l.b16 %v559
      %v680 = vunpack.c.l.b16 %v560
      %v681 = vunpack.c.l.b16 %v561
      %v682 = vunpack.c.l.b16 %v562
      %v683 = vunpack.c.l.b16 %v563
      %v684 = vunpack.c.l.b16 %v564
      %v685 = vunpack.c.l.b16 %v565
      %v686 = vunpack.c.l.b16 %v566
      %v687 = vunpack.c.l.b16 %v567
      %v688 = vunpack.c.l.b16 %v568
      %v689 = vunpack.c.l.b16 %v569
      %v690 = vunpack.c.l.b16 %v570
      %v691 = vpack.c.b16 %v644, %v643
      %v692 = vpack.c.b16 %v646, %v645
      %v693 = vpack.c.b16 %v648, %v647
      %v694 = vpack.c.b16 %v650, %v649
      %v695 = vpack.c.b16 %v652, %v651
      %v696 = vpack.c.b16 %v654, %v653
      %v697 = vpack.c.b16 %v656, %v655
      %v698 = vpack.c.b16 %v658, %v657
      %v699 = vpack.c.b16 %v660, %v659
      %v700 = vpack.c.b16 %v662, %v661
      %v701 = vpack.c.b16 %v664, %v663
      %v702 = vpack.c.b16 %v666, %v665
      %v703 = vpack.c.b16 %v668, %v667
      %v704 = vpack.c.b16 %v670, %v669
      %v705 = vpack.c.b16 %v672, %v671
      %v706 = vpack.c.b16 %v674, %v673
      %v707 = vpack.c.b16 %v676, %v675
      %v708 = vpack.c.b16 %v678, %v677
      %v709 = vpack.c.b16 %v680, %v679
      %v710 = vpack.c.b16 %v682, %v681
      %v711 = vpack.c.b16 %v684, %v683
      %v712 = vpack.c.b16 %v686, %v685
      %v713 = vpack.c.b16 %v688, %v687
      %v714 = vpack.c.b16 %v690, %v689
      %739 = vmatprep.subr.bf16.mxu0 0
      %740 = vmatpush1.bf16.msra.mxu0 %v698
      %741 = vmatprep.subr.bf16.mxu0 0
      %742 = vmatpush1.bf16.msra.mxu0 %v697
      %743 = vmatprep.subr.bf16.mxu0 0
      %744 = vmatpush1.bf16.msra.mxu0 %v696
      %745 = vmatprep.subr.bf16.mxu0 0
      %746 = vmatpush1.bf16.msra.mxu0 %v695
      %747 = vmatprep.subr.bf16.mxu0 0
      %748 = vmatpush1.bf16.msra.mxu0 %v694
      %749 = vmatprep.subr.bf16.mxu0 0
      %750 = vmatpush1.bf16.msra.mxu0 %v693
      %751 = vmatprep.subr.bf16.mxu0 0
      %752 = vmatpush1.bf16.msra.mxu0 %v692
      %753 = vmatprep.subr.bf16.mxu0 0
      %754 = vmatpush1.bf16.msra.mxu0 %v691
      %755 = vmatprep.subr.bf16.mxu0 0
      %756 = vmatpush2.bf16.msra.mxu0 %v706
      %757 = vmatprep.subr.bf16.mxu0 0
      %758 = vmatpush2.bf16.msra.mxu0 %v705
      %759 = vmatprep.subr.bf16.mxu0 0
      %760 = vmatpush2.bf16.msra.mxu0 %v704
      %761 = vmatprep.subr.bf16.mxu0 0
      %762 = vmatpush2.bf16.msra.mxu0 %v703
      %763 = vmatprep.subr.bf16.mxu0 0
      %764 = vmatpush2.bf16.msra.mxu0 %v702
      %765 = vmatprep.subr.bf16.mxu0 0
      %766 = vmatpush2.bf16.msra.mxu0 %v701
      %767 = vmatprep.subr.bf16.mxu0 0
      %768 = vmatpush2.bf16.msra.mxu0 %v700
      %769 = vmatprep.subr.bf16.mxu0 0
      %770 = vmatpush2.bf16.msra.mxu0 %v699
      %771 = vmatprep.mubr.bf16.mxu0 %v572
      %772 = vmatmul.mubr.bf16.gmra.mxu0 %v571
      %v773 = vpop.f32.mrf.mxu0
      %v774 = vadd.f32 0.0, %v773
      %v775 = vpop.f32.mrf.mxu0
      %v776 = vpop.f32.mrf.mxu0
      %v777 = vadd.f32 0.0, %v776
      %v778 = vpop.f32.mrf.mxu0
      %779 = vmatprep.mubr.bf16.mxu0 %v575
      %780 = vmatmul.mubr.bf16.gmra.mxu0 %v574
      %v781 = vpop.f32.mrf.mxu0
      %v782 = vadd.f32 0.0, %v781
      %v783 = vpop.f32.mrf.mxu0
      %v784 = vpop.f32.mrf.mxu0
      %v785 = vadd.f32 0.0, %v784
      %v786 = vpop.f32.mrf.mxu0
      %787 = vmatprep.mubr.bf16.mxu0 %v578
      %788 = vmatmul.mubr.bf16.gmra.mxu0 %v577
      %v789 = vpop.f32.mrf.mxu0
      %v790 = vadd.f32 0.0, %v789
      %v791 = vpop.f32.mrf.mxu0
      %v792 = vpop.f32.mrf.mxu0
      %v793 = vadd.f32 0.0, %v792
      %v794 = vpop.f32.mrf.mxu0
      %795 = vmatprep.mubr.bf16.mxu0 %v581
      %796 = vmatmul.mubr.bf16.gmra.mxu0 %v580
      %v797 = vpop.f32.mrf.mxu0
      %v798 = vadd.f32 0.0, %v797
      %v799 = vpop.f32.mrf.mxu0
      %v800 = vpop.f32.mrf.mxu0
      %v801 = vadd.f32 0.0, %v800
      %v802 = vpop.f32.mrf.mxu0
      %803 = vdwg.mxu0
      %804 = vmatprep.subr.bf16.mxu0 0
      %805 = vmatpush1.bf16.msra.mxu0 %v714
      %806 = vmatprep.subr.bf16.mxu0 0
      %807 = vmatpush1.bf16.msra.mxu0 %v713
      %808 = vmatprep.subr.bf16.mxu0 0
      %809 = vmatpush1.bf16.msra.mxu0 %v712
      %810 = vmatprep.subr.bf16.mxu0 0
      %811 = vmatpush1.bf16.msra.mxu0 %v711
      %812 = vmatprep.subr.bf16.mxu0 0
      %813 = vmatpush1.bf16.msra.mxu0 %v710
      %814 = vmatprep.subr.bf16.mxu0 0
      %815 = vmatpush1.bf16.msra.mxu0 %v709
      %816 = vmatprep.subr.bf16.mxu0 0
      %817 = vmatpush1.bf16.msra.mxu0 %v708
      %818 = vmatprep.subr.bf16.mxu0 0
      %819 = vmatpush1.bf16.msra.mxu0 %v707
      %820 = vmatprep.subr.bf16.mxu0 0
      %821 = vmatpush2.bf16.msra.mxu0 0
      %822 = vmatprep.subr.bf16.mxu0 0
      %823 = vmatpush2.bf16.msra.mxu0 0
      %824 = vmatprep.subr.bf16.mxu0 0
      %825 = vmatpush2.bf16.msra.mxu0 0
      %826 = vmatprep.subr.bf16.mxu0 0
      %827 = vmatpush2.bf16.msra.mxu0 0
      %828 = vmatprep.subr.bf16.mxu0 0
      %829 = vmatpush2.bf16.msra.mxu0 0
      %830 = vmatprep.subr.bf16.mxu0 0
      %831 = vmatpush2.bf16.msra.mxu0 0
      %832 = vmatprep.subr.bf16.mxu0 0
      %833 = vmatpush2.bf16.msra.mxu0 0
      %834 = vmatprep.subr.bf16.mxu0 0
      %835 = vmatpush2.bf16.msra.mxu0 0
      %836 = vmatprep.mubr.bf16.mxu0 0
      %837 = vmatmul.mubr.bf16.gmra.mxu0 %v573
      %v838 = vpop.f32.mrf.mxu0
      %v839 = vadd.f32 %v774, %v838
      %v840 = vpop.f32.mrf.mxu0
      %v841 = vpop.f32.mrf.mxu0
      %v842 = vadd.f32 %v777, %v841
      %v843 = vpop.f32.mrf.mxu0
      %844 = vmatprep.mubr.bf16.mxu0 0
      %845 = vmatmul.mubr.bf16.gmra.mxu0 %v576
      %v846 = vpop.f32.mrf.mxu0
      %v847 = vadd.f32 %v782, %v846
      %v848 = vpop.f32.mrf.mxu0
      %v849 = vpop.f32.mrf.mxu0
      %v850 = vadd.f32 %v785, %v849
      %v851 = vpop.f32.mrf.mxu0
      %852 = vmatprep.mubr.bf16.mxu0 0
      %853 = vmatmul.mubr.bf16.gmra.mxu0 %v579
      %v854 = vpop.f32.mrf.mxu0
      %v855 = vadd.f32 %v790, %v854
      %v856 = vpop.f32.mrf.mxu0
      %v857 = vpop.f32.mrf.mxu0
      %v858 = vadd.f32 %v793, %v857
      %v859 = vpop.f32.mrf.mxu0
      %860 = vmatprep.mubr.bf16.mxu0 0
      %861 = vmatmul.mubr.bf16.gmra.mxu0 %v582
      %v862 = vpop.f32.mrf.mxu0
      %v863 = vadd.f32 %v798, %v862
      %v864 = vpop.f32.mrf.mxu0
      %v865 = vpop.f32.mrf.mxu0
      %v866 = vadd.f32 %v801, %v865
      %v867 = vpop.f32.mrf.mxu0
      %868 = vdwg.mxu0
      %v869 = vpack.c.b16 %v357, %v355
      %v870 = vpack.c.b16 %v445, %v443
      %v871 = vpack.c.b16 %v446, %v444
      %v872 = vpack.c.b16 %v361, %v359
      %v873 = vpack.c.b16 %v449, %v447
      %v874 = vpack.c.b16 %v450, %v448
      %v875 = vpack.c.b16 %v365, %v363
      %v876 = vpack.c.b16 %v453, %v451
      %v877 = vpack.c.b16 %v454, %v452
      %v878 = vpack.c.b16 %v369, %v367
      %v879 = vpack.c.b16 %v457, %v455
      %v880 = vpack.c.b16 %v458, %v456
      %v941 = vunpack.c.l.b16 %v459
      %v942 = vunpack.c.l.b16 %v460
      %v943 = vunpack.c.l.b16 %v461
      %v944 = vunpack.c.l.b16 %v462
      %v945 = vunpack.c.l.b16 %v463
      %v946 = vunpack.c.l.b16 %v464
      %v947 = vunpack.c.l.b16 %v465
      %v948 = vunpack.c.l.b16 %v466
      %v949 = vunpack.c.l.b16 %v467
      %v950 = vunpack.c.l.b16 %v468
      %v951 = vunpack.c.l.b16 %v469
      %v952 = vunpack.c.l.b16 %v470
      %v953 = vunpack.c.l.b16 %v471
      %v954 = vunpack.c.l.b16 %v472
      %v955 = vunpack.c.l.b16 %v473
      %v956 = vunpack.c.l.b16 %v474
      %v957 = vunpack.c.l.b16 %v475
      %v958 = vunpack.c.l.b16 %v476
      %v959 = vunpack.c.l.b16 %v477
      %v960 = vunpack.c.l.b16 %v478
      %v961 = vunpack.c.l.b16 %v479
      %v962 = vunpack.c.l.b16 %v480
      %v963 = vunpack.c.l.b16 %v481
      %v964 = vunpack.c.l.b16 %v482
      %v965 = vunpack.c.l.b16 %v483
      %v966 = vunpack.c.l.b16 %v484
      %v967 = vunpack.c.l.b16 %v485
      %v968 = vunpack.c.l.b16 %v486
      %v969 = vunpack.c.l.b16 %v487
      %v970 = vunpack.c.l.b16 %v488
      %v971 = vunpack.c.l.b16 %v489
      %v972 = vunpack.c.l.b16 %v490
      %v973 = vunpack.c.l.b16 %v491
      %v974 = vunpack.c.l.b16 %v492
      %v975 = vunpack.c.l.b16 %v493
      %v976 = vunpack.c.l.b16 %v494
      %v977 = vunpack.c.l.b16 %v495
      %v978 = vunpack.c.l.b16 %v496
      %v979 = vunpack.c.l.b16 %v497
      %v980 = vunpack.c.l.b16 %v498
      %v981 = vunpack.c.l.b16 %v499
      %v982 = vunpack.c.l.b16 %v500
      %v983 = vunpack.c.l.b16 %v501
      %v984 = vunpack.c.l.b16 %v502
      %v985 = vunpack.c.l.b16 %v503
      %v986 = vunpack.c.l.b16 %v504
      %v987 = vunpack.c.l.b16 %v505
      %v988 = vunpack.c.l.b16 %v506
      %v989 = vpack.c.b16 %v942, %v941
      %v990 = vpack.c.b16 %v944, %v943
      %v991 = vpack.c.b16 %v946, %v945
      %v992 = vpack.c.b16 %v948, %v947
      %v993 = vpack.c.b16 %v950, %v949
      %v994 = vpack.c.b16 %v952, %v951
      %v995 = vpack.c.b16 %v954, %v953
      %v996 = vpack.c.b16 %v956, %v955
      %v997 = vpack.c.b16 %v958, %v957
      %v998 = vpack.c.b16 %v960, %v959
      %v999 = vpack.c.b16 %v962, %v961
      %v1000 = vpack.c.b16 %v964, %v963
      %v1001 = vpack.c.b16 %v966, %v965
      %v1002 = vpack.c.b16 %v968, %v967
      %v1003 = vpack.c.b16 %v970, %v969
      %v1004 = vpack.c.b16 %v972, %v971
      %v1005 = vpack.c.b16 %v974, %v973
      %v1006 = vpack.c.b16 %v976, %v975
      %v1007 = vpack.c.b16 %v978, %v977
      %v1008 = vpack.c.b16 %v980, %v979
      %v1009 = vpack.c.b16 %v982, %v981
      %v1010 = vpack.c.b16 %v984, %v983
      %v1011 = vpack.c.b16 %v986, %v985
      %v1012 = vpack.c.b16 %v988, %v987
      %1037 = vmatprep.subr.bf16.mxu0 0
      %1038 = vmatpush1.bf16.msra.mxu0 %v996
      %1039 = vmatprep.subr.bf16.mxu0 0
      %1040 = vmatpush1.bf16.msra.mxu0 %v995
      %1041 = vmatprep.subr.bf16.mxu0 0
      %1042 = vmatpush1.bf16.msra.mxu0 %v994
      %1043 = vmatprep.subr.bf16.mxu0 0
      %1044 = vmatpush1.bf16.msra.mxu0 %v993
      %1045 = vmatprep.subr.bf16.mxu0 0
      %1046 = vmatpush1.bf16.msra.mxu0 %v992
      %1047 = vmatprep.subr.bf16.mxu0 0
      %1048 = vmatpush1.bf16.msra.mxu0 %v991
      %1049 = vmatprep.subr.bf16.mxu0 0
      %1050 = vmatpush1.bf16.msra.mxu0 %v990
      %1051 = vmatprep.subr.bf16.mxu0 0
      %1052 = vmatpush1.bf16.msra.mxu0 %v989
      %1053 = vmatprep.subr.bf16.mxu0 0
      %1054 = vmatpush2.bf16.msra.mxu0 %v1004
      %1055 = vmatprep.subr.bf16.mxu0 0
      %1056 = vmatpush2.bf16.msra.mxu0 %v1003
      %1057 = vmatprep.subr.bf16.mxu0 0
      %1058 = vmatpush2.bf16.msra.mxu0 %v1002
      %1059 = vmatprep.subr.bf16.mxu0 0
      %1060 = vmatpush2.bf16.msra.mxu0 %v1001
      %1061 = vmatprep.subr.bf16.mxu0 0
      %1062 = vmatpush2.bf16.msra.mxu0 %v1000
      %1063 = vmatprep.subr.bf16.mxu0 0
      %1064 = vmatpush2.bf16.msra.mxu0 %v999
      %1065 = vmatprep.subr.bf16.mxu0 0
      %1066 = vmatpush2.bf16.msra.mxu0 %v998
      %1067 = vmatprep.subr.bf16.mxu0 0
      %1068 = vmatpush2.bf16.msra.mxu0 %v997
      %1069 = vmatprep.mubr.bf16.mxu0 %v870
      %1070 = vmatmul.mubr.bf16.gmra.mxu0 %v869
      %v1071 = vpop.f32.mrf.mxu0
      %v1072 = vadd.f32 %v839, %v1071
      %v1073 = vpop.f32.mrf.mxu0
      %v1074 = vpop.f32.mrf.mxu0
      %v1075 = vadd.f32 %v842, %v1074
      %v1076 = vpop.f32.mrf.mxu0
      %1077 = vmatprep.mubr.bf16.mxu0 %v873
      %1078 = vmatmul.mubr.bf16.gmra.mxu0 %v872
      %v1079 = vpop.f32.mrf.mxu0
      %v1080 = vadd.f32 %v847, %v1079
      %v1081 = vpop.f32.mrf.mxu0
      %v1082 = vpop.f32.mrf.mxu0
      %v1083 = vadd.f32 %v850, %v1082
      %v1084 = vpop.f32.mrf.mxu0
      %1085 = vmatprep.mubr.bf16.mxu0 %v876
      %1086 = vmatmul.mubr.bf16.gmra.mxu0 %v875
      %v1087 = vpop.f32.mrf.mxu0
      %v1088 = vadd.f32 %v855, %v1087
      %v1089 = vpop.f32.mrf.mxu0
      %v1090 = vpop.f32.mrf.mxu0
      %v1091 = vadd.f32 %v858, %v1090
      %v1092 = vpop.f32.mrf.mxu0
      %1093 = vmatprep.mubr.bf16.mxu0 %v879
      %1094 = vmatmul.mubr.bf16.gmra.mxu0 %v878
      %v1095 = vpop.f32.mrf.mxu0
      %v1096 = vadd.f32 %v863, %v1095
      %v1097 = vpop.f32.mrf.mxu0
      %v1098 = vpop.f32.mrf.mxu0
      %v1099 = vadd.f32 %v866, %v1098
      %v1100 = vpop.f32.mrf.mxu0
      %1101 = vdwg.mxu0
      %1102 = vmatprep.subr.bf16.mxu0 0
      %1103 = vmatpush1.bf16.msra.mxu0 %v1012
      %1104 = vmatprep.subr.bf16.mxu0 0
      %1105 = vmatpush1.bf16.msra.mxu0 %v1011
      %1106 = vmatprep.subr.bf16.mxu0 0
      %1107 = vmatpush1.bf16.msra.mxu0 %v1010
      %1108 = vmatprep.subr.bf16.mxu0 0
      %1109 = vmatpush1.bf16.msra.mxu0 %v1009
      %1110 = vmatprep.subr.bf16.mxu0 0
      %1111 = vmatpush1.bf16.msra.mxu0 %v1008
      %1112 = vmatprep.subr.bf16.mxu0 0
      %1113 = vmatpush1.bf16.msra.mxu0 %v1007
      %1114 = vmatprep.subr.bf16.mxu0 0
      %1115 = vmatpush1.bf16.msra.mxu0 %v1006
      %1116 = vmatprep.subr.bf16.mxu0 0
      %1117 = vmatpush1.bf16.msra.mxu0 %v1005
      %1118 = vmatprep.subr.bf16.mxu0 0
      %1119 = vmatpush2.bf16.msra.mxu0 0
      %1120 = vmatprep.subr.bf16.mxu0 0
      %1121 = vmatpush2.bf16.msra.mxu0 0
      %1122 = vmatprep.subr.bf16.mxu0 0
      %1123 = vmatpush2.bf16.msra.mxu0 0
      %1124 = vmatprep.subr.bf16.mxu0 0
      %1125 = vmatpush2.bf16.msra.mxu0 0
      %1126 = vmatprep.subr.bf16.mxu0 0
      %1127 = vmatpush2.bf16.msra.mxu0 0
      %1128 = vmatprep.subr.bf16.mxu0 0
      %1129 = vmatpush2.bf16.msra.mxu0 0
      %1130 = vmatprep.subr.bf16.mxu0 0
      %1131 = vmatpush2.bf16.msra.mxu0 0
      %1132 = vmatprep.subr.bf16.mxu0 0
      %1133 = vmatpush2.bf16.msra.mxu0 0
      %1134 = vmatprep.mubr.bf16.mxu0 0
      %1135 = vmatmul.mubr.bf16.gmra.mxu0 %v871
      %v1136 = vpop.f32.mrf.mxu0
      %v1137 = vadd.f32 %v1072, %v1136
      %v1138 = vpop.f32.mrf.mxu0
      %v1139 = vpop.f32.mrf.mxu0
      %v1140 = vadd.f32 %v1075, %v1139
      %v1141 = vpop.f32.mrf.mxu0
      %1142 = vmatprep.mubr.bf16.mxu0 0
      %1143 = vmatmul.mubr.bf16.gmra.mxu0 %v874
      %v1144 = vpop.f32.mrf.mxu0
      %v1145 = vadd.f32 %v1080, %v1144
      %v1146 = vpop.f32.mrf.mxu0
      %v1147 = vpop.f32.mrf.mxu0
      %v1148 = vadd.f32 %v1083, %v1147
      %v1149 = vpop.f32.mrf.mxu0
      %1150 = vmatprep.mubr.bf16.mxu0 0
      %1151 = vmatmul.mubr.bf16.gmra.mxu0 %v877
      %v1152 = vpop.f32.mrf.mxu0
      %v1153 = vadd.f32 %v1088, %v1152
      %v1154 = vpop.f32.mrf.mxu0
      %v1155 = vpop.f32.mrf.mxu0
      %v1156 = vadd.f32 %v1091, %v1155
      %v1157 = vpop.f32.mrf.mxu0
      %1158 = vmatprep.mubr.bf16.mxu0 0
      %1159 = vmatmul.mubr.bf16.gmra.mxu0 %v880
      %v1160 = vpop.f32.mrf.mxu0
      %v1161 = vadd.f32 %v1096, %v1160
      %v1162 = vpop.f32.mrf.mxu0
      %v1163 = vpop.f32.mrf.mxu0
      %v1164 = vadd.f32 %v1099, %v1163
      %v1165 = vpop.f32.mrf.mxu0
      %1166 = vdwg.mxu0
      %v1169 = vunpack.c.l.b16 %v337
      %v1170 = vunpack.c.l.b16 %v338
      %v1171 = vpack.c.b16 %v1170, %v1169
      %v1173 = vshrl.u32 %v1171, 16
      %v1175 = vshll.u32 %v1171, 16
      %v1177 = vrot.slane %v1175, 1
      %v1178 = vor.u32 %v1173, %v1177
      %v1179 = vrot.slane %v1171, 1
      %v1180 = vunpack.c.l.b16 %v1178
      %v1181 = vunpack.c.l.b16 %v1179
      %s1182 = scalar_lea.vmem %s2, 384
      %v1183 = vld [vmem:[%s1182] sm:$0xf]
      %v1184 = vld [vmem:[%s1182 + $0x4] sm:$0xf]
      %v1185 = vld [vmem:[%s1182 + $0x8] sm:$0xf]
      %v1186 = vld [vmem:[%s1182 + $0xc] sm:$0xf]
      %v1187 = vld [vmem:[%s1182 + $0x10] sm:$0xf]
      %v1188 = vld [vmem:[%s1182 + $0x14] sm:$0xf]
      %v1189 = vld [vmem:[%s1182 + $0x18] sm:$0xf]
      %v1190 = vld [vmem:[%s1182 + $0x1c] sm:$0xf]
      %v1191 = vld [vmem:[%s1182 + $0x20] sm:$0xf]
      %v1192 = vld [vmem:[%s1182 + $0x24] sm:$0xf]
      %v1193 = vld [vmem:[%s1182 + $0x28] sm:$0xf]
      %v1194 = vld [vmem:[%s1182 + $0x2c] sm:$0xf]
      %v1195 = vld [vmem:[%s1182 + $0x30] sm:$0xf]
      %v1196 = vld [vmem:[%s1182 + $0x34] sm:$0xf]
      %v1197 = vld [vmem:[%s1182 + $0x38] sm:$0xf]
      %v1198 = vld [vmem:[%s1182 + $0x3c] sm:$0xf]
      %v1199 = vld [vmem:[%s1182 + $0x40] sm:$0xf]
      %v1200 = vld [vmem:[%s1182 + $0x44] sm:$0xf]
      %v1201 = vld [vmem:[%s1182 + $0x48] sm:$0xf]
      %v1202 = vld [vmem:[%s1182 + $0x4c] sm:$0xf]
      %v1203 = vld [vmem:[%s1182 + $0x50] sm:$0xf]
      %v1204 = vld [vmem:[%s1182 + $0x54] sm:$0xf]
      %v1205 = vld [vmem:[%s1182 + $0x58] sm:$0xf]
      %v1206 = vld [vmem:[%s1182 + $0x5c] sm:$0xf]
      %v1207 = vld [vmem:[%s1182 + $0x60] sm:$0xf]
      %v1208 = vld [vmem:[%s1182 + $0x64] sm:$0xf]
      %v1209 = vld [vmem:[%s1182 + $0x68] sm:$0xf]
      %v1210 = vld [vmem:[%s1182 + $0x6c] sm:$0xf]
      %v1211 = vld [vmem:[%s1182 + $0x70] sm:$0xf]
      %v1212 = vld [vmem:[%s1182 + $0x74] sm:$0xf]
      %v1213 = vld [vmem:[%s1182 + $0x78] sm:$0xf]
      %v1214 = vld [vmem:[%s1182 + $0x7c] sm:$0xf]
      %v1215 = vld [vmem:[%s1182 + $0x80] sm:$0xf]
      %v1216 = vld [vmem:[%s1182 + $0x84] sm:$0xf]
      %v1217 = vld [vmem:[%s1182 + $0x88] sm:$0xf]
      %v1218 = vld [vmem:[%s1182 + $0x8c] sm:$0xf]
      %v1219 = vld [vmem:[%s1182 + $0x90] sm:$0xf]
      %v1220 = vld [vmem:[%s1182 + $0x94] sm:$0xf]
      %v1221 = vld [vmem:[%s1182 + $0x98] sm:$0xf]
      %v1222 = vld [vmem:[%s1182 + $0x9c] sm:$0xf]
      %v1223 = vld [vmem:[%s1182 + $0xa0] sm:$0xf]
      %v1224 = vld [vmem:[%s1182 + $0xa4] sm:$0xf]
      %v1225 = vld [vmem:[%s1182 + $0xa8] sm:$0xf]
      %v1226 = vld [vmem:[%s1182 + $0xac] sm:$0xf]
      %v1227 = vld [vmem:[%s1182 + $0xb0] sm:$0xf]
      %v1228 = vld [vmem:[%s1182 + $0xb4] sm:$0xf]
      %v1229 = vld [vmem:[%s1182 + $0xb8] sm:$0xf]
      %v1230 = vld [vmem:[%s1182 + $0xbc] sm:$0xf]
      %v1231 = vpack.c.b16 %v1169, %v509
      %v1232 = vpack.c.b16 %v1180, %v520
      %v1233 = vpack.c.b16 %v1181, %v521
      %v1285 = vunpack.c.l.b16 %v1183
      %v1286 = vunpack.c.l.b16 %v1184
      %v1287 = vunpack.c.l.b16 %v1185
      %v1288 = vunpack.c.l.b16 %v1186
      %v1289 = vunpack.c.l.b16 %v1187
      %v1290 = vunpack.c.l.b16 %v1188
      %v1291 = vunpack.c.l.b16 %v1189
      %v1292 = vunpack.c.l.b16 %v1190
      %v1293 = vunpack.c.l.b16 %v1191
      %v1294 = vunpack.c.l.b16 %v1192
      %v1295 = vunpack.c.l.b16 %v1193
      %v1296 = vunpack.c.l.b16 %v1194
      %v1297 = vunpack.c.l.b16 %v1195
      %v1298 = vunpack.c.l.b16 %v1196
      %v1299 = vunpack.c.l.b16 %v1197
      %v1300 = vunpack.c.l.b16 %v1198
      %v1301 = vunpack.c.l.b16 %v1199
      %v1302 = vunpack.c.l.b16 %v1200
      %v1303 = vunpack.c.l.b16 %v1201
      %v1304 = vunpack.c.l.b16 %v1202
      %v1305 = vunpack.c.l.b16 %v1203
      %v1306 = vunpack.c.l.b16 %v1204
      %v1307 = vunpack.c.l.b16 %v1205
      %v1308 = vunpack.c.l.b16 %v1206
      %v1309 = vunpack.c.l.b16 %v1207
      %v1310 = vunpack.c.l.b16 %v1208
      %v1311 = vunpack.c.l.b16 %v1209
      %v1312 = vunpack.c.l.b16 %v1210
      %v1313 = vunpack.c.l.b16 %v1211
      %v1314 = vunpack.c.l.b16 %v1212
      %v1315 = vunpack.c.l.b16 %v1213
      %v1316 = vunpack.c.l.b16 %v1214
      %v1317 = vunpack.c.l.b16 %v1215
      %v1318 = vunpack.c.l.b16 %v1216
      %v1319 = vunpack.c.l.b16 %v1217
      %v1320 = vunpack.c.l.b16 %v1218
      %v1321 = vunpack.c.l.b16 %v1219
      %v1322 = vunpack.c.l.b16 %v1220
      %v1323 = vunpack.c.l.b16 %v1221
      %v1324 = vunpack.c.l.b16 %v1222
      %v1325 = vunpack.c.l.b16 %v1223
      %v1326 = vunpack.c.l.b16 %v1224
      %v1327 = vunpack.c.l.b16 %v1225
      %v1328 = vunpack.c.l.b16 %v1226
      %v1329 = vunpack.c.l.b16 %v1227
      %v1330 = vunpack.c.l.b16 %v1228
      %v1331 = vunpack.c.l.b16 %v1229
      %v1332 = vunpack.c.l.b16 %v1230
      %v1333 = vpack.c.b16 %v1286, %v1285
      %v1334 = vpack.c.b16 %v1288, %v1287
      %v1335 = vpack.c.b16 %v1290, %v1289
      %v1336 = vpack.c.b16 %v1292, %v1291
      %v1337 = vpack.c.b16 %v1294, %v1293
      %v1338 = vpack.c.b16 %v1296, %v1295
      %v1339 = vpack.c.b16 %v1298, %v1297
      %v1340 = vpack.c.b16 %v1300, %v1299
      %v1341 = vpack.c.b16 %v1302, %v1301
      %v1342 = vpack.c.b16 %v1304, %v1303
      %v1343 = vpack.c.b16 %v1306, %v1305
      %v1344 = vpack.c.b16 %v1308, %v1307
      %v1345 = vpack.c.b16 %v1310, %v1309
      %v1346 = vpack.c.b16 %v1312, %v1311
      %v1347 = vpack.c.b16 %v1314, %v1313
      %v1348 = vpack.c.b16 %v1316, %v1315
      %v1349 = vpack.c.b16 %v1318, %v1317
      %v1350 = vpack.c.b16 %v1320, %v1319
      %v1351 = vpack.c.b16 %v1322, %v1321
      %v1352 = vpack.c.b16 %v1324, %v1323
      %v1353 = vpack.c.b16 %v1326, %v1325
      %v1354 = vpack.c.b16 %v1328, %v1327
      %v1355 = vpack.c.b16 %v1330, %v1329
      %v1356 = vpack.c.b16 %v1332, %v1331
      %1381 = vmatprep.subr.bf16.mxu0 0
      %1382 = vmatpush1.bf16.msra.mxu0 %v1340
      %1383 = vmatprep.subr.bf16.mxu0 0
      %1384 = vmatpush1.bf16.msra.mxu0 %v1339
      %1385 = vmatprep.subr.bf16.mxu0 0
      %1386 = vmatpush1.bf16.msra.mxu0 %v1338
      %1387 = vmatprep.subr.bf16.mxu0 0
      %1388 = vmatpush1.bf16.msra.mxu0 %v1337
      %1389 = vmatprep.subr.bf16.mxu0 0
      %1390 = vmatpush1.bf16.msra.mxu0 %v1336
      %1391 = vmatprep.subr.bf16.mxu0 0
      %1392 = vmatpush1.bf16.msra.mxu0 %v1335
      %1393 = vmatprep.subr.bf16.mxu0 0
      %1394 = vmatpush1.bf16.msra.mxu0 %v1334
      %1395 = vmatprep.subr.bf16.mxu0 0
      %1396 = vmatpush1.bf16.msra.mxu0 %v1333
      %1397 = vmatprep.subr.bf16.mxu0 0
      %1398 = vmatpush2.bf16.msra.mxu0 %v1348
      %1399 = vmatprep.subr.bf16.mxu0 0
      %1400 = vmatpush2.bf16.msra.mxu0 %v1347
      %1401 = vmatprep.subr.bf16.mxu0 0
      %1402 = vmatpush2.bf16.msra.mxu0 %v1346
      %1403 = vmatprep.subr.bf16.mxu0 0
      %1404 = vmatpush2.bf16.msra.mxu0 %v1345
      %1405 = vmatprep.subr.bf16.mxu0 0
      %1406 = vmatpush2.bf16.msra.mxu0 %v1344
      %1407 = vmatprep.subr.bf16.mxu0 0
      %1408 = vmatpush2.bf16.msra.mxu0 %v1343
      %1409 = vmatprep.subr.bf16.mxu0 0
      %1410 = vmatpush2.bf16.msra.mxu0 %v1342
      %1411 = vmatprep.subr.bf16.mxu0 0
      %1412 = vmatpush2.bf16.msra.mxu0 %v1341
      %1413 = vmatprep.mubr.bf16.mxu0 %v873
      %1414 = vmatmul.mubr.bf16.gmra.mxu0 %v872
      %v1415 = vpop.f32.mrf.mxu0
      %v1416 = vadd.f32 0.0, %v1415
      %v1417 = vpop.f32.mrf.mxu0
      %v1418 = vpop.f32.mrf.mxu0
      %v1419 = vadd.f32 0.0, %v1418
      %v1420 = vpop.f32.mrf.mxu0
      %1421 = vmatprep.mubr.bf16.mxu0 %v876
      %1422 = vmatmul.mubr.bf16.gmra.mxu0 %v875
      %v1423 = vpop.f32.mrf.mxu0
      %v1424 = vadd.f32 0.0, %v1423
      %v1425 = vpop.f32.mrf.mxu0
      %v1426 = vpop.f32.mrf.mxu0
      %v1427 = vadd.f32 0.0, %v1426
      %v1428 = vpop.f32.mrf.mxu0
      %1429 = vmatprep.mubr.bf16.mxu0 %v879
      %1430 = vmatmul.mubr.bf16.gmra.mxu0 %v878
      %v1431 = vpop.f32.mrf.mxu0
      %v1432 = vadd.f32 0.0, %v1431
      %v1433 = vpop.f32.mrf.mxu0
      %v1434 = vpop.f32.mrf.mxu0
      %v1435 = vadd.f32 0.0, %v1434
      %v1436 = vpop.f32.mrf.mxu0
      %1437 = vmatprep.mubr.bf16.mxu0 %v1232
      %1438 = vmatmul.mubr.bf16.gmra.mxu0 %v1231
      %v1439 = vpop.f32.mrf.mxu0
      %v1440 = vadd.f32 0.0, %v1439
      %v1441 = vpop.f32.mrf.mxu0
      %v1442 = vpop.f32.mrf.mxu0
      %v1443 = vadd.f32 0.0, %v1442
      %v1444 = vpop.f32.mrf.mxu0
      %1445 = vdwg.mxu0
      %1446 = vmatprep.subr.bf16.mxu0 0
      %1447 = vmatpush1.bf16.msra.mxu0 %v1356
      %1448 = vmatprep.subr.bf16.mxu0 0
      %1449 = vmatpush1.bf16.msra.mxu0 %v1355
      %1450 = vmatprep.subr.bf16.mxu0 0
      %1451 = vmatpush1.bf16.msra.mxu0 %v1354
      %1452 = vmatprep.subr.bf16.mxu0 0
      %1453 = vmatpush1.bf16.msra.mxu0 %v1353
      %1454 = vmatprep.subr.bf16.mxu0 0
      %1455 = vmatpush1.bf16.msra.mxu0 %v1352
      %1456 = vmatprep.subr.bf16.mxu0 0
      %1457 = vmatpush1.bf16.msra.mxu0 %v1351
      %1458 = vmatprep.subr.bf16.mxu0 0
      %1459 = vmatpush1.bf16.msra.mxu0 %v1350
      %1460 = vmatprep.subr.bf16.mxu0 0
      %1461 = vmatpush1.bf16.msra.mxu0 %v1349
      %1462 = vmatprep.subr.bf16.mxu0 0
      %1463 = vmatpush2.bf16.msra.mxu0 0
      %1464 = vmatprep.subr.bf16.mxu0 0
      %1465 = vmatpush2.bf16.msra.mxu0 0
      %1466 = vmatprep.subr.bf16.mxu0 0
      %1467 = vmatpush2.bf16.msra.mxu0 0
      %1468 = vmatprep.subr.bf16.mxu0 0
      %1469 = vmatpush2.bf16.msra.mxu0 0
      %1470 = vmatprep.subr.bf16.mxu0 0
      %1471 = vmatpush2.bf16.msra.mxu0 0
      %1472 = vmatprep.subr.bf16.mxu0 0
      %1473 = vmatpush2.bf16.msra.mxu0 0
      %1474 = vmatprep.subr.bf16.mxu0 0
      %1475 = vmatpush2.bf16.msra.mxu0 0
      %1476 = vmatprep.subr.bf16.mxu0 0
      %1477 = vmatpush2.bf16.msra.mxu0 0
      %1478 = vmatprep.mubr.bf16.mxu0 0
      %1479 = vmatmul.mubr.bf16.gmra.mxu0 %v874
      %v1480 = vpop.f32.mrf.mxu0
      %v1481 = vadd.f32 %v1416, %v1480
      %v1482 = vpop.f32.mrf.mxu0
      %v1483 = vpop.f32.mrf.mxu0
      %v1484 = vadd.f32 %v1419, %v1483
      %v1485 = vpop.f32.mrf.mxu0
      %1486 = vmatprep.mubr.bf16.mxu0 0
      %1487 = vmatmul.mubr.bf16.gmra.mxu0 %v877
      %v1488 = vpop.f32.mrf.mxu0
      %v1489 = vadd.f32 %v1424, %v1488
      %v1490 = vpop.f32.mrf.mxu0
      %v1491 = vpop.f32.mrf.mxu0
      %v1492 = vadd.f32 %v1427, %v1491
      %v1493 = vpop.f32.mrf.mxu0
      %1494 = vmatprep.mubr.bf16.mxu0 0
      %1495 = vmatmul.mubr.bf16.gmra.mxu0 %v880
      %v1496 = vpop.f32.mrf.mxu0
      %v1497 = vadd.f32 %v1432, %v1496
      %v1498 = vpop.f32.mrf.mxu0
      %v1499 = vpop.f32.mrf.mxu0
      %v1500 = vadd.f32 %v1435, %v1499
      %v1501 = vpop.f32.mrf.mxu0
      %1502 = vmatprep.mubr.bf16.mxu0 0
      %1503 = vmatmul.mubr.bf16.gmra.mxu0 %v1233
      %v1504 = vpop.f32.mrf.mxu0
      %v1505 = vadd.f32 %v1440, %v1504
      %v1506 = vpop.f32.mrf.mxu0
      %v1507 = vpop.f32.mrf.mxu0
      %v1508 = vadd.f32 %v1443, %v1507
      %v1509 = vpop.f32.mrf.mxu0
      %1510 = vdwg.mxu0
      %v1511 = vadd.f32 %v1137, %v1481
      %v1512 = vadd.f32 %v1140, %v1484
      %v1513 = vadd.f32 %v1145, %v1489
      %v1514 = vadd.f32 %v1148, %v1492
      %v1515 = vadd.f32 %v1153, %v1497
      %v1516 = vadd.f32 %v1156, %v1500
      %v1517 = vadd.f32 %v1161, %v1505
      %v1518 = vadd.f32 %v1164, %v1508
      %v1519 = vld [vmem:[%s3] sm:$0x1]
      %v1521 = vlaneseq
      %v1522 = vshrl.u32 %v1521, 7
      %v1523 = vsub.s32 0, %v1522
      %v1524 = vrot.slane %v1519, %v1523
      %v1526 = vadd.f32 %v1511, %v1524
      %v1527 = vadd.f32 %v1512, %v1524
      %v1528 = vadd.f32 %v1513, %v1524
      %v1529 = vadd.f32 %v1514, %v1524
      %v1530 = vadd.f32 %v1515, %v1524
      %v1531 = vadd.f32 %v1516, %v1524
      %v1532 = vadd.f32 %v1517, %v1524
      %v1533 = vadd.f32 %v1518, %v1524
      %v1534 = vmax.f32 %v1526, 0.0
      %v1535 = vmax.f32 %v1527, 0.0
      %v1536 = vmax.f32 %v1528, 0.0
      %v1537 = vmax.f32 %v1529, 0.0
      %v1538 = vmax.f32 %v1530, 0.0
      %v1539 = vmax.f32 %v1531, 0.0
      %v1540 = vmax.f32 %v1532, 0.0
      %v1541 = vmax.f32 %v1533, 0.0
      %v1542 = vmax.f32 %v1534, %v1535
      %v1543 = vmax.f32 %v1536, %v1537
      %v1544 = vmax.f32 %v1538, %v1539
      %v1545 = vmax.f32 %v1540, %v1541
      %v1550 = vcombine.high %v1542, %v1542
      %v1552 = vunpack.c.l.s4 1983009808
      %v1553 = vunpack.c.0.s8 %v1552
      %v1554 = vlaneseq
      %v1555 = vshrl.u32 %v1554, 7
      %v1556 = vsub.s32 %v1553, %v1555
      %v1557 = vrot.slane %v1542, %v1556
      %v1559 = vunpack.c.l.s4 1983009808
      %v1560 = vunpack.c.0.s8 %v1559
      %v1561 = vlaneseq
      %v1562 = vshrl.u32 %v1561, 7
      %v1563 = vsub.s32 %v1560, %v1562
      %v1564 = vrot.slane %v1550, %v1563
      %v1565 = vcombine.high %v1557, %v1557
      %v1566 = vcombine.high %v1564, %v1564
      %v1567 = vcombine.high %v1543, %v1543
      %v1569 = vunpack.c.l.s4 1983009808
      %v1570 = vunpack.c.0.s8 %v1569
      %v1571 = vlaneseq
      %v1572 = vshrl.u32 %v1571, 7
      %v1573 = vsub.s32 %v1570, %v1572
      %v1574 = vrot.slane %v1543, %v1573
      %v1576 = vunpack.c.l.s4 1983009808
      %v1577 = vunpack.c.0.s8 %v1576
      %v1578 = vlaneseq
      %v1579 = vshrl.u32 %v1578, 7
      %v1580 = vsub.s32 %v1577, %v1579
      %v1581 = vrot.slane %v1567, %v1580
      %v1582 = vcombine.high %v1574, %v1574
      %v1583 = vcombine.high %v1581, %v1581
      %v1584 = vcombine.high %v1544, %v1544
      %v1586 = vunpack.c.l.s4 1983009808
      %v1587 = vunpack.c.0.s8 %v1586
      %v1588 = vlaneseq
      %v1589 = vshrl.u32 %v1588, 7
      %v1590 = vsub.s32 %v1587, %v1589
      %v1591 = vrot.slane %v1544, %v1590
      %v1593 = vunpack.c.l.s4 1983009808
      %v1594 = vunpack.c.0.s8 %v1593
      %v1595 = vlaneseq
      %v1596 = vshrl.u32 %v1595, 7
      %v1597 = vsub.s32 %v1594, %v1596
      %v1598 = vrot.slane %v1584, %v1597
      %v1599 = vcombine.high %v1591, %v1591
      %v1600 = vcombine.high %v1598, %v1598
      %v1601 = vcombine.high %v1545, %v1545
      %v1603 = vunpack.c.l.s4 1983009808
      %v1604 = vunpack.c.0.s8 %v1603
      %v1605 = vlaneseq
      %v1606 = vshrl.u32 %v1605, 7
      %v1607 = vsub.s32 %v1604, %v1606
      %v1608 = vrot.slane %v1545, %v1607
      %v1610 = vunpack.c.l.s4 1983009808
      %v1611 = vunpack.c.0.s8 %v1610
      %v1612 = vlaneseq
      %v1613 = vshrl.u32 %v1612, 7
      %v1614 = vsub.s32 %v1611, %v1613
      %v1615 = vrot.slane %v1601, %v1614
      %v1616 = vcombine.high %v1608, %v1608
      %v1617 = vcombine.high %v1615, %v1615
      %vm1634 = vcmask 1041408
      %v1635 = vsel %vm1634, %v1557, -inf
      %v1636 = vrot.slane %v1635, 4
      %v1637 = vmax.f32 %v1635, %v1636
      %v1638 = vrot.slane %v1637, 2
      %v1639 = vmax.f32 %v1637, %v1638
      %v1640 = vrot.slane %v1639, 1
      %v1641 = vmax.f32 %v1639, %v1640
      %v1642 = vsel %vm1634, %v1565, -inf
      %v1643 = vrot.slane %v1642, 4
      %v1644 = vmax.f32 %v1642, %v1643
      %v1645 = vrot.slane %v1644, 2
      %v1646 = vmax.f32 %v1644, %v1645
      %v1647 = vrot.slane %v1646, 1
      %v1648 = vmax.f32 %v1646, %v1647
      %v1649 = vsel %vm1634, %v1564, -inf
      %v1650 = vrot.slane %v1649, 4
      %v1651 = vmax.f32 %v1649, %v1650
      %v1652 = vrot.slane %v1651, 2
      %v1653 = vmax.f32 %v1651, %v1652
      %v1654 = vrot.slane %v1653, 1
      %v1655 = vmax.f32 %v1653, %v1654
      %v1656 = vsel %vm1634, %v1566, -inf
      %v1657 = vrot.slane %v1656, 4
      %v1658 = vmax.f32 %v1656, %v1657
      %v1659 = vrot.slane %v1658, 2
      %v1660 = vmax.f32 %v1658, %v1659
      %v1661 = vrot.slane %v1660, 1
      %v1662 = vmax.f32 %v1660, %v1661
      %v1663 = vsel %vm1634, %v1574, -inf
      %v1664 = vrot.slane %v1663, 4
      %v1665 = vmax.f32 %v1663, %v1664
      %v1666 = vrot.slane %v1665, 2
      %v1667 = vmax.f32 %v1665, %v1666
      %v1668 = vrot.slane %v1667, 1
      %v1669 = vmax.f32 %v1667, %v1668
      %v1670 = vsel %vm1634, %v1582, -inf
      %v1671 = vrot.slane %v1670, 4
      %v1672 = vmax.f32 %v1670, %v1671
      %v1673 = vrot.slane %v1672, 2
      %v1674 = vmax.f32 %v1672, %v1673
      %v1675 = vrot.slane %v1674, 1
      %v1676 = vmax.f32 %v1674, %v1675
      %v1677 = vsel %vm1634, %v1581, -inf
      %v1678 = vrot.slane %v1677, 4
      %v1679 = vmax.f32 %v1677, %v1678
      %v1680 = vrot.slane %v1679, 2
      %v1681 = vmax.f32 %v1679, %v1680
      %v1682 = vrot.slane %v1681, 1
      %v1683 = vmax.f32 %v1681, %v1682
      %v1684 = vsel %vm1634, %v1583, -inf
      %v1685 = vrot.slane %v1684, 4
      %v1686 = vmax.f32 %v1684, %v1685
      %v1687 = vrot.slane %v1686, 2
      %v1688 = vmax.f32 %v1686, %v1687
      %v1689 = vrot.slane %v1688, 1
      %v1690 = vmax.f32 %v1688, %v1689
      %v1691 = vsel %vm1634, %v1591, -inf
      %v1692 = vrot.slane %v1691, 4
      %v1693 = vmax.f32 %v1691, %v1692
      %v1694 = vrot.slane %v1693, 2
      %v1695 = vmax.f32 %v1693, %v1694
      %v1696 = vrot.slane %v1695, 1
      %v1697 = vmax.f32 %v1695, %v1696
      %v1698 = vsel %vm1634, %v1599, -inf
      %v1699 = vrot.slane %v1698, 4
      %v1700 = vmax.f32 %v1698, %v1699
      %v1701 = vrot.slane %v1700, 2
      %v1702 = vmax.f32 %v1700, %v1701
      %v1703 = vrot.slane %v1702, 1
      %v1704 = vmax.f32 %v1702, %v1703
      %v1705 = vsel %vm1634, %v1598, -inf
      %v1706 = vrot.slane %v1705, 4
      %v1707 = vmax.f32 %v1705, %v1706
      %v1708 = vrot.slane %v1707, 2
      %v1709 = vmax.f32 %v1707, %v1708
      %v1710 = vrot.slane %v1709, 1
      %v1711 = vmax.f32 %v1709, %v1710
      %v1712 = vsel %vm1634, %v1600, -inf
      %v1713 = vrot.slane %v1712, 4
      %v1714 = vmax.f32 %v1712, %v1713
      %v1715 = vrot.slane %v1714, 2
      %v1716 = vmax.f32 %v1714, %v1715
      %v1717 = vrot.slane %v1716, 1
      %v1718 = vmax.f32 %v1716, %v1717
      %v1719 = vsel %vm1634, %v1608, -inf
      %v1720 = vrot.slane %v1719, 4
      %v1721 = vmax.f32 %v1719, %v1720
      %v1722 = vrot.slane %v1721, 2
      %v1723 = vmax.f32 %v1721, %v1722
      %v1724 = vrot.slane %v1723, 1
      %v1725 = vmax.f32 %v1723, %v1724
      %v1726 = vsel %vm1634, %v1616, -inf
      %v1727 = vrot.slane %v1726, 4
      %v1728 = vmax.f32 %v1726, %v1727
      %v1729 = vrot.slane %v1728, 2
      %v1730 = vmax.f32 %v1728, %v1729
      %v1731 = vrot.slane %v1730, 1
      %v1732 = vmax.f32 %v1730, %v1731
      %v1733 = vsel %vm1634, %v1615, -inf
      %v1734 = vrot.slane %v1733, 4
      %v1735 = vmax.f32 %v1733, %v1734
      %v1736 = vrot.slane %v1735, 2
      %v1737 = vmax.f32 %v1735, %v1736
      %v1738 = vrot.slane %v1737, 1
      %v1739 = vmax.f32 %v1737, %v1738
      %v1740 = vsel %vm1634, %v1617, -inf
      %v1741 = vrot.slane %v1740, 4
      %v1742 = vmax.f32 %v1740, %v1741
      %v1743 = vrot.slane %v1742, 2
      %v1744 = vmax.f32 %v1742, %v1743
      %v1745 = vrot.slane %v1744, 1
      %v1746 = vmax.f32 %v1744, %v1745
      %v1747 = vpack.c.bf16 %v1641, %v1641
      %v1748 = vpack.c.bf16 %v1648, %v1648
      %v1749 = vpack.c.bf16 %v1655, %v1655
      %v1750 = vpack.c.bf16 %v1662, %v1662
      %v1751 = vpack.c.bf16 %v1669, %v1669
      %v1752 = vpack.c.bf16 %v1676, %v1676
      %v1753 = vpack.c.bf16 %v1683, %v1683
      %v1754 = vpack.c.bf16 %v1690, %v1690
      %v1755 = vpack.c.bf16 %v1697, %v1697
      %v1756 = vpack.c.bf16 %v1704, %v1704
      %v1757 = vpack.c.bf16 %v1711, %v1711
      %v1758 = vpack.c.bf16 %v1718, %v1718
      %v1759 = vpack.c.bf16 %v1725, %v1725
      %v1760 = vpack.c.bf16 %v1732, %v1732
      %v1761 = vpack.c.bf16 %v1739, %v1739
      %v1762 = vpack.c.bf16 %v1746, %v1746
      %v1780 = vunpack.c.l.s4 1983009808
      %v1781 = vunpack.c.0.s8 %v1780
      %v1782 = vlaneseq
      %v1783 = vshrl.u32 %v1782, 7
      %v1784 = vsub.s32 %v1781, %v1783
      %v1785 = vrot.slane %v1747, %v1784
      %v1787 = vunpack.c.l.s4 1983009808
      %v1788 = vunpack.c.0.s8 %v1787
      %v1789 = vlaneseq
      %v1790 = vshrl.u32 %v1789, 7
      %v1791 = vsub.s32 %v1788, %v1790
      %v1792 = vrot.slane %v1748, %v1791
      %v1794 = vunpack.c.l.s4 1983009808
      %v1795 = vunpack.c.0.s8 %v1794
      %v1796 = vlaneseq
      %v1797 = vshrl.u32 %v1796, 7
      %v1798 = vsub.s32 %v1795, %v1797
      %v1799 = vrot.slane %v1749, %v1798
      %v1801 = vunpack.c.l.s4 1983009808
      %v1802 = vunpack.c.0.s8 %v1801
      %v1803 = vlaneseq
      %v1804 = vshrl.u32 %v1803, 7
      %v1805 = vsub.s32 %v1802, %v1804
      %v1806 = vrot.slane %v1750, %v1805
      %v1808 = vunpack.c.l.s4 1983009808
      %v1809 = vunpack.c.0.s8 %v1808
      %v1810 = vlaneseq
      %v1811 = vshrl.u32 %v1810, 7
      %v1812 = vsub.s32 %v1809, %v1811
      %v1813 = vrot.slane %v1751, %v1812
      %v1815 = vunpack.c.l.s4 1983009808
      %v1816 = vunpack.c.0.s8 %v1815
      %v1817 = vlaneseq
      %v1818 = vshrl.u32 %v1817, 7
      %v1819 = vsub.s32 %v1816, %v1818
      %v1820 = vrot.slane %v1752, %v1819
      %v1822 = vunpack.c.l.s4 1983009808
      %v1823 = vunpack.c.0.s8 %v1822
      %v1824 = vlaneseq
      %v1825 = vshrl.u32 %v1824, 7
      %v1826 = vsub.s32 %v1823, %v1825
      %v1827 = vrot.slane %v1753, %v1826
      %v1829 = vunpack.c.l.s4 1983009808
      %v1830 = vunpack.c.0.s8 %v1829
      %v1831 = vlaneseq
      %v1832 = vshrl.u32 %v1831, 7
      %v1833 = vsub.s32 %v1830, %v1832
      %v1834 = vrot.slane %v1754, %v1833
      %v1836 = vunpack.c.l.s4 1983009808
      %v1837 = vunpack.c.0.s8 %v1836
      %v1838 = vlaneseq
      %v1839 = vshrl.u32 %v1838, 7
      %v1840 = vsub.s32 %v1837, %v1839
      %v1841 = vrot.slane %v1755, %v1840
      %v1843 = vunpack.c.l.s4 1983009808
      %v1844 = vunpack.c.0.s8 %v1843
      %v1845 = vlaneseq
      %v1846 = vshrl.u32 %v1845, 7
      %v1847 = vsub.s32 %v1844, %v1846
      %v1848 = vrot.slane %v1756, %v1847
      %v1850 = vunpack.c.l.s4 1983009808
      %v1851 = vunpack.c.0.s8 %v1850
      %v1852 = vlaneseq
      %v1853 = vshrl.u32 %v1852, 7
      %v1854 = vsub.s32 %v1851, %v1853
      %v1855 = vrot.slane %v1757, %v1854
      %v1857 = vunpack.c.l.s4 1983009808
      %v1858 = vunpack.c.0.s8 %v1857
      %v1859 = vlaneseq
      %v1860 = vshrl.u32 %v1859, 7
      %v1861 = vsub.s32 %v1858, %v1860
      %v1862 = vrot.slane %v1758, %v1861
      %v1864 = vunpack.c.l.s4 1983009808
      %v1865 = vunpack.c.0.s8 %v1864
      %v1866 = vlaneseq
      %v1867 = vshrl.u32 %v1866, 7
      %v1868 = vsub.s32 %v1865, %v1867
      %v1869 = vrot.slane %v1759, %v1868
      %v1871 = vunpack.c.l.s4 1983009808
      %v1872 = vunpack.c.0.s8 %v1871
      %v1873 = vlaneseq
      %v1874 = vshrl.u32 %v1873, 7
      %v1875 = vsub.s32 %v1872, %v1874
      %v1876 = vrot.slane %v1760, %v1875
      %v1878 = vunpack.c.l.s4 1983009808
      %v1879 = vunpack.c.0.s8 %v1878
      %v1880 = vlaneseq
      %v1881 = vshrl.u32 %v1880, 7
      %v1882 = vsub.s32 %v1879, %v1881
      %v1883 = vrot.slane %v1761, %v1882
      %v1885 = vunpack.c.l.s4 1983009808
      %v1886 = vunpack.c.0.s8 %v1885
      %v1887 = vlaneseq
      %v1888 = vshrl.u32 %v1887, 7
      %v1889 = vsub.s32 %v1886, %v1888
      %v1890 = vrot.slane %v1762, %v1889
      %v1892 = vunpack.c.l.s4 1983009808
      %v1893 = vunpack.c.0.s8 %v1892
      %v1894 = vlaneseq
      %v1895 = vshrl.u32 %v1894, 7
      %v1896 = vsub.s32 %v1893, %v1895
      %v1897 = vrot.slane %v1785, %v1896
      %v1899 = vunpack.c.l.s4 1983009808
      %v1900 = vunpack.c.0.s8 %v1899
      %v1901 = vlaneseq
      %v1902 = vshrl.u32 %v1901, 7
      %v1903 = vsub.s32 %v1900, %v1902
      %v1904 = vrot.slane %v1792, %v1903
      %v1906 = vunpack.c.l.s4 1983009808
      %v1907 = vunpack.c.0.s8 %v1906
      %v1908 = vlaneseq
      %v1909 = vshrl.u32 %v1908, 7
      %v1910 = vsub.s32 %v1907, %v1909
      %v1911 = vrot.slane %v1799, %v1910
      %v1913 = vunpack.c.l.s4 1983009808
      %v1914 = vunpack.c.0.s8 %v1913
      %v1915 = vlaneseq
      %v1916 = vshrl.u32 %v1915, 7
      %v1917 = vsub.s32 %v1914, %v1916
      %v1918 = vrot.slane %v1806, %v1917
      %v1920 = vunpack.c.l.s4 1983009808
      %v1921 = vunpack.c.0.s8 %v1920
      %v1922 = vlaneseq
      %v1923 = vshrl.u32 %v1922, 7
      %v1924 = vsub.s32 %v1921, %v1923
      %v1925 = vrot.slane %v1813, %v1924
      %v1927 = vunpack.c.l.s4 1983009808
      %v1928 = vunpack.c.0.s8 %v1927
      %v1929 = vlaneseq
      %v1930 = vshrl.u32 %v1929, 7
      %v1931 = vsub.s32 %v1928, %v1930
      %v1932 = vrot.slane %v1820, %v1931
      %v1934 = vunpack.c.l.s4 1983009808
      %v1935 = vunpack.c.0.s8 %v1934
      %v1936 = vlaneseq
      %v1937 = vshrl.u32 %v1936, 7
      %v1938 = vsub.s32 %v1935, %v1937
      %v1939 = vrot.slane %v1827, %v1938
      %v1941 = vunpack.c.l.s4 1983009808
      %v1942 = vunpack.c.0.s8 %v1941
      %v1943 = vlaneseq
      %v1944 = vshrl.u32 %v1943, 7
      %v1945 = vsub.s32 %v1942, %v1944
      %v1946 = vrot.slane %v1834, %v1945
      %v1948 = vunpack.c.l.s4 1983009808
      %v1949 = vunpack.c.0.s8 %v1948
      %v1950 = vlaneseq
      %v1951 = vshrl.u32 %v1950, 7
      %v1952 = vsub.s32 %v1949, %v1951
      %v1953 = vrot.slane %v1841, %v1952
      %v1955 = vunpack.c.l.s4 1983009808
      %v1956 = vunpack.c.0.s8 %v1955
      %v1957 = vlaneseq
      %v1958 = vshrl.u32 %v1957, 7
      %v1959 = vsub.s32 %v1956, %v1958
      %v1960 = vrot.slane %v1848, %v1959
      %v1962 = vunpack.c.l.s4 1983009808
      %v1963 = vunpack.c.0.s8 %v1962
      %v1964 = vlaneseq
      %v1965 = vshrl.u32 %v1964, 7
      %v1966 = vsub.s32 %v1963, %v1965
      %v1967 = vrot.slane %v1855, %v1966
      %v1969 = vunpack.c.l.s4 1983009808
      %v1970 = vunpack.c.0.s8 %v1969
      %v1971 = vlaneseq
      %v1972 = vshrl.u32 %v1971, 7
      %v1973 = vsub.s32 %v1970, %v1972
      %v1974 = vrot.slane %v1862, %v1973
      %v1976 = vunpack.c.l.s4 1983009808
      %v1977 = vunpack.c.0.s8 %v1976
      %v1978 = vlaneseq
      %v1979 = vshrl.u32 %v1978, 7
      %v1980 = vsub.s32 %v1977, %v1979
      %v1981 = vrot.slane %v1869, %v1980
      %v1983 = vunpack.c.l.s4 1983009808
      %v1984 = vunpack.c.0.s8 %v1983
      %v1985 = vlaneseq
      %v1986 = vshrl.u32 %v1985, 7
      %v1987 = vsub.s32 %v1984, %v1986
      %v1988 = vrot.slane %v1876, %v1987
      %v1990 = vunpack.c.l.s4 1983009808
      %v1991 = vunpack.c.0.s8 %v1990
      %v1992 = vlaneseq
      %v1993 = vshrl.u32 %v1992, 7
      %v1994 = vsub.s32 %v1991, %v1993
      %v1995 = vrot.slane %v1883, %v1994
      %v1997 = vunpack.c.l.s4 1983009808
      %v1998 = vunpack.c.0.s8 %v1997
      %v1999 = vlaneseq
      %v2000 = vshrl.u32 %v1999, 7
      %v2001 = vsub.s32 %v1998, %v2000
      %v2002 = vrot.slane %v1890, %v2001
      %v2003 = vunpack.c.l.b16 %v1897
      %v2004 = vunpack.c.l.b16 %v1904
      %v2005 = vunpack.c.l.b16 %v1911
      %v2006 = vunpack.c.l.b16 %v1918
      %v2007 = vunpack.c.l.b16 %v1925
      %v2008 = vunpack.c.l.b16 %v1932
      %v2009 = vunpack.c.l.b16 %v1939
      %v2010 = vunpack.c.l.b16 %v1946
      %v2011 = vunpack.c.l.b16 %v1953
      %v2012 = vunpack.c.l.b16 %v1960
      %v2013 = vunpack.c.l.b16 %v1967
      %v2014 = vunpack.c.l.b16 %v1974
      %v2015 = vunpack.c.l.b16 %v1981
      %v2016 = vunpack.c.l.b16 %v1988
      %v2017 = vunpack.c.l.b16 %v1995
      %v2018 = vunpack.c.l.b16 %v2002
      %v2019 = vrot.slane %v2004, 7
      %vm2020 = vcmask 1041409
      %v2021 = vsel %vm2020, %v2019, %v2003
      %v2022 = vrot.slane %v2005, 6
      %vm2023 = vcmask 1042434
      %v2024 = vsel %vm2023, %v2022, %v2021
      %v2025 = vrot.slane %v2006, 5
      %vm2026 = vcmask 1043459
      %v2027 = vsel %vm2026, %v2025, %v2024
      %v2028 = vrot.slane %v2008, 7
      %v2029 = vsel %vm2020, %v2028, %v2007
      %v2030 = vrot.slane %v2009, 6
      %v2031 = vsel %vm2023, %v2030, %v2029
      %v2032 = vrot.slane %v2010, 5
      %v2033 = vsel %vm2026, %v2032, %v2031
      %v2034 = vrot.slane %v2012, 7
      %v2035 = vsel %vm2020, %v2034, %v2011
      %v2036 = vrot.slane %v2013, 6
      %v2037 = vsel %vm2023, %v2036, %v2035
      %v2038 = vrot.slane %v2014, 5
      %v2039 = vsel %vm2026, %v2038, %v2037
      %v2040 = vrot.slane %v2016, 7
      %v2041 = vsel %vm2020, %v2040, %v2015
      %v2042 = vrot.slane %v2017, 6
      %v2043 = vsel %vm2023, %v2042, %v2041
      %v2044 = vrot.slane %v2018, 5
      %v2045 = vsel %vm2026, %v2044, %v2043
      %v2046 = vpack.c.b16 %v2027, %v2027
      %v2047 = vpack.c.b16 %v2033, %v2033
      %v2048 = vpack.c.b16 %v2039, %v2039
      %v2049 = vpack.c.b16 %v2045, %v2045
      %v2051 = vunpack.c.l.s4 1983009808
      %v2052 = vunpack.c.0.s8 %v2051
      %v2053 = vlaneseq
      %v2054 = vshrl.u32 %v2053, 7
      %v2055 = vsub.s32 %v2052, %v2054
      %v2056 = vrot.slane %v2046, %v2055
      %v2058 = vunpack.c.l.s4 1983009808
      %v2059 = vunpack.c.0.s8 %v2058
      %v2060 = vlaneseq
      %v2061 = vshrl.u32 %v2060, 7
      %v2062 = vsub.s32 %v2059, %v2061
      %v2063 = vrot.slane %v2047, %v2062
      %v2065 = vunpack.c.l.s4 1983009808
      %v2066 = vunpack.c.0.s8 %v2065
      %v2067 = vlaneseq
      %v2068 = vshrl.u32 %v2067, 7
      %v2069 = vsub.s32 %v2066, %v2068
      %v2070 = vrot.slane %v2048, %v2069
      %v2072 = vunpack.c.l.s4 1983009808
      %v2073 = vunpack.c.0.s8 %v2072
      %v2074 = vlaneseq
      %v2075 = vshrl.u32 %v2074, 7
      %v2076 = vsub.s32 %v2073, %v2075
      %v2077 = vrot.slane %v2049, %v2076
      %2082 = vst [vmem:[%s316] sm:$0x3] %v2056
      %2083 = vst [vmem:[%s316 + $0x2] sm:$0x3] %v2063
      %2084 = vst [vmem:[%s316 + $0x4] sm:$0x3] %v2070
      %2085 = vst [vmem:[%s316 + $0x6] sm:$0x3] %v2077
      %s2086 = smul.u32 4, %s20
      %p2087 = scmp.lt.s32.totalorder %s19, 1
      %s2088 = scalar_select %p2087, %s19, 1
      %p2089 = scmp.lt.s32.totalorder %s2086, 3
      %s2090 = scalar_select %p2089, %s2086, 3
      %s2091 = smul.addr %s2088, 4
      %s2092 = sadd.s32 %s2090, %s2091
      %s2093 = smul.addr %s2092, 2
      %s2094 = scalar_lea.vmem %s4, %s2093
      // Predicated region
      $region37: #{encoder_forward.8} parent=35 // pred_check
        %p2095 = pneg %p149
      $region38: #{encoder_forward.8} parent=35 // pred_check_branch
        %2097 = sbr.rel (%p2095) target = $region40
      $region39: #{encoder_forward.8} parent=35 // pred_region
        %s2098 = smul.u32 4, %s20
      $region40: #{encoder_forward.8} parent=35 // pred_fallthru
        _
    $region36: #{encoder_forward.8} parent=5 // pred_fallthru
      _
    %p2099 = scmp.le.s32.totalorder 2, %s10
    // Predicated region
    $region41: #{encoder_forward.8} parent=5 // pred_check
      %p2100 = pneg %p2099
    $region42: #{encoder_forward.8} parent=5 // pred_check_branch
      %2102 = sbr.rel (%p2100) target = $region44
    $region43: #{encoder_forward.8} parent=5 // pred_region
      %s2103 = ssub.s32 %s10, 2
      // Predicated region
      $region45: #{encoder_forward.8} parent=43 // pred_check
        %p2104 = pneg %p155
      $region46: #{encoder_forward.8} parent=43 // pred_check_branch
        %2106 = sbr.rel (%p2104) target = $region48
      $region47: #{encoder_forward.8} parent=43 // pred_region
        %s2107 = smul.u32 4, %s22
        %p2108 = scmp.lt.s32.totalorder %s21, 1
        %s2109 = scalar_select %p2108, %s21, 1
        %p2110 = scmp.lt.s32.totalorder %s2107, 3
        %s2111 = scalar_select %p2110, %s2107, 3
        %s2112 = smul.addr %s2109, 4
        %s2113 = sadd.s32 %s2111, %s2112
        %s2114 = smul.addr %s2113, 2
        %s2115 = scalar_lea.vmem %s4, %s2114
      $region48: #{encoder_forward.8} parent=43 // pred_fallthru
        _
    $region44: #{encoder_forward.8} parent=5 // pred_fallthru
      _
  $region6: #{encoder_forward.8} parent=0 // loop_footer
    %s14 = sadd.s32 1, %s10
  $region7: #{encoder_forward.8} parent=0 // loop_footer_branch
    %9 = sbr.rel target = $region3
  $region8: #{encoder_forward.8} parent=0 // loop_exit
    _

// kernel: encoder_forward.9
$region0: #{encoder_forward.9}
  #allocation0 [shape = 'u32[]', space=smem, size = 0x4, offset = 0x4, fixed_abs, tag = 'smem constant byte address 0x4 - core index']
  #allocation1 [shape = 'u32[144,128]{1,0:T(1,128)}', space=vmem, size = 0x12000, scoped, tag = 'internal scratch']
  %s0 = inlined_call_operand.vmem [shape: bf16[2,6,6,128], index: 0, kind: input, shape index: {}, may-alias: {0,1}]
  %s1 = inlined_call_operand.vmem [shape: bf16[2,6,6,128], index: 1, kind: input, shape index: {}, may-alias: {0,1}]
  %s2 = inlined_call_operand.vmem [shape: bf16[3,384,256], index: 2, kind: input, shape index: {}]
  %s3 = inlined_call_operand.vmem [shape: f32[1,256], index: 3, kind: input, shape index: {}]
  %s4 = inlined_call_operand.vmem [shape: bf16[2,4,4,256], index: 4, kind: output, shape index: {}]
  %s5 = sld [smem:[#allocation0]]
  $region49: #{encoder_forward.9} parent=0
    _
  %s7 = ssub.s32 1, %s5
  %s8 = scalar_select 0, %s7, %s5
  loop: start=0, step=1, limit=4
  $region2: #{encoder_forward.9} parent=0 // loop_pre_header
    _
  $region3: #{encoder_forward.9} parent=0 // loop_header
    %s10 = sphi 0, %s14
    %p11 = scmp.ge.s32.totalorder %s10, 4
    %s17 = sphi 0, %s29
    %s18 = sphi 0, %s25
    %s19 = sphi 0, %s17
    %s20 = sphi 0, %s18
    %s21 = sphi 0, %s19
    %s22 = sphi 0, %s20
    %s34 = sphi 0, %s36
    %s37 = sphi 0, %s34
    %s38 = sphi 0, %s37
    %s54 = sphi 0, %s38
    %s66 = sphi 0, %s68
    %s69 = sphi 0, %s66
    %s70 = sphi 0, %s69
    %s86 = sphi 0, %s70
    %s90 = sphi 0, %s90
    %s92 = sphi 0, %s90
    %s93 = sphi 0, %s92
    %s107 = sphi 0, %s93
    %s111 = sphi 0, %s111
    %s113 = sphi 0, %s111
    %s114 = sphi 0, %s113
    %s128 = sphi 0, %s114
    %s136 = sphi 0, %s138
    %s139 = sphi 0, %s136
    %s140 = sphi 0, %s139
    %s156 = sphi 0, %s140
  $region4: #{encoder_forward.9} parent=0 // loop_header_branch
    %13 = sbr.rel (%p11) target = $region8
  $region5: #{encoder_forward.9} parent=0 // loop_body
    %s15 = ssub.s32 %s10, 1
    %s16 = ssub.s32 %s10, 2
    %s23 = sadd.s32 1, %s18
    %p24 = scmp.ge.s32.totalorder %s23, 1
    %s25 = scalar_select %p24, 0, %s23
    %s26 = sadd.s32 1, %s17
    %s27 = scalar_select %p24, %s26, %s17
    %p28 = scmp.ge.s32.totalorder %s27, 2
    %s29 = scalar_select %p28, 0, %s27
    %s30 = ssub.s32 %s17, %s29
    %s31 = ssub.s32 %s18, %s25
    %s32 = sor.u32 %s30, %s31
    %p33 = scmp.eq.s32.totalorder %s32, 0
    %s35 = sadd.s32 %s34, 1
    %s36 = scalar_select %p33, %s34, %s35
    %p39 = pneg %p33
    %p40 = scmp.eq.s32.totalorder %s10, 1
    %p41 = por %p39, %p40
    %p42 = scmp.ne.s32.totalorder %s34, %s37
    %p43 = scmp.eq.s32.totalorder %s10, 0
    %p44 = por %p42, %p43
    %p45 = scmp.ne.s32.totalorder %s34, %s37
    %p46 = scmp.eq.s32.totalorder %s15, 1
    %p47 = por %p45, %p46
    %p48 = scmp.ne.s32.totalorder %s37, %s38
    %p49 = scmp.eq.s32.totalorder %s15, 0
    %p50 = por %p48, %p49
    %p51 = scmp.ne.s32.totalorder %s37, %s38
    %p52 = scmp.eq.s32.totalorder %s16, 1
    %p53 = por %p51, %p52
    %p55 = scmp.ne.s32.totalorder %s38, %s54
    %p56 = scmp.eq.s32.totalorder %s16, 0
    %p57 = por %p55, %p56
    %s58 = sadd.s32 %s18, 1
    %s59 = smul.u32 %s58, 2
    %s60 = sadd.s32 %s25, 1
    %s61 = smul.u32 %s60, 2
    %s62 = ssub.s32 %s17, %s29
    %s63 = ssub.s32 %s59, %s61
    %s64 = sor.u32 %s62, %s63
    %p65 = scmp.eq.s32.totalorder %s64, 0
    %s67 = sadd.s32 %s66, 1
    %s68 = scalar_select %p65, %s66, %s67
    %p71 = pneg %p65
    %p72 = scmp.eq.s32.totalorder %s10, 1
    %p73 = por %p71, %p72
    %p74 = scmp.ne.s32.totalorder %s66, %s69
    %p75 = scmp.eq.s32.totalorder %s10, 0
    %p76 = por %p74, %p75
    %p77 = scmp.ne.s32.totalorder %s66, %s69
    %p78 = scmp.eq.s32.totalorder %s15, 1
    %p79 = por %p77, %p78
    %p80 = scmp.ne.s32.totalorder %s69, %s70
    %p81 = scmp.eq.s32.totalorder %s15, 0
    %p82 = por %p80, %p81
    %p83 = scmp.ne.s32.totalorder %s69, %s70
    %p84 = scmp.eq.s32.totalorder %s16, 1
    %p85 = por %p83, %p84
    %p87 = scmp.ne.s32.totalorder %s70, %s86
    %p88 = scmp.eq.s32.totalorder %s16, 0
    %p89 = por %p87, %p88
    %s91 = sadd.s32 %s90, 1
    %p94 = scmp.eq.s32.totalorder %s10, 1
    %p95 = scmp.ne.s32.totalorder %s90, %s92
    %p96 = scmp.eq.s32.totalorder %s10, 0
    %p97 = por %p95, %p96
    %p98 = scmp.ne.s32.totalorder %s90, %s92
    %p99 = scmp.eq.s32.totalorder %s15, 1
    %p100 = por %p98, %p99
    %p101 = scmp.ne.s32.totalorder %s92, %s93
    %p102 = scmp.eq.s32.totalorder %s15, 0
    %p103 = por %p101, %p102
    %p104 = scmp.ne.s32.totalorder %s92, %s93
    %p105 = scmp.eq.s32.totalorder %s16, 1
    %p106 = por %p104, %p105
    %p108 = scmp.ne.s32.totalorder %s93, %s107
    %p109 = scmp.eq.s32.totalorder %s16, 0
    %p110 = por %p108, %p109
    %s112 = sadd.s32 %s111, 1
    %p115 = scmp.eq.s32.totalorder %s10, 1
    %p116 = scmp.ne.s32.totalorder %s111, %s113
    %p117 = scmp.eq.s32.totalorder %s10, 0
    %p118 = por %p116, %p117
    %p119 = scmp.ne.s32.totalorder %s111, %s113
    %p120 = scmp.eq.s32.totalorder %s15, 1
    %p121 = por %p119, %p120
    %p122 = scmp.ne.s32.totalorder %s113, %s114
    %p123 = scmp.eq.s32.totalorder %s15, 0
    %p124 = por %p122, %p123
    %p125 = scmp.ne.s32.totalorder %s113, %s114
    %p126 = scmp.eq.s32.totalorder %s16, 1
    %p127 = por %p125, %p126
    %p129 = scmp.ne.s32.totalorder %s114, %s128
    %p130 = scmp.eq.s32.totalorder %s16, 0
    %p131 = por %p129, %p130
    %s132 = ssub.s32 %s17, %s29
    %s133 = ssub.s32 %s18, %s25
    %s134 = sor.u32 %s132, %s133
    %p135 = scmp.eq.s32.totalorder %s134, 0
    %s137 = sadd.s32 %s136, 1
    %s138 = scalar_select %p135, %s136, %s137
    %p141 = pneg %p135
    %p142 = scmp.eq.s32.totalorder %s10, 1
    %p143 = por %p141, %p142
    %p144 = scmp.ne.s32.totalorder %s136, %s139
    %p145 = scmp.eq.s32.totalorder %s10, 0
    %p146 = por %p144, %p145
    %p147 = scmp.ne.s32.totalorder %s136, %s139
    %p148 = scmp.eq.s32.totalorder %s15, 1
    %p149 = por %p147, %p148
    %p150 = scmp.ne.s32.totalorder %s139, %s140
    %p151 = scmp.eq.s32.totalorder %s15, 0
    %p152 = por %p150, %p151
    %p153 = scmp.ne.s32.totalorder %s139, %s140
    %p154 = scmp.eq.s32.totalorder %s16, 1
    %p155 = por %p153, %p154
    %p157 = scmp.ne.s32.totalorder %s140, %s156
    %p158 = scmp.eq.s32.totalorder %s16, 0
    %p159 = por %p157, %p158
    %p160 = scmp.le.s32.totalorder 1, %s10
    %p161 = scmp.lt.s32.totalorder %s10, 3
    %p162 = pnand %p160, %p161
    %p163 = pneg %p162
    // Predicated region
    $region9: #{encoder_forward.9} parent=5 // pred_check
      _
    $region10: #{encoder_forward.9} parent=5 // pred_check_branch
      %165 = sbr.rel (%p162) target = $region12
    $region11: #{encoder_forward.9} parent=5 // pred_region
      %s166 = ssub.s32 %s10, 1
      // Predicated region
      $region13: #{encoder_forward.9} parent=11 // pred_check
        %p167 = pneg %p103
      $region14: #{encoder_forward.9} parent=11 // pred_check_branch
        %169 = sbr.rel (%p167) target = $region16
      $region15: #{encoder_forward.9} parent=11 // pred_region
        _
      $region16: #{encoder_forward.9} parent=11 // pred_fallthru
        _
      // Predicated region
      $region17: #{encoder_forward.9} parent=11 // pred_check
        %p170 = pneg %p124
      $region18: #{encoder_forward.9} parent=11 // pred_check_branch
        %172 = sbr.rel (%p170) target = $region20
      $region19: #{encoder_forward.9} parent=11 // pred_region
        _
      $region20: #{encoder_forward.9} parent=11 // pred_fallthru
        _
    $region12: #{encoder_forward.9} parent=5 // pred_fallthru
      _
    %p173 = scmp.lt.s32.totalorder %s10, 2
    // Predicated region
    $region21: #{encoder_forward.9} parent=5 // pred_check
      %p174 = pneg %p173
    $region22: #{encoder_forward.9} parent=5 // pred_check_branch
      %176 = sbr.rel (%p174) target = $region24
    $region23: #{encoder_forward.9} parent=5 // pred_region
      // Predicated region
      $region25: #{encoder_forward.9} parent=23 // pred_check
        %p177 = pneg %p44
      $region26: #{encoder_forward.9} parent=23 // pred_check_branch
        %179 = sbr.rel (%p177) target = $region28
      $region27: #{encoder_forward.9} parent=23 // pred_region
        %s180 = smul.u32 4, %s18
        %s181 = ssub.s32 6, %s180
        %p182 = scmp.lt.s32.totalorder %s181, 4
        %s183 = scalar_select %p182, %s181, 4
        %s184 = smul.u32 64, %s183
        %p185 = scmp.lt.s32.totalorder %s17, 1
        %s186 = scalar_select %p185, %s17, 1
        %p187 = scmp.lt.s32.totalorder %s180, 5
        %s188 = scalar_select %p187, %s180, 5
        %s189 = smul.addr %s186, 6
        %s190 = sadd.s32 %s188, %s189
        %s191 = smul.addr %s190, 4
        %s192 = scalar_lea.vmem %s0, %s191
        %s193 = smul.u32 4, %s18
        %s194 = ssub.s32 6, %s193
        %p195 = scmp.lt.s32.totalorder %s194, 4
        %s196 = scalar_select %p195, %s194, 4
        %s197 = smul.u32 64, %s196
      $region28: #{encoder_forward.9} parent=23 // pred_fallthru
        _
      // Predicated region
      $region29: #{encoder_forward.9} parent=23 // pred_check
        %p198 = pneg %p76
      $region30: #{encoder_forward.9} parent=23 // pred_check_branch
        %200 = sbr.rel (%p198) target = $region32
      $region31: #{encoder_forward.9} parent=23 // pred_region
        %s201 = sadd.s32 %s18, 1
        %s202 = smul.u32 %s201, 2
        %s203 = smul.u32 2, %s202
        %p204 = scmp.lt.s32.totalorder %s17, 1
        %s205 = scalar_select %p204, %s17, 1
        %p206 = scmp.lt.s32.totalorder %s203, 5
        %s207 = scalar_select %p206, %s203, 5
        %s208 = smul.addr %s205, 6
        %s209 = sadd.s32 %s207, %s208
        %s210 = smul.addr %s209, 4
        %s211 = scalar_lea.vmem %s1, %s210
        %s212 = sadd.s32 %s18, 1
        %s213 = smul.u32 %s212, 2
        %s214 = smul.u32 2, %s213
      $region32: #{encoder_forward.9} parent=23 // pred_fallthru
        _
    $region24: #{encoder_forward.9} parent=5 // pred_fallthru
      _
    %p215 = scmp.le.s32.totalorder 1, %s10
    %p216 = scmp.lt.s32.totalorder %s10, 3
    %p217 = pnand %p215, %p216
    %p218 = pneg %p217
    // Predicated region
    $region33: #{encoder_forward.9} parent=5 // pred_check
      _
    $region34: #{encoder_forward.9} parent=5 // pred_check_branch
      %220 = sbr.rel (%p217) target = $region36
    $region35: #{encoder_forward.9} parent=5 // pred_region
      %s221 = ssub.s32 %s10, 1
      %s222 = smul.u32 4, %s20
      %s223 = ssub.s32 6, %s222
      %p224 = scmp.lt.s32.totalorder %s223, 4
      %s225 = scalar_select %p224, %s223, 4
      %s226 = smul.u32 64, %s225
      %p227 = scmp.lt.s32.totalorder %s19, 1
      %s228 = scalar_select %p227, %s19, 1
      %p229 = scmp.lt.s32.totalorder %s222, 5
      %s230 = scalar_select %p229, %s222, 5
      %s231 = smul.addr %s228, 6
      %s232 = sadd.s32 %s230, %s231
      %s233 = smul.addr %s232, 4
      %s234 = scalar_lea.vmem %s0, %s233
      %p235 = pneg %p50
      %p236 = pneg %p47
      %s237 = sadd.s32 %s20, 1
      %s238 = smul.u32 %s237, 2
      %s239 = smul.u32 2, %s238
      %p240 = scmp.lt.s32.totalorder %s19, 1
      %s241 = scalar_select %p240, %s19, 1
      %p242 = scmp.lt.s32.totalorder %s239, 5
      %s243 = scalar_select %p242, %s239, 5
      %s244 = smul.addr %s241, 6
      %s245 = sadd.s32 %s243, %s244
      %s246 = smul.addr %s245, 4
      %s247 = scalar_lea.vmem %s1, %s246
      %p248 = pneg %p82
      %p249 = pneg %p79
      %p250 = pneg %p103
      %p251 = pneg %p100
      %p252 = pneg %p124
      %p253 = pneg %p121
      %p254 = pneg %p152
      %p255 = pneg %p149
      %s256 = smul.u32 4, %s20
      %p257 = scmp.lt.s32.totalorder %s19, 1
      %s258 = scalar_select %p257, %s19, 1
      %p259 = scmp.lt.s32.totalorder %s256, 3
      %s260 = scalar_select %p259, %s256, 3
      %s261 = smul.addr %s260, 2
      %s262 = smul.addr %s258, 8
      %s263 = sadd.s32 %s261, %s262
      %s264 = smul.addr %s263, 2
      %s265 = scalar_lea.vmem %s4, %s264
      %s266 = smul.u32 4, %s20
      %s267 = ssub.s32 6, %s266
      %p268 = scmp.lt.s32.totalorder %s267, 4
      %s269 = scalar_select %p268, %s267, 4
      %s270 = smul.u32 64, %s269
      %p271 = scmp.lt.s32.totalorder %s19, 1
      %s272 = scalar_select %p271, %s19, 1
      %p273 = scmp.lt.s32.totalorder %s266, 5
      %s274 = scalar_select %p273, %s266, 5
      %s275 = smul.addr %s272, 6
      %s276 = sadd.s32 %s274, %s275
      %s277 = smul.addr %s276, 4
      %s278 = scalar_lea.vmem %s0, %s277
      %s279 = smul.u32 4, %s20
      %s280 = ssub.s32 6, %s279
      %p281 = scmp.lt.s32.totalorder %s280, 4
      %s282 = scalar_select %p281, %s280, 4
      %s283 = smul.u32 64, %s282
      %s284 = sadd.s32 %s20, 1
      %s285 = smul.u32 %s284, 2
      %s286 = smul.u32 2, %s285
      %p287 = scmp.lt.s32.totalorder %s19, 1
      %s288 = scalar_select %p287, %s19, 1
      %p289 = scmp.lt.s32.totalorder %s286, 5
      %s290 = scalar_select %p289, %s286, 5
      %s291 = smul.addr %s288, 6
      %s292 = sadd.s32 %s290, %s291
      %s293 = smul.addr %s292, 4
      %s294 = scalar_lea.vmem %s1, %s293
      %s295 = sadd.s32 %s20, 1
      %s296 = smul.u32 %s295, 2
      %s297 = smul.u32 2, %s296
      %s298 = smul.u32 4, %s20
      %p299 = scmp.lt.s32.totalorder %s19, 1
      %s300 = scalar_select %p299, %s19, 1
      %p301 = scmp.lt.s32.totalorder %s298, 3
      %s302 = scalar_select %p301, %s298, 3
      %s303 = smul.addr %s302, 2
      %s304 = smul.addr %s300, 8
      %s305 = sadd.s32 %s303, %s304
      %s306 = smul.addr %s305, 2
      %s307 = scalar_lea.vmem %s4, %s306
      %s308 = smul.u32 4, %s20
      %v310 = vld [vmem:[%s278] sm:$0x7]
      %v311 = vld [vmem:[%s278 + $0x4] sm:$0x7]
      %v312 = vld [vmem:[%s278 + $0x8] sm:$0x7]
      %v313 = vld [vmem:[%s278 + $0xc] sm:$0x7]
      %v314 = vld [vmem:[%s294] sm:$0x7]
      %v315 = vld [vmem:[%s294 + $0x4] sm:$0x7]
      %v320 = vunpack.c.l.b16 %v310
      %v321 = vunpack.c.l.b16 %v311
      %v322 = vunpack.c.l.b16 %v312
      %v323 = vunpack.c.l.b16 %v313
      %v324 = vpack.c.b16 %v320, %v320
      %v325 = vpack.c.b16 %v321, %v321
      %v326 = vpack.c.b16 %v322, %v322
      %v327 = vpack.c.b16 %v323, %v323
      %v329 = vshrl.u32 %v324, 16
      %v331 = vshll.u32 %v324, 16
      %v333 = vrot.slane %v331, 1
      %v334 = vor.u32 %v329, %v333
      %v336 = vshrl.u32 %v325, 16
      %v338 = vshll.u32 %v325, 16
      %v340 = vrot.slane %v338, 1
      %v341 = vor.u32 %v336, %v340
      %v343 = vshrl.u32 %v326, 16
      %v345 = vshll.u32 %v326, 16
      %v347 = vrot.slane %v345, 1
      %v348 = vor.u32 %v343, %v347
      %v350 = vshrl.u32 %v327, 16
      %v352 = vshll.u32 %v327, 16
      %v354 = vrot.slane %v352, 1
      %v355 = vor.u32 %v350, %v354
      %v356 = vrot.slane %v324, 1
      %v357 = vrot.slane %v325, 1
      %v358 = vrot.slane %v326, 1
      %v359 = vrot.slane %v327, 1
      %v360 = vcombine.low %v310, %v334
      %v362 = vunpack.c.l.s4 1983009808
      %v363 = vunpack.c.0.s8 %v362
      %v364 = vlaneseq
      %v365 = vshrl.u32 %v364, 7
      %v366 = vsub.s32 %v363, %v365
      %v367 = vrot.slane %v360, %v366
      %v369 = vunpack.c.l.s4 1983009808
      %v370 = vunpack.c.0.s8 %v369
      %v371 = vlaneseq
      %v372 = vshrl.u32 %v371, 7
      %v373 = vsub.s32 %v370, %v372
      %v374 = vrot.slane %v356, %v373
      %v375 = vcombine.low %v367, %v374
      %v376 = vcombine.low %v311, %v341
      %v378 = vunpack.c.l.s4 1983009808
      %v379 = vunpack.c.0.s8 %v378
      %v380 = vlaneseq
      %v381 = vshrl.u32 %v380, 7
      %v382 = vsub.s32 %v379, %v381
      %v383 = vrot.slane %v376, %v382
      %v385 = vunpack.c.l.s4 1983009808
      %v386 = vunpack.c.0.s8 %v385
      %v387 = vlaneseq
      %v388 = vshrl.u32 %v387, 7
      %v389 = vsub.s32 %v386, %v388
      %v390 = vrot.slane %v357, %v389
      %v391 = vcombine.low %v383, %v390
      %v392 = vcombine.low %v312, %v348
      %v394 = vunpack.c.l.s4 1983009808
      %v395 = vunpack.c.0.s8 %v394
      %v396 = vlaneseq
      %v397 = vshrl.u32 %v396, 7
      %v398 = vsub.s32 %v395, %v397
      %v399 = vrot.slane %v392, %v398
      %v401 = vunpack.c.l.s4 1983009808
      %v402 = vunpack.c.0.s8 %v401
      %v403 = vlaneseq
      %v404 = vshrl.u32 %v403, 7
      %v405 = vsub.s32 %v402, %v404
      %v406 = vrot.slane %v358, %v405
      %v407 = vcombine.low %v399, %v406
      %v408 = vcombine.low %v313, %v355
      %v410 = vunpack.c.l.s4 1983009808
      %v411 = vunpack.c.0.s8 %v410
      %v412 = vlaneseq
      %v413 = vshrl.u32 %v412, 7
      %v414 = vsub.s32 %v411, %v413
      %v415 = vrot.slane %v408, %v414
      %v417 = vunpack.c.l.s4 1983009808
      %v418 = vunpack.c.0.s8 %v417
      %v419 = vlaneseq
      %v420 = vshrl.u32 %v419, 7
      %v421 = vsub.s32 %v418, %v420
      %v422 = vrot.slane %v359, %v421
      %v423 = vcombine.low %v415, %v422
      %v424 = vld [vmem:[%s2] sm:$0xff]
      %v425 = vld [vmem:[%s2 + $0x8] sm:$0xff]
      %v426 = vld [vmem:[%s2 + $0x10] sm:$0xff]
      %v427 = vld [vmem:[%s2 + $0x18] sm:$0xff]
      %v428 = vld [vmem:[%s2 + $0x20] sm:$0xff]
      %v429 = vld [vmem:[%s2 + $0x28] sm:$0xff]
      %v430 = vld [vmem:[%s2 + $0x30] sm:$0xff]
      %v431 = vld [vmem:[%s2 + $0x38] sm:$0xff]
      %v432 = vld [vmem:[%s2 + $0x40] sm:$0xff]
      %v433 = vld [vmem:[%s2 + $0x48] sm:$0xff]
      %v434 = vld [vmem:[%s2 + $0x50] sm:$0xff]
      %v435 = vld [vmem:[%s2 + $0x58] sm:$0xff]
      %v436 = vld [vmem:[%s2 + $0x60] sm:$0xff]
      %v437 = vld [vmem:[%s2 + $0x68] sm:$0xff]
      %v438 = vld [vmem:[%s2 + $0x70] sm:$0xff]
      %v439 = vld [vmem:[%s2 + $0x78] sm:$0xff]
      %v440 = vld [vmem:[%s2 + $0x80] sm:$0xff]
      %v441 = vld [vmem:[%s2 + $0x88] sm:$0xff]
      %v442 = vld [vmem:[%s2 + $0x90] sm:$0xff]
      %v443 = vld [vmem:[%s2 + $0x98] sm:$0xff]
      %v444 = vld [vmem:[%s2 + $0xa0] sm:$0xff]
      %v445 = vld [vmem:[%s2 + $0xa8] sm:$0xff]
      %v446 = vld [vmem:[%s2 + $0xb0] sm:$0xff]
      %v447 = vld [vmem:[%s2 + $0xb8] sm:$0xff]
      %v448 = vld [vmem:[%s2 + $0xc0] sm:$0xff]
      %v449 = vld [vmem:[%s2 + $0xc8] sm:$0xff]
      %v450 = vld [vmem:[%s2 + $0xd0] sm:$0xff]
      %v451 = vld [vmem:[%s2 + $0xd8] sm:$0xff]
      %v452 = vld [vmem:[%s2 + $0xe0] sm:$0xff]
      %v453 = vld [vmem:[%s2 + $0xe8] sm:$0xff]
      %v454 = vld [vmem:[%s2 + $0xf0] sm:$0xff]
      %v455 = vld [vmem:[%s2 + $0xf8] sm:$0xff]
      %v456 = vld [vmem:[%s2 + $0x100] sm:$0xff]
      %v457 = vld [vmem:[%s2 + $0x108] sm:$0xff]
      %v458 = vld [vmem:[%s2 + $0x110] sm:$0xff]
      %v459 = vld [vmem:[%s2 + $0x118] sm:$0xff]
      %v460 = vld [vmem:[%s2 + $0x120] sm:$0xff]
      %v461 = vld [vmem:[%s2 + $0x128] sm:$0xff]
      %v462 = vld [vmem:[%s2 + $0x130] sm:$0xff]
      %v463 = vld [vmem:[%s2 + $0x138] sm:$0xff]
      %v464 = vld [vmem:[%s2 + $0x140] sm:$0xff]
      %v465 = vld [vmem:[%s2 + $0x148] sm:$0xff]
      %v466 = vld [vmem:[%s2 + $0x150] sm:$0xff]
      %v467 = vld [vmem:[%s2 + $0x158] sm:$0xff]
      %v468 = vld [vmem:[%s2 + $0x160] sm:$0xff]
      %v469 = vld [vmem:[%s2 + $0x168] sm:$0xff]
      %v470 = vld [vmem:[%s2 + $0x170] sm:$0xff]
      %v471 = vld [vmem:[%s2 + $0x178] sm:$0xff]
      %v473 = vunpack.c.l.b16 %v314
      %v474 = vpack.c.b16 %v473, %v473
      %v476 = vshrl.u32 %v474, 16
      %v478 = vshll.u32 %v474, 16
      %v480 = vrot.slane %v478, 1
      %v481 = vor.u32 %v476, %v480
      %v482 = vrot.slane %v474, 1
      %v483 = vcombine.low %v314, %v481
      %v485 = vunpack.c.l.s4 1983009808
      %v486 = vunpack.c.0.s8 %v485
      %v487 = vlaneseq
      %v488 = vshrl.u32 %v487, 7
      %v489 = vsub.s32 %v486, %v488
      %v490 = vrot.slane %v483, %v489
      %v492 = vunpack.c.l.s4 1983009808
      %v493 = vunpack.c.0.s8 %v492
      %v494 = vlaneseq
      %v495 = vshrl.u32 %v494, 7
      %v496 = vsub.s32 %v493, %v495
      %v497 = vrot.slane %v482, %v496
      %v498 = vcombine.low %v490, %v497
      %s499 = scalar_lea.vmem %s2, 384
      %v500 = vld [vmem:[%s499] sm:$0xff]
      %v501 = vld [vmem:[%s499 + $0x8] sm:$0xff]
      %v502 = vld [vmem:[%s499 + $0x10] sm:$0xff]
      %v503 = vld [vmem:[%s499 + $0x18] sm:$0xff]
      %v504 = vld [vmem:[%s499 + $0x20] sm:$0xff]
      %v505 = vld [vmem:[%s499 + $0x28] sm:$0xff]
      %v506 = vld [vmem:[%s499 + $0x30] sm:$0xff]
      %v507 = vld [vmem:[%s499 + $0x38] sm:$0xff]
      %v508 = vld [vmem:[%s499 + $0x40] sm:$0xff]
      %v509 = vld [vmem:[%s499 + $0x48] sm:$0xff]
      %v510 = vld [vmem:[%s499 + $0x50] sm:$0xff]
      %v511 = vld [vmem:[%s499 + $0x58] sm:$0xff]
      %v512 = vld [vmem:[%s499 + $0x60] sm:$0xff]
      %v513 = vld [vmem:[%s499 + $0x68] sm:$0xff]
      %v514 = vld [vmem:[%s499 + $0x70] sm:$0xff]
      %v515 = vld [vmem:[%s499 + $0x78] sm:$0xff]
      %v516 = vld [vmem:[%s499 + $0x80] sm:$0xff]
      %v517 = vld [vmem:[%s499 + $0x88] sm:$0xff]
      %v518 = vld [vmem:[%s499 + $0x90] sm:$0xff]
      %v519 = vld [vmem:[%s499 + $0x98] sm:$0xff]
      %v520 = vld [vmem:[%s499 + $0xa0] sm:$0xff]
      %v521 = vld [vmem:[%s499 + $0xa8] sm:$0xff]
      %v522 = vld [vmem:[%s499 + $0xb0] sm:$0xff]
      %v523 = vld [vmem:[%s499 + $0xb8] sm:$0xff]
      %v524 = vld [vmem:[%s499 + $0xc0] sm:$0xff]
      %v525 = vld [vmem:[%s499 + $0xc8] sm:$0xff]
      %v526 = vld [vmem:[%s499 + $0xd0] sm:$0xff]
      %v527 = vld [vmem:[%s499 + $0xd8] sm:$0xff]
      %v528 = vld [vmem:[%s499 + $0xe0] sm:$0xff]
      %v529 = vld [vmem:[%s499 + $0xe8] sm:$0xff]
      %v530 = vld [vmem:[%s499 + $0xf0] sm:$0xff]
      %v531 = vld [vmem:[%s499 + $0xf8] sm:$0xff]
      %v532 = vld [vmem:[%s499 + $0x100] sm:$0xff]
      %v533 = vld [vmem:[%s499 + $0x108] sm:$0xff]
      %v534 = vld [vmem:[%s499 + $0x110] sm:$0xff]
      %v535 = vld [vmem:[%s499 + $0x118] sm:$0xff]
      %v536 = vld [vmem:[%s499 + $0x120] sm:$0xff]
      %v537 = vld [vmem:[%s499 + $0x128] sm:$0xff]
      %v538 = vld [vmem:[%s499 + $0x130] sm:$0xff]
      %v539 = vld [vmem:[%s499 + $0x138] sm:$0xff]
      %v540 = vld [vmem:[%s499 + $0x140] sm:$0xff]
      %v541 = vld [vmem:[%s499 + $0x148] sm:$0xff]
      %v542 = vld [vmem:[%s499 + $0x150] sm:$0xff]
      %v543 = vld [vmem:[%s499 + $0x158] sm:$0xff]
      %v544 = vld [vmem:[%s499 + $0x160] sm:$0xff]
      %v545 = vld [vmem:[%s499 + $0x168] sm:$0xff]
      %v546 = vld [vmem:[%s499 + $0x170] sm:$0xff]
      %v547 = vld [vmem:[%s499 + $0x178] sm:$0xff]
      %v548 = vcombine.low %v391, %v407
      %v549 = vcombine.high %v391, %v407
      %v550 = vcombine.low %v423, %v498
      %v551 = vcombine.high %v423, %v498
      %v553 = vunpack.c.l.s4 1983009808
      %v554 = vunpack.c.0.s8 %v553
      %v555 = vlaneseq
      %v556 = vshrl.u32 %v555, 7
      %v557 = vsub.s32 %v554, %v556
      %v558 = vrot.slane %v548, %v557
      %v560 = vunpack.c.l.s4 1983009808
      %v561 = vunpack.c.0.s8 %v560
      %v562 = vlaneseq
      %v563 = vshrl.u32 %v562, 7
      %v564 = vsub.s32 %v561, %v563
      %v565 = vrot.slane %v549, %v564
      %v567 = vunpack.c.l.s4 1983009808
      %v568 = vunpack.c.0.s8 %v567
      %v569 = vlaneseq
      %v570 = vshrl.u32 %v569, 7
      %v571 = vsub.s32 %v568, %v570
      %v572 = vrot.slane %v550, %v571
      %v574 = vunpack.c.l.s4 1983009808
      %v575 = vunpack.c.0.s8 %v574
      %v576 = vlaneseq
      %v577 = vshrl.u32 %v576, 7
      %v578 = vsub.s32 %v575, %v577
      %v579 = vrot.slane %v551, %v578
      %v580 = vcombine.low %v558, %v572
      %v581 = vcombine.high %v558, %v572
      %v582 = vcombine.low %v565, %v579
      %v634 = vunpack.c.l.b16 %v500
      %v635 = vunpack.c.h.b16 %v500
      %v636 = vunpack.c.l.b16 %v501
      %v637 = vunpack.c.h.b16 %v501
      %v638 = vunpack.c.l.b16 %v502
      %v639 = vunpack.c.h.b16 %v502
      %v640 = vunpack.c.l.b16 %v503
      %v641 = vunpack.c.h.b16 %v503
      %v642 = vunpack.c.l.b16 %v504
      %v643 = vunpack.c.h.b16 %v504
      %v644 = vunpack.c.l.b16 %v505
      %v645 = vunpack.c.h.b16 %v505
      %v646 = vunpack.c.l.b16 %v506
      %v647 = vunpack.c.h.b16 %v506
      %v648 = vunpack.c.l.b16 %v507
      %v649 = vunpack.c.h.b16 %v507
      %v650 = vunpack.c.l.b16 %v508
      %v651 = vunpack.c.h.b16 %v508
      %v652 = vunpack.c.l.b16 %v509
      %v653 = vunpack.c.h.b16 %v509
      %v654 = vunpack.c.l.b16 %v510
      %v655 = vunpack.c.h.b16 %v510
      %v656 = vunpack.c.l.b16 %v511
      %v657 = vunpack.c.h.b16 %v511
      %v658 = vunpack.c.l.b16 %v512
      %v659 = vunpack.c.h.b16 %v512
      %v660 = vunpack.c.l.b16 %v513
      %v661 = vunpack.c.h.b16 %v513
      %v662 = vunpack.c.l.b16 %v514
      %v663 = vunpack.c.h.b16 %v514
      %v664 = vunpack.c.l.b16 %v515
      %v665 = vunpack.c.h.b16 %v515
      %v666 = vunpack.c.l.b16 %v516
      %v667 = vunpack.c.h.b16 %v516
      %v668 = vunpack.c.l.b16 %v517
      %v669 = vunpack.c.h.b16 %v517
      %v670 = vunpack.c.l.b16 %v518
      %v671 = vunpack.c.h.b16 %v518
      %v672 = vunpack.c.l.b16 %v519
      %v673 = vunpack.c.h.b16 %v519
      %v674 = vunpack.c.l.b16 %v520
      %v675 = vunpack.c.h.b16 %v520
      %v676 = vunpack.c.l.b16 %v521
      %v677 = vunpack.c.h.b16 %v521
      %v678 = vunpack.c.l.b16 %v522
      %v679 = vunpack.c.h.b16 %v522
      %v680 = vunpack.c.l.b16 %v523
      %v681 = vunpack.c.h.b16 %v523
      %v682 = vunpack.c.l.b16 %v524
      %v683 = vunpack.c.h.b16 %v524
      %v684 = vunpack.c.l.b16 %v525
      %v685 = vunpack.c.h.b16 %v525
      %v686 = vunpack.c.l.b16 %v526
      %v687 = vunpack.c.h.b16 %v526
      %v688 = vunpack.c.l.b16 %v527
      %v689 = vunpack.c.h.b16 %v527
      %v690 = vunpack.c.l.b16 %v528
      %v691 = vunpack.c.h.b16 %v528
      %v692 = vunpack.c.l.b16 %v529
      %v693 = vunpack.c.h.b16 %v529
      %v694 = vunpack.c.l.b16 %v530
      %v695 = vunpack.c.h.b16 %v530
      %v696 = vunpack.c.l.b16 %v531
      %v697 = vunpack.c.h.b16 %v531
      %v698 = vunpack.c.l.b16 %v532
      %v699 = vunpack.c.h.b16 %v532
      %v700 = vunpack.c.l.b16 %v533
      %v701 = vunpack.c.h.b16 %v533
      %v702 = vunpack.c.l.b16 %v534
      %v703 = vunpack.c.h.b16 %v534
      %v704 = vunpack.c.l.b16 %v535
      %v705 = vunpack.c.h.b16 %v535
      %v706 = vunpack.c.l.b16 %v536
      %v707 = vunpack.c.h.b16 %v536
      %v708 = vunpack.c.l.b16 %v537
      %v709 = vunpack.c.h.b16 %v537
      %v710 = vunpack.c.l.b16 %v538
      %v711 = vunpack.c.h.b16 %v538
      %v712 = vunpack.c.l.b16 %v539
      %v713 = vunpack.c.h.b16 %v539
      %v714 = vunpack.c.l.b16 %v540
      %v715 = vunpack.c.h.b16 %v540
      %v716 = vunpack.c.l.b16 %v541
      %v717 = vunpack.c.h.b16 %v541
      %v718 = vunpack.c.l.b16 %v542
      %v719 = vunpack.c.h.b16 %v542
      %v720 = vunpack.c.l.b16 %v543
      %v721 = vunpack.c.h.b16 %v543
      %v722 = vunpack.c.l.b16 %v544
      %v723 = vunpack.c.h.b16 %v544
      %v724 = vunpack.c.l.b16 %v545
      %v725 = vunpack.c.h.b16 %v545
      %v726 = vunpack.c.l.b16 %v546
      %v727 = vunpack.c.h.b16 %v546
      %v728 = vunpack.c.l.b16 %v547
      %v729 = vunpack.c.h.b16 %v547
      %v730 = vpack.c.b16 %v636, %v634
      %v731 = vpack.c.b16 %v637, %v635
      %v732 = vpack.c.b16 %v640, %v638
      %v733 = vpack.c.b16 %v641, %v639
      %v734 = vpack.c.b16 %v644, %v642
      %v735 = vpack.c.b16 %v645, %v643
      %v736 = vpack.c.b16 %v648, %v646
      %v737 = vpack.c.b16 %v649, %v647
      %v738 = vpack.c.b16 %v652, %v650
      %v739 = vpack.c.b16 %v653, %v651
      %v740 = vpack.c.b16 %v656, %v654
      %v741 = vpack.c.b16 %v657, %v655
      %v742 = vpack.c.b16 %v660, %v658
      %v743 = vpack.c.b16 %v661, %v659
      %v744 = vpack.c.b16 %v664, %v662
      %v745 = vpack.c.b16 %v665, %v663
      %v746 = vpack.c.b16 %v668, %v666
      %v747 = vpack.c.b16 %v669, %v667
      %v748 = vpack.c.b16 %v672, %v670
      %v749 = vpack.c.b16 %v673, %v671
      %v750 = vpack.c.b16 %v676, %v674
      %v751 = vpack.c.b16 %v677, %v675
      %v752 = vpack.c.b16 %v680, %v678
      %v753 = vpack.c.b16 %v681, %v679
      %v754 = vpack.c.b16 %v684, %v682
      %v755 = vpack.c.b16 %v685, %v683
      %v756 = vpack.c.b16 %v688, %v686
      %v757 = vpack.c.b16 %v689, %v687
      %v758 = vpack.c.b16 %v692, %v690
      %v759 = vpack.c.b16 %v693, %v691
      %v760 = vpack.c.b16 %v696, %v694
      %v761 = vpack.c.b16 %v697, %v695
      %v762 = vpack.c.b16 %v700, %v698
      %v763 = vpack.c.b16 %v701, %v699
      %v764 = vpack.c.b16 %v704, %v702
      %v765 = vpack.c.b16 %v705, %v703
      %v766 = vpack.c.b16 %v708, %v706
      %v767 = vpack.c.b16 %v709, %v707
      %v768 = vpack.c.b16 %v712, %v710
      %v769 = vpack.c.b16 %v713, %v711
      %v770 = vpack.c.b16 %v716, %v714
      %v771 = vpack.c.b16 %v717, %v715
      %v772 = vpack.c.b16 %v720, %v718
      %v773 = vpack.c.b16 %v721, %v719
      %v774 = vpack.c.b16 %v724, %v722
      %v775 = vpack.c.b16 %v725, %v723
      %v776 = vpack.c.b16 %v728, %v726
      %v777 = vpack.c.b16 %v729, %v727
      %826 = vmatprep.subr.bf16.mxu0 %v745
      %827 = vmatpush1.bf16.msra.mxu0 %v744
      %828 = vmatprep.subr.bf16.mxu0 %v743
      %829 = vmatpush1.bf16.msra.mxu0 %v742
      %830 = vmatprep.subr.bf16.mxu0 %v741
      %831 = vmatpush1.bf16.msra.mxu0 %v740
      %832 = vmatprep.subr.bf16.mxu0 %v739
      %833 = vmatpush1.bf16.msra.mxu0 %v738
      %834 = vmatprep.subr.bf16.mxu0 %v737
      %835 = vmatpush1.bf16.msra.mxu0 %v736
      %836 = vmatprep.subr.bf16.mxu0 %v735
      %837 = vmatpush1.bf16.msra.mxu0 %v734
      %838 = vmatprep.subr.bf16.mxu0 %v733
      %839 = vmatpush1.bf16.msra.mxu0 %v732
      %840 = vmatprep.subr.bf16.mxu0 %v731
      %841 = vmatpush1.bf16.msra.mxu0 %v730
      %842 = vmatprep.subr.bf16.mxu0 %v761
      %843 = vmatpush2.bf16.msra.mxu0 %v760
      %844 = vmatprep.subr.bf16.mxu0 %v759
      %845 = vmatpush2.bf16.msra.mxu0 %v758
      %846 = vmatprep.subr.bf16.mxu0 %v757
      %847 = vmatpush2.bf16.msra.mxu0 %v756
      %848 = vmatprep.subr.bf16.mxu0 %v755
      %849 = vmatpush2.bf16.msra.mxu0 %v754
      %850 = vmatprep.subr.bf16.mxu0 %v753
      %851 = vmatpush2.bf16.msra.mxu0 %v752
      %852 = vmatprep.subr.bf16.mxu0 %v751
      %853 = vmatpush2.bf16.msra.mxu0 %v750
      %854 = vmatprep.subr.bf16.mxu0 %v749
      %855 = vmatpush2.bf16.msra.mxu0 %v748
      %856 = vmatprep.subr.bf16.mxu0 %v747
      %857 = vmatpush2.bf16.msra.mxu0 %v746
      %858 = vmatprep.mubr.bf16.mxu0 %v581
      %859 = vmatmul.mubr.bf16.gmra.mxu0 %v580
      %v860 = vpop.f32.mrf.mxu0
      %v861 = vadd.f32 0.0, %v860
      %v862 = vpop.f32.mrf.mxu0
      %v863 = vadd.f32 0.0, %v862
      %v864 = vpop.f32.mrf.mxu0
      %v865 = vadd.f32 0.0, %v864
      %v866 = vpop.f32.mrf.mxu0
      %v867 = vadd.f32 0.0, %v866
      %868 = vdwg.mxu0
      %869 = vmatprep.subr.bf16.mxu0 %v777
      %870 = vmatpush1.bf16.msra.mxu0 %v776
      %871 = vmatprep.subr.bf16.mxu0 %v775
      %872 = vmatpush1.bf16.msra.mxu0 %v774
      %873 = vmatprep.subr.bf16.mxu0 %v773
      %874 = vmatpush1.bf16.msra.mxu0 %v772
      %875 = vmatprep.subr.bf16.mxu0 %v771
      %876 = vmatpush1.bf16.msra.mxu0 %v770
      %877 = vmatprep.subr.bf16.mxu0 %v769
      %878 = vmatpush1.bf16.msra.mxu0 %v768
      %879 = vmatprep.subr.bf16.mxu0 %v767
      %880 = vmatpush1.bf16.msra.mxu0 %v766
      %881 = vmatprep.subr.bf16.mxu0 %v765
      %882 = vmatpush1.bf16.msra.mxu0 %v764
      %883 = vmatprep.subr.bf16.mxu0 %v763
      %884 = vmatpush1.bf16.msra.mxu0 %v762
      %885 = vmatprep.subr.bf16.mxu0 0
      %886 = vmatpush2.bf16.msra.mxu0 0
      %887 = vmatprep.subr.bf16.mxu0 0
      %888 = vmatpush2.bf16.msra.mxu0 0
      %889 = vmatprep.subr.bf16.mxu0 0
      %890 = vmatpush2.bf16.msra.mxu0 0
      %891 = vmatprep.subr.bf16.mxu0 0
      %892 = vmatpush2.bf16.msra.mxu0 0
      %893 = vmatprep.subr.bf16.mxu0 0
      %894 = vmatpush2.bf16.msra.mxu0 0
      %895 = vmatprep.subr.bf16.mxu0 0
      %896 = vmatpush2.bf16.msra.mxu0 0
      %897 = vmatprep.subr.bf16.mxu0 0
      %898 = vmatpush2.bf16.msra.mxu0 0
      %899 = vmatprep.subr.bf16.mxu0 0
      %900 = vmatpush2.bf16.msra.mxu0 0
      %901 = vmatprep.mubr.bf16.mxu0 0
      %902 = vmatmul.mubr.bf16.gmra.mxu0 %v582
      %v903 = vpop.f32.mrf.mxu0
      %v904 = vadd.f32 %v861, %v903
      %v905 = vpop.f32.mrf.mxu0
      %v906 = vadd.f32 %v863, %v905
      %v907 = vpop.f32.mrf.mxu0
      %v908 = vadd.f32 %v865, %v907
      %v909 = vpop.f32.mrf.mxu0
      %v910 = vadd.f32 %v867, %v909
      %911 = vdwg.mxu0
      %v912 = vcombine.low %v375, %v391
      %v913 = vcombine.high %v375, %v391
      %v914 = vcombine.low %v407, %v423
      %v915 = vcombine.high %v407, %v423
      %v917 = vunpack.c.l.s4 1983009808
      %v918 = vunpack.c.0.s8 %v917
      %v919 = vlaneseq
      %v920 = vshrl.u32 %v919, 7
      %v921 = vsub.s32 %v918, %v920
      %v922 = vrot.slane %v912, %v921
      %v924 = vunpack.c.l.s4 1983009808
      %v925 = vunpack.c.0.s8 %v924
      %v926 = vlaneseq
      %v927 = vshrl.u32 %v926, 7
      %v928 = vsub.s32 %v925, %v927
      %v929 = vrot.slane %v913, %v928
      %v931 = vunpack.c.l.s4 1983009808
      %v932 = vunpack.c.0.s8 %v931
      %v933 = vlaneseq
      %v934 = vshrl.u32 %v933, 7
      %v935 = vsub.s32 %v932, %v934
      %v936 = vrot.slane %v914, %v935
      %v938 = vunpack.c.l.s4 1983009808
      %v939 = vunpack.c.0.s8 %v938
      %v940 = vlaneseq
      %v941 = vshrl.u32 %v940, 7
      %v942 = vsub.s32 %v939, %v941
      %v943 = vrot.slane %v915, %v942
      %v944 = vcombine.low %v922, %v936
      %v945 = vcombine.high %v922, %v936
      %v946 = vcombine.low %v929, %v943
      %v998 = vunpack.c.l.b16 %v424
      %v999 = vunpack.c.h.b16 %v424
      %v1000 = vunpack.c.l.b16 %v425
      %v1001 = vunpack.c.h.b16 %v425
      %v1002 = vunpack.c.l.b16 %v426
      %v1003 = vunpack.c.h.b16 %v426
      %v1004 = vunpack.c.l.b16 %v427
      %v1005 = vunpack.c.h.b16 %v427
      %v1006 = vunpack.c.l.b16 %v428
      %v1007 = vunpack.c.h.b16 %v428
      %v1008 = vunpack.c.l.b16 %v429
      %v1009 = vunpack.c.h.b16 %v429
      %v1010 = vunpack.c.l.b16 %v430
      %v1011 = vunpack.c.h.b16 %v430
      %v1012 = vunpack.c.l.b16 %v431
      %v1013 = vunpack.c.h.b16 %v431
      %v1014 = vunpack.c.l.b16 %v432
      %v1015 = vunpack.c.h.b16 %v432
      %v1016 = vunpack.c.l.b16 %v433
      %v1017 = vunpack.c.h.b16 %v433
      %v1018 = vunpack.c.l.b16 %v434
      %v1019 = vunpack.c.h.b16 %v434
      %v1020 = vunpack.c.l.b16 %v435
      %v1021 = vunpack.c.h.b16 %v435
      %v1022 = vunpack.c.l.b16 %v436
      %v1023 = vunpack.c.h.b16 %v436
      %v1024 = vunpack.c.l.b16 %v437
      %v1025 = vunpack.c.h.b16 %v437
      %v1026 = vunpack.c.l.b16 %v438
      %v1027 = vunpack.c.h.b16 %v438
      %v1028 = vunpack.c.l.b16 %v439
      %v1029 = vunpack.c.h.b16 %v439
      %v1030 = vunpack.c.l.b16 %v440
      %v1031 = vunpack.c.h.b16 %v440
      %v1032 = vunpack.c.l.b16 %v441
      %v1033 = vunpack.c.h.b16 %v441
      %v1034 = vunpack.c.l.b16 %v442
      %v1035 = vunpack.c.h.b16 %v442
      %v1036 = vunpack.c.l.b16 %v443
      %v1037 = vunpack.c.h.b16 %v443
      %v1038 = vunpack.c.l.b16 %v444
      %v1039 = vunpack.c.h.b16 %v444
      %v1040 = vunpack.c.l.b16 %v445
      %v1041 = vunpack.c.h.b16 %v445
      %v1042 = vunpack.c.l.b16 %v446
      %v1043 = vunpack.c.h.b16 %v446
      %v1044 = vunpack.c.l.b16 %v447
      %v1045 = vunpack.c.h.b16 %v447
      %v1046 = vunpack.c.l.b16 %v448
      %v1047 = vunpack.c.h.b16 %v448
      %v1048 = vunpack.c.l.b16 %v449
      %v1049 = vunpack.c.h.b16 %v449
      %v1050 = vunpack.c.l.b16 %v450
      %v1051 = vunpack.c.h.b16 %v450
      %v1052 = vunpack.c.l.b16 %v451
      %v1053 = vunpack.c.h.b16 %v451
      %v1054 = vunpack.c.l.b16 %v452
      %v1055 = vunpack.c.h.b16 %v452
      %v1056 = vunpack.c.l.b16 %v453
      %v1057 = vunpack.c.h.b16 %v453
      %v1058 = vunpack.c.l.b16 %v454
      %v1059 = vunpack.c.h.b16 %v454
      %v1060 = vunpack.c.l.b16 %v455
      %v1061 = vunpack.c.h.b16 %v455
      %v1062 = vunpack.c.l.b16 %v456
      %v1063 = vunpack.c.h.b16 %v456
      %v1064 = vunpack.c.l.b16 %v457
      %v1065 = vunpack.c.h.b16 %v457
      %v1066 = vunpack.c.l.b16 %v458
      %v1067 = vunpack.c.h.b16 %v458
      %v1068 = vunpack.c.l.b16 %v459
      %v1069 = vunpack.c.h.b16 %v459
      %v1070 = vunpack.c.l.b16 %v460
      %v1071 = vunpack.c.h.b16 %v460
      %v1072 = vunpack.c.l.b16 %v461
      %v1073 = vunpack.c.h.b16 %v461
      %v1074 = vunpack.c.l.b16 %v462
      %v1075 = vunpack.c.h.b16 %v462
      %v1076 = vunpack.c.l.b16 %v463
      %v1077 = vunpack.c.h.b16 %v463
      %v1078 = vunpack.c.l.b16 %v464
      %v1079 = vunpack.c.h.b16 %v464
      %v1080 = vunpack.c.l.b16 %v465
      %v1081 = vunpack.c.h.b16 %v465
      %v1082 = vunpack.c.l.b16 %v466
      %v1083 = vunpack.c.h.b16 %v466
      %v1084 = vunpack.c.l.b16 %v467
      %v1085 = vunpack.c.h.b16 %v467
      %v1086 = vunpack.c.l.b16 %v468
      %v1087 = vunpack.c.h.b16 %v468
      %v1088 = vunpack.c.l.b16 %v469
      %v1089 = vunpack.c.h.b16 %v469
      %v1090 = vunpack.c.l.b16 %v470
      %v1091 = vunpack.c.h.b16 %v470
      %v1092 = vunpack.c.l.b16 %v471
      %v1093 = vunpack.c.h.b16 %v471
      %v1094 = vpack.c.b16 %v1000, %v998
      %v1095 = vpack.c.b16 %v1001, %v999
      %v1096 = vpack.c.b16 %v1004, %v1002
      %v1097 = vpack.c.b16 %v1005, %v1003
      %v1098 = vpack.c.b16 %v1008, %v1006
      %v1099 = vpack.c.b16 %v1009, %v1007
      %v1100 = vpack.c.b16 %v1012, %v1010
      %v1101 = vpack.c.b16 %v1013, %v1011
      %v1102 = vpack.c.b16 %v1016, %v1014
      %v1103 = vpack.c.b16 %v1017, %v1015
      %v1104 = vpack.c.b16 %v1020, %v1018
      %v1105 = vpack.c.b16 %v1021, %v1019
      %v1106 = vpack.c.b16 %v1024, %v1022
      %v1107 = vpack.c.b16 %v1025, %v1023
      %v1108 = vpack.c.b16 %v1028, %v1026
      %v1109 = vpack.c.b16 %v1029, %v1027
      %v1110 = vpack.c.b16 %v1032, %v1030
      %v1111 = vpack.c.b16 %v1033, %v1031
      %v1112 = vpack.c.b16 %v1036, %v1034
      %v1113 = vpack.c.b16 %v1037, %v1035
      %v1114 = vpack.c.b16 %v1040, %v1038
      %v1115 = vpack.c.b16 %v1041, %v1039
      %v1116 = vpack.c.b16 %v1044, %v1042
      %v1117 = vpack.c.b16 %v1045, %v1043
      %v1118 = vpack.c.b16 %v1048, %v1046
      %v1119 = vpack.c.b16 %v1049, %v1047
      %v1120 = vpack.c.b16 %v1052, %v1050
      %v1121 = vpack.c.b16 %v1053, %v1051
      %v1122 = vpack.c.b16 %v1056, %v1054
      %v1123 = vpack.c.b16 %v1057, %v1055
      %v1124 = vpack.c.b16 %v1060, %v1058
      %v1125 = vpack.c.b16 %v1061, %v1059
      %v1126 = vpack.c.b16 %v1064, %v1062
      %v1127 = vpack.c.b16 %v1065, %v1063
      %v1128 = vpack.c.b16 %v1068, %v1066
      %v1129 = vpack.c.b16 %v1069, %v1067
      %v1130 = vpack.c.b16 %v1072, %v1070
      %v1131 = vpack.c.b16 %v1073, %v1071
      %v1132 = vpack.c.b16 %v1076, %v1074
      %v1133 = vpack.c.b16 %v1077, %v1075
      %v1134 = vpack.c.b16 %v1080, %v1078
      %v1135 = vpack.c.b16 %v1081, %v1079
      %v1136 = vpack.c.b16 %v1084, %v1082
      %v1137 = vpack.c.b16 %v1085, %v1083
      %v1138 = vpack.c.b16 %v1088, %v1086
      %v1139 = vpack.c.b16 %v1089, %v1087
      %v1140 = vpack.c.b16 %v1092, %v1090
      %v1141 = vpack.c.b16 %v1093, %v1091
      %1190 = vmatprep.subr.bf16.mxu0 %v1109
      %1191 = vmatpush1.bf16.msra.mxu0 %v1108
      %1192 = vmatprep.subr.bf16.mxu0 %v1107
      %1193 = vmatpush1.bf16.msra.mxu0 %v1106
      %1194 = vmatprep.subr.bf16.mxu0 %v1105
      %1195 = vmatpush1.bf16.msra.mxu0 %v1104
      %1196 = vmatprep.subr.bf16.mxu0 %v1103
      %1197 = vmatpush1.bf16.msra.mxu0 %v1102
      %1198 = vmatprep.subr.bf16.mxu0 %v1101
      %1199 = vmatpush1.bf16.msra.mxu0 %v1100
      %1200 = vmatprep.subr.bf16.mxu0 %v1099
      %1201 = vmatpush1.bf16.msra.mxu0 %v1098
      %1202 = vmatprep.subr.bf16.mxu0 %v1097
      %1203 = vmatpush1.bf16.msra.mxu0 %v1096
      %1204 = vmatprep.subr.bf16.mxu0 %v1095
      %1205 = vmatpush1.bf16.msra.mxu0 %v1094
      %1206 = vmatprep.subr.bf16.mxu0 %v1125
      %1207 = vmatpush2.bf16.msra.mxu0 %v1124
      %1208 = vmatprep.subr.bf16.mxu0 %v1123
      %1209 = vmatpush2.bf16.msra.mxu0 %v1122
      %1210 = vmatprep.subr.bf16.mxu0 %v1121
      %1211 = vmatpush2.bf16.msra.mxu0 %v1120
      %1212 = vmatprep.subr.bf16.mxu0 %v1119
      %1213 = vmatpush2.bf16.msra.mxu0 %v1118
      %1214 = vmatprep.subr.bf16.mxu0 %v1117
      %1215 = vmatpush2.bf16.msra.mxu0 %v1116
      %1216 = vmatprep.subr.bf16.mxu0 %v1115
      %1217 = vmatpush2.bf16.msra.mxu0 %v1114
      %1218 = vmatprep.subr.bf16.mxu0 %v1113
      %1219 = vmatpush2.bf16.msra.mxu0 %v1112
      %1220 = vmatprep.subr.bf16.mxu0 %v1111
      %1221 = vmatpush2.bf16.msra.mxu0 %v1110
      %1222 = vmatprep.mubr.bf16.mxu0 %v945
      %1223 = vmatmul.mubr.bf16.gmra.mxu0 %v944
      %v1224 = vpop.f32.mrf.mxu0
      %v1225 = vadd.f32 %v904, %v1224
      %v1226 = vpop.f32.mrf.mxu0
      %v1227 = vadd.f32 %v906, %v1226
      %v1228 = vpop.f32.mrf.mxu0
      %v1229 = vadd.f32 %v908, %v1228
      %v1230 = vpop.f32.mrf.mxu0
      %v1231 = vadd.f32 %v910, %v1230
      %1232 = vdwg.mxu0
      %1233 = vmatprep.subr.bf16.mxu0 %v1141
      %1234 = vmatpush1.bf16.msra.mxu0 %v1140
      %1235 = vmatprep.subr.bf16.mxu0 %v1139
      %1236 = vmatpush1.bf16.msra.mxu0 %v1138
      %1237 = vmatprep.subr.bf16.mxu0 %v1137
      %1238 = vmatpush1.bf16.msra.mxu0 %v1136
      %1239 = vmatprep.subr.bf16.mxu0 %v1135
      %1240 = vmatpush1.bf16.msra.mxu0 %v1134
      %1241 = vmatprep.subr.bf16.mxu0 %v1133
      %1242 = vmatpush1.bf16.msra.mxu0 %v1132
      %1243 = vmatprep.subr.bf16.mxu0 %v1131
      %1244 = vmatpush1.bf16.msra.mxu0 %v1130
      %1245 = vmatprep.subr.bf16.mxu0 %v1129
      %1246 = vmatpush1.bf16.msra.mxu0 %v1128
      %1247 = vmatprep.subr.bf16.mxu0 %v1127
      %1248 = vmatpush1.bf16.msra.mxu0 %v1126
      %1249 = vmatprep.subr.bf16.mxu0 0
      %1250 = vmatpush2.bf16.msra.mxu0 0
      %1251 = vmatprep.subr.bf16.mxu0 0
      %1252 = vmatpush2.bf16.msra.mxu0 0
      %1253 = vmatprep.subr.bf16.mxu0 0
      %1254 = vmatpush2.bf16.msra.mxu0 0
      %1255 = vmatprep.subr.bf16.mxu0 0
      %1256 = vmatpush2.bf16.msra.mxu0 0
      %1257 = vmatprep.subr.bf16.mxu0 0
      %1258 = vmatpush2.bf16.msra.mxu0 0
      %1259 = vmatprep.subr.bf16.mxu0 0
      %1260 = vmatpush2.bf16.msra.mxu0 0
      %1261 = vmatprep.subr.bf16.mxu0 0
      %1262 = vmatpush2.bf16.msra.mxu0 0
      %1263 = vmatprep.subr.bf16.mxu0 0
      %1264 = vmatpush2.bf16.msra.mxu0 0
      %1265 = vmatprep.mubr.bf16.mxu0 0
      %1266 = vmatmul.mubr.bf16.gmra.mxu0 %v946
      %v1267 = vpop.f32.mrf.mxu0
      %v1268 = vadd.f32 %v1225, %v1267
      %v1269 = vpop.f32.mrf.mxu0
      %v1270 = vadd.f32 %v1227, %v1269
      %v1271 = vpop.f32.mrf.mxu0
      %v1272 = vadd.f32 %v1229, %v1271
      %v1273 = vpop.f32.mrf.mxu0
      %v1274 = vadd.f32 %v1231, %v1273
      %1275 = vdwg.mxu0
      %v1277 = vunpack.c.l.b16 %v315
      %v1278 = vpack.c.b16 %v1277, %v1277
      %v1280 = vshrl.u32 %v1278, 16
      %v1282 = vshll.u32 %v1278, 16
      %v1284 = vrot.slane %v1282, 1
      %v1285 = vor.u32 %v1280, %v1284
      %v1286 = vrot.slane %v1278, 1
      %v1287 = vcombine.low %v315, %v1285
      %v1289 = vunpack.c.l.s4 1983009808
      %v1290 = vunpack.c.0.s8 %v1289
      %v1291 = vlaneseq
      %v1292 = vshrl.u32 %v1291, 7
      %v1293 = vsub.s32 %v1290, %v1292
      %v1294 = vrot.slane %v1287, %v1293
      %v1296 = vunpack.c.l.s4 1983009808
      %v1297 = vunpack.c.0.s8 %v1296
      %v1298 = vlaneseq
      %v1299 = vshrl.u32 %v1298, 7
      %v1300 = vsub.s32 %v1297, %v1299
      %v1301 = vrot.slane %v1286, %v1300
      %v1302 = vcombine.low %v1294, %v1301
      %s1303 = scalar_lea.vmem %s2, 768
      %v1304 = vld [vmem:[%s1303] sm:$0xff]
      %v1305 = vld [vmem:[%s1303 + $0x8] sm:$0xff]
      %v1306 = vld [vmem:[%s1303 + $0x10] sm:$0xff]
      %v1307 = vld [vmem:[%s1303 + $0x18] sm:$0xff]
      %v1308 = vld [vmem:[%s1303 + $0x20] sm:$0xff]
      %v1309 = vld [vmem:[%s1303 + $0x28] sm:$0xff]
      %v1310 = vld [vmem:[%s1303 + $0x30] sm:$0xff]
      %v1311 = vld [vmem:[%s1303 + $0x38] sm:$0xff]
      %v1312 = vld [vmem:[%s1303 + $0x40] sm:$0xff]
      %v1313 = vld [vmem:[%s1303 + $0x48] sm:$0xff]
      %v1314 = vld [vmem:[%s1303 + $0x50] sm:$0xff]
      %v1315 = vld [vmem:[%s1303 + $0x58] sm:$0xff]
      %v1316 = vld [vmem:[%s1303 + $0x60] sm:$0xff]
      %v1317 = vld [vmem:[%s1303 + $0x68] sm:$0xff]
      %v1318 = vld [vmem:[%s1303 + $0x70] sm:$0xff]
      %v1319 = vld [vmem:[%s1303 + $0x78] sm:$0xff]
      %v1320 = vld [vmem:[%s1303 + $0x80] sm:$0xff]
      %v1321 = vld [vmem:[%s1303 + $0x88] sm:$0xff]
      %v1322 = vld [vmem:[%s1303 + $0x90] sm:$0xff]
      %v1323 = vld [vmem:[%s1303 + $0x98] sm:$0xff]
      %v1324 = vld [vmem:[%s1303 + $0xa0] sm:$0xff]
      %v1325 = vld [vmem:[%s1303 + $0xa8] sm:$0xff]
      %v1326 = vld [vmem:[%s1303 + $0xb0] sm:$0xff]
      %v1327 = vld [vmem:[%s1303 + $0xb8] sm:$0xff]
      %v1328 = vld [vmem:[%s1303 + $0xc0] sm:$0xff]
      %v1329 = vld [vmem:[%s1303 + $0xc8] sm:$0xff]
      %v1330 = vld [vmem:[%s1303 + $0xd0] sm:$0xff]
      %v1331 = vld [vmem:[%s1303 + $0xd8] sm:$0xff]
      %v1332 = vld [vmem:[%s1303 + $0xe0] sm:$0xff]
      %v1333 = vld [vmem:[%s1303 + $0xe8] sm:$0xff]
      %v1334 = vld [vmem:[%s1303 + $0xf0] sm:$0xff]
      %v1335 = vld [vmem:[%s1303 + $0xf8] sm:$0xff]
      %v1336 = vld [vmem:[%s1303 + $0x100] sm:$0xff]
      %v1337 = vld [vmem:[%s1303 + $0x108] sm:$0xff]
      %v1338 = vld [vmem:[%s1303 + $0x110] sm:$0xff]
      %v1339 = vld [vmem:[%s1303 + $0x118] sm:$0xff]
      %v1340 = vld [vmem:[%s1303 + $0x120] sm:$0xff]
      %v1341 = vld [vmem:[%s1303 + $0x128] sm:$0xff]
      %v1342 = vld [vmem:[%s1303 + $0x130] sm:$0xff]
      %v1343 = vld [vmem:[%s1303 + $0x138] sm:$0xff]
      %v1344 = vld [vmem:[%s1303 + $0x140] sm:$0xff]
      %v1345 = vld [vmem:[%s1303 + $0x148] sm:$0xff]
      %v1346 = vld [vmem:[%s1303 + $0x150] sm:$0xff]
      %v1347 = vld [vmem:[%s1303 + $0x158] sm:$0xff]
      %v1348 = vld [vmem:[%s1303 + $0x160] sm:$0xff]
      %v1349 = vld [vmem:[%s1303 + $0x168] sm:$0xff]
      %v1350 = vld [vmem:[%s1303 + $0x170] sm:$0xff]
      %v1351 = vld [vmem:[%s1303 + $0x178] sm:$0xff]
      %v1352 = vcombine.low %v498, %v1302
      %v1353 = vcombine.high %v498, %v1302
      %v1355 = vunpack.c.l.s4 1983009808
      %v1356 = vunpack.c.0.s8 %v1355
      %v1357 = vlaneseq
      %v1358 = vshrl.u32 %v1357, 7
      %v1359 = vsub.s32 %v1356, %v1358
      %v1360 = vrot.slane %v1352, %v1359
      %v1362 = vunpack.c.l.s4 1983009808
      %v1363 = vunpack.c.0.s8 %v1362
      %v1364 = vlaneseq
      %v1365 = vshrl.u32 %v1364, 7
      %v1366 = vsub.s32 %v1363, %v1365
      %v1367 = vrot.slane %v1353, %v1366
      %v1368 = vcombine.low %v936, %v1360
      %v1369 = vcombine.high %v936, %v1360
      %v1370 = vcombine.low %v943, %v1367
      %v1422 = vunpack.c.l.b16 %v1304
      %v1423 = vunpack.c.h.b16 %v1304
      %v1424 = vunpack.c.l.b16 %v1305
      %v1425 = vunpack.c.h.b16 %v1305
      %v1426 = vunpack.c.l.b16 %v1306
      %v1427 = vunpack.c.h.b16 %v1306
      %v1428 = vunpack.c.l.b16 %v1307
      %v1429 = vunpack.c.h.b16 %v1307
      %v1430 = vunpack.c.l.b16 %v1308
      %v1431 = vunpack.c.h.b16 %v1308
      %v1432 = vunpack.c.l.b16 %v1309
      %v1433 = vunpack.c.h.b16 %v1309
      %v1434 = vunpack.c.l.b16 %v1310
      %v1435 = vunpack.c.h.b16 %v1310
      %v1436 = vunpack.c.l.b16 %v1311
      %v1437 = vunpack.c.h.b16 %v1311
      %v1438 = vunpack.c.l.b16 %v1312
      %v1439 = vunpack.c.h.b16 %v1312
      %v1440 = vunpack.c.l.b16 %v1313
      %v1441 = vunpack.c.h.b16 %v1313
      %v1442 = vunpack.c.l.b16 %v1314
      %v1443 = vunpack.c.h.b16 %v1314
      %v1444 = vunpack.c.l.b16 %v1315
      %v1445 = vunpack.c.h.b16 %v1315
      %v1446 = vunpack.c.l.b16 %v1316
      %v1447 = vunpack.c.h.b16 %v1316
      %v1448 = vunpack.c.l.b16 %v1317
      %v1449 = vunpack.c.h.b16 %v1317
      %v1450 = vunpack.c.l.b16 %v1318
      %v1451 = vunpack.c.h.b16 %v1318
      %v1452 = vunpack.c.l.b16 %v1319
      %v1453 = vunpack.c.h.b16 %v1319
      %v1454 = vunpack.c.l.b16 %v1320
      %v1455 = vunpack.c.h.b16 %v1320
      %v1456 = vunpack.c.l.b16 %v1321
      %v1457 = vunpack.c.h.b16 %v1321
      %v1458 = vunpack.c.l.b16 %v1322
      %v1459 = vunpack.c.h.b16 %v1322
      %v1460 = vunpack.c.l.b16 %v1323
      %v1461 = vunpack.c.h.b16 %v1323
      %v1462 = vunpack.c.l.b16 %v1324
      %v1463 = vunpack.c.h.b16 %v1324
      %v1464 = vunpack.c.l.b16 %v1325
      %v1465 = vunpack.c.h.b16 %v1325
      %v1466 = vunpack.c.l.b16 %v1326
      %v1467 = vunpack.c.h.b16 %v1326
      %v1468 = vunpack.c.l.b16 %v1327
      %v1469 = vunpack.c.h.b16 %v1327
      %v1470 = vunpack.c.l.b16 %v1328
      %v1471 = vunpack.c.h.b16 %v1328
      %v1472 = vunpack.c.l.b16 %v1329
      %v1473 = vunpack.c.h.b16 %v1329
      %v1474 = vunpack.c.l.b16 %v1330
      %v1475 = vunpack.c.h.b16 %v1330
      %v1476 = vunpack.c.l.b16 %v1331
      %v1477 = vunpack.c.h.b16 %v1331
      %v1478 = vunpack.c.l.b16 %v1332
      %v1479 = vunpack.c.h.b16 %v1332
      %v1480 = vunpack.c.l.b16 %v1333
      %v1481 = vunpack.c.h.b16 %v1333
      %v1482 = vunpack.c.l.b16 %v1334
      %v1483 = vunpack.c.h.b16 %v1334
      %v1484 = vunpack.c.l.b16 %v1335
      %v1485 = vunpack.c.h.b16 %v1335
      %v1486 = vunpack.c.l.b16 %v1336
      %v1487 = vunpack.c.h.b16 %v1336
      %v1488 = vunpack.c.l.b16 %v1337
      %v1489 = vunpack.c.h.b16 %v1337
      %v1490 = vunpack.c.l.b16 %v1338
      %v1491 = vunpack.c.h.b16 %v1338
      %v1492 = vunpack.c.l.b16 %v1339
      %v1493 = vunpack.c.h.b16 %v1339
      %v1494 = vunpack.c.l.b16 %v1340
      %v1495 = vunpack.c.h.b16 %v1340
      %v1496 = vunpack.c.l.b16 %v1341
      %v1497 = vunpack.c.h.b16 %v1341
      %v1498 = vunpack.c.l.b16 %v1342
      %v1499 = vunpack.c.h.b16 %v1342
      %v1500 = vunpack.c.l.b16 %v1343
      %v1501 = vunpack.c.h.b16 %v1343
      %v1502 = vunpack.c.l.b16 %v1344
      %v1503 = vunpack.c.h.b16 %v1344
      %v1504 = vunpack.c.l.b16 %v1345
      %v1505 = vunpack.c.h.b16 %v1345
      %v1506 = vunpack.c.l.b16 %v1346
      %v1507 = vunpack.c.h.b16 %v1346
      %v1508 = vunpack.c.l.b16 %v1347
      %v1509 = vunpack.c.h.b16 %v1347
      %v1510 = vunpack.c.l.b16 %v1348
      %v1511 = vunpack.c.h.b16 %v1348
      %v1512 = vunpack.c.l.b16 %v1349
      %v1513 = vunpack.c.h.b16 %v1349
      %v1514 = vunpack.c.l.b16 %v1350
      %v1515 = vunpack.c.h.b16 %v1350
      %v1516 = vunpack.c.l.b16 %v1351
      %v1517 = vunpack.c.h.b16 %v1351
      %v1518 = vpack.c.b16 %v1424, %v1422
      %v1519 = vpack.c.b16 %v1425, %v1423
      %v1520 = vpack.c.b16 %v1428, %v1426
      %v1521 = vpack.c.b16 %v1429, %v1427
      %v1522 = vpack.c.b16 %v1432, %v1430
      %v1523 = vpack.c.b16 %v1433, %v1431
      %v1524 = vpack.c.b16 %v1436, %v1434
      %v1525 = vpack.c.b16 %v1437, %v1435
      %v1526 = vpack.c.b16 %v1440, %v1438
      %v1527 = vpack.c.b16 %v1441, %v1439
      %v1528 = vpack.c.b16 %v1444, %v1442
      %v1529 = vpack.c.b16 %v1445, %v1443
      %v1530 = vpack.c.b16 %v1448, %v1446
      %v1531 = vpack.c.b16 %v1449, %v1447
      %v1532 = vpack.c.b16 %v1452, %v1450
      %v1533 = vpack.c.b16 %v1453, %v1451
      %v1534 = vpack.c.b16 %v1456, %v1454
      %v1535 = vpack.c.b16 %v1457, %v1455
      %v1536 = vpack.c.b16 %v1460, %v1458
      %v1537 = vpack.c.b16 %v1461, %v1459
      %v1538 = vpack.c.b16 %v1464, %v1462
      %v1539 = vpack.c.b16 %v1465, %v1463
      %v1540 = vpack.c.b16 %v1468, %v1466
      %v1541 = vpack.c.b16 %v1469, %v1467
      %v1542 = vpack.c.b16 %v1472, %v1470
      %v1543 = vpack.c.b16 %v1473, %v1471
      %v1544 = vpack.c.b16 %v1476, %v1474
      %v1545 = vpack.c.b16 %v1477, %v1475
      %v1546 = vpack.c.b16 %v1480, %v1478
      %v1547 = vpack.c.b16 %v1481, %v1479
      %v1548 = vpack.c.b16 %v1484, %v1482
      %v1549 = vpack.c.b16 %v1485, %v1483
      %v1550 = vpack.c.b16 %v1488, %v1486
      %v1551 = vpack.c.b16 %v1489, %v1487
      %v1552 = vpack.c.b16 %v1492, %v1490
      %v1553 = vpack.c.b16 %v1493, %v1491
      %v1554 = vpack.c.b16 %v1496, %v1494
      %v1555 = vpack.c.b16 %v1497, %v1495
      %v1556 = vpack.c.b16 %v1500, %v1498
      %v1557 = vpack.c.b16 %v1501, %v1499
      %v1558 = vpack.c.b16 %v1504, %v1502
      %v1559 = vpack.c.b16 %v1505, %v1503
      %v1560 = vpack.c.b16 %v1508, %v1506
      %v1561 = vpack.c.b16 %v1509, %v1507
      %v1562 = vpack.c.b16 %v1512, %v1510
      %v1563 = vpack.c.b16 %v1513, %v1511
      %v1564 = vpack.c.b16 %v1516, %v1514
      %v1565 = vpack.c.b16 %v1517, %v1515
      %1614 = vmatprep.subr.bf16.mxu0 %v1533
      %1615 = vmatpush1.bf16.msra.mxu0 %v1532
      %1616 = vmatprep.subr.bf16.mxu0 %v1531
      %1617 = vmatpush1.bf16.msra.mxu0 %v1530
      %1618 = vmatprep.subr.bf16.mxu0 %v1529
      %1619 = vmatpush1.bf16.msra.mxu0 %v1528
      %1620 = vmatprep.subr.bf16.mxu0 %v1527
      %1621 = vmatpush1.bf16.msra.mxu0 %v1526
      %1622 = vmatprep.subr.bf16.mxu0 %v1525
      %1623 = vmatpush1.bf16.msra.mxu0 %v1524
      %1624 = vmatprep.subr.bf16.mxu0 %v1523
      %1625 = vmatpush1.bf16.msra.mxu0 %v1522
      %1626 = vmatprep.subr.bf16.mxu0 %v1521
      %1627 = vmatpush1.bf16.msra.mxu0 %v1520
      %1628 = vmatprep.subr.bf16.mxu0 %v1519
      %1629 = vmatpush1.bf16.msra.mxu0 %v1518
      %1630 = vmatprep.subr.bf16.mxu0 %v1549
      %1631 = vmatpush2.bf16.msra.mxu0 %v1548
      %1632 = vmatprep.subr.bf16.mxu0 %v1547
      %1633 = vmatpush2.bf16.msra.mxu0 %v1546
      %1634 = vmatprep.subr.bf16.mxu0 %v1545
      %1635 = vmatpush2.bf16.msra.mxu0 %v1544
      %1636 = vmatprep.subr.bf16.mxu0 %v1543
      %1637 = vmatpush2.bf16.msra.mxu0 %v1542
      %1638 = vmatprep.subr.bf16.mxu0 %v1541
      %1639 = vmatpush2.bf16.msra.mxu0 %v1540
      %1640 = vmatprep.subr.bf16.mxu0 %v1539
      %1641 = vmatpush2.bf16.msra.mxu0 %v1538
      %1642 = vmatprep.subr.bf16.mxu0 %v1537
      %1643 = vmatpush2.bf16.msra.mxu0 %v1536
      %1644 = vmatprep.subr.bf16.mxu0 %v1535
      %1645 = vmatpush2.bf16.msra.mxu0 %v1534
      %1646 = vmatprep.mubr.bf16.mxu0 %v1369
      %1647 = vmatmul.mubr.bf16.gmra.mxu0 %v1368
      %v1648 = vpop.f32.mrf.mxu0
      %v1649 = vadd.f32 0.0, %v1648
      %v1650 = vpop.f32.mrf.mxu0
      %v1651 = vadd.f32 0.0, %v1650
      %v1652 = vpop.f32.mrf.mxu0
      %v1653 = vadd.f32 0.0, %v1652
      %v1654 = vpop.f32.mrf.mxu0
      %v1655 = vadd.f32 0.0, %v1654
      %1656 = vdwg.mxu0
      %1657 = vmatprep.subr.bf16.mxu0 %v1565
      %1658 = vmatpush1.bf16.msra.mxu0 %v1564
      %1659 = vmatprep.subr.bf16.mxu0 %v1563
      %1660 = vmatpush1.bf16.msra.mxu0 %v1562
      %1661 = vmatprep.subr.bf16.mxu0 %v1561
      %1662 = vmatpush1.bf16.msra.mxu0 %v1560
      %1663 = vmatprep.subr.bf16.mxu0 %v1559
      %1664 = vmatpush1.bf16.msra.mxu0 %v1558
      %1665 = vmatprep.subr.bf16.mxu0 %v1557
      %1666 = vmatpush1.bf16.msra.mxu0 %v1556
      %1667 = vmatprep.subr.bf16.mxu0 %v1555
      %1668 = vmatpush1.bf16.msra.mxu0 %v1554
      %1669 = vmatprep.subr.bf16.mxu0 %v1553
      %1670 = vmatpush1.bf16.msra.mxu0 %v1552
      %1671 = vmatprep.subr.bf16.mxu0 %v1551
      %1672 = vmatpush1.bf16.msra.mxu0 %v1550
      %1673 = vmatprep.subr.bf16.mxu0 0
      %1674 = vmatpush2.bf16.msra.mxu0 0
      %1675 = vmatprep.subr.bf16.mxu0 0
      %1676 = vmatpush2.bf16.msra.mxu0 0
      %1677 = vmatprep.subr.bf16.mxu0 0
      %1678 = vmatpush2.bf16.msra.mxu0 0
      %1679 = vmatprep.subr.bf16.mxu0 0
      %1680 = vmatpush2.bf16.msra.mxu0 0
      %1681 = vmatprep.subr.bf16.mxu0 0
      %1682 = vmatpush2.bf16.msra.mxu0 0
      %1683 = vmatprep.subr.bf16.mxu0 0
      %1684 = vmatpush2.bf16.msra.mxu0 0
      %1685 = vmatprep.subr.bf16.mxu0 0
      %1686 = vmatpush2.bf16.msra.mxu0 0
      %1687 = vmatprep.subr.bf16.mxu0 0
      %1688 = vmatpush2.bf16.msra.mxu0 0
      %1689 = vmatprep.mubr.bf16.mxu0 0
      %1690 = vmatmul.mubr.bf16.gmra.mxu0 %v1370
      %v1691 = vpop.f32.mrf.mxu0
      %v1692 = vadd.f32 %v1649, %v1691
      %v1693 = vpop.f32.mrf.mxu0
      %v1694 = vadd.f32 %v1651, %v1693
      %v1695 = vpop.f32.mrf.mxu0
      %v1696 = vadd.f32 %v1653, %v1695
      %v1697 = vpop.f32.mrf.mxu0
      %v1698 = vadd.f32 %v1655, %v1697
      %1699 = vdwg.mxu0
      %v1700 = vadd.f32 %v1268, %v1692
      %v1701 = vadd.f32 %v1270, %v1694
      %v1702 = vadd.f32 %v1272, %v1696
      %v1703 = vadd.f32 %v1274, %v1698
      %v1704 = vld [vmem:[%s3] sm:$0x3]
      %v1706 = vlaneseq
      %v1707 = vshrl.u32 %v1706, 7
      %v1708 = vsub.s32 0, %v1707
      %v1709 = vrot.slane %v1704, %v1708
      %v1710 = vlaneseq
      %v1711 = vshrl.u32 %v1710, 7
      %v1712 = vsub.s32 1, %v1711
      %v1713 = vrot.slane %v1704, %v1712
      %v1716 = vadd.f32 %v1700, %v1709
      %v1717 = vadd.f32 %v1701, %v1713
      %v1718 = vadd.f32 %v1702, %v1709
      %v1719 = vadd.f32 %v1703, %v1713
      %v1720 = vmax.f32 %v1716, 0.0
      %v1721 = vmax.f32 %v1717, 0.0
      %v1722 = vmax.f32 %v1718, 0.0
      %v1723 = vmax.f32 %v1719, 0.0
      %v1728 = vcombine.low %v1720, %v1721
      %v1729 = vcombine.high %v1720, %v1721
      %v1730 = vcombine.low %v1722, %v1723
      %v1731 = vcombine.high %v1722, %v1723
      %v1736 = vcombine.high %v1728, %v1728
      %v1737 = vcombine.high %v1729, %v1729
      %v1738 = vcombine.high %v1730, %v1730
      %v1739 = vcombine.high %v1731, %v1731
      %v1744 = vpack.c.bf16 %v1728, %v1728
      %v1745 = vpack.c.bf16 %v1736, %v1736
      %v1746 = vpack.c.bf16 %v1729, %v1729
      %v1747 = vpack.c.bf16 %v1737, %v1737
      %v1748 = vpack.c.bf16 %v1730, %v1730
      %v1749 = vpack.c.bf16 %v1738, %v1738
      %v1750 = vpack.c.bf16 %v1731, %v1731
      %v1751 = vpack.c.bf16 %v1739, %v1739
      %v1760 = vcombine.low %v1744, %v1745
      %v1762 = vunpack.c.l.s4 1983009808
      %v1763 = vunpack.c.0.s8 %v1762
      %v1764 = vlaneseq
      %v1765 = vshrl.u32 %v1764, 7
      %v1766 = vsub.s32 %v1763, %v1765
      %v1767 = vrot.slane %v1760, %v1766
      %v1768 = vcombine.low %v1746, %v1747
      %v1770 = vunpack.c.l.s4 1983009808
      %v1771 = vunpack.c.0.s8 %v1770
      %v1772 = vlaneseq
      %v1773 = vshrl.u32 %v1772, 7
      %v1774 = vsub.s32 %v1771, %v1773
      %v1775 = vrot.slane %v1768, %v1774
      %v1776 = vcombine.low %v1748, %v1749
      %v1778 = vunpack.c.l.s4 1983009808
      %v1779 = vunpack.c.0.s8 %v1778
      %v1780 = vlaneseq
      %v1781 = vshrl.u32 %v1780, 7
      %v1782 = vsub.s32 %v1779, %v1781
      %v1783 = vrot.slane %v1776, %v1782
      %v1784 = vcombine.low %v1750, %v1751
      %v1786 = vunpack.c.l.s4 1983009808
      %v1787 = vunpack.c.0.s8 %v1786
      %v1788 = vlaneseq
      %v1789 = vshrl.u32 %v1788, 7
      %v1790 = vsub.s32 %v1787, %v1789
      %v1791 = vrot.slane %v1784, %v1790
      %1796 = vst [vmem:[%s307] sm:$0xf] %v1767
      %1797 = vst [vmem:[%s307 + $0x4] sm:$0xf] %v1775
      %1798 = vst [vmem:[%s307 + $0x8] sm:$0xf] %v1783
      %1799 = vst [vmem:[%s307 + $0xc] sm:$0xf] %v1791
      %s1800 = smul.u32 4, %s20
      %p1801 = scmp.lt.s32.totalorder %s19, 1
      %s1802 = scalar_select %p1801, %s19, 1
      %p1803 = scmp.lt.s32.totalorder %s1800, 3
      %s1804 = scalar_select %p1803, %s1800, 3
      %s1805 = smul.addr %s1804, 2
      %s1806 = smul.addr %s1802, 8
      %s1807 = sadd.s32 %s1805, %s1806
      %s1808 = smul.addr %s1807, 2
      %s1809 = scalar_lea.vmem %s4, %s1808
      // Predicated region
      $region37: #{encoder_forward.9} parent=35 // pred_check
        %p1810 = pneg %p149
      $region38: #{encoder_forward.9} parent=35 // pred_check_branch
        %1812 = sbr.rel (%p1810) target = $region40
      $region39: #{encoder_forward.9} parent=35 // pred_region
        %s1813 = smul.u32 4, %s20
      $region40: #{encoder_forward.9} parent=35 // pred_fallthru
        _
    $region36: #{encoder_forward.9} parent=5 // pred_fallthru
      _
    %p1814 = scmp.le.s32.totalorder 2, %s10
    // Predicated region
    $region41: #{encoder_forward.9} parent=5 // pred_check
      %p1815 = pneg %p1814
    $region42: #{encoder_forward.9} parent=5 // pred_check_branch
      %1817 = sbr.rel (%p1815) target = $region44
    $region43: #{encoder_forward.9} parent=5 // pred_region
      %s1818 = ssub.s32 %s10, 2
      // Predicated region
      $region45: #{encoder_forward.9} parent=43 // pred_check
        %p1819 = pneg %p155
      $region46: #{encoder_forward.9} parent=43 // pred_check_branch
        %1821 = sbr.rel (%p1819) target = $region48
      $region47: #{encoder_forward.9} parent=43 // pred_region
        %s1822 = smul.u32 4, %s22
        %p1823 = scmp.lt.s32.totalorder %s21, 1
        %s1824 = scalar_select %p1823, %s21, 1
        %p1825 = scmp.lt.s32.totalorder %s1822, 3
        %s1826 = scalar_select %p1825, %s1822, 3
        %s1827 = smul.addr %s1826, 2
        %s1828 = smul.addr %s1824, 8
        %s1829 = sadd.s32 %s1827, %s1828
        %s1830 = smul.addr %s1829, 2
        %s1831 = scalar_lea.vmem %s4, %s1830
      $region48: #{encoder_forward.9} parent=43 // pred_fallthru
        _
    $region44: #{encoder_forward.9} parent=5 // pred_fallthru
      _
  $region6: #{encoder_forward.9} parent=0 // loop_footer
    %s14 = sadd.s32 1, %s10
  $region7: #{encoder_forward.9} parent=0 // loop_footer_branch
    %9 = sbr.rel target = $region3
  $region8: #{encoder_forward.9} parent=0 // loop_exit
    _

</llo_original>
